<compile_context>
chip_gen: v5e
topology: v5e:2x2
jax: 0.10.0
libtpu: 0.0.40
codegen_flags: <defaults>
</compile_context>

<pallas_src>
import jax
import jax.numpy as jnp
from jax.experimental import pallas as pl
from jax.experimental.pallas import tpu as pltpu

INPUT_SIZE = 3
HIDDEN_SIZE = 128
NUM_LAYERS = 2
OUTPUT_SIZE = 1
FC_PAD = 128  # pad the 1-wide fc output to a full lane tile (lane-dense store)


# ------------------------------------------------------------ layer kernel
def _make_layer_kernel(T, Bp, H, with_head):
    G = 4 * H

    def cell(gates_in, h, c, w_hh_ref):
        # gates_in already contains x_t @ W_ih + (b_ih + b_hh)
        g = gates_in + jnp.dot(h, w_hh_ref[...], preferred_element_type=jnp.float32)
        i = jax.nn.sigmoid(g[:, 0 * H:1 * H])
        f = jax.nn.sigmoid(g[:, 1 * H:2 * H])
        gg = jnp.tanh(g[:, 2 * H:3 * H])
        o = jax.nn.sigmoid(g[:, 3 * H:4 * H])
        c_new = f * c + i * gg
        h_new = o * jnp.tanh(c_new)
        return h_new, c_new

    def kernel(*refs):
        if with_head:
            (x_ref, wih_ref, b_ref, whf_ref, whb_ref,
             fcw_ref, fcb_ref, head_ref, gates_ref) = refs
        else:
            (x_ref, wih_ref, b_ref, whf_ref, whb_ref,
             feat_ref, gates_ref) = refs

        # Hoisted input projection: one big MXU matmul for all timesteps and
        # both directions, bias folded in.  [T*Bp, D] @ [D, 8H] -> VMEM scratch.
        gates_ref[...] = (
            jnp.dot(x_ref[...], wih_ref[...],
                    preferred_element_type=jnp.float32) + b_ref[...])

        zeros = jnp.zeros((Bp, H), jnp.float32)
        hf, cf = zeros, zeros          # forward state   (h0 = c0 = 0)
        hb, cb = zeros, zeros          # backward state
        hb_at_last = zeros             # backward hidden at original index T-1

        # Fully unrolled time loop; fwd/bwd chains are independent -> overlap.
        for t in range(T):
            rt = T - 1 - t
            gf = gates_ref[t * Bp:(t + 1) * Bp, 0:G]          # fwd gates at t
            gb = gates_ref[rt * Bp:(rt + 1) * Bp, G:2 * G]    # bwd gates at T-1-t
            hf, cf = cell(gf, hf, cf, whf_ref)
            hb, cb = cell(gb, hb, cb, whb_ref)
            if with_head:
                if t == 0:
                    hb_at_last = hb                            # bwd h at index T-1
            else:
                feat_ref[t, :, 0:H] = hf                       # column-offset writes,
                feat_ref[rt, :, H:2 * H] = hb                  # no concat / reverse copies

        if with_head:
            # out[:, -1, :] = [fwd h_{T-1} | bwd h at index T-1]; fused fc head.
            last = jnp.concatenate([hf, hb_at_last], axis=-1)  # (Bp, 2H)
            head_ref[...] = (
                jnp.dot(last, fcw_ref[...],
                        preferred_element_type=jnp.float32) + fcb_ref[...])

    return kernel


def _vmem_specs(n):
    return [pl.BlockSpec(memory_space=pltpu.MemorySpace.VMEM) for _ in range(n)]


def bilstm_layer(x2d, w_ih, b, w_hh_f, w_hh_b, *, T, Bp):
    """One bidirectional layer. x2d: [T*Bp, D_in] -> feat [T, Bp, 2H]."""
    H = HIDDEN_SIZE
    return pl.pallas_call(
        _make_layer_kernel(T, Bp, H, with_head=False),
        out_shape=jax.ShapeDtypeStruct((T, Bp, 2 * H), jnp.float32),
        in_specs=_vmem_specs(5),
        out_specs=pl.BlockSpec(memory_space=pltpu.MemorySpace.VMEM),
        scratch_shapes=[pltpu.VMEM((T * Bp, 8 * H), jnp.float32)],  # hoisted gates
    )(x2d, w_ih, b, w_hh_f, w_hh_b)


def bilstm_layer_with_head(x2d, w_ih, b, w_hh_f, w_hh_b, fc_w, fc_b, *, T, Bp):
    """Last bidirectional layer fused with the Linear head -> [Bp, FC_PAD]."""
    H = HIDDEN_SIZE
    return pl.pallas_call(
        _make_layer_kernel(T, Bp, H, with_head=True),
        out_shape=jax.ShapeDtypeStruct((Bp, FC_PAD), jnp.float32),
        in_specs=_vmem_specs(7),
        out_specs=pl.BlockSpec(memory_space=pltpu.MemorySpace.VMEM),
        scratch_shapes=[pltpu.VMEM((T * Bp, 8 * H), jnp.float32)],  # hoisted gates
    )(x2d, w_ih, b, w_hh_f, w_hh_b, fc_w, fc_b)


# --------------------------------------------------------------------- params
def init_params(key):
    H = HIDDEN_SIZE
    k = 1.0 / float(H) ** 0.5
    keys = jax.random.split(key, NUM_LAYERS * 8 + 2)
    idx = 0
    layers = []
    for layer in range(NUM_LAYERS):
        d_in = INPUT_SIZE if layer == 0 else 2 * H
        w_ihs, w_hhs, biases = [], [], []
        for _ in range(2):                                   # forward, backward
            w_ih = jax.random.uniform(keys[idx], (d_in, 4 * H), jnp.float32, -k, k); idx += 1
            w_hh = jax.random.uniform(keys[idx], (H, 4 * H), jnp.float32, -k, k); idx += 1
            b_ih = jax.random.uniform(keys[idx], (4 * H,), jnp.float32, -k, k); idx += 1
            b_hh = jax.random.uniform(keys[idx], (4 * H,), jnp.float32, -k, k); idx += 1
            w_ihs.append(w_ih); w_hhs.append(w_hh); biases.append(b_ih + b_hh)
        layers.append({
            "w_ih": jnp.concatenate(w_ihs, axis=1),          # [d_in, 8H]  (fwd | bwd)
            "b": jnp.concatenate(biases).reshape(1, 8 * H),  # [1, 8H]  (b_ih + b_hh)
            "w_hh_f": w_hhs[0],                              # [H, 4H]
            "w_hh_b": w_hhs[1],                              # [H, 4H]
        })
    kf = 1.0 / float(2 * H) ** 0.5
    fc_w = jax.random.uniform(keys[idx], (2 * H, OUTPUT_SIZE), jnp.float32, -kf, kf); idx += 1
    fc_b = jax.random.uniform(keys[idx], (OUTPUT_SIZE,), jnp.float32, -kf, kf)
    fc_w_pad = jnp.zeros((2 * H, FC_PAD), jnp.float32).at[:, :OUTPUT_SIZE].set(fc_w)
    fc_b_pad = jnp.zeros((1, FC_PAD), jnp.float32).at[:, :OUTPUT_SIZE].set(fc_b)
    return {"lstm": layers, "fc_w": fc_w_pad, "fc_b": fc_b_pad}


# -------------------------------------------------------------------- forward
def bilstm_forward(x, params):
    """x: [B, T, input_size] (batch_first) -> [B, output_size]."""
    B, T, D = x.shape
    H = HIDDEN_SIZE
    Bp = max(8, ((B + 7) // 8) * 8)                          # pad batch to full sublanes
    x_tm = jnp.transpose(x, (1, 0, 2)).astype(jnp.float32)   # [T, B, D] time-major
    x_tm = jnp.pad(x_tm, ((0, 0), (0, Bp - B), (0, 0)))      # [T, Bp, D]
    feat2d = x_tm.reshape(T * Bp, D)

    p0, p1 = params["lstm"]
    feat = bilstm_layer(feat2d, p0["w_ih"], p0["b"], p0["w_hh_f"], p0["w_hh_b"],
                        T=T, Bp=Bp)                          # [T, Bp, 2H]
    # TODO(synk): inter-layer dropout (p=0.2) only fires in training mode;
    # inference semantics (identity) are implemented here.
    head = bilstm_layer_with_head(feat.reshape(T * Bp, 2 * H),
                                  p1["w_ih"], p1["b"], p1["w_hh_f"], p1["w_hh_b"],
                                  params["fc_w"], params["fc_b"],
                                  T=T, Bp=Bp)                # [Bp, FC_PAD]
    return head[:B, :OUTPUT_SIZE]                            # [B, 1]


if __name__ == "__main__":
    key = jax.random.PRNGKey(0)
    pkey, xkey = jax.random.split(key)
    params = init_params(pkey)

    B, T = 2, 8
    x = jax.random.normal(xkey, (B, T, INPUT_SIZE), dtype=jnp.float32)

    out = jax.jit(bilstm_forward)(x, params)
    out = jax.block_until_ready(out)
    assert out.shape == (B, OUTPUT_SIZE), out.shape
    print("KERNEL_OK")
</pallas_src>

<mosaic_0001>
module attributes {stable_mosaic.version = 11 : i64} {
  func.func @kernel(%arg0: memref<64x3xf32, #tpu.memory_space<vmem>>, %arg1: memref<3x1024xf32, #tpu.memory_space<vmem>>, %arg2: memref<1x1024xf32, #tpu.memory_space<vmem>>, %arg3: memref<128x512xf32, #tpu.memory_space<vmem>>, %arg4: memref<128x512xf32, #tpu.memory_space<vmem>>, %arg5: memref<8x8x256xf32, #tpu.memory_space<vmem>>, %arg6: memref<64x1024xf32, #tpu.memory_space<vmem>>) attributes {dimension_semantics = [], scalar_prefetch = 0 : i64, scratch_operands = 1 : i64, tpu.core_type = #tpu.core_type<tc>} {
    %c0 = arith.constant 0 : index
    %c0_0 = arith.constant 0 : index
    %0 = vector.load %arg0[%c0, %c0_0] : memref<64x3xf32, #tpu.memory_space<vmem>>, vector<64x3xf32>
    %c0_1 = arith.constant 0 : index
    %c0_2 = arith.constant 0 : index
    %1 = vector.load %arg1[%c0_1, %c0_2] : memref<3x1024xf32, #tpu.memory_space<vmem>>, vector<3x1024xf32>
    %cst = arith.constant dense<0.000000e+00> : vector<64x1024xf32>
    %2 = tpu.matmul %0, %1, %cst {dimension_numbers = #tpu.dot_dimension_numbers<[1], [0], [0], [1], [0, 0, 1, 1], [], []>} : vector<64x3xf32>, vector<3x1024xf32>, vector<64x1024xf32> -> vector<64x1024xf32>
    %c0_3 = arith.constant 0 : index
    %c0_4 = arith.constant 0 : index
    %3 = vector.load %arg2[%c0_3, %c0_4] : memref<1x1024xf32, #tpu.memory_space<vmem>>, vector<1x1024xf32>
    %4 = vector.broadcast %3 : vector<1x1024xf32> to vector<64x1024xf32>
    %5 = arith.addf %2, %4 : vector<64x1024xf32>
    %c0_5 = arith.constant 0 : index
    %c0_6 = arith.constant 0 : index
    %6 = vector.load %arg6[%c0_5, %c0_6] : memref<64x1024xf32, #tpu.memory_space<vmem>>, vector<64x1024xf32>
    tpu.vector_store %arg6[%c0_5, %c0_6], %5 {strides = array<i32>} : memref<64x1024xf32, #tpu.memory_space<vmem>>, vector<64x1024xf32>,
    %cst_7 = arith.constant 0.000000e+00 : f32
    %7 = vector.broadcast %cst_7 : f32 to vector<8x128xf32>
    %c0_8 = arith.constant 0 : index
    %c0_9 = arith.constant 0 : index
    %8 = vector.load %arg6[%c0_8, %c0_9] : memref<64x1024xf32, #tpu.memory_space<vmem>>, vector<8x512xf32>
    %c56 = arith.constant 56 : index
    %c512 = arith.constant 512 : index
    %9 = vector.load %arg6[%c56, %c512] : memref<64x1024xf32, #tpu.memory_space<vmem>>, vector<8x512xf32>
    %c0_10 = arith.constant 0 : index
    %c0_11 = arith.constant 0 : index
    %10 = vector.load %arg3[%c0_10, %c0_11] : memref<128x512xf32, #tpu.memory_space<vmem>>, vector<128x512xf32>
    %cst_12 = arith.constant dense<0.000000e+00> : vector<8x512xf32>
    %11 = tpu.matmul %7, %10, %cst_12 {dimension_numbers = #tpu.dot_dimension_numbers<[1], [0], [0], [1], [0, 0, 1, 1], [], []>} : vector<8x128xf32>, vector<128x512xf32>, vector<8x512xf32> -> vector<8x512xf32>
    %12 = arith.addf %8, %11 : vector<8x512xf32>
    %13 = vector.extract_strided_slice %12 {offsets = [0, 0], sizes = [8, 128], strides = [1, 1]} : vector<8x512xf32> to vector<8x128xf32>
    %14 = arith.negf %13 : vector<8x128xf32>
    %15 = math.exp %14 : vector<8x128xf32>
    %cst_13 = arith.constant 1.000000e+00 : f32
    %16 = vector.broadcast %cst_13 : f32 to vector<8x128xf32>
    %17 = arith.addf %16, %15 : vector<8x128xf32>
    %18 = arith.divf %16, %17 : vector<8x128xf32>
    %19 = vector.extract_strided_slice %12 {offsets = [0, 128], sizes = [8, 128], strides = [1, 1]} : vector<8x512xf32> to vector<8x128xf32>
    %20 = arith.negf %19 : vector<8x128xf32>
    %21 = math.exp %20 : vector<8x128xf32>
    %cst_14 = arith.constant 1.000000e+00 : f32
    %22 = vector.broadcast %cst_14 : f32 to vector<8x128xf32>
    %23 = arith.addf %22, %21 : vector<8x128xf32>
    %24 = arith.divf %22, %23 : vector<8x128xf32>
    %25 = vector.extract_strided_slice %12 {offsets = [0, 256], sizes = [8, 128], strides = [1, 1]} : vector<8x512xf32> to vector<8x128xf32>
    %26 = math.tanh %25 : vector<8x128xf32>
    %27 = vector.extract_strided_slice %12 {offsets = [0, 384], sizes = [8, 128], strides = [1, 1]} : vector<8x512xf32> to vector<8x128xf32>
    %28 = arith.negf %27 : vector<8x128xf32>
    %29 = math.exp %28 : vector<8x128xf32>
    %cst_15 = arith.constant 1.000000e+00 : f32
    %30 = vector.broadcast %cst_15 : f32 to vector<8x128xf32>
    %31 = arith.addf %30, %29 : vector<8x128xf32>
    %32 = arith.divf %30, %31 : vector<8x128xf32>
    %33 = arith.mulf %24, %7 : vector<8x128xf32>
    %34 = arith.mulf %18, %26 : vector<8x128xf32>
    %35 = arith.addf %33, %34 : vector<8x128xf32>
    %36 = math.tanh %35 : vector<8x128xf32>
    %37 = arith.mulf %32, %36 : vector<8x128xf32>
    %c0_16 = arith.constant 0 : index
    %c0_17 = arith.constant 0 : index
    %38 = vector.load %arg4[%c0_16, %c0_17] : memref<128x512xf32, #tpu.memory_space<vmem>>, vector<128x512xf32>
    %cst_18 = arith.constant dense<0.000000e+00> : vector<8x512xf32>
    %39 = tpu.matmul %7, %38, %cst_18 {dimension_numbers = #tpu.dot_dimension_numbers<[1], [0], [0], [1], [0, 0, 1, 1], [], []>} : vector<8x128xf32>, vector<128x512xf32>, vector<8x512xf32> -> vector<8x512xf32>
    %40 = arith.addf %9, %39 : vector<8x512xf32>
    %41 = vector.extract_strided_slice %40 {offsets = [0, 0], sizes = [8, 128], strides = [1, 1]} : vector<8x512xf32> to vector<8x128xf32>
    %42 = arith.negf %41 : vector<8x128xf32>
    %43 = math.exp %42 : vector<8x128xf32>
    %cst_19 = arith.constant 1.000000e+00 : f32
    %44 = vector.broadcast %cst_19 : f32 to vector<8x128xf32>
    %45 = arith.addf %44, %43 : vector<8x128xf32>
    %46 = arith.divf %44, %45 : vector<8x128xf32>
    %47 = vector.extract_strided_slice %40 {offsets = [0, 128], sizes = [8, 128], strides = [1, 1]} : vector<8x512xf32> to vector<8x128xf32>
    %48 = arith.negf %47 : vector<8x128xf32>
    %49 = math.exp %48 : vector<8x128xf32>
    %cst_20 = arith.constant 1.000000e+00 : f32
    %50 = vector.broadcast %cst_20 : f32 to vector<8x128xf32>
    %51 = arith.addf %50, %49 : vector<8x128xf32>
    %52 = arith.divf %50, %51 : vector<8x128xf32>
    %53 = vector.extract_strided_slice %40 {offsets = [0, 256], sizes = [8, 128], strides = [1, 1]} : vector<8x512xf32> to vector<8x128xf32>
    %54 = math.tanh %53 : vector<8x128xf32>
    %55 = vector.extract_strided_slice %40 {offsets = [0, 384], sizes = [8, 128], strides = [1, 1]} : vector<8x512xf32> to vector<8x128xf32>
    %56 = arith.negf %55 : vector<8x128xf32>
    %57 = math.exp %56 : vector<8x128xf32>
    %cst_21 = arith.constant 1.000000e+00 : f32
    %58 = vector.broadcast %cst_21 : f32 to vector<8x128xf32>
    %59 = arith.addf %58, %57 : vector<8x128xf32>
    %60 = arith.divf %58, %59 : vector<8x128xf32>
    %61 = arith.mulf %52, %7 : vector<8x128xf32>
    %62 = arith.mulf %46, %54 : vector<8x128xf32>
    %63 = arith.addf %61, %62 : vector<8x128xf32>
    %64 = math.tanh %63 : vector<8x128xf32>
    %65 = arith.mulf %60, %64 : vector<8x128xf32>
    %c0_22 = arith.constant 0 : index
    %c0_23 = arith.constant 0 : index
    %c0_24 = arith.constant 0 : index
    %66 = vector.load %arg5[%c0_22, %c0_23, %c0_24] : memref<8x8x256xf32, #tpu.memory_space<vmem>>, vector<1x8x128xf32>
    %67 = vector.shape_cast %66 : vector<1x8x128xf32> to vector<8x128xf32>
    %68 = vector.shape_cast %37 : vector<8x128xf32> to vector<1x8x128xf32>
    tpu.vector_store %arg5[%c0_22, %c0_23, %c0_24], %68 {strides = array<i32>} : memref<8x8x256xf32, #tpu.memory_space<vmem>>, vector<1x8x128xf32>,
    %c7 = arith.constant 7 : index
    %c0_25 = arith.constant 0 : index
    %c128 = arith.constant 128 : index
    %69 = vector.load %arg5[%c7, %c0_25, %c128] : memref<8x8x256xf32, #tpu.memory_space<vmem>>, vector<1x8x128xf32>
    %70 = vector.shape_cast %69 : vector<1x8x128xf32> to vector<8x128xf32>
    %71 = vector.shape_cast %65 : vector<8x128xf32> to vector<1x8x128xf32>
    tpu.vector_store %arg5[%c7, %c0_25, %c128], %71 {strides = array<i32>} : memref<8x8x256xf32, #tpu.memory_space<vmem>>, vector<1x8x128xf32>,
    %c8 = arith.constant 8 : index
    %c0_26 = arith.constant 0 : index
    %72 = vector.load %arg6[%c8, %c0_26] : memref<64x1024xf32, #tpu.memory_space<vmem>>, vector<8x512xf32>
    %c48 = arith.constant 48 : index
    %c512_27 = arith.constant 512 : index
    %73 = vector.load %arg6[%c48, %c512_27] : memref<64x1024xf32, #tpu.memory_space<vmem>>, vector<8x512xf32>
    %c0_28 = arith.constant 0 : index
    %c0_29 = arith.constant 0 : index
    %74 = vector.load %arg3[%c0_28, %c0_29] : memref<128x512xf32, #tpu.memory_space<vmem>>, vector<128x512xf32>
    %cst_30 = arith.constant dense<0.000000e+00> : vector<8x512xf32>
    %75 = tpu.matmul %37, %74, %cst_30 {dimension_numbers = #tpu.dot_dimension_numbers<[1], [0], [0], [1], [0, 0, 1, 1], [], []>} : vector<8x128xf32>, vector<128x512xf32>, vector<8x512xf32> -> vector<8x512xf32>
    %76 = arith.addf %72, %75 : vector<8x512xf32>
    %77 = vector.extract_strided_slice %76 {offsets = [0, 0], sizes = [8, 128], strides = [1, 1]} : vector<8x512xf32> to vector<8x128xf32>
    %78 = arith.negf %77 : vector<8x128xf32>
    %79 = math.exp %78 : vector<8x128xf32>
    %cst_31 = arith.constant 1.000000e+00 : f32
    %80 = vector.broadcast %cst_31 : f32 to vector<8x128xf32>
    %81 = arith.addf %80, %79 : vector<8x128xf32>
    %82 = arith.divf %80, %81 : vector<8x128xf32>
    %83 = vector.extract_strided_slice %76 {offsets = [0, 128], sizes = [8, 128], strides = [1, 1]} : vector<8x512xf32> to vector<8x128xf32>
    %84 = arith.negf %83 : vector<8x128xf32>
    %85 = math.exp %84 : vector<8x128xf32>
    %cst_32 = arith.constant 1.000000e+00 : f32
    %86 = vector.broadcast %cst_32 : f32 to vector<8x128xf32>
    %87 = arith.addf %86, %85 : vector<8x128xf32>
    %88 = arith.divf %86, %87 : vector<8x128xf32>
    %89 = vector.extract_strided_slice %76 {offsets = [0, 256], sizes = [8, 128], strides = [1, 1]} : vector<8x512xf32> to vector<8x128xf32>
    %90 = math.tanh %89 : vector<8x128xf32>
    %91 = vector.extract_strided_slice %76 {offsets = [0, 384], sizes = [8, 128], strides = [1, 1]} : vector<8x512xf32> to vector<8x128xf32>
    %92 = arith.negf %91 : vector<8x128xf32>
    %93 = math.exp %92 : vector<8x128xf32>
    %cst_33 = arith.constant 1.000000e+00 : f32
    %94 = vector.broadcast %cst_33 : f32 to vector<8x128xf32>
    %95 = arith.addf %94, %93 : vector<8x128xf32>
    %96 = arith.divf %94, %95 : vector<8x128xf32>
    %97 = arith.mulf %88, %35 : vector<8x128xf32>
    %98 = arith.mulf %82, %90 : vector<8x128xf32>
    %99 = arith.addf %97, %98 : vector<8x128xf32>
    %100 = math.tanh %99 : vector<8x128xf32>
    %101 = arith.mulf %96, %100 : vector<8x128xf32>
    %c0_34 = arith.constant 0 : index
    %c0_35 = arith.constant 0 : index
    %102 = vector.load %arg4[%c0_34, %c0_35] : memref<128x512xf32, #tpu.memory_space<vmem>>, vector<128x512xf32>
    %cst_36 = arith.constant dense<0.000000e+00> : vector<8x512xf32>
    %103 = tpu.matmul %65, %102, %cst_36 {dimension_numbers = #tpu.dot_dimension_numbers<[1], [0], [0], [1], [0, 0, 1, 1], [], []>} : vector<8x128xf32>, vector<128x512xf32>, vector<8x512xf32> -> vector<8x512xf32>
    %104 = arith.addf %73, %103 : vector<8x512xf32>
    %105 = vector.extract_strided_slice %104 {offsets = [0, 0], sizes = [8, 128], strides = [1, 1]} : vector<8x512xf32> to vector<8x128xf32>
    %106 = arith.negf %105 : vector<8x128xf32>
    %107 = math.exp %106 : vector<8x128xf32>
    %cst_37 = arith.constant 1.000000e+00 : f32
    %108 = vector.broadcast %cst_37 : f32 to vector<8x128xf32>
    %109 = arith.addf %108, %107 : vector<8x128xf32>
    %110 = arith.divf %108, %109 : vector<8x128xf32>
    %111 = vector.extract_strided_slice %104 {offsets = [0, 128], sizes = [8, 128], strides = [1, 1]} : vector<8x512xf32> to vector<8x128xf32>
    %112 = arith.negf %111 : vector<8x128xf32>
    %113 = math.exp %112 : vector<8x128xf32>
    %cst_38 = arith.constant 1.000000e+00 : f32
    %114 = vector.broadcast %cst_38 : f32 to vector<8x128xf32>
    %115 = arith.addf %114, %113 : vector<8x128xf32>
    %116 = arith.divf %114, %115 : vector<8x128xf32>
    %117 = vector.extract_strided_slice %104 {offsets = [0, 256], sizes = [8, 128], strides = [1, 1]} : vector<8x512xf32> to vector<8x128xf32>
    %118 = math.tanh %117 : vector<8x128xf32>
    %119 = vector.extract_strided_slice %104 {offsets = [0, 384], sizes = [8, 128], strides = [1, 1]} : vector<8x512xf32> to vector<8x128xf32>
    %120 = arith.negf %119 : vector<8x128xf32>
    %121 = math.exp %120 : vector<8x128xf32>
    %cst_39 = arith.constant 1.000000e+00 : f32
    %122 = vector.broadcast %cst_39 : f32 to vector<8x128xf32>
    %123 = arith.addf %122, %121 : vector<8x128xf32>
    %124 = arith.divf %122, %123 : vector<8x128xf32>
    %125 = arith.mulf %116, %63 : vector<8x128xf32>
    %126 = arith.mulf %110, %118 : vector<8x128xf32>
    %127 = arith.addf %125, %126 : vector<8x128xf32>
    %128 = math.tanh %127 : vector<8x128xf32>
    %129 = arith.mulf %124, %128 : vector<8x128xf32>
    %c1 = arith.constant 1 : index
    %c0_40 = arith.constant 0 : index
    %c0_41 = arith.constant 0 : index
    %130 = vector.load %arg5[%c1, %c0_40, %c0_41] : memref<8x8x256xf32, #tpu.memory_space<vmem>>, vector<1x8x128xf32>
    %131 = vector.shape_cast %130 : vector<1x8x128xf32> to vector<8x128xf32>
    %132 = vector.shape_cast %101 : vector<8x128xf32> to vector<1x8x128xf32>
    tpu.vector_store %arg5[%c1, %c0_40, %c0_41], %132 {strides = array<i32>} : memref<8x8x256xf32, #tpu.memory_space<vmem>>, vector<1x8x128xf32>,
    %c6 = arith.constant 6 : index
    %c0_42 = arith.constant 0 : index
    %c128_43 = arith.constant 128 : index
    %133 = vector.load %arg5[%c6, %c0_42, %c128_43] : memref<8x8x256xf32, #tpu.memory_space<vmem>>, vector<1x8x128xf32>
    %134 = vector.shape_cast %133 : vector<1x8x128xf32> to vector<8x128xf32>
    %135 = vector.shape_cast %129 : vector<8x128xf32> to vector<1x8x128xf32>
    tpu.vector_store %arg5[%c6, %c0_42, %c128_43], %135 {strides = array<i32>} : memref<8x8x256xf32, #tpu.memory_space<vmem>>, vector<1x8x128xf32>,
    %c16 = arith.constant 16 : index
    %c0_44 = arith.constant 0 : index
    %136 = vector.load %arg6[%c16, %c0_44] : memref<64x1024xf32, #tpu.memory_space<vmem>>, vector<8x512xf32>
    %c40 = arith.constant 40 : index
    %c512_45 = arith.constant 512 : index
    %137 = vector.load %arg6[%c40, %c512_45] : memref<64x1024xf32, #tpu.memory_space<vmem>>, vector<8x512xf32>
    %c0_46 = arith.constant 0 : index
    %c0_47 = arith.constant 0 : index
    %138 = vector.load %arg3[%c0_46, %c0_47] : memref<128x512xf32, #tpu.memory_space<vmem>>, vector<128x512xf32>
    %cst_48 = arith.constant dense<0.000000e+00> : vector<8x512xf32>
    %139 = tpu.matmul %101, %138, %cst_48 {dimension_numbers = #tpu.dot_dimension_numbers<[1], [0], [0], [1], [0, 0, 1, 1], [], []>} : vector<8x128xf32>, vector<128x512xf32>, vector<8x512xf32> -> vector<8x512xf32>
    %140 = arith.addf %136, %139 : vector<8x512xf32>
    %141 = vector.extract_strided_slice %140 {offsets = [0, 0], sizes = [8, 128], strides = [1, 1]} : vector<8x512xf32> to vector<8x128xf32>
    %142 = arith.negf %141 : vector<8x128xf32>
    %143 = math.exp %142 : vector<8x128xf32>
    %cst_49 = arith.constant 1.000000e+00 : f32
    %144 = vector.broadcast %cst_49 : f32 to vector<8x128xf32>
    %145 = arith.addf %144, %143 : vector<8x128xf32>
    %146 = arith.divf %144, %145 : vector<8x128xf32>
    %147 = vector.extract_strided_slice %140 {offsets = [0, 128], sizes = [8, 128], strides = [1, 1]} : vector<8x512xf32> to vector<8x128xf32>
    %148 = arith.negf %147 : vector<8x128xf32>
    %149 = math.exp %148 : vector<8x128xf32>
    %cst_50 = arith.constant 1.000000e+00 : f32
    %150 = vector.broadcast %cst_50 : f32 to vector<8x128xf32>
    %151 = arith.addf %150, %149 : vector<8x128xf32>
    %152 = arith.divf %150, %151 : vector<8x128xf32>
    %153 = vector.extract_strided_slice %140 {offsets = [0, 256], sizes = [8, 128], strides = [1, 1]} : vector<8x512xf32> to vector<8x128xf32>
    %154 = math.tanh %153 : vector<8x128xf32>
    %155 = vector.extract_strided_slice %140 {offsets = [0, 384], sizes = [8, 128], strides = [1, 1]} : vector<8x512xf32> to vector<8x128xf32>
    %156 = arith.negf %155 : vector<8x128xf32>
    %157 = math.exp %156 : vector<8x128xf32>
    %cst_51 = arith.constant 1.000000e+00 : f32
    %158 = vector.broadcast %cst_51 : f32 to vector<8x128xf32>
    %159 = arith.addf %158, %157 : vector<8x128xf32>
    %160 = arith.divf %158, %159 : vector<8x128xf32>
    %161 = arith.mulf %152, %99 : vector<8x128xf32>
    %162 = arith.mulf %146, %154 : vector<8x128xf32>
    %163 = arith.addf %161, %162 : vector<8x128xf32>
    %164 = math.tanh %163 : vector<8x128xf32>
    %165 = arith.mulf %160, %164 : vector<8x128xf32>
    %c0_52 = arith.constant 0 : index
    %c0_53 = arith.constant 0 : index
    %166 = vector.load %arg4[%c0_52, %c0_53] : memref<128x512xf32, #tpu.memory_space<vmem>>, vector<128x512xf32>
    %cst_54 = arith.constant dense<0.000000e+00> : vector<8x512xf32>
    %167 = tpu.matmul %129, %166, %cst_54 {dimension_numbers = #tpu.dot_dimension_numbers<[1], [0], [0], [1], [0, 0, 1, 1], [], []>} : vector<8x128xf32>, vector<128x512xf32>, vector<8x512xf32> -> vector<8x512xf32>
    %168 = arith.addf %137, %167 : vector<8x512xf32>
    %169 = vector.extract_strided_slice %168 {offsets = [0, 0], sizes = [8, 128], strides = [1, 1]} : vector<8x512xf32> to vector<8x128xf32>
    %170 = arith.negf %169 : vector<8x128xf32>
    %171 = math.exp %170 : vector<8x128xf32>
    %cst_55 = arith.constant 1.000000e+00 : f32
    %172 = vector.broadcast %cst_55 : f32 to vector<8x128xf32>
    %173 = arith.addf %172, %171 : vector<8x128xf32>
    %174 = arith.divf %172, %173 : vector<8x128xf32>
    %175 = vector.extract_strided_slice %168 {offsets = [0, 128], sizes = [8, 128], strides = [1, 1]} : vector<8x512xf32> to vector<8x128xf32>
    %176 = arith.negf %175 : vector<8x128xf32>
    %177 = math.exp %176 : vector<8x128xf32>
    %cst_56 = arith.constant 1.000000e+00 : f32
    %178 = vector.broadcast %cst_56 : f32 to vector<8x128xf32>
    %179 = arith.addf %178, %177 : vector<8x128xf32>
    %180 = arith.divf %178, %179 : vector<8x128xf32>
    %181 = vector.extract_strided_slice %168 {offsets = [0, 256], sizes = [8, 128], strides = [1, 1]} : vector<8x512xf32> to vector<8x128xf32>
    %182 = math.tanh %181 : vector<8x128xf32>
    %183 = vector.extract_strided_slice %168 {offsets = [0, 384], sizes = [8, 128], strides = [1, 1]} : vector<8x512xf32> to vector<8x128xf32>
    %184 = arith.negf %183 : vector<8x128xf32>
    %185 = math.exp %184 : vector<8x128xf32>
    %cst_57 = arith.constant 1.000000e+00 : f32
    %186 = vector.broadcast %cst_57 : f32 to vector<8x128xf32>
    %187 = arith.addf %186, %185 : vector<8x128xf32>
    %188 = arith.divf %186, %187 : vector<8x128xf32>
    %189 = arith.mulf %180, %127 : vector<8x128xf32>
    %190 = arith.mulf %174, %182 : vector<8x128xf32>
    %191 = arith.addf %189, %190 : vector<8x128xf32>
    %192 = math.tanh %191 : vector<8x128xf32>
    %193 = arith.mulf %188, %192 : vector<8x128xf32>
    %c2 = arith.constant 2 : index
    %c0_58 = arith.constant 0 : index
    %c0_59 = arith.constant 0 : index
    %194 = vector.load %arg5[%c2, %c0_58, %c0_59] : memref<8x8x256xf32, #tpu.memory_space<vmem>>, vector<1x8x128xf32>
    %195 = vector.shape_cast %194 : vector<1x8x128xf32> to vector<8x128xf32>
    %196 = vector.shape_cast %165 : vector<8x128xf32> to vector<1x8x128xf32>
    tpu.vector_store %arg5[%c2, %c0_58, %c0_59], %196 {strides = array<i32>} : memref<8x8x256xf32, #tpu.memory_space<vmem>>, vector<1x8x128xf32>,
    %c5 = arith.constant 5 : index
    %c0_60 = arith.constant 0 : index
    %c128_61 = arith.constant 128 : index
    %197 = vector.load %arg5[%c5, %c0_60, %c128_61] : memref<8x8x256xf32, #tpu.memory_space<vmem>>, vector<1x8x128xf32>
    %198 = vector.shape_cast %197 : vector<1x8x128xf32> to vector<8x128xf32>
    %199 = vector.shape_cast %193 : vector<8x128xf32> to vector<1x8x128xf32>
    tpu.vector_store %arg5[%c5, %c0_60, %c128_61], %199 {strides = array<i32>} : memref<8x8x256xf32, #tpu.memory_space<vmem>>, vector<1x8x128xf32>,
    %c24 = arith.constant 24 : index
    %c0_62 = arith.constant 0 : index
    %200 = vector.load %arg6[%c24, %c0_62] : memref<64x1024xf32, #tpu.memory_space<vmem>>, vector<8x512xf32>
    %c32 = arith.constant 32 : index
    %c512_63 = arith.constant 512 : index
    %201 = vector.load %arg6[%c32, %c512_63] : memref<64x1024xf32, #tpu.memory_space<vmem>>, vector<8x512xf32>
    %c0_64 = arith.constant 0 : index
    %c0_65 = arith.constant 0 : index
    %202 = vector.load %arg3[%c0_64, %c0_65] : memref<128x512xf32, #tpu.memory_space<vmem>>, vector<128x512xf32>
    %cst_66 = arith.constant dense<0.000000e+00> : vector<8x512xf32>
    %203 = tpu.matmul %165, %202, %cst_66 {dimension_numbers = #tpu.dot_dimension_numbers<[1], [0], [0], [1], [0, 0, 1, 1], [], []>} : vector<8x128xf32>, vector<128x512xf32>, vector<8x512xf32> -> vector<8x512xf32>
    %204 = arith.addf %200, %203 : vector<8x512xf32>
    %205 = vector.extract_strided_slice %204 {offsets = [0, 0], sizes = [8, 128], strides = [1, 1]} : vector<8x512xf32> to vector<8x128xf32>
    %206 = arith.negf %205 : vector<8x128xf32>
    %207 = math.exp %206 : vector<8x128xf32>
    %cst_67 = arith.constant 1.000000e+00 : f32
    %208 = vector.broadcast %cst_67 : f32 to vector<8x128xf32>
    %209 = arith.addf %208, %207 : vector<8x128xf32>
    %210 = arith.divf %208, %209 : vector<8x128xf32>
    %211 = vector.extract_strided_slice %204 {offsets = [0, 128], sizes = [8, 128], strides = [1, 1]} : vector<8x512xf32> to vector<8x128xf32>
    %212 = arith.negf %211 : vector<8x128xf32>
    %213 = math.exp %212 : vector<8x128xf32>
    %cst_68 = arith.constant 1.000000e+00 : f32
    %214 = vector.broadcast %cst_68 : f32 to vector<8x128xf32>
    %215 = arith.addf %214, %213 : vector<8x128xf32>
    %216 = arith.divf %214, %215 : vector<8x128xf32>
    %217 = vector.extract_strided_slice %204 {offsets = [0, 256], sizes = [8, 128], strides = [1, 1]} : vector<8x512xf32> to vector<8x128xf32>
    %218 = math.tanh %217 : vector<8x128xf32>
    %219 = vector.extract_strided_slice %204 {offsets = [0, 384], sizes = [8, 128], strides = [1, 1]} : vector<8x512xf32> to vector<8x128xf32>
    %220 = arith.negf %219 : vector<8x128xf32>
    %221 = math.exp %220 : vector<8x128xf32>
    %cst_69 = arith.constant 1.000000e+00 : f32
    %222 = vector.broadcast %cst_69 : f32 to vector<8x128xf32>
    %223 = arith.addf %222, %221 : vector<8x128xf32>
    %224 = arith.divf %222, %223 : vector<8x128xf32>
    %225 = arith.mulf %216, %163 : vector<8x128xf32>
    %226 = arith.mulf %210, %218 : vector<8x128xf32>
    %227 = arith.addf %225, %226 : vector<8x128xf32>
    %228 = math.tanh %227 : vector<8x128xf32>
    %229 = arith.mulf %224, %228 : vector<8x128xf32>
    %c0_70 = arith.constant 0 : index
    %c0_71 = arith.constant 0 : index
    %230 = vector.load %arg4[%c0_70, %c0_71] : memref<128x512xf32, #tpu.memory_space<vmem>>, vector<128x512xf32>
    %cst_72 = arith.constant dense<0.000000e+00> : vector<8x512xf32>
    %231 = tpu.matmul %193, %230, %cst_72 {dimension_numbers = #tpu.dot_dimension_numbers<[1], [0], [0], [1], [0, 0, 1, 1], [], []>} : vector<8x128xf32>, vector<128x512xf32>, vector<8x512xf32> -> vector<8x512xf32>
    %232 = arith.addf %201, %231 : vector<8x512xf32>
    %233 = vector.extract_strided_slice %232 {offsets = [0, 0], sizes = [8, 128], strides = [1, 1]} : vector<8x512xf32> to vector<8x128xf32>
    %234 = arith.negf %233 : vector<8x128xf32>
    %235 = math.exp %234 : vector<8x128xf32>
    %cst_73 = arith.constant 1.000000e+00 : f32
    %236 = vector.broadcast %cst_73 : f32 to vector<8x128xf32>
    %237 = arith.addf %236, %235 : vector<8x128xf32>
    %238 = arith.divf %236, %237 : vector<8x128xf32>
    %239 = vector.extract_strided_slice %232 {offsets = [0, 128], sizes = [8, 128], strides = [1, 1]} : vector<8x512xf32> to vector<8x128xf32>
    %240 = arith.negf %239 : vector<8x128xf32>
    %241 = math.exp %240 : vector<8x128xf32>
    %cst_74 = arith.constant 1.000000e+00 : f32
    %242 = vector.broadcast %cst_74 : f32 to vector<8x128xf32>
    %243 = arith.addf %242, %241 : vector<8x128xf32>
    %244 = arith.divf %242, %243 : vector<8x128xf32>
    %245 = vector.extract_strided_slice %232 {offsets = [0, 256], sizes = [8, 128], strides = [1, 1]} : vector<8x512xf32> to vector<8x128xf32>
    %246 = math.tanh %245 : vector<8x128xf32>
    %247 = vector.extract_strided_slice %232 {offsets = [0, 384], sizes = [8, 128], strides = [1, 1]} : vector<8x512xf32> to vector<8x128xf32>
    %248 = arith.negf %247 : vector<8x128xf32>
    %249 = math.exp %248 : vector<8x128xf32>
    %cst_75 = arith.constant 1.000000e+00 : f32
    %250 = vector.broadcast %cst_75 : f32 to vector<8x128xf32>
    %251 = arith.addf %250, %249 : vector<8x128xf32>
    %252 = arith.divf %250, %251 : vector<8x128xf32>
    %253 = arith.mulf %244, %191 : vector<8x128xf32>
    %254 = arith.mulf %238, %246 : vector<8x128xf32>
    %255 = arith.addf %253, %254 : vector<8x128xf32>
    %256 = math.tanh %255 : vector<8x128xf32>
    %257 = arith.mulf %252, %256 : vector<8x128xf32>
    %c3 = arith.constant 3 : index
    %c0_76 = arith.constant 0 : index
    %c0_77 = arith.constant 0 : index
    %258 = vector.load %arg5[%c3, %c0_76, %c0_77] : memref<8x8x256xf32, #tpu.memory_space<vmem>>, vector<1x8x128xf32>
    %259 = vector.shape_cast %258 : vector<1x8x128xf32> to vector<8x128xf32>
    %260 = vector.shape_cast %229 : vector<8x128xf32> to vector<1x8x128xf32>
    tpu.vector_store %arg5[%c3, %c0_76, %c0_77], %260 {strides = array<i32>} : memref<8x8x256xf32, #tpu.memory_space<vmem>>, vector<1x8x128xf32>,
    %c4 = arith.constant 4 : index
    %c0_78 = arith.constant 0 : index
    %c128_79 = arith.constant 128 : index
    %261 = vector.load %arg5[%c4, %c0_78, %c128_79] : memref<8x8x256xf32, #tpu.memory_space<vmem>>, vector<1x8x128xf32>
    %262 = vector.shape_cast %261 : vector<1x8x128xf32> to vector<8x128xf32>
    %263 = vector.shape_cast %257 : vector<8x128xf32> to vector<1x8x128xf32>
    tpu.vector_store %arg5[%c4, %c0_78, %c128_79], %263 {strides = array<i32>} : memref<8x8x256xf32, #tpu.memory_space<vmem>>, vector<1x8x128xf32>,
    %c32_80 = arith.constant 32 : index
    %c0_81 = arith.constant 0 : index
    %264 = vector.load %arg6[%c32_80, %c0_81] : memref<64x1024xf32, #tpu.memory_space<vmem>>, vector<8x512xf32>
    %c24_82 = arith.constant 24 : index
    %c512_83 = arith.constant 512 : index
    %265 = vector.load %arg6[%c24_82, %c512_83] : memref<64x1024xf32, #tpu.memory_space<vmem>>, vector<8x512xf32>
    %c0_84 = arith.constant 0 : index
    %c0_85 = arith.constant 0 : index
    %266 = vector.load %arg3[%c0_84, %c0_85] : memref<128x512xf32, #tpu.memory_space<vmem>>, vector<128x512xf32>
    %cst_86 = arith.constant dense<0.000000e+00> : vector<8x512xf32>
    %267 = tpu.matmul %229, %266, %cst_86 {dimension_numbers = #tpu.dot_dimension_numbers<[1], [0], [0], [1], [0, 0, 1, 1], [], []>} : vector<8x128xf32>, vector<128x512xf32>, vector<8x512xf32> -> vector<8x512xf32>
    %268 = arith.addf %264, %267 : vector<8x512xf32>
    %269 = vector.extract_strided_slice %268 {offsets = [0, 0], sizes = [8, 128], strides = [1, 1]} : vector<8x512xf32> to vector<8x128xf32>
    %270 = arith.negf %269 : vector<8x128xf32>
    %271 = math.exp %270 : vector<8x128xf32>
    %cst_87 = arith.constant 1.000000e+00 : f32
    %272 = vector.broadcast %cst_87 : f32 to vector<8x128xf32>
    %273 = arith.addf %272, %271 : vector<8x128xf32>
    %274 = arith.divf %272, %273 : vector<8x128xf32>
    %275 = vector.extract_strided_slice %268 {offsets = [0, 128], sizes = [8, 128], strides = [1, 1]} : vector<8x512xf32> to vector<8x128xf32>
    %276 = arith.negf %275 : vector<8x128xf32>
    %277 = math.exp %276 : vector<8x128xf32>
    %cst_88 = arith.constant 1.000000e+00 : f32
    %278 = vector.broadcast %cst_88 : f32 to vector<8x128xf32>
    %279 = arith.addf %278, %277 : vector<8x128xf32>
    %280 = arith.divf %278, %279 : vector<8x128xf32>
    %281 = vector.extract_strided_slice %268 {offsets = [0, 256], sizes = [8, 128], strides = [1, 1]} : vector<8x512xf32> to vector<8x128xf32>
    %282 = math.tanh %281 : vector<8x128xf32>
    %283 = vector.extract_strided_slice %268 {offsets = [0, 384], sizes = [8, 128], strides = [1, 1]} : vector<8x512xf32> to vector<8x128xf32>
    %284 = arith.negf %283 : vector<8x128xf32>
    %285 = math.exp %284 : vector<8x128xf32>
    %cst_89 = arith.constant 1.000000e+00 : f32
    %286 = vector.broadcast %cst_89 : f32 to vector<8x128xf32>
    %287 = arith.addf %286, %285 : vector<8x128xf32>
    %288 = arith.divf %286, %287 : vector<8x128xf32>
    %289 = arith.mulf %280, %227 : vector<8x128xf32>
    %290 = arith.mulf %274, %282 : vector<8x128xf32>
    %291 = arith.addf %289, %290 : vector<8x128xf32>
    %292 = math.tanh %291 : vector<8x128xf32>
    %293 = arith.mulf %288, %292 : vector<8x128xf32>
    %c0_90 = arith.constant 0 : index
    %c0_91 = arith.constant 0 : index
    %294 = vector.load %arg4[%c0_90, %c0_91] : memref<128x512xf32, #tpu.memory_space<vmem>>, vector<128x512xf32>
    %cst_92 = arith.constant dense<0.000000e+00> : vector<8x512xf32>
    %295 = tpu.matmul %257, %294, %cst_92 {dimension_numbers = #tpu.dot_dimension_numbers<[1], [0], [0], [1], [0, 0, 1, 1], [], []>} : vector<8x128xf32>, vector<128x512xf32>, vector<8x512xf32> -> vector<8x512xf32>
    %296 = arith.addf %265, %295 : vector<8x512xf32>
    %297 = vector.extract_strided_slice %296 {offsets = [0, 0], sizes = [8, 128], strides = [1, 1]} : vector<8x512xf32> to vector<8x128xf32>
    %298 = arith.negf %297 : vector<8x128xf32>
    %299 = math.exp %298 : vector<8x128xf32>
    %cst_93 = arith.constant 1.000000e+00 : f32
    %300 = vector.broadcast %cst_93 : f32 to vector<8x128xf32>
    %301 = arith.addf %300, %299 : vector<8x128xf32>
    %302 = arith.divf %300, %301 : vector<8x128xf32>
    %303 = vector.extract_strided_slice %296 {offsets = [0, 128], sizes = [8, 128], strides = [1, 1]} : vector<8x512xf32> to vector<8x128xf32>
    %304 = arith.negf %303 : vector<8x128xf32>
    %305 = math.exp %304 : vector<8x128xf32>
    %cst_94 = arith.constant 1.000000e+00 : f32
    %306 = vector.broadcast %cst_94 : f32 to vector<8x128xf32>
    %307 = arith.addf %306, %305 : vector<8x128xf32>
    %308 = arith.divf %306, %307 : vector<8x128xf32>
    %309 = vector.extract_strided_slice %296 {offsets = [0, 256], sizes = [8, 128], strides = [1, 1]} : vector<8x512xf32> to vector<8x128xf32>
    %310 = math.tanh %309 : vector<8x128xf32>
    %311 = vector.extract_strided_slice %296 {offsets = [0, 384], sizes = [8, 128], strides = [1, 1]} : vector<8x512xf32> to vector<8x128xf32>
    %312 = arith.negf %311 : vector<8x128xf32>
    %313 = math.exp %312 : vector<8x128xf32>
    %cst_95 = arith.constant 1.000000e+00 : f32
    %314 = vector.broadcast %cst_95 : f32 to vector<8x128xf32>
    %315 = arith.addf %314, %313 : vector<8x128xf32>
    %316 = arith.divf %314, %315 : vector<8x128xf32>
    %317 = arith.mulf %308, %255 : vector<8x128xf32>
    %318 = arith.mulf %302, %310 : vector<8x128xf32>
    %319 = arith.addf %317, %318 : vector<8x128xf32>
    %320 = math.tanh %319 : vector<8x128xf32>
    %321 = arith.mulf %316, %320 : vector<8x128xf32>
    %c4_96 = arith.constant 4 : index
    %c0_97 = arith.constant 0 : index
    %c0_98 = arith.constant 0 : index
    %322 = vector.load %arg5[%c4_96, %c0_97, %c0_98] : memref<8x8x256xf32, #tpu.memory_space<vmem>>, vector<1x8x128xf32>
    %323 = vector.shape_cast %322 : vector<1x8x128xf32> to vector<8x128xf32>
    %324 = vector.shape_cast %293 : vector<8x128xf32> to vector<1x8x128xf32>
    tpu.vector_store %arg5[%c4_96, %c0_97, %c0_98], %324 {strides = array<i32>} : memref<8x8x256xf32, #tpu.memory_space<vmem>>, vector<1x8x128xf32>,
    %c3_99 = arith.constant 3 : index
    %c0_100 = arith.constant 0 : index
    %c128_101 = arith.constant 128 : index
    %325 = vector.load %arg5[%c3_99, %c0_100, %c128_101] : memref<8x8x256xf32, #tpu.memory_space<vmem>>, vector<1x8x128xf32>
    %326 = vector.shape_cast %325 : vector<1x8x128xf32> to vector<8x128xf32>
    %327 = vector.shape_cast %321 : vector<8x128xf32> to vector<1x8x128xf32>
    tpu.vector_store %arg5[%c3_99, %c0_100, %c128_101], %327 {strides = array<i32>} : memref<8x8x256xf32, #tpu.memory_space<vmem>>, vector<1x8x128xf32>,
    %c40_102 = arith.constant 40 : index
    %c0_103 = arith.constant 0 : index
    %328 = vector.load %arg6[%c40_102, %c0_103] : memref<64x1024xf32, #tpu.memory_space<vmem>>, vector<8x512xf32>
    %c16_104 = arith.constant 16 : index
    %c512_105 = arith.constant 512 : index
    %329 = vector.load %arg6[%c16_104, %c512_105] : memref<64x1024xf32, #tpu.memory_space<vmem>>, vector<8x512xf32>
    %c0_106 = arith.constant 0 : index
    %c0_107 = arith.constant 0 : index
    %330 = vector.load %arg3[%c0_106, %c0_107] : memref<128x512xf32, #tpu.memory_space<vmem>>, vector<128x512xf32>
    %cst_108 = arith.constant dense<0.000000e+00> : vector<8x512xf32>
    %331 = tpu.matmul %293, %330, %cst_108 {dimension_numbers = #tpu.dot_dimension_numbers<[1], [0], [0], [1], [0, 0, 1, 1], [], []>} : vector<8x128xf32>, vector<128x512xf32>, vector<8x512xf32> -> vector<8x512xf32>
    %332 = arith.addf %328, %331 : vector<8x512xf32>
    %333 = vector.extract_strided_slice %332 {offsets = [0, 0], sizes = [8, 128], strides = [1, 1]} : vector<8x512xf32> to vector<8x128xf32>
    %334 = arith.negf %333 : vector<8x128xf32>
    %335 = math.exp %334 : vector<8x128xf32>
    %cst_109 = arith.constant 1.000000e+00 : f32
    %336 = vector.broadcast %cst_109 : f32 to vector<8x128xf32>
    %337 = arith.addf %336, %335 : vector<8x128xf32>
    %338 = arith.divf %336, %337 : vector<8x128xf32>
    %339 = vector.extract_strided_slice %332 {offsets = [0, 128], sizes = [8, 128], strides = [1, 1]} : vector<8x512xf32> to vector<8x128xf32>
    %340 = arith.negf %339 : vector<8x128xf32>
    %341 = math.exp %340 : vector<8x128xf32>
    %cst_110 = arith.constant 1.000000e+00 : f32
    %342 = vector.broadcast %cst_110 : f32 to vector<8x128xf32>
    %343 = arith.addf %342, %341 : vector<8x128xf32>
    %344 = arith.divf %342, %343 : vector<8x128xf32>
    %345 = vector.extract_strided_slice %332 {offsets = [0, 256], sizes = [8, 128], strides = [1, 1]} : vector<8x512xf32> to vector<8x128xf32>
    %346 = math.tanh %345 : vector<8x128xf32>
    %347 = vector.extract_strided_slice %332 {offsets = [0, 384], sizes = [8, 128], strides = [1, 1]} : vector<8x512xf32> to vector<8x128xf32>
    %348 = arith.negf %347 : vector<8x128xf32>
    %349 = math.exp %348 : vector<8x128xf32>
    %cst_111 = arith.constant 1.000000e+00 : f32
    %350 = vector.broadcast %cst_111 : f32 to vector<8x128xf32>
    %351 = arith.addf %350, %349 : vector<8x128xf32>
    %352 = arith.divf %350, %351 : vector<8x128xf32>
    %353 = arith.mulf %344, %291 : vector<8x128xf32>
    %354 = arith.mulf %338, %346 : vector<8x128xf32>
    %355 = arith.addf %353, %354 : vector<8x128xf32>
    %356 = math.tanh %355 : vector<8x128xf32>
    %357 = arith.mulf %352, %356 : vector<8x128xf32>
    %c0_112 = arith.constant 0 : index
    %c0_113 = arith.constant 0 : index
    %358 = vector.load %arg4[%c0_112, %c0_113] : memref<128x512xf32, #tpu.memory_space<vmem>>, vector<128x512xf32>
    %cst_114 = arith.constant dense<0.000000e+00> : vector<8x512xf32>
    %359 = tpu.matmul %321, %358, %cst_114 {dimension_numbers = #tpu.dot_dimension_numbers<[1], [0], [0], [1], [0, 0, 1, 1], [], []>} : vector<8x128xf32>, vector<128x512xf32>, vector<8x512xf32> -> vector<8x512xf32>
    %360 = arith.addf %329, %359 : vector<8x512xf32>
    %361 = vector.extract_strided_slice %360 {offsets = [0, 0], sizes = [8, 128], strides = [1, 1]} : vector<8x512xf32> to vector<8x128xf32>
    %362 = arith.negf %361 : vector<8x128xf32>
    %363 = math.exp %362 : vector<8x128xf32>
    %cst_115 = arith.constant 1.000000e+00 : f32
    %364 = vector.broadcast %cst_115 : f32 to vector<8x128xf32>
    %365 = arith.addf %364, %363 : vector<8x128xf32>
    %366 = arith.divf %364, %365 : vector<8x128xf32>
    %367 = vector.extract_strided_slice %360 {offsets = [0, 128], sizes = [8, 128], strides = [1, 1]} : vector<8x512xf32> to vector<8x128xf32>
    %368 = arith.negf %367 : vector<8x128xf32>
    %369 = math.exp %368 : vector<8x128xf32>
    %cst_116 = arith.constant 1.000000e+00 : f32
    %370 = vector.broadcast %cst_116 : f32 to vector<8x128xf32>
    %371 = arith.addf %370, %369 : vector<8x128xf32>
    %372 = arith.divf %370, %371 : vector<8x128xf32>
    %373 = vector.extract_strided_slice %360 {offsets = [0, 256], sizes = [8, 128], strides = [1, 1]} : vector<8x512xf32> to vector<8x128xf32>
    %374 = math.tanh %373 : vector<8x128xf32>
    %375 = vector.extract_strided_slice %360 {offsets = [0, 384], sizes = [8, 128], strides = [1, 1]} : vector<8x512xf32> to vector<8x128xf32>
    %376 = arith.negf %375 : vector<8x128xf32>
    %377 = math.exp %376 : vector<8x128xf32>
    %cst_117 = arith.constant 1.000000e+00 : f32
    %378 = vector.broadcast %cst_117 : f32 to vector<8x128xf32>
    %379 = arith.addf %378, %377 : vector<8x128xf32>
    %380 = arith.divf %378, %379 : vector<8x128xf32>
    %381 = arith.mulf %372, %319 : vector<8x128xf32>
    %382 = arith.mulf %366, %374 : vector<8x128xf32>
    %383 = arith.addf %381, %382 : vector<8x128xf32>
    %384 = math.tanh %383 : vector<8x128xf32>
    %385 = arith.mulf %380, %384 : vector<8x128xf32>
    %c5_118 = arith.constant 5 : index
    %c0_119 = arith.constant 0 : index
    %c0_120 = arith.constant 0 : index
    %386 = vector.load %arg5[%c5_118, %c0_119, %c0_120] : memref<8x8x256xf32, #tpu.memory_space<vmem>>, vector<1x8x128xf32>
    %387 = vector.shape_cast %386 : vector<1x8x128xf32> to vector<8x128xf32>
    %388 = vector.shape_cast %357 : vector<8x128xf32> to vector<1x8x128xf32>
    tpu.vector_store %arg5[%c5_118, %c0_119, %c0_120], %388 {strides = array<i32>} : memref<8x8x256xf32, #tpu.memory_space<vmem>>, vector<1x8x128xf32>,
    %c2_121 = arith.constant 2 : index
    %c0_122 = arith.constant 0 : index
    %c128_123 = arith.constant 128 : index
    %389 = vector.load %arg5[%c2_121, %c0_122, %c128_123] : memref<8x8x256xf32, #tpu.memory_space<vmem>>, vector<1x8x128xf32>
    %390 = vector.shape_cast %389 : vector<1x8x128xf32> to vector<8x128xf32>
    %391 = vector.shape_cast %385 : vector<8x128xf32> to vector<1x8x128xf32>
    tpu.vector_store %arg5[%c2_121, %c0_122, %c128_123], %391 {strides = array<i32>} : memref<8x8x256xf32, #tpu.memory_space<vmem>>, vector<1x8x128xf32>,
    %c48_124 = arith.constant 48 : index
    %c0_125 = arith.constant 0 : index
    %392 = vector.load %arg6[%c48_124, %c0_125] : memref<64x1024xf32, #tpu.memory_space<vmem>>, vector<8x512xf32>
    %c8_126 = arith.constant 8 : index
    %c512_127 = arith.constant 512 : index
    %393 = vector.load %arg6[%c8_126, %c512_127] : memref<64x1024xf32, #tpu.memory_space<vmem>>, vector<8x512xf32>
    %c0_128 = arith.constant 0 : index
    %c0_129 = arith.constant 0 : index
    %394 = vector.load %arg3[%c0_128, %c0_129] : memref<128x512xf32, #tpu.memory_space<vmem>>, vector<128x512xf32>
    %cst_130 = arith.constant dense<0.000000e+00> : vector<8x512xf32>
    %395 = tpu.matmul %357, %394, %cst_130 {dimension_numbers = #tpu.dot_dimension_numbers<[1], [0], [0], [1], [0, 0, 1, 1], [], []>} : vector<8x128xf32>, vector<128x512xf32>, vector<8x512xf32> -> vector<8x512xf32>
    %396 = arith.addf %392, %395 : vector<8x512xf32>
    %397 = vector.extract_strided_slice %396 {offsets = [0, 0], sizes = [8, 128], strides = [1, 1]} : vector<8x512xf32> to vector<8x128xf32>
    %398 = arith.negf %397 : vector<8x128xf32>
    %399 = math.exp %398 : vector<8x128xf32>
    %cst_131 = arith.constant 1.000000e+00 : f32
    %400 = vector.broadcast %cst_131 : f32 to vector<8x128xf32>
    %401 = arith.addf %400, %399 : vector<8x128xf32>
    %402 = arith.divf %400, %401 : vector<8x128xf32>
    %403 = vector.extract_strided_slice %396 {offsets = [0, 128], sizes = [8, 128], strides = [1, 1]} : vector<8x512xf32> to vector<8x128xf32>
    %404 = arith.negf %403 : vector<8x128xf32>
    %405 = math.exp %404 : vector<8x128xf32>
    %cst_132 = arith.constant 1.000000e+00 : f32
    %406 = vector.broadcast %cst_132 : f32 to vector<8x128xf32>
    %407 = arith.addf %406, %405 : vector<8x128xf32>
    %408 = arith.divf %406, %407 : vector<8x128xf32>
    %409 = vector.extract_strided_slice %396 {offsets = [0, 256], sizes = [8, 128], strides = [1, 1]} : vector<8x512xf32> to vector<8x128xf32>
    %410 = math.tanh %409 : vector<8x128xf32>
    %411 = vector.extract_strided_slice %396 {offsets = [0, 384], sizes = [8, 128], strides = [1, 1]} : vector<8x512xf32> to vector<8x128xf32>
    %412 = arith.negf %411 : vector<8x128xf32>
    %413 = math.exp %412 : vector<8x128xf32>
    %cst_133 = arith.constant 1.000000e+00 : f32
    %414 = vector.broadcast %cst_133 : f32 to vector<8x128xf32>
    %415 = arith.addf %414, %413 : vector<8x128xf32>
    %416 = arith.divf %414, %415 : vector<8x128xf32>
    %417 = arith.mulf %408, %355 : vector<8x128xf32>
    %418 = arith.mulf %402, %410 : vector<8x128xf32>
    %419 = arith.addf %417, %418 : vector<8x128xf32>
    %420 = math.tanh %419 : vector<8x128xf32>
    %421 = arith.mulf %416, %420 : vector<8x128xf32>
    %c0_134 = arith.constant 0 : index
    %c0_135 = arith.constant 0 : index
    %422 = vector.load %arg4[%c0_134, %c0_135] : memref<128x512xf32, #tpu.memory_space<vmem>>, vector<128x512xf32>
    %cst_136 = arith.constant dense<0.000000e+00> : vector<8x512xf32>
    %423 = tpu.matmul %385, %422, %cst_136 {dimension_numbers = #tpu.dot_dimension_numbers<[1], [0], [0], [1], [0, 0, 1, 1], [], []>} : vector<8x128xf32>, vector<128x512xf32>, vector<8x512xf32> -> vector<8x512xf32>
    %424 = arith.addf %393, %423 : vector<8x512xf32>
    %425 = vector.extract_strided_slice %424 {offsets = [0, 0], sizes = [8, 128], strides = [1, 1]} : vector<8x512xf32> to vector<8x128xf32>
    %426 = arith.negf %425 : vector<8x128xf32>
    %427 = math.exp %426 : vector<8x128xf32>
    %cst_137 = arith.constant 1.000000e+00 : f32
    %428 = vector.broadcast %cst_137 : f32 to vector<8x128xf32>
    %429 = arith.addf %428, %427 : vector<8x128xf32>
    %430 = arith.divf %428, %429 : vector<8x128xf32>
    %431 = vector.extract_strided_slice %424 {offsets = [0, 128], sizes = [8, 128], strides = [1, 1]} : vector<8x512xf32> to vector<8x128xf32>
    %432 = arith.negf %431 : vector<8x128xf32>
    %433 = math.exp %432 : vector<8x128xf32>
    %cst_138 = arith.constant 1.000000e+00 : f32
    %434 = vector.broadcast %cst_138 : f32 to vector<8x128xf32>
    %435 = arith.addf %434, %433 : vector<8x128xf32>
    %436 = arith.divf %434, %435 : vector<8x128xf32>
    %437 = vector.extract_strided_slice %424 {offsets = [0, 256], sizes = [8, 128], strides = [1, 1]} : vector<8x512xf32> to vector<8x128xf32>
    %438 = math.tanh %437 : vector<8x128xf32>
    %439 = vector.extract_strided_slice %424 {offsets = [0, 384], sizes = [8, 128], strides = [1, 1]} : vector<8x512xf32> to vector<8x128xf32>
    %440 = arith.negf %439 : vector<8x128xf32>
    %441 = math.exp %440 : vector<8x128xf32>
    %cst_139 = arith.constant 1.000000e+00 : f32
    %442 = vector.broadcast %cst_139 : f32 to vector<8x128xf32>
    %443 = arith.addf %442, %441 : vector<8x128xf32>
    %444 = arith.divf %442, %443 : vector<8x128xf32>
    %445 = arith.mulf %436, %383 : vector<8x128xf32>
    %446 = arith.mulf %430, %438 : vector<8x128xf32>
    %447 = arith.addf %445, %446 : vector<8x128xf32>
    %448 = math.tanh %447 : vector<8x128xf32>
    %449 = arith.mulf %444, %448 : vector<8x128xf32>
    %c6_140 = arith.constant 6 : index
    %c0_141 = arith.constant 0 : index
    %c0_142 = arith.constant 0 : index
    %450 = vector.load %arg5[%c6_140, %c0_141, %c0_142] : memref<8x8x256xf32, #tpu.memory_space<vmem>>, vector<1x8x128xf32>
    %451 = vector.shape_cast %450 : vector<1x8x128xf32> to vector<8x128xf32>
    %452 = vector.shape_cast %421 : vector<8x128xf32> to vector<1x8x128xf32>
    tpu.vector_store %arg5[%c6_140, %c0_141, %c0_142], %452 {strides = array<i32>} : memref<8x8x256xf32, #tpu.memory_space<vmem>>, vector<1x8x128xf32>,
    %c1_143 = arith.constant 1 : index
    %c0_144 = arith.constant 0 : index
    %c128_145 = arith.constant 128 : index
    %453 = vector.load %arg5[%c1_143, %c0_144, %c128_145] : memref<8x8x256xf32, #tpu.memory_space<vmem>>, vector<1x8x128xf32>
    %454 = vector.shape_cast %453 : vector<1x8x128xf32> to vector<8x128xf32>
    %455 = vector.shape_cast %449 : vector<8x128xf32> to vector<1x8x128xf32>
    tpu.vector_store %arg5[%c1_143, %c0_144, %c128_145], %455 {strides = array<i32>} : memref<8x8x256xf32, #tpu.memory_space<vmem>>, vector<1x8x128xf32>,
    %c56_146 = arith.constant 56 : index
    %c0_147 = arith.constant 0 : index
    %456 = vector.load %arg6[%c56_146, %c0_147] : memref<64x1024xf32, #tpu.memory_space<vmem>>, vector<8x512xf32>
    %c0_148 = arith.constant 0 : index
    %c512_149 = arith.constant 512 : index
    %457 = vector.load %arg6[%c0_148, %c512_149] : memref<64x1024xf32, #tpu.memory_space<vmem>>, vector<8x512xf32>
    %c0_150 = arith.constant 0 : index
    %c0_151 = arith.constant 0 : index
    %458 = vector.load %arg3[%c0_150, %c0_151] : memref<128x512xf32, #tpu.memory_space<vmem>>, vector<128x512xf32>
    %cst_152 = arith.constant dense<0.000000e+00> : vector<8x512xf32>
    %459 = tpu.matmul %421, %458, %cst_152 {dimension_numbers = #tpu.dot_dimension_numbers<[1], [0], [0], [1], [0, 0, 1, 1], [], []>} : vector<8x128xf32>, vector<128x512xf32>, vector<8x512xf32> -> vector<8x512xf32>
    %460 = arith.addf %456, %459 : vector<8x512xf32>
    %461 = vector.extract_strided_slice %460 {offsets = [0, 0], sizes = [8, 128], strides = [1, 1]} : vector<8x512xf32> to vector<8x128xf32>
    %462 = arith.negf %461 : vector<8x128xf32>
    %463 = math.exp %462 : vector<8x128xf32>
    %cst_153 = arith.constant 1.000000e+00 : f32
    %464 = vector.broadcast %cst_153 : f32 to vector<8x128xf32>
    %465 = arith.addf %464, %463 : vector<8x128xf32>
    %466 = arith.divf %464, %465 : vector<8x128xf32>
    %467 = vector.extract_strided_slice %460 {offsets = [0, 128], sizes = [8, 128], strides = [1, 1]} : vector<8x512xf32> to vector<8x128xf32>
    %468 = arith.negf %467 : vector<8x128xf32>
    %469 = math.exp %468 : vector<8x128xf32>
    %cst_154 = arith.constant 1.000000e+00 : f32
    %470 = vector.broadcast %cst_154 : f32 to vector<8x128xf32>
    %471 = arith.addf %470, %469 : vector<8x128xf32>
    %472 = arith.divf %470, %471 : vector<8x128xf32>
    %473 = vector.extract_strided_slice %460 {offsets = [0, 256], sizes = [8, 128], strides = [1, 1]} : vector<8x512xf32> to vector<8x128xf32>
    %474 = math.tanh %473 : vector<8x128xf32>
    %475 = vector.extract_strided_slice %460 {offsets = [0, 384], sizes = [8, 128], strides = [1, 1]} : vector<8x512xf32> to vector<8x128xf32>
    %476 = arith.negf %475 : vector<8x128xf32>
    %477 = math.exp %476 : vector<8x128xf32>
    %cst_155 = arith.constant 1.000000e+00 : f32
    %478 = vector.broadcast %cst_155 : f32 to vector<8x128xf32>
    %479 = arith.addf %478, %477 : vector<8x128xf32>
    %480 = arith.divf %478, %479 : vector<8x128xf32>
    %481 = arith.mulf %472, %419 : vector<8x128xf32>
    %482 = arith.mulf %466, %474 : vector<8x128xf32>
    %483 = arith.addf %481, %482 : vector<8x128xf32>
    %484 = math.tanh %483 : vector<8x128xf32>
    %485 = arith.mulf %480, %484 : vector<8x128xf32>
    %c0_156 = arith.constant 0 : index
    %c0_157 = arith.constant 0 : index
    %486 = vector.load %arg4[%c0_156, %c0_157] : memref<128x512xf32, #tpu.memory_space<vmem>>, vector<128x512xf32>
    %cst_158 = arith.constant dense<0.000000e+00> : vector<8x512xf32>
    %487 = tpu.matmul %449, %486, %cst_158 {dimension_numbers = #tpu.dot_dimension_numbers<[1], [0], [0], [1], [0, 0, 1, 1], [], []>} : vector<8x128xf32>, vector<128x512xf32>, vector<8x512xf32> -> vector<8x512xf32>
    %488 = arith.addf %457, %487 : vector<8x512xf32>
    %489 = vector.extract_strided_slice %488 {offsets = [0, 0], sizes = [8, 128], strides = [1, 1]} : vector<8x512xf32> to vector<8x128xf32>
    %490 = arith.negf %489 : vector<8x128xf32>
    %491 = math.exp %490 : vector<8x128xf32>
    %cst_159 = arith.constant 1.000000e+00 : f32
    %492 = vector.broadcast %cst_159 : f32 to vector<8x128xf32>
    %493 = arith.addf %492, %491 : vector<8x128xf32>
    %494 = arith.divf %492, %493 : vector<8x128xf32>
    %495 = vector.extract_strided_slice %488 {offsets = [0, 128], sizes = [8, 128], strides = [1, 1]} : vector<8x512xf32> to vector<8x128xf32>
    %496 = arith.negf %495 : vector<8x128xf32>
    %497 = math.exp %496 : vector<8x128xf32>
    %cst_160 = arith.constant 1.000000e+00 : f32
    %498 = vector.broadcast %cst_160 : f32 to vector<8x128xf32>
    %499 = arith.addf %498, %497 : vector<8x128xf32>
    %500 = arith.divf %498, %499 : vector<8x128xf32>
    %501 = vector.extract_strided_slice %488 {offsets = [0, 256], sizes = [8, 128], strides = [1, 1]} : vector<8x512xf32> to vector<8x128xf32>
    %502 = math.tanh %501 : vector<8x128xf32>
    %503 = vector.extract_strided_slice %488 {offsets = [0, 384], sizes = [8, 128], strides = [1, 1]} : vector<8x512xf32> to vector<8x128xf32>
    %504 = arith.negf %503 : vector<8x128xf32>
    %505 = math.exp %504 : vector<8x128xf32>
    %cst_161 = arith.constant 1.000000e+00 : f32
    %506 = vector.broadcast %cst_161 : f32 to vector<8x128xf32>
    %507 = arith.addf %506, %505 : vector<8x128xf32>
    %508 = arith.divf %506, %507 : vector<8x128xf32>
    %509 = arith.mulf %500, %447 : vector<8x128xf32>
    %510 = arith.mulf %494, %502 : vector<8x128xf32>
    %511 = arith.addf %509, %510 : vector<8x128xf32>
    %512 = math.tanh %511 : vector<8x128xf32>
    %513 = arith.mulf %508, %512 : vector<8x128xf32>
    %c7_162 = arith.constant 7 : index
    %c0_163 = arith.constant 0 : index
    %c0_164 = arith.constant 0 : index
    %514 = vector.load %arg5[%c7_162, %c0_163, %c0_164] : memref<8x8x256xf32, #tpu.memory_space<vmem>>, vector<1x8x128xf32>
    %515 = vector.shape_cast %514 : vector<1x8x128xf32> to vector<8x128xf32>
    %516 = vector.shape_cast %485 : vector<8x128xf32> to vector<1x8x128xf32>
    tpu.vector_store %arg5[%c7_162, %c0_163, %c0_164], %516 {strides = array<i32>} : memref<8x8x256xf32, #tpu.memory_space<vmem>>, vector<1x8x128xf32>,
    %c0_165 = arith.constant 0 : index
    %c0_166 = arith.constant 0 : index
    %c128_167 = arith.constant 128 : index
    %517 = vector.load %arg5[%c0_165, %c0_166, %c128_167] : memref<8x8x256xf32, #tpu.memory_space<vmem>>, vector<1x8x128xf32>
    %518 = vector.shape_cast %517 : vector<1x8x128xf32> to vector<8x128xf32>
    %519 = vector.shape_cast %513 : vector<8x128xf32> to vector<1x8x128xf32>
    tpu.vector_store %arg5[%c0_165, %c0_166, %c128_167], %519 {strides = array<i32>} : memref<8x8x256xf32, #tpu.memory_space<vmem>>, vector<1x8x128xf32>,
    return
  }
}

module attributes {stable_mosaic.version = 11 : i64} {
  func.func @kernel(%arg0: memref<64x256xf32, #tpu.memory_space<vmem>>, %arg1: memref<256x1024xf32, #tpu.memory_space<vmem>>, %arg2: memref<1x1024xf32, #tpu.memory_space<vmem>>, %arg3: memref<128x512xf32, #tpu.memory_space<vmem>>, %arg4: memref<128x512xf32, #tpu.memory_space<vmem>>, %arg5: memref<256x128xf32, #tpu.memory_space<vmem>>, %arg6: memref<1x128xf32, #tpu.memory_space<vmem>>, %arg7: memref<8x128xf32, #tpu.memory_space<vmem>>, %arg8: memref<64x1024xf32, #tpu.memory_space<vmem>>) attributes {dimension_semantics = [], scalar_prefetch = 0 : i64, scratch_operands = 1 : i64, tpu.core_type = #tpu.core_type<tc>} {
    %c0 = arith.constant 0 : index
    %c0_0 = arith.constant 0 : index
    %0 = vector.load %arg0[%c0, %c0_0] : memref<64x256xf32, #tpu.memory_space<vmem>>, vector<64x256xf32>
    %c0_1 = arith.constant 0 : index
    %c0_2 = arith.constant 0 : index
    %1 = vector.load %arg1[%c0_1, %c0_2] : memref<256x1024xf32, #tpu.memory_space<vmem>>, vector<256x1024xf32>
    %cst = arith.constant dense<0.000000e+00> : vector<64x1024xf32>
    %2 = tpu.matmul %0, %1, %cst {dimension_numbers = #tpu.dot_dimension_numbers<[1], [0], [0], [1], [0, 0, 1, 1], [], []>} : vector<64x256xf32>, vector<256x1024xf32>, vector<64x1024xf32> -> vector<64x1024xf32>
    %c0_3 = arith.constant 0 : index
    %c0_4 = arith.constant 0 : index
    %3 = vector.load %arg2[%c0_3, %c0_4] : memref<1x1024xf32, #tpu.memory_space<vmem>>, vector<1x1024xf32>
    %4 = vector.broadcast %3 : vector<1x1024xf32> to vector<64x1024xf32>
    %5 = arith.addf %2, %4 : vector<64x1024xf32>
    %c0_5 = arith.constant 0 : index
    %c0_6 = arith.constant 0 : index
    %6 = vector.load %arg8[%c0_5, %c0_6] : memref<64x1024xf32, #tpu.memory_space<vmem>>, vector<64x1024xf32>
    tpu.vector_store %arg8[%c0_5, %c0_6], %5 {strides = array<i32>} : memref<64x1024xf32, #tpu.memory_space<vmem>>, vector<64x1024xf32>,
    %cst_7 = arith.constant 0.000000e+00 : f32
    %7 = vector.broadcast %cst_7 : f32 to vector<8x128xf32>
    %c0_8 = arith.constant 0 : index
    %c0_9 = arith.constant 0 : index
    %8 = vector.load %arg8[%c0_8, %c0_9] : memref<64x1024xf32, #tpu.memory_space<vmem>>, vector<8x512xf32>
    %c56 = arith.constant 56 : index
    %c512 = arith.constant 512 : index
    %9 = vector.load %arg8[%c56, %c512] : memref<64x1024xf32, #tpu.memory_space<vmem>>, vector<8x512xf32>
    %c0_10 = arith.constant 0 : index
    %c0_11 = arith.constant 0 : index
    %10 = vector.load %arg3[%c0_10, %c0_11] : memref<128x512xf32, #tpu.memory_space<vmem>>, vector<128x512xf32>
    %cst_12 = arith.constant dense<0.000000e+00> : vector<8x512xf32>
    %11 = tpu.matmul %7, %10, %cst_12 {dimension_numbers = #tpu.dot_dimension_numbers<[1], [0], [0], [1], [0, 0, 1, 1], [], []>} : vector<8x128xf32>, vector<128x512xf32>, vector<8x512xf32> -> vector<8x512xf32>
    %12 = arith.addf %8, %11 : vector<8x512xf32>
    %13 = vector.extract_strided_slice %12 {offsets = [0, 0], sizes = [8, 128], strides = [1, 1]} : vector<8x512xf32> to vector<8x128xf32>
    %14 = arith.negf %13 : vector<8x128xf32>
    %15 = math.exp %14 : vector<8x128xf32>
    %cst_13 = arith.constant 1.000000e+00 : f32
    %16 = vector.broadcast %cst_13 : f32 to vector<8x128xf32>
    %17 = arith.addf %16, %15 : vector<8x128xf32>
    %18 = arith.divf %16, %17 : vector<8x128xf32>
    %19 = vector.extract_strided_slice %12 {offsets = [0, 128], sizes = [8, 128], strides = [1, 1]} : vector<8x512xf32> to vector<8x128xf32>
    %20 = arith.negf %19 : vector<8x128xf32>
    %21 = math.exp %20 : vector<8x128xf32>
    %cst_14 = arith.constant 1.000000e+00 : f32
    %22 = vector.broadcast %cst_14 : f32 to vector<8x128xf32>
    %23 = arith.addf %22, %21 : vector<8x128xf32>
    %24 = arith.divf %22, %23 : vector<8x128xf32>
    %25 = vector.extract_strided_slice %12 {offsets = [0, 256], sizes = [8, 128], strides = [1, 1]} : vector<8x512xf32> to vector<8x128xf32>
    %26 = math.tanh %25 : vector<8x128xf32>
    %27 = vector.extract_strided_slice %12 {offsets = [0, 384], sizes = [8, 128], strides = [1, 1]} : vector<8x512xf32> to vector<8x128xf32>
    %28 = arith.negf %27 : vector<8x128xf32>
    %29 = math.exp %28 : vector<8x128xf32>
    %cst_15 = arith.constant 1.000000e+00 : f32
    %30 = vector.broadcast %cst_15 : f32 to vector<8x128xf32>
    %31 = arith.addf %30, %29 : vector<8x128xf32>
    %32 = arith.divf %30, %31 : vector<8x128xf32>
    %33 = arith.mulf %24, %7 : vector<8x128xf32>
    %34 = arith.mulf %18, %26 : vector<8x128xf32>
    %35 = arith.addf %33, %34 : vector<8x128xf32>
    %36 = math.tanh %35 : vector<8x128xf32>
    %37 = arith.mulf %32, %36 : vector<8x128xf32>
    %c0_16 = arith.constant 0 : index
    %c0_17 = arith.constant 0 : index
    %38 = vector.load %arg4[%c0_16, %c0_17] : memref<128x512xf32, #tpu.memory_space<vmem>>, vector<128x512xf32>
    %cst_18 = arith.constant dense<0.000000e+00> : vector<8x512xf32>
    %39 = tpu.matmul %7, %38, %cst_18 {dimension_numbers = #tpu.dot_dimension_numbers<[1], [0], [0], [1], [0, 0, 1, 1], [], []>} : vector<8x128xf32>, vector<128x512xf32>, vector<8x512xf32> -> vector<8x512xf32>
    %40 = arith.addf %9, %39 : vector<8x512xf32>
    %41 = vector.extract_strided_slice %40 {offsets = [0, 0], sizes = [8, 128], strides = [1, 1]} : vector<8x512xf32> to vector<8x128xf32>
    %42 = arith.negf %41 : vector<8x128xf32>
    %43 = math.exp %42 : vector<8x128xf32>
    %cst_19 = arith.constant 1.000000e+00 : f32
    %44 = vector.broadcast %cst_19 : f32 to vector<8x128xf32>
    %45 = arith.addf %44, %43 : vector<8x128xf32>
    %46 = arith.divf %44, %45 : vector<8x128xf32>
    %47 = vector.extract_strided_slice %40 {offsets = [0, 128], sizes = [8, 128], strides = [1, 1]} : vector<8x512xf32> to vector<8x128xf32>
    %48 = arith.negf %47 : vector<8x128xf32>
    %49 = math.exp %48 : vector<8x128xf32>
    %cst_20 = arith.constant 1.000000e+00 : f32
    %50 = vector.broadcast %cst_20 : f32 to vector<8x128xf32>
    %51 = arith.addf %50, %49 : vector<8x128xf32>
    %52 = arith.divf %50, %51 : vector<8x128xf32>
    %53 = vector.extract_strided_slice %40 {offsets = [0, 256], sizes = [8, 128], strides = [1, 1]} : vector<8x512xf32> to vector<8x128xf32>
    %54 = math.tanh %53 : vector<8x128xf32>
    %55 = vector.extract_strided_slice %40 {offsets = [0, 384], sizes = [8, 128], strides = [1, 1]} : vector<8x512xf32> to vector<8x128xf32>
    %56 = arith.negf %55 : vector<8x128xf32>
    %57 = math.exp %56 : vector<8x128xf32>
    %cst_21 = arith.constant 1.000000e+00 : f32
    %58 = vector.broadcast %cst_21 : f32 to vector<8x128xf32>
    %59 = arith.addf %58, %57 : vector<8x128xf32>
    %60 = arith.divf %58, %59 : vector<8x128xf32>
    %61 = arith.mulf %52, %7 : vector<8x128xf32>
    %62 = arith.mulf %46, %54 : vector<8x128xf32>
    %63 = arith.addf %61, %62 : vector<8x128xf32>
    %64 = math.tanh %63 : vector<8x128xf32>
    %65 = arith.mulf %60, %64 : vector<8x128xf32>
    %c8 = arith.constant 8 : index
    %c0_22 = arith.constant 0 : index
    %66 = vector.load %arg8[%c8, %c0_22] : memref<64x1024xf32, #tpu.memory_space<vmem>>, vector<8x512xf32>
    %c0_23 = arith.constant 0 : index
    %c0_24 = arith.constant 0 : index
    %67 = vector.load %arg3[%c0_23, %c0_24] : memref<128x512xf32, #tpu.memory_space<vmem>>, vector<128x512xf32>
    %cst_25 = arith.constant dense<0.000000e+00> : vector<8x512xf32>
    %68 = tpu.matmul %37, %67, %cst_25 {dimension_numbers = #tpu.dot_dimension_numbers<[1], [0], [0], [1], [0, 0, 1, 1], [], []>} : vector<8x128xf32>, vector<128x512xf32>, vector<8x512xf32> -> vector<8x512xf32>
    %69 = arith.addf %66, %68 : vector<8x512xf32>
    %70 = vector.extract_strided_slice %69 {offsets = [0, 0], sizes = [8, 128], strides = [1, 1]} : vector<8x512xf32> to vector<8x128xf32>
    %71 = arith.negf %70 : vector<8x128xf32>
    %72 = math.exp %71 : vector<8x128xf32>
    %cst_26 = arith.constant 1.000000e+00 : f32
    %73 = vector.broadcast %cst_26 : f32 to vector<8x128xf32>
    %74 = arith.addf %73, %72 : vector<8x128xf32>
    %75 = arith.divf %73, %74 : vector<8x128xf32>
    %76 = vector.extract_strided_slice %69 {offsets = [0, 128], sizes = [8, 128], strides = [1, 1]} : vector<8x512xf32> to vector<8x128xf32>
    %77 = arith.negf %76 : vector<8x128xf32>
    %78 = math.exp %77 : vector<8x128xf32>
    %cst_27 = arith.constant 1.000000e+00 : f32
    %79 = vector.broadcast %cst_27 : f32 to vector<8x128xf32>
    %80 = arith.addf %79, %78 : vector<8x128xf32>
    %81 = arith.divf %79, %80 : vector<8x128xf32>
    %82 = vector.extract_strided_slice %69 {offsets = [0, 256], sizes = [8, 128], strides = [1, 1]} : vector<8x512xf32> to vector<8x128xf32>
    %83 = math.tanh %82 : vector<8x128xf32>
    %84 = vector.extract_strided_slice %69 {offsets = [0, 384], sizes = [8, 128], strides = [1, 1]} : vector<8x512xf32> to vector<8x128xf32>
    %85 = arith.negf %84 : vector<8x128xf32>
    %86 = math.exp %85 : vector<8x128xf32>
    %cst_28 = arith.constant 1.000000e+00 : f32
    %87 = vector.broadcast %cst_28 : f32 to vector<8x128xf32>
    %88 = arith.addf %87, %86 : vector<8x128xf32>
    %89 = arith.divf %87, %88 : vector<8x128xf32>
    %90 = arith.mulf %81, %35 : vector<8x128xf32>
    %91 = arith.mulf %75, %83 : vector<8x128xf32>
    %92 = arith.addf %90, %91 : vector<8x128xf32>
    %93 = math.tanh %92 : vector<8x128xf32>
    %94 = arith.mulf %89, %93 : vector<8x128xf32>
    %c16 = arith.constant 16 : index
    %c0_29 = arith.constant 0 : index
    %95 = vector.load %arg8[%c16, %c0_29] : memref<64x1024xf32, #tpu.memory_space<vmem>>, vector<8x512xf32>
    %c0_30 = arith.constant 0 : index
    %c0_31 = arith.constant 0 : index
    %96 = vector.load %arg3[%c0_30, %c0_31] : memref<128x512xf32, #tpu.memory_space<vmem>>, vector<128x512xf32>
    %cst_32 = arith.constant dense<0.000000e+00> : vector<8x512xf32>
    %97 = tpu.matmul %94, %96, %cst_32 {dimension_numbers = #tpu.dot_dimension_numbers<[1], [0], [0], [1], [0, 0, 1, 1], [], []>} : vector<8x128xf32>, vector<128x512xf32>, vector<8x512xf32> -> vector<8x512xf32>
    %98 = arith.addf %95, %97 : vector<8x512xf32>
    %99 = vector.extract_strided_slice %98 {offsets = [0, 0], sizes = [8, 128], strides = [1, 1]} : vector<8x512xf32> to vector<8x128xf32>
    %100 = arith.negf %99 : vector<8x128xf32>
    %101 = math.exp %100 : vector<8x128xf32>
    %cst_33 = arith.constant 1.000000e+00 : f32
    %102 = vector.broadcast %cst_33 : f32 to vector<8x128xf32>
    %103 = arith.addf %102, %101 : vector<8x128xf32>
    %104 = arith.divf %102, %103 : vector<8x128xf32>
    %105 = vector.extract_strided_slice %98 {offsets = [0, 128], sizes = [8, 128], strides = [1, 1]} : vector<8x512xf32> to vector<8x128xf32>
    %106 = arith.negf %105 : vector<8x128xf32>
    %107 = math.exp %106 : vector<8x128xf32>
    %cst_34 = arith.constant 1.000000e+00 : f32
    %108 = vector.broadcast %cst_34 : f32 to vector<8x128xf32>
    %109 = arith.addf %108, %107 : vector<8x128xf32>
    %110 = arith.divf %108, %109 : vector<8x128xf32>
    %111 = vector.extract_strided_slice %98 {offsets = [0, 256], sizes = [8, 128], strides = [1, 1]} : vector<8x512xf32> to vector<8x128xf32>
    %112 = math.tanh %111 : vector<8x128xf32>
    %113 = vector.extract_strided_slice %98 {offsets = [0, 384], sizes = [8, 128], strides = [1, 1]} : vector<8x512xf32> to vector<8x128xf32>
    %114 = arith.negf %113 : vector<8x128xf32>
    %115 = math.exp %114 : vector<8x128xf32>
    %cst_35 = arith.constant 1.000000e+00 : f32
    %116 = vector.broadcast %cst_35 : f32 to vector<8x128xf32>
    %117 = arith.addf %116, %115 : vector<8x128xf32>
    %118 = arith.divf %116, %117 : vector<8x128xf32>
    %119 = arith.mulf %110, %92 : vector<8x128xf32>
    %120 = arith.mulf %104, %112 : vector<8x128xf32>
    %121 = arith.addf %119, %120 : vector<8x128xf32>
    %122 = math.tanh %121 : vector<8x128xf32>
    %123 = arith.mulf %118, %122 : vector<8x128xf32>
    %c24 = arith.constant 24 : index
    %c0_36 = arith.constant 0 : index
    %124 = vector.load %arg8[%c24, %c0_36] : memref<64x1024xf32, #tpu.memory_space<vmem>>, vector<8x512xf32>
    %c0_37 = arith.constant 0 : index
    %c0_38 = arith.constant 0 : index
    %125 = vector.load %arg3[%c0_37, %c0_38] : memref<128x512xf32, #tpu.memory_space<vmem>>, vector<128x512xf32>
    %cst_39 = arith.constant dense<0.000000e+00> : vector<8x512xf32>
    %126 = tpu.matmul %123, %125, %cst_39 {dimension_numbers = #tpu.dot_dimension_numbers<[1], [0], [0], [1], [0, 0, 1, 1], [], []>} : vector<8x128xf32>, vector<128x512xf32>, vector<8x512xf32> -> vector<8x512xf32>
    %127 = arith.addf %124, %126 : vector<8x512xf32>
    %128 = vector.extract_strided_slice %127 {offsets = [0, 0], sizes = [8, 128], strides = [1, 1]} : vector<8x512xf32> to vector<8x128xf32>
    %129 = arith.negf %128 : vector<8x128xf32>
    %130 = math.exp %129 : vector<8x128xf32>
    %cst_40 = arith.constant 1.000000e+00 : f32
    %131 = vector.broadcast %cst_40 : f32 to vector<8x128xf32>
    %132 = arith.addf %131, %130 : vector<8x128xf32>
    %133 = arith.divf %131, %132 : vector<8x128xf32>
    %134 = vector.extract_strided_slice %127 {offsets = [0, 128], sizes = [8, 128], strides = [1, 1]} : vector<8x512xf32> to vector<8x128xf32>
    %135 = arith.negf %134 : vector<8x128xf32>
    %136 = math.exp %135 : vector<8x128xf32>
    %cst_41 = arith.constant 1.000000e+00 : f32
    %137 = vector.broadcast %cst_41 : f32 to vector<8x128xf32>
    %138 = arith.addf %137, %136 : vector<8x128xf32>
    %139 = arith.divf %137, %138 : vector<8x128xf32>
    %140 = vector.extract_strided_slice %127 {offsets = [0, 256], sizes = [8, 128], strides = [1, 1]} : vector<8x512xf32> to vector<8x128xf32>
    %141 = math.tanh %140 : vector<8x128xf32>
    %142 = vector.extract_strided_slice %127 {offsets = [0, 384], sizes = [8, 128], strides = [1, 1]} : vector<8x512xf32> to vector<8x128xf32>
    %143 = arith.negf %142 : vector<8x128xf32>
    %144 = math.exp %143 : vector<8x128xf32>
    %cst_42 = arith.constant 1.000000e+00 : f32
    %145 = vector.broadcast %cst_42 : f32 to vector<8x128xf32>
    %146 = arith.addf %145, %144 : vector<8x128xf32>
    %147 = arith.divf %145, %146 : vector<8x128xf32>
    %148 = arith.mulf %139, %121 : vector<8x128xf32>
    %149 = arith.mulf %133, %141 : vector<8x128xf32>
    %150 = arith.addf %148, %149 : vector<8x128xf32>
    %151 = math.tanh %150 : vector<8x128xf32>
    %152 = arith.mulf %147, %151 : vector<8x128xf32>
    %c32 = arith.constant 32 : index
    %c0_43 = arith.constant 0 : index
    %153 = vector.load %arg8[%c32, %c0_43] : memref<64x1024xf32, #tpu.memory_space<vmem>>, vector<8x512xf32>
    %c0_44 = arith.constant 0 : index
    %c0_45 = arith.constant 0 : index
    %154 = vector.load %arg3[%c0_44, %c0_45] : memref<128x512xf32, #tpu.memory_space<vmem>>, vector<128x512xf32>
    %cst_46 = arith.constant dense<0.000000e+00> : vector<8x512xf32>
    %155 = tpu.matmul %152, %154, %cst_46 {dimension_numbers = #tpu.dot_dimension_numbers<[1], [0], [0], [1], [0, 0, 1, 1], [], []>} : vector<8x128xf32>, vector<128x512xf32>, vector<8x512xf32> -> vector<8x512xf32>
    %156 = arith.addf %153, %155 : vector<8x512xf32>
    %157 = vector.extract_strided_slice %156 {offsets = [0, 0], sizes = [8, 128], strides = [1, 1]} : vector<8x512xf32> to vector<8x128xf32>
    %158 = arith.negf %157 : vector<8x128xf32>
    %159 = math.exp %158 : vector<8x128xf32>
    %cst_47 = arith.constant 1.000000e+00 : f32
    %160 = vector.broadcast %cst_47 : f32 to vector<8x128xf32>
    %161 = arith.addf %160, %159 : vector<8x128xf32>
    %162 = arith.divf %160, %161 : vector<8x128xf32>
    %163 = vector.extract_strided_slice %156 {offsets = [0, 128], sizes = [8, 128], strides = [1, 1]} : vector<8x512xf32> to vector<8x128xf32>
    %164 = arith.negf %163 : vector<8x128xf32>
    %165 = math.exp %164 : vector<8x128xf32>
    %cst_48 = arith.constant 1.000000e+00 : f32
    %166 = vector.broadcast %cst_48 : f32 to vector<8x128xf32>
    %167 = arith.addf %166, %165 : vector<8x128xf32>
    %168 = arith.divf %166, %167 : vector<8x128xf32>
    %169 = vector.extract_strided_slice %156 {offsets = [0, 256], sizes = [8, 128], strides = [1, 1]} : vector<8x512xf32> to vector<8x128xf32>
    %170 = math.tanh %169 : vector<8x128xf32>
    %171 = vector.extract_strided_slice %156 {offsets = [0, 384], sizes = [8, 128], strides = [1, 1]} : vector<8x512xf32> to vector<8x128xf32>
    %172 = arith.negf %171 : vector<8x128xf32>
    %173 = math.exp %172 : vector<8x128xf32>
    %cst_49 = arith.constant 1.000000e+00 : f32
    %174 = vector.broadcast %cst_49 : f32 to vector<8x128xf32>
    %175 = arith.addf %174, %173 : vector<8x128xf32>
    %176 = arith.divf %174, %175 : vector<8x128xf32>
    %177 = arith.mulf %168, %150 : vector<8x128xf32>
    %178 = arith.mulf %162, %170 : vector<8x128xf32>
    %179 = arith.addf %177, %178 : vector<8x128xf32>
    %180 = math.tanh %179 : vector<8x128xf32>
    %181 = arith.mulf %176, %180 : vector<8x128xf32>
    %c40 = arith.constant 40 : index
    %c0_50 = arith.constant 0 : index
    %182 = vector.load %arg8[%c40, %c0_50] : memref<64x1024xf32, #tpu.memory_space<vmem>>, vector<8x512xf32>
    %c0_51 = arith.constant 0 : index
    %c0_52 = arith.constant 0 : index
    %183 = vector.load %arg3[%c0_51, %c0_52] : memref<128x512xf32, #tpu.memory_space<vmem>>, vector<128x512xf32>
    %cst_53 = arith.constant dense<0.000000e+00> : vector<8x512xf32>
    %184 = tpu.matmul %181, %183, %cst_53 {dimension_numbers = #tpu.dot_dimension_numbers<[1], [0], [0], [1], [0, 0, 1, 1], [], []>} : vector<8x128xf32>, vector<128x512xf32>, vector<8x512xf32> -> vector<8x512xf32>
    %185 = arith.addf %182, %184 : vector<8x512xf32>
    %186 = vector.extract_strided_slice %185 {offsets = [0, 0], sizes = [8, 128], strides = [1, 1]} : vector<8x512xf32> to vector<8x128xf32>
    %187 = arith.negf %186 : vector<8x128xf32>
    %188 = math.exp %187 : vector<8x128xf32>
    %cst_54 = arith.constant 1.000000e+00 : f32
    %189 = vector.broadcast %cst_54 : f32 to vector<8x128xf32>
    %190 = arith.addf %189, %188 : vector<8x128xf32>
    %191 = arith.divf %189, %190 : vector<8x128xf32>
    %192 = vector.extract_strided_slice %185 {offsets = [0, 128], sizes = [8, 128], strides = [1, 1]} : vector<8x512xf32> to vector<8x128xf32>
    %193 = arith.negf %192 : vector<8x128xf32>
    %194 = math.exp %193 : vector<8x128xf32>
    %cst_55 = arith.constant 1.000000e+00 : f32
    %195 = vector.broadcast %cst_55 : f32 to vector<8x128xf32>
    %196 = arith.addf %195, %194 : vector<8x128xf32>
    %197 = arith.divf %195, %196 : vector<8x128xf32>
    %198 = vector.extract_strided_slice %185 {offsets = [0, 256], sizes = [8, 128], strides = [1, 1]} : vector<8x512xf32> to vector<8x128xf32>
    %199 = math.tanh %198 : vector<8x128xf32>
    %200 = vector.extract_strided_slice %185 {offsets = [0, 384], sizes = [8, 128], strides = [1, 1]} : vector<8x512xf32> to vector<8x128xf32>
    %201 = arith.negf %200 : vector<8x128xf32>
    %202 = math.exp %201 : vector<8x128xf32>
    %cst_56 = arith.constant 1.000000e+00 : f32
    %203 = vector.broadcast %cst_56 : f32 to vector<8x128xf32>
    %204 = arith.addf %203, %202 : vector<8x128xf32>
    %205 = arith.divf %203, %204 : vector<8x128xf32>
    %206 = arith.mulf %197, %179 : vector<8x128xf32>
    %207 = arith.mulf %191, %199 : vector<8x128xf32>
    %208 = arith.addf %206, %207 : vector<8x128xf32>
    %209 = math.tanh %208 : vector<8x128xf32>
    %210 = arith.mulf %205, %209 : vector<8x128xf32>
    %c48 = arith.constant 48 : index
    %c0_57 = arith.constant 0 : index
    %211 = vector.load %arg8[%c48, %c0_57] : memref<64x1024xf32, #tpu.memory_space<vmem>>, vector<8x512xf32>
    %c0_58 = arith.constant 0 : index
    %c0_59 = arith.constant 0 : index
    %212 = vector.load %arg3[%c0_58, %c0_59] : memref<128x512xf32, #tpu.memory_space<vmem>>, vector<128x512xf32>
    %cst_60 = arith.constant dense<0.000000e+00> : vector<8x512xf32>
    %213 = tpu.matmul %210, %212, %cst_60 {dimension_numbers = #tpu.dot_dimension_numbers<[1], [0], [0], [1], [0, 0, 1, 1], [], []>} : vector<8x128xf32>, vector<128x512xf32>, vector<8x512xf32> -> vector<8x512xf32>
    %214 = arith.addf %211, %213 : vector<8x512xf32>
    %215 = vector.extract_strided_slice %214 {offsets = [0, 0], sizes = [8, 128], strides = [1, 1]} : vector<8x512xf32> to vector<8x128xf32>
    %216 = arith.negf %215 : vector<8x128xf32>
    %217 = math.exp %216 : vector<8x128xf32>
    %cst_61 = arith.constant 1.000000e+00 : f32
    %218 = vector.broadcast %cst_61 : f32 to vector<8x128xf32>
    %219 = arith.addf %218, %217 : vector<8x128xf32>
    %220 = arith.divf %218, %219 : vector<8x128xf32>
    %221 = vector.extract_strided_slice %214 {offsets = [0, 128], sizes = [8, 128], strides = [1, 1]} : vector<8x512xf32> to vector<8x128xf32>
    %222 = arith.negf %221 : vector<8x128xf32>
    %223 = math.exp %222 : vector<8x128xf32>
    %cst_62 = arith.constant 1.000000e+00 : f32
    %224 = vector.broadcast %cst_62 : f32 to vector<8x128xf32>
    %225 = arith.addf %224, %223 : vector<8x128xf32>
    %226 = arith.divf %224, %225 : vector<8x128xf32>
    %227 = vector.extract_strided_slice %214 {offsets = [0, 256], sizes = [8, 128], strides = [1, 1]} : vector<8x512xf32> to vector<8x128xf32>
    %228 = math.tanh %227 : vector<8x128xf32>
    %229 = vector.extract_strided_slice %214 {offsets = [0, 384], sizes = [8, 128], strides = [1, 1]} : vector<8x512xf32> to vector<8x128xf32>
    %230 = arith.negf %229 : vector<8x128xf32>
    %231 = math.exp %230 : vector<8x128xf32>
    %cst_63 = arith.constant 1.000000e+00 : f32
    %232 = vector.broadcast %cst_63 : f32 to vector<8x128xf32>
    %233 = arith.addf %232, %231 : vector<8x128xf32>
    %234 = arith.divf %232, %233 : vector<8x128xf32>
    %235 = arith.mulf %226, %208 : vector<8x128xf32>
    %236 = arith.mulf %220, %228 : vector<8x128xf32>
    %237 = arith.addf %235, %236 : vector<8x128xf32>
    %238 = math.tanh %237 : vector<8x128xf32>
    %239 = arith.mulf %234, %238 : vector<8x128xf32>
    %c56_64 = arith.constant 56 : index
    %c0_65 = arith.constant 0 : index
    %240 = vector.load %arg8[%c56_64, %c0_65] : memref<64x1024xf32, #tpu.memory_space<vmem>>, vector<8x512xf32>
    %c0_66 = arith.constant 0 : index
    %c0_67 = arith.constant 0 : index
    %241 = vector.load %arg3[%c0_66, %c0_67] : memref<128x512xf32, #tpu.memory_space<vmem>>, vector<128x512xf32>
    %cst_68 = arith.constant dense<0.000000e+00> : vector<8x512xf32>
    %242 = tpu.matmul %239, %241, %cst_68 {dimension_numbers = #tpu.dot_dimension_numbers<[1], [0], [0], [1], [0, 0, 1, 1], [], []>} : vector<8x128xf32>, vector<128x512xf32>, vector<8x512xf32> -> vector<8x512xf32>
    %243 = arith.addf %240, %242 : vector<8x512xf32>
    %244 = vector.extract_strided_slice %243 {offsets = [0, 0], sizes = [8, 128], strides = [1, 1]} : vector<8x512xf32> to vector<8x128xf32>
    %245 = arith.negf %244 : vector<8x128xf32>
    %246 = math.exp %245 : vector<8x128xf32>
    %cst_69 = arith.constant 1.000000e+00 : f32
    %247 = vector.broadcast %cst_69 : f32 to vector<8x128xf32>
    %248 = arith.addf %247, %246 : vector<8x128xf32>
    %249 = arith.divf %247, %248 : vector<8x128xf32>
    %250 = vector.extract_strided_slice %243 {offsets = [0, 128], sizes = [8, 128], strides = [1, 1]} : vector<8x512xf32> to vector<8x128xf32>
    %251 = arith.negf %250 : vector<8x128xf32>
    %252 = math.exp %251 : vector<8x128xf32>
    %cst_70 = arith.constant 1.000000e+00 : f32
    %253 = vector.broadcast %cst_70 : f32 to vector<8x128xf32>
    %254 = arith.addf %253, %252 : vector<8x128xf32>
    %255 = arith.divf %253, %254 : vector<8x128xf32>
    %256 = vector.extract_strided_slice %243 {offsets = [0, 256], sizes = [8, 128], strides = [1, 1]} : vector<8x512xf32> to vector<8x128xf32>
    %257 = math.tanh %256 : vector<8x128xf32>
    %258 = vector.extract_strided_slice %243 {offsets = [0, 384], sizes = [8, 128], strides = [1, 1]} : vector<8x512xf32> to vector<8x128xf32>
    %259 = arith.negf %258 : vector<8x128xf32>
    %260 = math.exp %259 : vector<8x128xf32>
    %cst_71 = arith.constant 1.000000e+00 : f32
    %261 = vector.broadcast %cst_71 : f32 to vector<8x128xf32>
    %262 = arith.addf %261, %260 : vector<8x128xf32>
    %263 = arith.divf %261, %262 : vector<8x128xf32>
    %264 = arith.mulf %255, %237 : vector<8x128xf32>
    %265 = arith.mulf %249, %257 : vector<8x128xf32>
    %266 = arith.addf %264, %265 : vector<8x128xf32>
    %267 = math.tanh %266 : vector<8x128xf32>
    %268 = arith.mulf %263, %267 : vector<8x128xf32>
    %269 = tpu.concatenate %268, %65 in 1 : vector<8x128xf32>, vector<8x128xf32> -> vector<8x256xf32>
    %c0_72 = arith.constant 0 : index
    %c0_73 = arith.constant 0 : index
    %270 = vector.load %arg5[%c0_72, %c0_73] : memref<256x128xf32, #tpu.memory_space<vmem>>, vector<256x128xf32>
    %cst_74 = arith.constant dense<0.000000e+00> : vector<8x128xf32>
    %271 = tpu.matmul %269, %270, %cst_74 {dimension_numbers = #tpu.dot_dimension_numbers<[1], [0], [0], [1], [0, 0, 1, 1], [], []>} : vector<8x256xf32>, vector<256x128xf32>, vector<8x128xf32> -> vector<8x128xf32>
    %c0_75 = arith.constant 0 : index
    %c0_76 = arith.constant 0 : index
    %272 = vector.load %arg6[%c0_75, %c0_76] : memref<1x128xf32, #tpu.memory_space<vmem>>, vector<1x128xf32>
    %273 = vector.broadcast %272 : vector<1x128xf32> to vector<8x128xf32>
    %274 = arith.addf %271, %273 : vector<8x128xf32>
    %c0_77 = arith.constant 0 : index
    %c0_78 = arith.constant 0 : index
    %275 = vector.load %arg7[%c0_77, %c0_78] : memref<8x128xf32, #tpu.memory_space<vmem>>, vector<8x128xf32>
    tpu.vector_store %arg7[%c0_77, %c0_78], %274 {strides = array<i32>} : memref<8x128xf32, #tpu.memory_space<vmem>>, vector<8x128xf32>,
    return
  }
}

</mosaic_0001>

<llo_original>
// kernel: bilstm_forward.3
$region0: #{bilstm_forward.3}
  #allocation0 [shape = 'u32[]', space=smem, size = 0x4, offset = 0x4, fixed_abs, tag = 'smem constant byte address 0x4 - core index']
  #allocation1 [shape = 'u32[72,128]{1,0:T(1,128)}', space=vmem, size = 0x9000, scoped, tag = 'internal scratch']
  #allocation2 [shape = 'f32[64,1024]{1,0:T(8,128)}', space=vmem, size = 0x40000, scoped, tag = 'scratch operand']
  %s0 = inlined_call_operand.vmem [shape: f32[64,256], index: 0, kind: input, shape index: {}]
  %s1 = inlined_call_operand.hbm [shape: f32[256,1024], index: 1, kind: input, shape index: {}]
  %s2 = inlined_call_operand.vmem [shape: f32[1,1024], index: 2, kind: input, shape index: {}]
  %s3 = inlined_call_operand.hbm [shape: f32[128,512], index: 3, kind: input, shape index: {}]
  %s4 = inlined_call_operand.hbm [shape: f32[128,512], index: 4, kind: input, shape index: {}]
  %s5 = inlined_call_operand.hbm [shape: f32[256,128], index: 5, kind: input, shape index: {}]
  %s6 = inlined_call_operand.vmem [shape: f32[1,128], index: 6, kind: input, shape index: {}]
  %s7 = inlined_call_operand.vmem [shape: f32[8,128], index: 7, kind: output, shape index: {}]
  %s8 = sld [smem:[#allocation0]]
  $region54: #{bilstm_forward.3} parent=0
    _
  %s10 = ssub.s32 1, %s8
  %s11 = scalar_select 0, %s10, %s8
  $region1: #{bilstm_forward.3} parent=0
    #allocation3 [shape = 'u8[1048576]{0}', space=vmem, size = 0x100000, scoped, tag = 'input window, operand 1, single buffered']
    #allocation4 [shape = 's32[1]{0}', space=sflag, size = 0x4, scoped, tag = 'scoped memory for bilstm_forward.3']
    #allocation5 [shape = 'u8[262144]{0}', space=vmem, size = 0x40000, scoped, tag = 'input window, operand 3, single buffered']
    #allocation6 [shape = 's32[1]{0}', space=sflag, size = 0x4, scoped, tag = 'scoped memory for bilstm_forward.3']
    #allocation7 [shape = 'u8[262144]{0}', space=vmem, size = 0x40000, scoped, tag = 'input window, operand 4, single buffered']
    #allocation8 [shape = 'u8[131072]{0}', space=vmem, size = 0x20000, scoped, tag = 'input window, operand 5, single buffered']
    #allocation9 [shape = 's32[1]{0}', space=sflag, size = 0x4, scoped, tag = 'scoped memory for bilstm_forward.3']
    %12 = vsyncpa [#allocation4], 0
    %13 = vsyncpa [#allocation6], 0
    %14 = vsyncpa [#allocation9], 0
    // Predicated region
    $region2: #{bilstm_forward.3} parent=1 // pred_check
      _
    $region3: #{bilstm_forward.3} parent=1 // pred_check_branch
      %16 = sbr.rel (0) target = $region5
    $region4: #{bilstm_forward.3} parent=1 // pred_region
      _
    $region5: #{bilstm_forward.3} parent=1 // pred_fallthru
      _
    // Predicated region
    $region6: #{bilstm_forward.3} parent=1 // pred_check
      _
    $region7: #{bilstm_forward.3} parent=1 // pred_check_branch
      %18 = sbr.rel (0) target = $region9
    $region8: #{bilstm_forward.3} parent=1 // pred_region
      %20 = vsyncadd [#allocation4], 0
      %s21 = sshll.u32 %s1, 4
      %s22 = int_to_ptr.hbm [resolvable:$true] %s21
      %s23 = sshll.u32 [#allocation3], 4
      %s24 = int_to_ptr.vmem [resolvable:$true] %s23
      %29 = dma.hbm_to_vmem [thread:$0]  %s22, 32768, %s24, [#allocation4], 1024, 1024, 64
    $region9: #{bilstm_forward.3} parent=1 // pred_fallthru
      _
    // Predicated region
    $region10: #{bilstm_forward.3} parent=1 // pred_check
      _
    $region11: #{bilstm_forward.3} parent=1 // pred_check_branch
      %31 = sbr.rel (0) target = $region13
    $region12: #{bilstm_forward.3} parent=1 // pred_region
      _
    $region13: #{bilstm_forward.3} parent=1 // pred_fallthru
      _
    // Predicated region
    $region14: #{bilstm_forward.3} parent=1 // pred_check
      _
    $region15: #{bilstm_forward.3} parent=1 // pred_check_branch
      %33 = sbr.rel (0) target = $region17
    $region16: #{bilstm_forward.3} parent=1 // pred_region
      %35 = vsyncadd [#allocation6], 0
      %s36 = sshll.u32 %s3, 4
      %s37 = int_to_ptr.hbm [resolvable:$true] %s36
      %s38 = sshll.u32 [#allocation5], 4
      %s39 = int_to_ptr.vmem [resolvable:$true] %s38
      %44 = dma.hbm_to_vmem [thread:$0]  %s37, 8192, %s39, [#allocation6], 512, 512, 32
    $region17: #{bilstm_forward.3} parent=1 // pred_fallthru
      _
    // Predicated region
    $region18: #{bilstm_forward.3} parent=1 // pred_check
      _
    $region19: #{bilstm_forward.3} parent=1 // pred_check_branch
      %46 = sbr.rel (0) target = $region21
    $region20: #{bilstm_forward.3} parent=1 // pred_region
      %48 = vsyncadd [#allocation6], 0
      %s49 = sshll.u32 %s4, 4
      %s50 = int_to_ptr.hbm [resolvable:$true] %s49
      %s51 = sshll.u32 [#allocation7], 4
      %s52 = int_to_ptr.vmem [resolvable:$true] %s51
      %57 = dma.hbm_to_vmem [thread:$0]  %s50, 8192, %s52, [#allocation6], 512, 512, 32
    $region21: #{bilstm_forward.3} parent=1 // pred_fallthru
      _
    // Predicated region
    $region22: #{bilstm_forward.3} parent=1 // pred_check
      _
    $region23: #{bilstm_forward.3} parent=1 // pred_check_branch
      %59 = sbr.rel (0) target = $region25
    $region24: #{bilstm_forward.3} parent=1 // pred_region
      %61 = vsyncadd [#allocation9], 0
      %s62 = sshll.u32 %s5, 4
      %s63 = int_to_ptr.hbm [resolvable:$true] %s62
      %s64 = sshll.u32 [#allocation8], 4
      %s65 = int_to_ptr.vmem [resolvable:$true] %s64
      %70 = dma.hbm_to_vmem [thread:$0]  %s63, 4096, %s65, [#allocation9], 128, 128, 8
    $region25: #{bilstm_forward.3} parent=1 // pred_fallthru
      _
    // Predicated region
    $region26: #{bilstm_forward.3} parent=1 // pred_check
      _
    $region27: #{bilstm_forward.3} parent=1 // pred_check_branch
      %72 = sbr.rel (0) target = $region29
    $region28: #{bilstm_forward.3} parent=1 // pred_region
      _
    $region29: #{bilstm_forward.3} parent=1 // pred_fallthru
      _
    // Predicated region
    $region30: #{bilstm_forward.3} parent=1 // pred_check
      _
    $region31: #{bilstm_forward.3} parent=1 // pred_check_branch
      %74 = sbr.rel (0) target = $region33
    $region32: #{bilstm_forward.3} parent=1 // pred_region
      %76 = dma.done [#allocation4], 32768
    $region33: #{bilstm_forward.3} parent=1 // pred_fallthru
      _
    // Predicated region
    $region34: #{bilstm_forward.3} parent=1 // pred_check
      _
    $region35: #{bilstm_forward.3} parent=1 // pred_check_branch
      %78 = sbr.rel (0) target = $region37
    $region36: #{bilstm_forward.3} parent=1 // pred_region
      %80 = dma.done [#allocation6], 8192
    $region37: #{bilstm_forward.3} parent=1 // pred_fallthru
      _
    // Predicated region
    $region38: #{bilstm_forward.3} parent=1 // pred_check
      _
    $region39: #{bilstm_forward.3} parent=1 // pred_check_branch
      %82 = sbr.rel (0) target = $region41
    $region40: #{bilstm_forward.3} parent=1 // pred_region
      %84 = dma.done [#allocation6], 8192
    $region41: #{bilstm_forward.3} parent=1 // pred_fallthru
      _
    // Predicated region
    $region42: #{bilstm_forward.3} parent=1 // pred_check
      _
    $region43: #{bilstm_forward.3} parent=1 // pred_check_branch
      %86 = sbr.rel (0) target = $region45
    $region44: #{bilstm_forward.3} parent=1 // pred_region
      %88 = dma.done [#allocation9], 4096
    $region45: #{bilstm_forward.3} parent=1 // pred_fallthru
      _
    %v89 = vld [vmem:[%s0] sm:$0xff]
    %v90 = vld [vmem:[%s0 + $0x8] sm:$0xff]
    %v91 = vld [vmem:[%s0 + $0x10] sm:$0xff]
    %v92 = vld [vmem:[%s0 + $0x18] sm:$0xff]
    %v93 = vld [vmem:[%s0 + $0x20] sm:$0xff]
    %v94 = vld [vmem:[%s0 + $0x28] sm:$0xff]
    %v95 = vld [vmem:[%s0 + $0x30] sm:$0xff]
    %v96 = vld [vmem:[%s0 + $0x38] sm:$0xff]
    %v97 = vld [vmem:[%s0 + $0x40] sm:$0xff]
    %v98 = vld [vmem:[%s0 + $0x48] sm:$0xff]
    %v99 = vld [vmem:[%s0 + $0x50] sm:$0xff]
    %v100 = vld [vmem:[%s0 + $0x58] sm:$0xff]
    %v101 = vld [vmem:[%s0 + $0x60] sm:$0xff]
    %v102 = vld [vmem:[%s0 + $0x68] sm:$0xff]
    %v103 = vld [vmem:[%s0 + $0x70] sm:$0xff]
    %v104 = vld [vmem:[%s0 + $0x78] sm:$0xff]
    %v105 = vld [vmem:[#allocation3] sm:$0xff]
    %v106 = vld [vmem:[#allocation3 + $0x8] sm:$0xff]
    %v107 = vld [vmem:[#allocation3 + $0x10] sm:$0xff]
    %v108 = vld [vmem:[#allocation3 + $0x18] sm:$0xff]
    %v109 = vld [vmem:[#allocation3 + $0x20] sm:$0xff]
    %v110 = vld [vmem:[#allocation3 + $0x28] sm:$0xff]
    %v111 = vld [vmem:[#allocation3 + $0x30] sm:$0xff]
    %v112 = vld [vmem:[#allocation3 + $0x38] sm:$0xff]
    %v113 = vld [vmem:[#allocation3 + $0x40] sm:$0xff]
    %v114 = vld [vmem:[#allocation3 + $0x48] sm:$0xff]
    %v115 = vld [vmem:[#allocation3 + $0x50] sm:$0xff]
    %v116 = vld [vmem:[#allocation3 + $0x58] sm:$0xff]
    %v117 = vld [vmem:[#allocation3 + $0x60] sm:$0xff]
    %v118 = vld [vmem:[#allocation3 + $0x68] sm:$0xff]
    %v119 = vld [vmem:[#allocation3 + $0x70] sm:$0xff]
    %v120 = vld [vmem:[#allocation3 + $0x78] sm:$0xff]
    %v121 = vld [vmem:[#allocation3 + $0x80] sm:$0xff]
    %v122 = vld [vmem:[#allocation3 + $0x88] sm:$0xff]
    %v123 = vld [vmem:[#allocation3 + $0x90] sm:$0xff]
    %v124 = vld [vmem:[#allocation3 + $0x98] sm:$0xff]
    %v125 = vld [vmem:[#allocation3 + $0xa0] sm:$0xff]
    %v126 = vld [vmem:[#allocation3 + $0xa8] sm:$0xff]
    %v127 = vld [vmem:[#allocation3 + $0xb0] sm:$0xff]
    %v128 = vld [vmem:[#allocation3 + $0xb8] sm:$0xff]
    %v129 = vld [vmem:[#allocation3 + $0xc0] sm:$0xff]
    %v130 = vld [vmem:[#allocation3 + $0xc8] sm:$0xff]
    %v131 = vld [vmem:[#allocation3 + $0xd0] sm:$0xff]
    %v132 = vld [vmem:[#allocation3 + $0xd8] sm:$0xff]
    %v133 = vld [vmem:[#allocation3 + $0xe0] sm:$0xff]
    %v134 = vld [vmem:[#allocation3 + $0xe8] sm:$0xff]
    %v135 = vld [vmem:[#allocation3 + $0xf0] sm:$0xff]
    %v136 = vld [vmem:[#allocation3 + $0xf8] sm:$0xff]
    %v137 = vld [vmem:[#allocation3 + $0x100] sm:$0xff]
    %v138 = vld [vmem:[#allocation3 + $0x108] sm:$0xff]
    %v139 = vld [vmem:[#allocation3 + $0x110] sm:$0xff]
    %v140 = vld [vmem:[#allocation3 + $0x118] sm:$0xff]
    %v141 = vld [vmem:[#allocation3 + $0x120] sm:$0xff]
    %v142 = vld [vmem:[#allocation3 + $0x128] sm:$0xff]
    %v143 = vld [vmem:[#allocation3 + $0x130] sm:$0xff]
    %v144 = vld [vmem:[#allocation3 + $0x138] sm:$0xff]
    %v145 = vld [vmem:[#allocation3 + $0x140] sm:$0xff]
    %v146 = vld [vmem:[#allocation3 + $0x148] sm:$0xff]
    %v147 = vld [vmem:[#allocation3 + $0x150] sm:$0xff]
    %v148 = vld [vmem:[#allocation3 + $0x158] sm:$0xff]
    %v149 = vld [vmem:[#allocation3 + $0x160] sm:$0xff]
    %v150 = vld [vmem:[#allocation3 + $0x168] sm:$0xff]
    %v151 = vld [vmem:[#allocation3 + $0x170] sm:$0xff]
    %v152 = vld [vmem:[#allocation3 + $0x178] sm:$0xff]
    %v153 = vld [vmem:[#allocation3 + $0x180] sm:$0xff]
    %v154 = vld [vmem:[#allocation3 + $0x188] sm:$0xff]
    %v155 = vld [vmem:[#allocation3 + $0x190] sm:$0xff]
    %v156 = vld [vmem:[#allocation3 + $0x198] sm:$0xff]
    %v157 = vld [vmem:[#allocation3 + $0x1a0] sm:$0xff]
    %v158 = vld [vmem:[#allocation3 + $0x1a8] sm:$0xff]
    %v159 = vld [vmem:[#allocation3 + $0x1b0] sm:$0xff]
    %v160 = vld [vmem:[#allocation3 + $0x1b8] sm:$0xff]
    %v161 = vld [vmem:[#allocation3 + $0x1c0] sm:$0xff]
    %v162 = vld [vmem:[#allocation3 + $0x1c8] sm:$0xff]
    %v163 = vld [vmem:[#allocation3 + $0x1d0] sm:$0xff]
    %v164 = vld [vmem:[#allocation3 + $0x1d8] sm:$0xff]
    %v165 = vld [vmem:[#allocation3 + $0x1e0] sm:$0xff]
    %v166 = vld [vmem:[#allocation3 + $0x1e8] sm:$0xff]
    %v167 = vld [vmem:[#allocation3 + $0x1f0] sm:$0xff]
    %v168 = vld [vmem:[#allocation3 + $0x1f8] sm:$0xff]
    %v169 = vld [vmem:[#allocation3 + $0x200] sm:$0xff]
    %v170 = vld [vmem:[#allocation3 + $0x208] sm:$0xff]
    %v171 = vld [vmem:[#allocation3 + $0x210] sm:$0xff]
    %v172 = vld [vmem:[#allocation3 + $0x218] sm:$0xff]
    %v173 = vld [vmem:[#allocation3 + $0x220] sm:$0xff]
    %v174 = vld [vmem:[#allocation3 + $0x228] sm:$0xff]
    %v175 = vld [vmem:[#allocation3 + $0x230] sm:$0xff]
    %v176 = vld [vmem:[#allocation3 + $0x238] sm:$0xff]
    %v177 = vld [vmem:[#allocation3 + $0x240] sm:$0xff]
    %v178 = vld [vmem:[#allocation3 + $0x248] sm:$0xff]
    %v179 = vld [vmem:[#allocation3 + $0x250] sm:$0xff]
    %v180 = vld [vmem:[#allocation3 + $0x258] sm:$0xff]
    %v181 = vld [vmem:[#allocation3 + $0x260] sm:$0xff]
    %v182 = vld [vmem:[#allocation3 + $0x268] sm:$0xff]
    %v183 = vld [vmem:[#allocation3 + $0x270] sm:$0xff]
    %v184 = vld [vmem:[#allocation3 + $0x278] sm:$0xff]
    %v185 = vld [vmem:[#allocation3 + $0x280] sm:$0xff]
    %v186 = vld [vmem:[#allocation3 + $0x288] sm:$0xff]
    %v187 = vld [vmem:[#allocation3 + $0x290] sm:$0xff]
    %v188 = vld [vmem:[#allocation3 + $0x298] sm:$0xff]
    %v189 = vld [vmem:[#allocation3 + $0x2a0] sm:$0xff]
    %v190 = vld [vmem:[#allocation3 + $0x2a8] sm:$0xff]
    %v191 = vld [vmem:[#allocation3 + $0x2b0] sm:$0xff]
    %v192 = vld [vmem:[#allocation3 + $0x2b8] sm:$0xff]
    %v193 = vld [vmem:[#allocation3 + $0x2c0] sm:$0xff]
    %v194 = vld [vmem:[#allocation3 + $0x2c8] sm:$0xff]
    %v195 = vld [vmem:[#allocation3 + $0x2d0] sm:$0xff]
    %v196 = vld [vmem:[#allocation3 + $0x2d8] sm:$0xff]
    %v197 = vld [vmem:[#allocation3 + $0x2e0] sm:$0xff]
    %v198 = vld [vmem:[#allocation3 + $0x2e8] sm:$0xff]
    %v199 = vld [vmem:[#allocation3 + $0x2f0] sm:$0xff]
    %v200 = vld [vmem:[#allocation3 + $0x2f8] sm:$0xff]
    %v201 = vld [vmem:[#allocation3 + $0x300] sm:$0xff]
    %v202 = vld [vmem:[#allocation3 + $0x308] sm:$0xff]
    %v203 = vld [vmem:[#allocation3 + $0x310] sm:$0xff]
    %v204 = vld [vmem:[#allocation3 + $0x318] sm:$0xff]
    %v205 = vld [vmem:[#allocation3 + $0x320] sm:$0xff]
    %v206 = vld [vmem:[#allocation3 + $0x328] sm:$0xff]
    %v207 = vld [vmem:[#allocation3 + $0x330] sm:$0xff]
    %v208 = vld [vmem:[#allocation3 + $0x338] sm:$0xff]
    %v209 = vld [vmem:[#allocation3 + $0x340] sm:$0xff]
    %v210 = vld [vmem:[#allocation3 + $0x348] sm:$0xff]
    %v211 = vld [vmem:[#allocation3 + $0x350] sm:$0xff]
    %v212 = vld [vmem:[#allocation3 + $0x358] sm:$0xff]
    %v213 = vld [vmem:[#allocation3 + $0x360] sm:$0xff]
    %v214 = vld [vmem:[#allocation3 + $0x368] sm:$0xff]
    %v215 = vld [vmem:[#allocation3 + $0x370] sm:$0xff]
    %v216 = vld [vmem:[#allocation3 + $0x378] sm:$0xff]
    %v217 = vld [vmem:[#allocation3 + $0x380] sm:$0xff]
    %v218 = vld [vmem:[#allocation3 + $0x388] sm:$0xff]
    %v219 = vld [vmem:[#allocation3 + $0x390] sm:$0xff]
    %v220 = vld [vmem:[#allocation3 + $0x398] sm:$0xff]
    %v221 = vld [vmem:[#allocation3 + $0x3a0] sm:$0xff]
    %v222 = vld [vmem:[#allocation3 + $0x3a8] sm:$0xff]
    %v223 = vld [vmem:[#allocation3 + $0x3b0] sm:$0xff]
    %v224 = vld [vmem:[#allocation3 + $0x3b8] sm:$0xff]
    %v225 = vld [vmem:[#allocation3 + $0x3c0] sm:$0xff]
    %v226 = vld [vmem:[#allocation3 + $0x3c8] sm:$0xff]
    %v227 = vld [vmem:[#allocation3 + $0x3d0] sm:$0xff]
    %v228 = vld [vmem:[#allocation3 + $0x3d8] sm:$0xff]
    %v229 = vld [vmem:[#allocation3 + $0x3e0] sm:$0xff]
    %v230 = vld [vmem:[#allocation3 + $0x3e8] sm:$0xff]
    %v231 = vld [vmem:[#allocation3 + $0x3f0] sm:$0xff]
    %v232 = vld [vmem:[#allocation3 + $0x3f8] sm:$0xff]
    %v233 = vld [vmem:[#allocation3 + $0x400] sm:$0xff]
    %v234 = vld [vmem:[#allocation3 + $0x408] sm:$0xff]
    %v235 = vld [vmem:[#allocation3 + $0x410] sm:$0xff]
    %v236 = vld [vmem:[#allocation3 + $0x418] sm:$0xff]
    %v237 = vld [vmem:[#allocation3 + $0x420] sm:$0xff]
    %v238 = vld [vmem:[#allocation3 + $0x428] sm:$0xff]
    %v239 = vld [vmem:[#allocation3 + $0x430] sm:$0xff]
    %v240 = vld [vmem:[#allocation3 + $0x438] sm:$0xff]
    %v241 = vld [vmem:[#allocation3 + $0x440] sm:$0xff]
    %v242 = vld [vmem:[#allocation3 + $0x448] sm:$0xff]
    %v243 = vld [vmem:[#allocation3 + $0x450] sm:$0xff]
    %v244 = vld [vmem:[#allocation3 + $0x458] sm:$0xff]
    %v245 = vld [vmem:[#allocation3 + $0x460] sm:$0xff]
    %v246 = vld [vmem:[#allocation3 + $0x468] sm:$0xff]
    %v247 = vld [vmem:[#allocation3 + $0x470] sm:$0xff]
    %v248 = vld [vmem:[#allocation3 + $0x478] sm:$0xff]
    %v249 = vld [vmem:[#allocation3 + $0x480] sm:$0xff]
    %v250 = vld [vmem:[#allocation3 + $0x488] sm:$0xff]
    %v251 = vld [vmem:[#allocation3 + $0x490] sm:$0xff]
    %v252 = vld [vmem:[#allocation3 + $0x498] sm:$0xff]
    %v253 = vld [vmem:[#allocation3 + $0x4a0] sm:$0xff]
    %v254 = vld [vmem:[#allocation3 + $0x4a8] sm:$0xff]
    %v255 = vld [vmem:[#allocation3 + $0x4b0] sm:$0xff]
    %v256 = vld [vmem:[#allocation3 + $0x4b8] sm:$0xff]
    %v257 = vld [vmem:[#allocation3 + $0x4c0] sm:$0xff]
    %v258 = vld [vmem:[#allocation3 + $0x4c8] sm:$0xff]
    %v259 = vld [vmem:[#allocation3 + $0x4d0] sm:$0xff]
    %v260 = vld [vmem:[#allocation3 + $0x4d8] sm:$0xff]
    %v261 = vld [vmem:[#allocation3 + $0x4e0] sm:$0xff]
    %v262 = vld [vmem:[#allocation3 + $0x4e8] sm:$0xff]
    %v263 = vld [vmem:[#allocation3 + $0x4f0] sm:$0xff]
    %v264 = vld [vmem:[#allocation3 + $0x4f8] sm:$0xff]
    %v265 = vld [vmem:[#allocation3 + $0x500] sm:$0xff]
    %v266 = vld [vmem:[#allocation3 + $0x508] sm:$0xff]
    %v267 = vld [vmem:[#allocation3 + $0x510] sm:$0xff]
    %v268 = vld [vmem:[#allocation3 + $0x518] sm:$0xff]
    %v269 = vld [vmem:[#allocation3 + $0x520] sm:$0xff]
    %v270 = vld [vmem:[#allocation3 + $0x528] sm:$0xff]
    %v271 = vld [vmem:[#allocation3 + $0x530] sm:$0xff]
    %v272 = vld [vmem:[#allocation3 + $0x538] sm:$0xff]
    %v273 = vld [vmem:[#allocation3 + $0x540] sm:$0xff]
    %v274 = vld [vmem:[#allocation3 + $0x548] sm:$0xff]
    %v275 = vld [vmem:[#allocation3 + $0x550] sm:$0xff]
    %v276 = vld [vmem:[#allocation3 + $0x558] sm:$0xff]
    %v277 = vld [vmem:[#allocation3 + $0x560] sm:$0xff]
    %v278 = vld [vmem:[#allocation3 + $0x568] sm:$0xff]
    %v279 = vld [vmem:[#allocation3 + $0x570] sm:$0xff]
    %v280 = vld [vmem:[#allocation3 + $0x578] sm:$0xff]
    %v281 = vld [vmem:[#allocation3 + $0x580] sm:$0xff]
    %v282 = vld [vmem:[#allocation3 + $0x588] sm:$0xff]
    %v283 = vld [vmem:[#allocation3 + $0x590] sm:$0xff]
    %v284 = vld [vmem:[#allocation3 + $0x598] sm:$0xff]
    %v285 = vld [vmem:[#allocation3 + $0x5a0] sm:$0xff]
    %v286 = vld [vmem:[#allocation3 + $0x5a8] sm:$0xff]
    %v287 = vld [vmem:[#allocation3 + $0x5b0] sm:$0xff]
    %v288 = vld [vmem:[#allocation3 + $0x5b8] sm:$0xff]
    %v289 = vld [vmem:[#allocation3 + $0x5c0] sm:$0xff]
    %v290 = vld [vmem:[#allocation3 + $0x5c8] sm:$0xff]
    %v291 = vld [vmem:[#allocation3 + $0x5d0] sm:$0xff]
    %v292 = vld [vmem:[#allocation3 + $0x5d8] sm:$0xff]
    %v293 = vld [vmem:[#allocation3 + $0x5e0] sm:$0xff]
    %v294 = vld [vmem:[#allocation3 + $0x5e8] sm:$0xff]
    %v295 = vld [vmem:[#allocation3 + $0x5f0] sm:$0xff]
    %v296 = vld [vmem:[#allocation3 + $0x5f8] sm:$0xff]
    %v297 = vld [vmem:[#allocation3 + $0x600] sm:$0xff]
    %v298 = vld [vmem:[#allocation3 + $0x608] sm:$0xff]
    %v299 = vld [vmem:[#allocation3 + $0x610] sm:$0xff]
    %v300 = vld [vmem:[#allocation3 + $0x618] sm:$0xff]
    %v301 = vld [vmem:[#allocation3 + $0x620] sm:$0xff]
    %v302 = vld [vmem:[#allocation3 + $0x628] sm:$0xff]
    %v303 = vld [vmem:[#allocation3 + $0x630] sm:$0xff]
    %v304 = vld [vmem:[#allocation3 + $0x638] sm:$0xff]
    %v305 = vld [vmem:[#allocation3 + $0x640] sm:$0xff]
    %v306 = vld [vmem:[#allocation3 + $0x648] sm:$0xff]
    %v307 = vld [vmem:[#allocation3 + $0x650] sm:$0xff]
    %v308 = vld [vmem:[#allocation3 + $0x658] sm:$0xff]
    %v309 = vld [vmem:[#allocation3 + $0x660] sm:$0xff]
    %v310 = vld [vmem:[#allocation3 + $0x668] sm:$0xff]
    %v311 = vld [vmem:[#allocation3 + $0x670] sm:$0xff]
    %v312 = vld [vmem:[#allocation3 + $0x678] sm:$0xff]
    %v313 = vld [vmem:[#allocation3 + $0x680] sm:$0xff]
    %v314 = vld [vmem:[#allocation3 + $0x688] sm:$0xff]
    %v315 = vld [vmem:[#allocation3 + $0x690] sm:$0xff]
    %v316 = vld [vmem:[#allocation3 + $0x698] sm:$0xff]
    %v317 = vld [vmem:[#allocation3 + $0x6a0] sm:$0xff]
    %v318 = vld [vmem:[#allocation3 + $0x6a8] sm:$0xff]
    %v319 = vld [vmem:[#allocation3 + $0x6b0] sm:$0xff]
    %v320 = vld [vmem:[#allocation3 + $0x6b8] sm:$0xff]
    %v321 = vld [vmem:[#allocation3 + $0x6c0] sm:$0xff]
    %v322 = vld [vmem:[#allocation3 + $0x6c8] sm:$0xff]
    %v323 = vld [vmem:[#allocation3 + $0x6d0] sm:$0xff]
    %v324 = vld [vmem:[#allocation3 + $0x6d8] sm:$0xff]
    %v325 = vld [vmem:[#allocation3 + $0x6e0] sm:$0xff]
    %v326 = vld [vmem:[#allocation3 + $0x6e8] sm:$0xff]
    %v327 = vld [vmem:[#allocation3 + $0x6f0] sm:$0xff]
    %v328 = vld [vmem:[#allocation3 + $0x6f8] sm:$0xff]
    %v329 = vld [vmem:[#allocation3 + $0x700] sm:$0xff]
    %v330 = vld [vmem:[#allocation3 + $0x708] sm:$0xff]
    %v331 = vld [vmem:[#allocation3 + $0x710] sm:$0xff]
    %v332 = vld [vmem:[#allocation3 + $0x718] sm:$0xff]
    %v333 = vld [vmem:[#allocation3 + $0x720] sm:$0xff]
    %v334 = vld [vmem:[#allocation3 + $0x728] sm:$0xff]
    %v335 = vld [vmem:[#allocation3 + $0x730] sm:$0xff]
    %v336 = vld [vmem:[#allocation3 + $0x738] sm:$0xff]
    %v337 = vld [vmem:[#allocation3 + $0x740] sm:$0xff]
    %v338 = vld [vmem:[#allocation3 + $0x748] sm:$0xff]
    %v339 = vld [vmem:[#allocation3 + $0x750] sm:$0xff]
    %v340 = vld [vmem:[#allocation3 + $0x758] sm:$0xff]
    %v341 = vld [vmem:[#allocation3 + $0x760] sm:$0xff]
    %v342 = vld [vmem:[#allocation3 + $0x768] sm:$0xff]
    %v343 = vld [vmem:[#allocation3 + $0x770] sm:$0xff]
    %v344 = vld [vmem:[#allocation3 + $0x778] sm:$0xff]
    %v345 = vld [vmem:[#allocation3 + $0x780] sm:$0xff]
    %v346 = vld [vmem:[#allocation3 + $0x788] sm:$0xff]
    %v347 = vld [vmem:[#allocation3 + $0x790] sm:$0xff]
    %v348 = vld [vmem:[#allocation3 + $0x798] sm:$0xff]
    %v349 = vld [vmem:[#allocation3 + $0x7a0] sm:$0xff]
    %v350 = vld [vmem:[#allocation3 + $0x7a8] sm:$0xff]
    %v351 = vld [vmem:[#allocation3 + $0x7b0] sm:$0xff]
    %v352 = vld [vmem:[#allocation3 + $0x7b8] sm:$0xff]
    %v353 = vld [vmem:[#allocation3 + $0x7c0] sm:$0xff]
    %v354 = vld [vmem:[#allocation3 + $0x7c8] sm:$0xff]
    %v355 = vld [vmem:[#allocation3 + $0x7d0] sm:$0xff]
    %v356 = vld [vmem:[#allocation3 + $0x7d8] sm:$0xff]
    %v357 = vld [vmem:[#allocation3 + $0x7e0] sm:$0xff]
    %v358 = vld [vmem:[#allocation3 + $0x7e8] sm:$0xff]
    %v359 = vld [vmem:[#allocation3 + $0x7f0] sm:$0xff]
    %v360 = vld [vmem:[#allocation3 + $0x7f8] sm:$0xff]
    %v361 = vld [vmem:[%s2] sm:$0xff]
    %v363 = vperm.slane %v361, 0
    %v364 = vperm.slane %v361, 1
    %v365 = vperm.slane %v361, 2
    %v366 = vperm.slane %v361, 3
    %v367 = vperm.slane %v361, 4
    %v368 = vperm.slane %v361, 5
    %v369 = vperm.slane %v361, 6
    %v370 = vperm.slane %v361, 7
    %379 = vmatpush.msra.mxu0 %v225
    %380 = vmatpush.msra.mxu0 %v217
    %381 = vmatpush.msra.mxu0 %v209
    %382 = vmatpush.msra.mxu0 %v201
    %383 = vmatpush.msra.mxu0 %v193
    %384 = vmatpush.msra.mxu0 %v185
    %385 = vmatpush.msra.mxu0 %v177
    %386 = vmatpush.msra.mxu0 %v169
    %387 = vmatpush.msra.mxu0 %v161
    %388 = vmatpush.msra.mxu0 %v153
    %389 = vmatpush.msra.mxu0 %v145
    %390 = vmatpush.msra.mxu0 %v137
    %391 = vmatpush.msra.mxu0 %v129
    %392 = vmatpush.msra.mxu0 %v121
    %393 = vmatpush.msra.mxu0 %v113
    %394 = vmatpush.msra.mxu0 %v105
    %395 = vmatmul.f32.gmra.mxu0 %v89
    %v396 = vpop.f32.mrf.mxu0
    %v397 = vadd.f32 %v363, %v396
    %398 = vmatmul.f32.gmra.mxu0 %v91
    %v399 = vpop.f32.mrf.mxu0
    %v400 = vadd.f32 %v363, %v399
    %401 = vmatmul.f32.gmra.mxu0 %v93
    %v402 = vpop.f32.mrf.mxu0
    %v403 = vadd.f32 %v363, %v402
    %404 = vmatmul.f32.gmra.mxu0 %v95
    %v405 = vpop.f32.mrf.mxu0
    %v406 = vadd.f32 %v363, %v405
    %407 = vmatmul.f32.gmra.mxu0 %v97
    %v408 = vpop.f32.mrf.mxu0
    %v409 = vadd.f32 %v363, %v408
    %410 = vmatmul.f32.gmra.mxu0 %v99
    %v411 = vpop.f32.mrf.mxu0
    %v412 = vadd.f32 %v363, %v411
    %413 = vmatmul.f32.gmra.mxu0 %v101
    %v414 = vpop.f32.mrf.mxu0
    %v415 = vadd.f32 %v363, %v414
    %416 = vmatmul.f32.gmra.mxu0 %v103
    %v417 = vpop.f32.mrf.mxu0
    %v418 = vadd.f32 %v363, %v417
    %419 = vdwg.mxu0
    %420 = vmatpush.msra.mxu0 %v353
    %421 = vmatpush.msra.mxu0 %v345
    %422 = vmatpush.msra.mxu0 %v337
    %423 = vmatpush.msra.mxu0 %v329
    %424 = vmatpush.msra.mxu0 %v321
    %425 = vmatpush.msra.mxu0 %v313
    %426 = vmatpush.msra.mxu0 %v305
    %427 = vmatpush.msra.mxu0 %v297
    %428 = vmatpush.msra.mxu0 %v289
    %429 = vmatpush.msra.mxu0 %v281
    %430 = vmatpush.msra.mxu0 %v273
    %431 = vmatpush.msra.mxu0 %v265
    %432 = vmatpush.msra.mxu0 %v257
    %433 = vmatpush.msra.mxu0 %v249
    %434 = vmatpush.msra.mxu0 %v241
    %435 = vmatpush.msra.mxu0 %v233
    %436 = vmatmul.f32.gmra.mxu0 %v90
    %v437 = vpop.f32.mrf.mxu0
    %v438 = vadd.f32 %v397, %v437
    %439 = vmatmul.f32.gmra.mxu0 %v92
    %v440 = vpop.f32.mrf.mxu0
    %v441 = vadd.f32 %v400, %v440
    %442 = vmatmul.f32.gmra.mxu0 %v94
    %v443 = vpop.f32.mrf.mxu0
    %v444 = vadd.f32 %v403, %v443
    %445 = vmatmul.f32.gmra.mxu0 %v96
    %v446 = vpop.f32.mrf.mxu0
    %v447 = vadd.f32 %v406, %v446
    %448 = vmatmul.f32.gmra.mxu0 %v98
    %v449 = vpop.f32.mrf.mxu0
    %v450 = vadd.f32 %v409, %v449
    %451 = vmatmul.f32.gmra.mxu0 %v100
    %v452 = vpop.f32.mrf.mxu0
    %v453 = vadd.f32 %v412, %v452
    %454 = vmatmul.f32.gmra.mxu0 %v102
    %v455 = vpop.f32.mrf.mxu0
    %v456 = vadd.f32 %v415, %v455
    %457 = vmatmul.f32.gmra.mxu0 %v104
    %v458 = vpop.f32.mrf.mxu0
    %v459 = vadd.f32 %v418, %v458
    %460 = vdwg.mxu0
    %461 = vmatpush.msra.mxu0 %v226
    %462 = vmatpush.msra.mxu0 %v218
    %463 = vmatpush.msra.mxu0 %v210
    %464 = vmatpush.msra.mxu0 %v202
    %465 = vmatpush.msra.mxu0 %v194
    %466 = vmatpush.msra.mxu0 %v186
    %467 = vmatpush.msra.mxu0 %v178
    %468 = vmatpush.msra.mxu0 %v170
    %469 = vmatpush.msra.mxu0 %v162
    %470 = vmatpush.msra.mxu0 %v154
    %471 = vmatpush.msra.mxu0 %v146
    %472 = vmatpush.msra.mxu0 %v138
    %473 = vmatpush.msra.mxu0 %v130
    %474 = vmatpush.msra.mxu0 %v122
    %475 = vmatpush.msra.mxu0 %v114
    %476 = vmatpush.msra.mxu0 %v106
    %477 = vmatmul.f32.gmra.mxu0 %v89
    %v478 = vpop.f32.mrf.mxu0
    %v479 = vadd.f32 %v364, %v478
    %480 = vmatmul.f32.gmra.mxu0 %v91
    %v481 = vpop.f32.mrf.mxu0
    %v482 = vadd.f32 %v364, %v481
    %483 = vmatmul.f32.gmra.mxu0 %v93
    %v484 = vpop.f32.mrf.mxu0
    %v485 = vadd.f32 %v364, %v484
    %486 = vmatmul.f32.gmra.mxu0 %v95
    %v487 = vpop.f32.mrf.mxu0
    %v488 = vadd.f32 %v364, %v487
    %489 = vmatmul.f32.gmra.mxu0 %v97
    %v490 = vpop.f32.mrf.mxu0
    %v491 = vadd.f32 %v364, %v490
    %492 = vmatmul.f32.gmra.mxu0 %v99
    %v493 = vpop.f32.mrf.mxu0
    %v494 = vadd.f32 %v364, %v493
    %495 = vmatmul.f32.gmra.mxu0 %v101
    %v496 = vpop.f32.mrf.mxu0
    %v497 = vadd.f32 %v364, %v496
    %498 = vmatmul.f32.gmra.mxu0 %v103
    %v499 = vpop.f32.mrf.mxu0
    %v500 = vadd.f32 %v364, %v499
    %501 = vdwg.mxu0
    %502 = vmatpush.msra.mxu0 %v354
    %503 = vmatpush.msra.mxu0 %v346
    %504 = vmatpush.msra.mxu0 %v338
    %505 = vmatpush.msra.mxu0 %v330
    %506 = vmatpush.msra.mxu0 %v322
    %507 = vmatpush.msra.mxu0 %v314
    %508 = vmatpush.msra.mxu0 %v306
    %509 = vmatpush.msra.mxu0 %v298
    %510 = vmatpush.msra.mxu0 %v290
    %511 = vmatpush.msra.mxu0 %v282
    %512 = vmatpush.msra.mxu0 %v274
    %513 = vmatpush.msra.mxu0 %v266
    %514 = vmatpush.msra.mxu0 %v258
    %515 = vmatpush.msra.mxu0 %v250
    %516 = vmatpush.msra.mxu0 %v242
    %517 = vmatpush.msra.mxu0 %v234
    %518 = vmatmul.f32.gmra.mxu0 %v90
    %v519 = vpop.f32.mrf.mxu0
    %v520 = vadd.f32 %v479, %v519
    %521 = vmatmul.f32.gmra.mxu0 %v92
    %v522 = vpop.f32.mrf.mxu0
    %v523 = vadd.f32 %v482, %v522
    %524 = vmatmul.f32.gmra.mxu0 %v94
    %v525 = vpop.f32.mrf.mxu0
    %v526 = vadd.f32 %v485, %v525
    %527 = vmatmul.f32.gmra.mxu0 %v96
    %v528 = vpop.f32.mrf.mxu0
    %v529 = vadd.f32 %v488, %v528
    %530 = vmatmul.f32.gmra.mxu0 %v98
    %v531 = vpop.f32.mrf.mxu0
    %v532 = vadd.f32 %v491, %v531
    %533 = vmatmul.f32.gmra.mxu0 %v100
    %v534 = vpop.f32.mrf.mxu0
    %v535 = vadd.f32 %v494, %v534
    %536 = vmatmul.f32.gmra.mxu0 %v102
    %v537 = vpop.f32.mrf.mxu0
    %v538 = vadd.f32 %v497, %v537
    %539 = vmatmul.f32.gmra.mxu0 %v104
    %v540 = vpop.f32.mrf.mxu0
    %v541 = vadd.f32 %v500, %v540
    %542 = vdwg.mxu0
    %543 = vmatpush.msra.mxu0 %v227
    %544 = vmatpush.msra.mxu0 %v219
    %545 = vmatpush.msra.mxu0 %v211
    %546 = vmatpush.msra.mxu0 %v203
    %547 = vmatpush.msra.mxu0 %v195
    %548 = vmatpush.msra.mxu0 %v187
    %549 = vmatpush.msra.mxu0 %v179
    %550 = vmatpush.msra.mxu0 %v171
    %551 = vmatpush.msra.mxu0 %v163
    %552 = vmatpush.msra.mxu0 %v155
    %553 = vmatpush.msra.mxu0 %v147
    %554 = vmatpush.msra.mxu0 %v139
    %555 = vmatpush.msra.mxu0 %v131
    %556 = vmatpush.msra.mxu0 %v123
    %557 = vmatpush.msra.mxu0 %v115
    %558 = vmatpush.msra.mxu0 %v107
    %559 = vmatmul.f32.gmra.mxu0 %v89
    %v560 = vpop.f32.mrf.mxu0
    %v561 = vadd.f32 %v365, %v560
    %562 = vmatmul.f32.gmra.mxu0 %v91
    %v563 = vpop.f32.mrf.mxu0
    %v564 = vadd.f32 %v365, %v563
    %565 = vmatmul.f32.gmra.mxu0 %v93
    %v566 = vpop.f32.mrf.mxu0
    %v567 = vadd.f32 %v365, %v566
    %568 = vmatmul.f32.gmra.mxu0 %v95
    %v569 = vpop.f32.mrf.mxu0
    %v570 = vadd.f32 %v365, %v569
    %571 = vmatmul.f32.gmra.mxu0 %v97
    %v572 = vpop.f32.mrf.mxu0
    %v573 = vadd.f32 %v365, %v572
    %574 = vmatmul.f32.gmra.mxu0 %v99
    %v575 = vpop.f32.mrf.mxu0
    %v576 = vadd.f32 %v365, %v575
    %577 = vmatmul.f32.gmra.mxu0 %v101
    %v578 = vpop.f32.mrf.mxu0
    %v579 = vadd.f32 %v365, %v578
    %580 = vmatmul.f32.gmra.mxu0 %v103
    %v581 = vpop.f32.mrf.mxu0
    %v582 = vadd.f32 %v365, %v581
    %583 = vdwg.mxu0
    %584 = vmatpush.msra.mxu0 %v355
    %585 = vmatpush.msra.mxu0 %v347
    %586 = vmatpush.msra.mxu0 %v339
    %587 = vmatpush.msra.mxu0 %v331
    %588 = vmatpush.msra.mxu0 %v323
    %589 = vmatpush.msra.mxu0 %v315
    %590 = vmatpush.msra.mxu0 %v307
    %591 = vmatpush.msra.mxu0 %v299
    %592 = vmatpush.msra.mxu0 %v291
    %593 = vmatpush.msra.mxu0 %v283
    %594 = vmatpush.msra.mxu0 %v275
    %595 = vmatpush.msra.mxu0 %v267
    %596 = vmatpush.msra.mxu0 %v259
    %597 = vmatpush.msra.mxu0 %v251
    %598 = vmatpush.msra.mxu0 %v243
    %599 = vmatpush.msra.mxu0 %v235
    %600 = vmatmul.f32.gmra.mxu0 %v90
    %v601 = vpop.f32.mrf.mxu0
    %v602 = vadd.f32 %v561, %v601
    %603 = vmatmul.f32.gmra.mxu0 %v92
    %v604 = vpop.f32.mrf.mxu0
    %v605 = vadd.f32 %v564, %v604
    %606 = vmatmul.f32.gmra.mxu0 %v94
    %v607 = vpop.f32.mrf.mxu0
    %v608 = vadd.f32 %v567, %v607
    %609 = vmatmul.f32.gmra.mxu0 %v96
    %v610 = vpop.f32.mrf.mxu0
    %v611 = vadd.f32 %v570, %v610
    %612 = vmatmul.f32.gmra.mxu0 %v98
    %v613 = vpop.f32.mrf.mxu0
    %v614 = vadd.f32 %v573, %v613
    %615 = vmatmul.f32.gmra.mxu0 %v100
    %v616 = vpop.f32.mrf.mxu0
    %v617 = vadd.f32 %v576, %v616
    %618 = vmatmul.f32.gmra.mxu0 %v102
    %v619 = vpop.f32.mrf.mxu0
    %v620 = vadd.f32 %v579, %v619
    %621 = vmatmul.f32.gmra.mxu0 %v104
    %v622 = vpop.f32.mrf.mxu0
    %v623 = vadd.f32 %v582, %v622
    %624 = vdwg.mxu0
    %625 = vmatpush.msra.mxu0 %v228
    %626 = vmatpush.msra.mxu0 %v220
    %627 = vmatpush.msra.mxu0 %v212
    %628 = vmatpush.msra.mxu0 %v204
    %629 = vmatpush.msra.mxu0 %v196
    %630 = vmatpush.msra.mxu0 %v188
    %631 = vmatpush.msra.mxu0 %v180
    %632 = vmatpush.msra.mxu0 %v172
    %633 = vmatpush.msra.mxu0 %v164
    %634 = vmatpush.msra.mxu0 %v156
    %635 = vmatpush.msra.mxu0 %v148
    %636 = vmatpush.msra.mxu0 %v140
    %637 = vmatpush.msra.mxu0 %v132
    %638 = vmatpush.msra.mxu0 %v124
    %639 = vmatpush.msra.mxu0 %v116
    %640 = vmatpush.msra.mxu0 %v108
    %641 = vmatmul.f32.gmra.mxu0 %v89
    %v642 = vpop.f32.mrf.mxu0
    %v643 = vadd.f32 %v366, %v642
    %644 = vmatmul.f32.gmra.mxu0 %v91
    %v645 = vpop.f32.mrf.mxu0
    %v646 = vadd.f32 %v366, %v645
    %647 = vmatmul.f32.gmra.mxu0 %v93
    %v648 = vpop.f32.mrf.mxu0
    %v649 = vadd.f32 %v366, %v648
    %650 = vmatmul.f32.gmra.mxu0 %v95
    %v651 = vpop.f32.mrf.mxu0
    %v652 = vadd.f32 %v366, %v651
    %653 = vmatmul.f32.gmra.mxu0 %v97
    %v654 = vpop.f32.mrf.mxu0
    %v655 = vadd.f32 %v366, %v654
    %656 = vmatmul.f32.gmra.mxu0 %v99
    %v657 = vpop.f32.mrf.mxu0
    %v658 = vadd.f32 %v366, %v657
    %659 = vmatmul.f32.gmra.mxu0 %v101
    %v660 = vpop.f32.mrf.mxu0
    %v661 = vadd.f32 %v366, %v660
    %662 = vmatmul.f32.gmra.mxu0 %v103
    %v663 = vpop.f32.mrf.mxu0
    %v664 = vadd.f32 %v366, %v663
    %665 = vdwg.mxu0
    %666 = vmatpush.msra.mxu0 %v356
    %667 = vmatpush.msra.mxu0 %v348
    %668 = vmatpush.msra.mxu0 %v340
    %669 = vmatpush.msra.mxu0 %v332
    %670 = vmatpush.msra.mxu0 %v324
    %671 = vmatpush.msra.mxu0 %v316
    %672 = vmatpush.msra.mxu0 %v308
    %673 = vmatpush.msra.mxu0 %v300
    %674 = vmatpush.msra.mxu0 %v292
    %675 = vmatpush.msra.mxu0 %v284
    %676 = vmatpush.msra.mxu0 %v276
    %677 = vmatpush.msra.mxu0 %v268
    %678 = vmatpush.msra.mxu0 %v260
    %679 = vmatpush.msra.mxu0 %v252
    %680 = vmatpush.msra.mxu0 %v244
    %681 = vmatpush.msra.mxu0 %v236
    %682 = vmatmul.f32.gmra.mxu0 %v90
    %v683 = vpop.f32.mrf.mxu0
    %v684 = vadd.f32 %v643, %v683
    %685 = vmatmul.f32.gmra.mxu0 %v92
    %v686 = vpop.f32.mrf.mxu0
    %v687 = vadd.f32 %v646, %v686
    %688 = vmatmul.f32.gmra.mxu0 %v94
    %v689 = vpop.f32.mrf.mxu0
    %v690 = vadd.f32 %v649, %v689
    %691 = vmatmul.f32.gmra.mxu0 %v96
    %v692 = vpop.f32.mrf.mxu0
    %v693 = vadd.f32 %v652, %v692
    %694 = vmatmul.f32.gmra.mxu0 %v98
    %v695 = vpop.f32.mrf.mxu0
    %v696 = vadd.f32 %v655, %v695
    %697 = vmatmul.f32.gmra.mxu0 %v100
    %v698 = vpop.f32.mrf.mxu0
    %v699 = vadd.f32 %v658, %v698
    %700 = vmatmul.f32.gmra.mxu0 %v102
    %v701 = vpop.f32.mrf.mxu0
    %v702 = vadd.f32 %v661, %v701
    %703 = vmatmul.f32.gmra.mxu0 %v104
    %v704 = vpop.f32.mrf.mxu0
    %v705 = vadd.f32 %v664, %v704
    %706 = vdwg.mxu0
    %707 = vmatpush.msra.mxu0 %v229
    %708 = vmatpush.msra.mxu0 %v221
    %709 = vmatpush.msra.mxu0 %v213
    %710 = vmatpush.msra.mxu0 %v205
    %711 = vmatpush.msra.mxu0 %v197
    %712 = vmatpush.msra.mxu0 %v189
    %713 = vmatpush.msra.mxu0 %v181
    %714 = vmatpush.msra.mxu0 %v173
    %715 = vmatpush.msra.mxu0 %v165
    %716 = vmatpush.msra.mxu0 %v157
    %717 = vmatpush.msra.mxu0 %v149
    %718 = vmatpush.msra.mxu0 %v141
    %719 = vmatpush.msra.mxu0 %v133
    %720 = vmatpush.msra.mxu0 %v125
    %721 = vmatpush.msra.mxu0 %v117
    %722 = vmatpush.msra.mxu0 %v109
    %723 = vmatmul.f32.gmra.mxu0 %v89
    %v724 = vpop.f32.mrf.mxu0
    %v725 = vadd.f32 %v367, %v724
    %726 = vmatmul.f32.gmra.mxu0 %v91
    %v727 = vpop.f32.mrf.mxu0
    %v728 = vadd.f32 %v367, %v727
    %729 = vmatmul.f32.gmra.mxu0 %v93
    %v730 = vpop.f32.mrf.mxu0
    %v731 = vadd.f32 %v367, %v730
    %732 = vmatmul.f32.gmra.mxu0 %v95
    %v733 = vpop.f32.mrf.mxu0
    %v734 = vadd.f32 %v367, %v733
    %735 = vmatmul.f32.gmra.mxu0 %v97
    %v736 = vpop.f32.mrf.mxu0
    %v737 = vadd.f32 %v367, %v736
    %738 = vmatmul.f32.gmra.mxu0 %v99
    %v739 = vpop.f32.mrf.mxu0
    %v740 = vadd.f32 %v367, %v739
    %741 = vmatmul.f32.gmra.mxu0 %v101
    %v742 = vpop.f32.mrf.mxu0
    %v743 = vadd.f32 %v367, %v742
    %744 = vmatmul.f32.gmra.mxu0 %v103
    %v745 = vpop.f32.mrf.mxu0
    %v746 = vadd.f32 %v367, %v745
    %747 = vdwg.mxu0
    %748 = vmatpush.msra.mxu0 %v357
    %749 = vmatpush.msra.mxu0 %v349
    %750 = vmatpush.msra.mxu0 %v341
    %751 = vmatpush.msra.mxu0 %v333
    %752 = vmatpush.msra.mxu0 %v325
    %753 = vmatpush.msra.mxu0 %v317
    %754 = vmatpush.msra.mxu0 %v309
    %755 = vmatpush.msra.mxu0 %v301
    %756 = vmatpush.msra.mxu0 %v293
    %757 = vmatpush.msra.mxu0 %v285
    %758 = vmatpush.msra.mxu0 %v277
    %759 = vmatpush.msra.mxu0 %v269
    %760 = vmatpush.msra.mxu0 %v261
    %761 = vmatpush.msra.mxu0 %v253
    %762 = vmatpush.msra.mxu0 %v245
    %763 = vmatpush.msra.mxu0 %v237
    %764 = vmatmul.f32.gmra.mxu0 %v90
    %v765 = vpop.f32.mrf.mxu0
    %v766 = vadd.f32 %v725, %v765
    %767 = vmatmul.f32.gmra.mxu0 %v92
    %v768 = vpop.f32.mrf.mxu0
    %v769 = vadd.f32 %v728, %v768
    %770 = vmatmul.f32.gmra.mxu0 %v94
    %v771 = vpop.f32.mrf.mxu0
    %v772 = vadd.f32 %v731, %v771
    %773 = vmatmul.f32.gmra.mxu0 %v96
    %v774 = vpop.f32.mrf.mxu0
    %v775 = vadd.f32 %v734, %v774
    %776 = vmatmul.f32.gmra.mxu0 %v98
    %v777 = vpop.f32.mrf.mxu0
    %v778 = vadd.f32 %v737, %v777
    %779 = vmatmul.f32.gmra.mxu0 %v100
    %v780 = vpop.f32.mrf.mxu0
    %v781 = vadd.f32 %v740, %v780
    %782 = vmatmul.f32.gmra.mxu0 %v102
    %v783 = vpop.f32.mrf.mxu0
    %v784 = vadd.f32 %v743, %v783
    %785 = vmatmul.f32.gmra.mxu0 %v104
    %v786 = vpop.f32.mrf.mxu0
    %v787 = vadd.f32 %v746, %v786
    %788 = vdwg.mxu0
    %789 = vmatpush.msra.mxu0 %v230
    %790 = vmatpush.msra.mxu0 %v222
    %791 = vmatpush.msra.mxu0 %v214
    %792 = vmatpush.msra.mxu0 %v206
    %793 = vmatpush.msra.mxu0 %v198
    %794 = vmatpush.msra.mxu0 %v190
    %795 = vmatpush.msra.mxu0 %v182
    %796 = vmatpush.msra.mxu0 %v174
    %797 = vmatpush.msra.mxu0 %v166
    %798 = vmatpush.msra.mxu0 %v158
    %799 = vmatpush.msra.mxu0 %v150
    %800 = vmatpush.msra.mxu0 %v142
    %801 = vmatpush.msra.mxu0 %v134
    %802 = vmatpush.msra.mxu0 %v126
    %803 = vmatpush.msra.mxu0 %v118
    %804 = vmatpush.msra.mxu0 %v110
    %805 = vmatmul.f32.gmra.mxu0 %v89
    %v806 = vpop.f32.mrf.mxu0
    %v807 = vadd.f32 %v368, %v806
    %808 = vmatmul.f32.gmra.mxu0 %v91
    %v809 = vpop.f32.mrf.mxu0
    %v810 = vadd.f32 %v368, %v809
    %811 = vmatmul.f32.gmra.mxu0 %v93
    %v812 = vpop.f32.mrf.mxu0
    %v813 = vadd.f32 %v368, %v812
    %814 = vmatmul.f32.gmra.mxu0 %v95
    %v815 = vpop.f32.mrf.mxu0
    %v816 = vadd.f32 %v368, %v815
    %817 = vmatmul.f32.gmra.mxu0 %v97
    %v818 = vpop.f32.mrf.mxu0
    %v819 = vadd.f32 %v368, %v818
    %820 = vmatmul.f32.gmra.mxu0 %v99
    %v821 = vpop.f32.mrf.mxu0
    %v822 = vadd.f32 %v368, %v821
    %823 = vmatmul.f32.gmra.mxu0 %v101
    %v824 = vpop.f32.mrf.mxu0
    %v825 = vadd.f32 %v368, %v824
    %826 = vmatmul.f32.gmra.mxu0 %v103
    %v827 = vpop.f32.mrf.mxu0
    %v828 = vadd.f32 %v368, %v827
    %829 = vdwg.mxu0
    %830 = vmatpush.msra.mxu0 %v358
    %831 = vmatpush.msra.mxu0 %v350
    %832 = vmatpush.msra.mxu0 %v342
    %833 = vmatpush.msra.mxu0 %v334
    %834 = vmatpush.msra.mxu0 %v326
    %835 = vmatpush.msra.mxu0 %v318
    %836 = vmatpush.msra.mxu0 %v310
    %837 = vmatpush.msra.mxu0 %v302
    %838 = vmatpush.msra.mxu0 %v294
    %839 = vmatpush.msra.mxu0 %v286
    %840 = vmatpush.msra.mxu0 %v278
    %841 = vmatpush.msra.mxu0 %v270
    %842 = vmatpush.msra.mxu0 %v262
    %843 = vmatpush.msra.mxu0 %v254
    %844 = vmatpush.msra.mxu0 %v246
    %845 = vmatpush.msra.mxu0 %v238
    %846 = vmatmul.f32.gmra.mxu0 %v90
    %v847 = vpop.f32.mrf.mxu0
    %v848 = vadd.f32 %v807, %v847
    %849 = vmatmul.f32.gmra.mxu0 %v92
    %v850 = vpop.f32.mrf.mxu0
    %v851 = vadd.f32 %v810, %v850
    %852 = vmatmul.f32.gmra.mxu0 %v94
    %v853 = vpop.f32.mrf.mxu0
    %v854 = vadd.f32 %v813, %v853
    %855 = vmatmul.f32.gmra.mxu0 %v96
    %v856 = vpop.f32.mrf.mxu0
    %v857 = vadd.f32 %v816, %v856
    %858 = vmatmul.f32.gmra.mxu0 %v98
    %v859 = vpop.f32.mrf.mxu0
    %v860 = vadd.f32 %v819, %v859
    %861 = vmatmul.f32.gmra.mxu0 %v100
    %v862 = vpop.f32.mrf.mxu0
    %v863 = vadd.f32 %v822, %v862
    %864 = vmatmul.f32.gmra.mxu0 %v102
    %v865 = vpop.f32.mrf.mxu0
    %v866 = vadd.f32 %v825, %v865
    %867 = vmatmul.f32.gmra.mxu0 %v104
    %v868 = vpop.f32.mrf.mxu0
    %v869 = vadd.f32 %v828, %v868
    %870 = vdwg.mxu0
    %871 = vmatpush.msra.mxu0 %v231
    %872 = vmatpush.msra.mxu0 %v223
    %873 = vmatpush.msra.mxu0 %v215
    %874 = vmatpush.msra.mxu0 %v207
    %875 = vmatpush.msra.mxu0 %v199
    %876 = vmatpush.msra.mxu0 %v191
    %877 = vmatpush.msra.mxu0 %v183
    %878 = vmatpush.msra.mxu0 %v175
    %879 = vmatpush.msra.mxu0 %v167
    %880 = vmatpush.msra.mxu0 %v159
    %881 = vmatpush.msra.mxu0 %v151
    %882 = vmatpush.msra.mxu0 %v143
    %883 = vmatpush.msra.mxu0 %v135
    %884 = vmatpush.msra.mxu0 %v127
    %885 = vmatpush.msra.mxu0 %v119
    %886 = vmatpush.msra.mxu0 %v111
    %887 = vmatmul.f32.gmra.mxu0 %v89
    %v888 = vpop.f32.mrf.mxu0
    %v889 = vadd.f32 %v369, %v888
    %890 = vmatmul.f32.gmra.mxu0 %v91
    %v891 = vpop.f32.mrf.mxu0
    %v892 = vadd.f32 %v369, %v891
    %893 = vmatmul.f32.gmra.mxu0 %v93
    %v894 = vpop.f32.mrf.mxu0
    %v895 = vadd.f32 %v369, %v894
    %896 = vmatmul.f32.gmra.mxu0 %v95
    %v897 = vpop.f32.mrf.mxu0
    %v898 = vadd.f32 %v369, %v897
    %899 = vmatmul.f32.gmra.mxu0 %v97
    %v900 = vpop.f32.mrf.mxu0
    %v901 = vadd.f32 %v369, %v900
    %902 = vmatmul.f32.gmra.mxu0 %v99
    %v903 = vpop.f32.mrf.mxu0
    %v904 = vadd.f32 %v369, %v903
    %905 = vmatmul.f32.gmra.mxu0 %v101
    %v906 = vpop.f32.mrf.mxu0
    %v907 = vadd.f32 %v369, %v906
    %908 = vmatmul.f32.gmra.mxu0 %v103
    %v909 = vpop.f32.mrf.mxu0
    %v910 = vadd.f32 %v369, %v909
    %911 = vdwg.mxu0
    %912 = vmatpush.msra.mxu0 %v359
    %913 = vmatpush.msra.mxu0 %v351
    %914 = vmatpush.msra.mxu0 %v343
    %915 = vmatpush.msra.mxu0 %v335
    %916 = vmatpush.msra.mxu0 %v327
    %917 = vmatpush.msra.mxu0 %v319
    %918 = vmatpush.msra.mxu0 %v311
    %919 = vmatpush.msra.mxu0 %v303
    %920 = vmatpush.msra.mxu0 %v295
    %921 = vmatpush.msra.mxu0 %v287
    %922 = vmatpush.msra.mxu0 %v279
    %923 = vmatpush.msra.mxu0 %v271
    %924 = vmatpush.msra.mxu0 %v263
    %925 = vmatpush.msra.mxu0 %v255
    %926 = vmatpush.msra.mxu0 %v247
    %927 = vmatpush.msra.mxu0 %v239
    %928 = vmatmul.f32.gmra.mxu0 %v90
    %v929 = vpop.f32.mrf.mxu0
    %v930 = vadd.f32 %v889, %v929
    %931 = vmatmul.f32.gmra.mxu0 %v92
    %v932 = vpop.f32.mrf.mxu0
    %v933 = vadd.f32 %v892, %v932
    %934 = vmatmul.f32.gmra.mxu0 %v94
    %v935 = vpop.f32.mrf.mxu0
    %v936 = vadd.f32 %v895, %v935
    %937 = vmatmul.f32.gmra.mxu0 %v96
    %v938 = vpop.f32.mrf.mxu0
    %v939 = vadd.f32 %v898, %v938
    %940 = vmatmul.f32.gmra.mxu0 %v98
    %v941 = vpop.f32.mrf.mxu0
    %v942 = vadd.f32 %v901, %v941
    %943 = vmatmul.f32.gmra.mxu0 %v100
    %v944 = vpop.f32.mrf.mxu0
    %v945 = vadd.f32 %v904, %v944
    %946 = vmatmul.f32.gmra.mxu0 %v102
    %v947 = vpop.f32.mrf.mxu0
    %v948 = vadd.f32 %v907, %v947
    %949 = vmatmul.f32.gmra.mxu0 %v104
    %v950 = vpop.f32.mrf.mxu0
    %v951 = vadd.f32 %v910, %v950
    %952 = vdwg.mxu0
    %953 = vmatpush.msra.mxu0 %v232
    %954 = vmatpush.msra.mxu0 %v224
    %955 = vmatpush.msra.mxu0 %v216
    %956 = vmatpush.msra.mxu0 %v208
    %957 = vmatpush.msra.mxu0 %v200
    %958 = vmatpush.msra.mxu0 %v192
    %959 = vmatpush.msra.mxu0 %v184
    %960 = vmatpush.msra.mxu0 %v176
    %961 = vmatpush.msra.mxu0 %v168
    %962 = vmatpush.msra.mxu0 %v160
    %963 = vmatpush.msra.mxu0 %v152
    %964 = vmatpush.msra.mxu0 %v144
    %965 = vmatpush.msra.mxu0 %v136
    %966 = vmatpush.msra.mxu0 %v128
    %967 = vmatpush.msra.mxu0 %v120
    %968 = vmatpush.msra.mxu0 %v112
    %969 = vmatmul.f32.gmra.mxu0 %v89
    %v970 = vpop.f32.mrf.mxu0
    %v971 = vadd.f32 %v370, %v970
    %972 = vmatmul.f32.gmra.mxu0 %v91
    %v973 = vpop.f32.mrf.mxu0
    %v974 = vadd.f32 %v370, %v973
    %975 = vmatmul.f32.gmra.mxu0 %v93
    %v976 = vpop.f32.mrf.mxu0
    %v977 = vadd.f32 %v370, %v976
    %978 = vmatmul.f32.gmra.mxu0 %v95
    %v979 = vpop.f32.mrf.mxu0
    %v980 = vadd.f32 %v370, %v979
    %981 = vmatmul.f32.gmra.mxu0 %v97
    %v982 = vpop.f32.mrf.mxu0
    %v983 = vadd.f32 %v370, %v982
    %984 = vmatmul.f32.gmra.mxu0 %v99
    %v985 = vpop.f32.mrf.mxu0
    %v986 = vadd.f32 %v370, %v985
    %987 = vmatmul.f32.gmra.mxu0 %v101
    %v988 = vpop.f32.mrf.mxu0
    %v989 = vadd.f32 %v370, %v988
    %990 = vmatmul.f32.gmra.mxu0 %v103
    %v991 = vpop.f32.mrf.mxu0
    %v992 = vadd.f32 %v370, %v991
    %993 = vdwg.mxu0
    %994 = vmatpush.msra.mxu0 %v360
    %995 = vmatpush.msra.mxu0 %v352
    %996 = vmatpush.msra.mxu0 %v344
    %997 = vmatpush.msra.mxu0 %v336
    %998 = vmatpush.msra.mxu0 %v328
    %999 = vmatpush.msra.mxu0 %v320
    %1000 = vmatpush.msra.mxu0 %v312
    %1001 = vmatpush.msra.mxu0 %v304
    %1002 = vmatpush.msra.mxu0 %v296
    %1003 = vmatpush.msra.mxu0 %v288
    %1004 = vmatpush.msra.mxu0 %v280
    %1005 = vmatpush.msra.mxu0 %v272
    %1006 = vmatpush.msra.mxu0 %v264
    %1007 = vmatpush.msra.mxu0 %v256
    %1008 = vmatpush.msra.mxu0 %v248
    %1009 = vmatpush.msra.mxu0 %v240
    %1010 = vmatmul.f32.gmra.mxu0 %v90
    %v1011 = vpop.f32.mrf.mxu0
    %v1012 = vadd.f32 %v971, %v1011
    %1013 = vmatmul.f32.gmra.mxu0 %v92
    %v1014 = vpop.f32.mrf.mxu0
    %v1015 = vadd.f32 %v974, %v1014
    %1016 = vmatmul.f32.gmra.mxu0 %v94
    %v1017 = vpop.f32.mrf.mxu0
    %v1018 = vadd.f32 %v977, %v1017
    %1019 = vmatmul.f32.gmra.mxu0 %v96
    %v1020 = vpop.f32.mrf.mxu0
    %v1021 = vadd.f32 %v980, %v1020
    %1022 = vmatmul.f32.gmra.mxu0 %v98
    %v1023 = vpop.f32.mrf.mxu0
    %v1024 = vadd.f32 %v983, %v1023
    %1025 = vmatmul.f32.gmra.mxu0 %v100
    %v1026 = vpop.f32.mrf.mxu0
    %v1027 = vadd.f32 %v986, %v1026
    %1028 = vmatmul.f32.gmra.mxu0 %v102
    %v1029 = vpop.f32.mrf.mxu0
    %v1030 = vadd.f32 %v989, %v1029
    %1031 = vmatmul.f32.gmra.mxu0 %v104
    %v1032 = vpop.f32.mrf.mxu0
    %v1033 = vadd.f32 %v992, %v1032
    %1034 = vdwg.mxu0
    %1035 = vst [vmem:[#allocation2] sm:$0xff] %v438
    %1036 = vst [vmem:[#allocation2 + $0x8] sm:$0xff] %v520
    %1037 = vst [vmem:[#allocation2 + $0x10] sm:$0xff] %v602
    %1038 = vst [vmem:[#allocation2 + $0x18] sm:$0xff] %v684
    %1039 = vst [vmem:[#allocation2 + $0x20] sm:$0xff] %v766
    %1040 = vst [vmem:[#allocation2 + $0x28] sm:$0xff] %v848
    %1041 = vst [vmem:[#allocation2 + $0x30] sm:$0xff] %v930
    %1042 = vst [vmem:[#allocation2 + $0x38] sm:$0xff] %v1012
    %1043 = vst [vmem:[#allocation2 + $0x40] sm:$0xff] %v441
    %1044 = vst [vmem:[#allocation2 + $0x48] sm:$0xff] %v523
    %1045 = vst [vmem:[#allocation2 + $0x50] sm:$0xff] %v605
    %1046 = vst [vmem:[#allocation2 + $0x58] sm:$0xff] %v687
    %1047 = vst [vmem:[#allocation2 + $0x60] sm:$0xff] %v769
    %1048 = vst [vmem:[#allocation2 + $0x68] sm:$0xff] %v851
    %1049 = vst [vmem:[#allocation2 + $0x70] sm:$0xff] %v933
    %1050 = vst [vmem:[#allocation2 + $0x78] sm:$0xff] %v1015
    %1051 = vst [vmem:[#allocation2 + $0x80] sm:$0xff] %v444
    %1052 = vst [vmem:[#allocation2 + $0x88] sm:$0xff] %v526
    %1053 = vst [vmem:[#allocation2 + $0x90] sm:$0xff] %v608
    %1054 = vst [vmem:[#allocation2 + $0x98] sm:$0xff] %v690
    %1055 = vst [vmem:[#allocation2 + $0xa0] sm:$0xff] %v772
    %1056 = vst [vmem:[#allocation2 + $0xa8] sm:$0xff] %v854
    %1057 = vst [vmem:[#allocation2 + $0xb0] sm:$0xff] %v936
    %1058 = vst [vmem:[#allocation2 + $0xb8] sm:$0xff] %v1018
    %1059 = vst [vmem:[#allocation2 + $0xc0] sm:$0xff] %v447
    %1060 = vst [vmem:[#allocation2 + $0xc8] sm:$0xff] %v529
    %1061 = vst [vmem:[#allocation2 + $0xd0] sm:$0xff] %v611
    %1062 = vst [vmem:[#allocation2 + $0xd8] sm:$0xff] %v693
    %1063 = vst [vmem:[#allocation2 + $0xe0] sm:$0xff] %v775
    %1064 = vst [vmem:[#allocation2 + $0xe8] sm:$0xff] %v857
    %1065 = vst [vmem:[#allocation2 + $0xf0] sm:$0xff] %v939
    %1066 = vst [vmem:[#allocation2 + $0xf8] sm:$0xff] %v1021
    %1067 = vst [vmem:[#allocation2 + $0x100] sm:$0xff] %v450
    %1068 = vst [vmem:[#allocation2 + $0x108] sm:$0xff] %v532
    %1069 = vst [vmem:[#allocation2 + $0x110] sm:$0xff] %v614
    %1070 = vst [vmem:[#allocation2 + $0x118] sm:$0xff] %v696
    %1071 = vst [vmem:[#allocation2 + $0x120] sm:$0xff] %v778
    %1072 = vst [vmem:[#allocation2 + $0x128] sm:$0xff] %v860
    %1073 = vst [vmem:[#allocation2 + $0x130] sm:$0xff] %v942
    %1074 = vst [vmem:[#allocation2 + $0x138] sm:$0xff] %v1024
    %1075 = vst [vmem:[#allocation2 + $0x140] sm:$0xff] %v453
    %1076 = vst [vmem:[#allocation2 + $0x148] sm:$0xff] %v535
    %1077 = vst [vmem:[#allocation2 + $0x150] sm:$0xff] %v617
    %1078 = vst [vmem:[#allocation2 + $0x158] sm:$0xff] %v699
    %1079 = vst [vmem:[#allocation2 + $0x160] sm:$0xff] %v781
    %1080 = vst [vmem:[#allocation2 + $0x168] sm:$0xff] %v863
    %1081 = vst [vmem:[#allocation2 + $0x170] sm:$0xff] %v945
    %1082 = vst [vmem:[#allocation2 + $0x178] sm:$0xff] %v1027
    %1083 = vst [vmem:[#allocation2 + $0x180] sm:$0xff] %v456
    %1084 = vst [vmem:[#allocation2 + $0x188] sm:$0xff] %v538
    %1085 = vst [vmem:[#allocation2 + $0x190] sm:$0xff] %v620
    %1086 = vst [vmem:[#allocation2 + $0x198] sm:$0xff] %v702
    %1087 = vst [vmem:[#allocation2 + $0x1a0] sm:$0xff] %v784
    %1088 = vst [vmem:[#allocation2 + $0x1a8] sm:$0xff] %v866
    %1089 = vst [vmem:[#allocation2 + $0x1b0] sm:$0xff] %v948
    %1090 = vst [vmem:[#allocation2 + $0x1b8] sm:$0xff] %v1030
    %1091 = vst [vmem:[#allocation2 + $0x1c0] sm:$0xff] %v459
    %1092 = vst [vmem:[#allocation2 + $0x1c8] sm:$0xff] %v541
    %1093 = vst [vmem:[#allocation2 + $0x1d0] sm:$0xff] %v623
    %1094 = vst [vmem:[#allocation2 + $0x1d8] sm:$0xff] %v705
    %1095 = vst [vmem:[#allocation2 + $0x1e0] sm:$0xff] %v787
    %1096 = vst [vmem:[#allocation2 + $0x1e8] sm:$0xff] %v869
    %1097 = vst [vmem:[#allocation2 + $0x1f0] sm:$0xff] %v951
    %1098 = vst [vmem:[#allocation2 + $0x1f8] sm:$0xff] %v1033
    %v1099 = vld [vmem:[#allocation2] sm:$0xff]
    %v1100 = vld [vmem:[#allocation2 + $0x8] sm:$0xff]
    %v1101 = vld [vmem:[#allocation2 + $0x10] sm:$0xff]
    %v1102 = vld [vmem:[#allocation2 + $0x18] sm:$0xff]
    %v1103 = vld [vmem:[#allocation2 + $0x1e0] sm:$0xff]
    %v1104 = vld [vmem:[#allocation2 + $0x1e8] sm:$0xff]
    %v1105 = vld [vmem:[#allocation2 + $0x1f0] sm:$0xff]
    %v1106 = vld [vmem:[#allocation2 + $0x1f8] sm:$0xff]
    %v1107 = vld [vmem:[#allocation5] sm:$0xff]
    %v1108 = vld [vmem:[#allocation5 + $0x8] sm:$0xff]
    %v1109 = vld [vmem:[#allocation5 + $0x10] sm:$0xff]
    %v1110 = vld [vmem:[#allocation5 + $0x18] sm:$0xff]
    %v1111 = vld [vmem:[#allocation5 + $0x20] sm:$0xff]
    %v1112 = vld [vmem:[#allocation5 + $0x28] sm:$0xff]
    %v1113 = vld [vmem:[#allocation5 + $0x30] sm:$0xff]
    %v1114 = vld [vmem:[#allocation5 + $0x38] sm:$0xff]
    %v1115 = vld [vmem:[#allocation5 + $0x40] sm:$0xff]
    %v1116 = vld [vmem:[#allocation5 + $0x48] sm:$0xff]
    %v1117 = vld [vmem:[#allocation5 + $0x50] sm:$0xff]
    %v1118 = vld [vmem:[#allocation5 + $0x58] sm:$0xff]
    %v1119 = vld [vmem:[#allocation5 + $0x60] sm:$0xff]
    %v1120 = vld [vmem:[#allocation5 + $0x68] sm:$0xff]
    %v1121 = vld [vmem:[#allocation5 + $0x70] sm:$0xff]
    %v1122 = vld [vmem:[#allocation5 + $0x78] sm:$0xff]
    %v1123 = vld [vmem:[#allocation5 + $0x80] sm:$0xff]
    %v1124 = vld [vmem:[#allocation5 + $0x88] sm:$0xff]
    %v1125 = vld [vmem:[#allocation5 + $0x90] sm:$0xff]
    %v1126 = vld [vmem:[#allocation5 + $0x98] sm:$0xff]
    %v1127 = vld [vmem:[#allocation5 + $0xa0] sm:$0xff]
    %v1128 = vld [vmem:[#allocation5 + $0xa8] sm:$0xff]
    %v1129 = vld [vmem:[#allocation5 + $0xb0] sm:$0xff]
    %v1130 = vld [vmem:[#allocation5 + $0xb8] sm:$0xff]
    %v1131 = vld [vmem:[#allocation5 + $0xc0] sm:$0xff]
    %v1132 = vld [vmem:[#allocation5 + $0xc8] sm:$0xff]
    %v1133 = vld [vmem:[#allocation5 + $0xd0] sm:$0xff]
    %v1134 = vld [vmem:[#allocation5 + $0xd8] sm:$0xff]
    %v1135 = vld [vmem:[#allocation5 + $0xe0] sm:$0xff]
    %v1136 = vld [vmem:[#allocation5 + $0xe8] sm:$0xff]
    %v1137 = vld [vmem:[#allocation5 + $0xf0] sm:$0xff]
    %v1138 = vld [vmem:[#allocation5 + $0xf8] sm:$0xff]
    %v1139 = vld [vmem:[#allocation5 + $0x100] sm:$0xff]
    %v1140 = vld [vmem:[#allocation5 + $0x108] sm:$0xff]
    %v1141 = vld [vmem:[#allocation5 + $0x110] sm:$0xff]
    %v1142 = vld [vmem:[#allocation5 + $0x118] sm:$0xff]
    %v1143 = vld [vmem:[#allocation5 + $0x120] sm:$0xff]
    %v1144 = vld [vmem:[#allocation5 + $0x128] sm:$0xff]
    %v1145 = vld [vmem:[#allocation5 + $0x130] sm:$0xff]
    %v1146 = vld [vmem:[#allocation5 + $0x138] sm:$0xff]
    %v1147 = vld [vmem:[#allocation5 + $0x140] sm:$0xff]
    %v1148 = vld [vmem:[#allocation5 + $0x148] sm:$0xff]
    %v1149 = vld [vmem:[#allocation5 + $0x150] sm:$0xff]
    %v1150 = vld [vmem:[#allocation5 + $0x158] sm:$0xff]
    %v1151 = vld [vmem:[#allocation5 + $0x160] sm:$0xff]
    %v1152 = vld [vmem:[#allocation5 + $0x168] sm:$0xff]
    %v1153 = vld [vmem:[#allocation5 + $0x170] sm:$0xff]
    %v1154 = vld [vmem:[#allocation5 + $0x178] sm:$0xff]
    %v1155 = vld [vmem:[#allocation5 + $0x180] sm:$0xff]
    %v1156 = vld [vmem:[#allocation5 + $0x188] sm:$0xff]
    %v1157 = vld [vmem:[#allocation5 + $0x190] sm:$0xff]
    %v1158 = vld [vmem:[#allocation5 + $0x198] sm:$0xff]
    %v1159 = vld [vmem:[#allocation5 + $0x1a0] sm:$0xff]
    %v1160 = vld [vmem:[#allocation5 + $0x1a8] sm:$0xff]
    %v1161 = vld [vmem:[#allocation5 + $0x1b0] sm:$0xff]
    %v1162 = vld [vmem:[#allocation5 + $0x1b8] sm:$0xff]
    %v1163 = vld [vmem:[#allocation5 + $0x1c0] sm:$0xff]
    %v1164 = vld [vmem:[#allocation5 + $0x1c8] sm:$0xff]
    %v1165 = vld [vmem:[#allocation5 + $0x1d0] sm:$0xff]
    %v1166 = vld [vmem:[#allocation5 + $0x1d8] sm:$0xff]
    %v1167 = vld [vmem:[#allocation5 + $0x1e0] sm:$0xff]
    %v1168 = vld [vmem:[#allocation5 + $0x1e8] sm:$0xff]
    %v1169 = vld [vmem:[#allocation5 + $0x1f0] sm:$0xff]
    %v1170 = vld [vmem:[#allocation5 + $0x1f8] sm:$0xff]
    %1171 = vmatpush.msra.mxu0 %v1167
    %1172 = vmatpush.msra.mxu0 %v1163
    %1173 = vmatpush.msra.mxu0 %v1159
    %1174 = vmatpush.msra.mxu0 %v1155
    %1175 = vmatpush.msra.mxu0 %v1151
    %1176 = vmatpush.msra.mxu0 %v1147
    %1177 = vmatpush.msra.mxu0 %v1143
    %1178 = vmatpush.msra.mxu0 %v1139
    %1179 = vmatpush.msra.mxu0 %v1135
    %1180 = vmatpush.msra.mxu0 %v1131
    %1181 = vmatpush.msra.mxu0 %v1127
    %1182 = vmatpush.msra.mxu0 %v1123
    %1183 = vmatpush.msra.mxu0 %v1119
    %1184 = vmatpush.msra.mxu0 %v1115
    %1185 = vmatpush.msra.mxu0 %v1111
    %1186 = vmatpush.msra.mxu0 %v1107
    %1187 = vmatmul.f32.gmra.mxu0 0.0
    %v1188 = vpop.f32.mrf.mxu0
    %v1189 = vadd.f32 0.0, %v1188
    %1190 = vdwg.mxu0
    %1191 = vmatpush.msra.mxu0 %v1168
    %1192 = vmatpush.msra.mxu0 %v1164
    %1193 = vmatpush.msra.mxu0 %v1160
    %1194 = vmatpush.msra.mxu0 %v1156
    %1195 = vmatpush.msra.mxu0 %v1152
    %1196 = vmatpush.msra.mxu0 %v1148
    %1197 = vmatpush.msra.mxu0 %v1144
    %1198 = vmatpush.msra.mxu0 %v1140
    %1199 = vmatpush.msra.mxu0 %v1136
    %1200 = vmatpush.msra.mxu0 %v1132
    %1201 = vmatpush.msra.mxu0 %v1128
    %1202 = vmatpush.msra.mxu0 %v1124
    %1203 = vmatpush.msra.mxu0 %v1120
    %1204 = vmatpush.msra.mxu0 %v1116
    %1205 = vmatpush.msra.mxu0 %v1112
    %1206 = vmatpush.msra.mxu0 %v1108
    %1207 = vmatmul.f32.gmra.mxu0 0.0
    %v1208 = vpop.f32.mrf.mxu0
    %v1209 = vadd.f32 0.0, %v1208
    %1210 = vdwg.mxu0
    %1211 = vmatpush.msra.mxu0 %v1169
    %1212 = vmatpush.msra.mxu0 %v1165
    %1213 = vmatpush.msra.mxu0 %v1161
    %1214 = vmatpush.msra.mxu0 %v1157
    %1215 = vmatpush.msra.mxu0 %v1153
    %1216 = vmatpush.msra.mxu0 %v1149
    %1217 = vmatpush.msra.mxu0 %v1145
    %1218 = vmatpush.msra.mxu0 %v1141
    %1219 = vmatpush.msra.mxu0 %v1137
    %1220 = vmatpush.msra.mxu0 %v1133
    %1221 = vmatpush.msra.mxu0 %v1129
    %1222 = vmatpush.msra.mxu0 %v1125
    %1223 = vmatpush.msra.mxu0 %v1121
    %1224 = vmatpush.msra.mxu0 %v1117
    %1225 = vmatpush.msra.mxu0 %v1113
    %1226 = vmatpush.msra.mxu0 %v1109
    %1227 = vmatmul.f32.gmra.mxu0 0.0
    %v1228 = vpop.f32.mrf.mxu0
    %v1229 = vadd.f32 0.0, %v1228
    %1230 = vdwg.mxu0
    %1231 = vmatpush.msra.mxu0 %v1170
    %1232 = vmatpush.msra.mxu0 %v1166
    %1233 = vmatpush.msra.mxu0 %v1162
    %1234 = vmatpush.msra.mxu0 %v1158
    %1235 = vmatpush.msra.mxu0 %v1154
    %1236 = vmatpush.msra.mxu0 %v1150
    %1237 = vmatpush.msra.mxu0 %v1146
    %1238 = vmatpush.msra.mxu0 %v1142
    %1239 = vmatpush.msra.mxu0 %v1138
    %1240 = vmatpush.msra.mxu0 %v1134
    %1241 = vmatpush.msra.mxu0 %v1130
    %1242 = vmatpush.msra.mxu0 %v1126
    %1243 = vmatpush.msra.mxu0 %v1122
    %1244 = vmatpush.msra.mxu0 %v1118
    %1245 = vmatpush.msra.mxu0 %v1114
    %1246 = vmatpush.msra.mxu0 %v1110
    %1247 = vmatmul.f32.gmra.mxu0 0.0
    %v1248 = vpop.f32.mrf.mxu0
    %v1249 = vadd.f32 0.0, %v1248
    %1250 = vdwg.mxu0
    %v1251 = vadd.f32 %v1099, %v1189
    %v1252 = vadd.f32 %v1100, %v1209
    %v1253 = vadd.f32 %v1101, %v1229
    %v1254 = vadd.f32 %v1102, %v1249
    %v1255 = vxor.u32 %v1251, 2147483648
    %v1256 = vmul.f32 %v1255, 1.442695
    %v1257 = vpow.pop %v1256
    %v1258 = vadd.f32 %v1257, 1.0
    %v1259 = vrcp.pop %v1258
    %v1260 = vmul.f32 %v1258, %v1259
    %v1261 = vsub.f32 1.0, %v1260
    %v1262 = vmul.f32 %v1259, %v1261
    %v1263 = vadd.f32 %v1259, %v1262
    %vm1264 = vweird.f32 %v1258
    %vm1265 = vweird.f32 %v1259
    %vm1266 = vmor %vm1264, %vm1265
    %v1267 = vsel %vm1266, %v1259, %v1263
    %v1268 = vand.u32 2147483647, %v1258
    %vm1269 = vcmp.eq.f32.partialorder %v1268, 8.507059e+37
    %v1270 = vand.u32 %v1258, 2147483648
    %v1271 = vor.u32 1.1754944e-38, %v1270
    %v1272 = vsel %vm1269, %v1271, %v1267
    %v1273 = vmul.f32 1.0, %v1272
    %v1274 = vxor.u32 %v1252, 2147483648
    %v1275 = vmul.f32 %v1274, 1.442695
    %v1276 = vpow.pop %v1275
    %v1277 = vadd.f32 %v1276, 1.0
    %v1278 = vrcp.pop %v1277
    %v1279 = vmul.f32 %v1277, %v1278
    %v1280 = vsub.f32 1.0, %v1279
    %v1281 = vmul.f32 %v1278, %v1280
    %v1282 = vadd.f32 %v1278, %v1281
    %vm1283 = vweird.f32 %v1277
    %vm1284 = vweird.f32 %v1278
    %vm1285 = vmor %vm1283, %vm1284
    %v1286 = vsel %vm1285, %v1278, %v1282
    %v1287 = vand.u32 2147483647, %v1277
    %vm1288 = vcmp.eq.f32.partialorder %v1287, 8.507059e+37
    %v1289 = vand.u32 %v1277, 2147483648
    %v1290 = vor.u32 1.1754944e-38, %v1289
    %v1291 = vsel %vm1288, %v1290, %v1286
    %v1292 = vmul.f32 1.0, %v1291
    %v1293 = vtanh.pop %v1253
    %v1294 = vxor.u32 %v1254, 2147483648
    %v1295 = vmul.f32 %v1294, 1.442695
    %v1296 = vpow.pop %v1295
    %v1297 = vadd.f32 %v1296, 1.0
    %v1298 = vrcp.pop %v1297
    %v1299 = vmul.f32 %v1297, %v1298
    %v1300 = vsub.f32 1.0, %v1299
    %v1301 = vmul.f32 %v1298, %v1300
    %v1302 = vadd.f32 %v1298, %v1301
    %vm1303 = vweird.f32 %v1297
    %vm1304 = vweird.f32 %v1298
    %vm1305 = vmor %vm1303, %vm1304
    %v1306 = vsel %vm1305, %v1298, %v1302
    %v1307 = vand.u32 2147483647, %v1297
    %vm1308 = vcmp.eq.f32.partialorder %v1307, 8.507059e+37
    %v1309 = vand.u32 %v1297, 2147483648
    %v1310 = vor.u32 1.1754944e-38, %v1309
    %v1311 = vsel %vm1308, %v1310, %v1306
    %v1312 = vmul.f32 1.0, %v1311
    %v1313 = vmul.f32 %v1292, 0.0
    %v1314 = vmul.f32 %v1273, %v1293
    %v1315 = vadd.f32 %v1313, %v1314
    %v1316 = vtanh.pop %v1315
    %v1317 = vmul.f32 %v1312, %v1316
    %v1318 = vld [vmem:[#allocation7] sm:$0xff]
    %v1319 = vld [vmem:[#allocation7 + $0x8] sm:$0xff]
    %v1320 = vld [vmem:[#allocation7 + $0x10] sm:$0xff]
    %v1321 = vld [vmem:[#allocation7 + $0x18] sm:$0xff]
    %v1322 = vld [vmem:[#allocation7 + $0x20] sm:$0xff]
    %v1323 = vld [vmem:[#allocation7 + $0x28] sm:$0xff]
    %v1324 = vld [vmem:[#allocation7 + $0x30] sm:$0xff]
    %v1325 = vld [vmem:[#allocation7 + $0x38] sm:$0xff]
    %v1326 = vld [vmem:[#allocation7 + $0x40] sm:$0xff]
    %v1327 = vld [vmem:[#allocation7 + $0x48] sm:$0xff]
    %v1328 = vld [vmem:[#allocation7 + $0x50] sm:$0xff]
    %v1329 = vld [vmem:[#allocation7 + $0x58] sm:$0xff]
    %v1330 = vld [vmem:[#allocation7 + $0x60] sm:$0xff]
    %v1331 = vld [vmem:[#allocation7 + $0x68] sm:$0xff]
    %v1332 = vld [vmem:[#allocation7 + $0x70] sm:$0xff]
    %v1333 = vld [vmem:[#allocation7 + $0x78] sm:$0xff]
    %v1334 = vld [vmem:[#allocation7 + $0x80] sm:$0xff]
    %v1335 = vld [vmem:[#allocation7 + $0x88] sm:$0xff]
    %v1336 = vld [vmem:[#allocation7 + $0x90] sm:$0xff]
    %v1337 = vld [vmem:[#allocation7 + $0x98] sm:$0xff]
    %v1338 = vld [vmem:[#allocation7 + $0xa0] sm:$0xff]
    %v1339 = vld [vmem:[#allocation7 + $0xa8] sm:$0xff]
    %v1340 = vld [vmem:[#allocation7 + $0xb0] sm:$0xff]
    %v1341 = vld [vmem:[#allocation7 + $0xb8] sm:$0xff]
    %v1342 = vld [vmem:[#allocation7 + $0xc0] sm:$0xff]
    %v1343 = vld [vmem:[#allocation7 + $0xc8] sm:$0xff]
    %v1344 = vld [vmem:[#allocation7 + $0xd0] sm:$0xff]
    %v1345 = vld [vmem:[#allocation7 + $0xd8] sm:$0xff]
    %v1346 = vld [vmem:[#allocation7 + $0xe0] sm:$0xff]
    %v1347 = vld [vmem:[#allocation7 + $0xe8] sm:$0xff]
    %v1348 = vld [vmem:[#allocation7 + $0xf0] sm:$0xff]
    %v1349 = vld [vmem:[#allocation7 + $0xf8] sm:$0xff]
    %v1350 = vld [vmem:[#allocation7 + $0x100] sm:$0xff]
    %v1351 = vld [vmem:[#allocation7 + $0x108] sm:$0xff]
    %v1352 = vld [vmem:[#allocation7 + $0x110] sm:$0xff]
    %v1353 = vld [vmem:[#allocation7 + $0x118] sm:$0xff]
    %v1354 = vld [vmem:[#allocation7 + $0x120] sm:$0xff]
    %v1355 = vld [vmem:[#allocation7 + $0x128] sm:$0xff]
    %v1356 = vld [vmem:[#allocation7 + $0x130] sm:$0xff]
    %v1357 = vld [vmem:[#allocation7 + $0x138] sm:$0xff]
    %v1358 = vld [vmem:[#allocation7 + $0x140] sm:$0xff]
    %v1359 = vld [vmem:[#allocation7 + $0x148] sm:$0xff]
    %v1360 = vld [vmem:[#allocation7 + $0x150] sm:$0xff]
    %v1361 = vld [vmem:[#allocation7 + $0x158] sm:$0xff]
    %v1362 = vld [vmem:[#allocation7 + $0x160] sm:$0xff]
    %v1363 = vld [vmem:[#allocation7 + $0x168] sm:$0xff]
    %v1364 = vld [vmem:[#allocation7 + $0x170] sm:$0xff]
    %v1365 = vld [vmem:[#allocation7 + $0x178] sm:$0xff]
    %v1366 = vld [vmem:[#allocation7 + $0x180] sm:$0xff]
    %v1367 = vld [vmem:[#allocation7 + $0x188] sm:$0xff]
    %v1368 = vld [vmem:[#allocation7 + $0x190] sm:$0xff]
    %v1369 = vld [vmem:[#allocation7 + $0x198] sm:$0xff]
    %v1370 = vld [vmem:[#allocation7 + $0x1a0] sm:$0xff]
    %v1371 = vld [vmem:[#allocation7 + $0x1a8] sm:$0xff]
    %v1372 = vld [vmem:[#allocation7 + $0x1b0] sm:$0xff]
    %v1373 = vld [vmem:[#allocation7 + $0x1b8] sm:$0xff]
    %v1374 = vld [vmem:[#allocation7 + $0x1c0] sm:$0xff]
    %v1375 = vld [vmem:[#allocation7 + $0x1c8] sm:$0xff]
    %v1376 = vld [vmem:[#allocation7 + $0x1d0] sm:$0xff]
    %v1377 = vld [vmem:[#allocation7 + $0x1d8] sm:$0xff]
    %v1378 = vld [vmem:[#allocation7 + $0x1e0] sm:$0xff]
    %v1379 = vld [vmem:[#allocation7 + $0x1e8] sm:$0xff]
    %v1380 = vld [vmem:[#allocation7 + $0x1f0] sm:$0xff]
    %v1381 = vld [vmem:[#allocation7 + $0x1f8] sm:$0xff]
    %1382 = vmatpush.msra.mxu0 %v1378
    %1383 = vmatpush.msra.mxu0 %v1374
    %1384 = vmatpush.msra.mxu0 %v1370
    %1385 = vmatpush.msra.mxu0 %v1366
    %1386 = vmatpush.msra.mxu0 %v1362
    %1387 = vmatpush.msra.mxu0 %v1358
    %1388 = vmatpush.msra.mxu0 %v1354
    %1389 = vmatpush.msra.mxu0 %v1350
    %1390 = vmatpush.msra.mxu0 %v1346
    %1391 = vmatpush.msra.mxu0 %v1342
    %1392 = vmatpush.msra.mxu0 %v1338
    %1393 = vmatpush.msra.mxu0 %v1334
    %1394 = vmatpush.msra.mxu0 %v1330
    %1395 = vmatpush.msra.mxu0 %v1326
    %1396 = vmatpush.msra.mxu0 %v1322
    %1397 = vmatpush.msra.mxu0 %v1318
    %1398 = vmatmul.f32.gmra.mxu0 0.0
    %v1399 = vpop.f32.mrf.mxu0
    %v1400 = vadd.f32 0.0, %v1399
    %1401 = vdwg.mxu0
    %1402 = vmatpush.msra.mxu0 %v1379
    %1403 = vmatpush.msra.mxu0 %v1375
    %1404 = vmatpush.msra.mxu0 %v1371
    %1405 = vmatpush.msra.mxu0 %v1367
    %1406 = vmatpush.msra.mxu0 %v1363
    %1407 = vmatpush.msra.mxu0 %v1359
    %1408 = vmatpush.msra.mxu0 %v1355
    %1409 = vmatpush.msra.mxu0 %v1351
    %1410 = vmatpush.msra.mxu0 %v1347
    %1411 = vmatpush.msra.mxu0 %v1343
    %1412 = vmatpush.msra.mxu0 %v1339
    %1413 = vmatpush.msra.mxu0 %v1335
    %1414 = vmatpush.msra.mxu0 %v1331
    %1415 = vmatpush.msra.mxu0 %v1327
    %1416 = vmatpush.msra.mxu0 %v1323
    %1417 = vmatpush.msra.mxu0 %v1319
    %1418 = vmatmul.f32.gmra.mxu0 0.0
    %v1419 = vpop.f32.mrf.mxu0
    %v1420 = vadd.f32 0.0, %v1419
    %1421 = vdwg.mxu0
    %1422 = vmatpush.msra.mxu0 %v1380
    %1423 = vmatpush.msra.mxu0 %v1376
    %1424 = vmatpush.msra.mxu0 %v1372
    %1425 = vmatpush.msra.mxu0 %v1368
    %1426 = vmatpush.msra.mxu0 %v1364
    %1427 = vmatpush.msra.mxu0 %v1360
    %1428 = vmatpush.msra.mxu0 %v1356
    %1429 = vmatpush.msra.mxu0 %v1352
    %1430 = vmatpush.msra.mxu0 %v1348
    %1431 = vmatpush.msra.mxu0 %v1344
    %1432 = vmatpush.msra.mxu0 %v1340
    %1433 = vmatpush.msra.mxu0 %v1336
    %1434 = vmatpush.msra.mxu0 %v1332
    %1435 = vmatpush.msra.mxu0 %v1328
    %1436 = vmatpush.msra.mxu0 %v1324
    %1437 = vmatpush.msra.mxu0 %v1320
    %1438 = vmatmul.f32.gmra.mxu0 0.0
    %v1439 = vpop.f32.mrf.mxu0
    %v1440 = vadd.f32 0.0, %v1439
    %1441 = vdwg.mxu0
    %1442 = vmatpush.msra.mxu0 %v1381
    %1443 = vmatpush.msra.mxu0 %v1377
    %1444 = vmatpush.msra.mxu0 %v1373
    %1445 = vmatpush.msra.mxu0 %v1369
    %1446 = vmatpush.msra.mxu0 %v1365
    %1447 = vmatpush.msra.mxu0 %v1361
    %1448 = vmatpush.msra.mxu0 %v1357
    %1449 = vmatpush.msra.mxu0 %v1353
    %1450 = vmatpush.msra.mxu0 %v1349
    %1451 = vmatpush.msra.mxu0 %v1345
    %1452 = vmatpush.msra.mxu0 %v1341
    %1453 = vmatpush.msra.mxu0 %v1337
    %1454 = vmatpush.msra.mxu0 %v1333
    %1455 = vmatpush.msra.mxu0 %v1329
    %1456 = vmatpush.msra.mxu0 %v1325
    %1457 = vmatpush.msra.mxu0 %v1321
    %1458 = vmatmul.f32.gmra.mxu0 0.0
    %v1459 = vpop.f32.mrf.mxu0
    %v1460 = vadd.f32 0.0, %v1459
    %1461 = vdwg.mxu0
    %v1462 = vadd.f32 %v1103, %v1400
    %v1463 = vadd.f32 %v1104, %v1420
    %v1464 = vadd.f32 %v1105, %v1440
    %v1465 = vadd.f32 %v1106, %v1460
    %v1466 = vxor.u32 %v1462, 2147483648
    %v1467 = vmul.f32 %v1466, 1.442695
    %v1468 = vpow.pop %v1467
    %v1469 = vadd.f32 %v1468, 1.0
    %v1470 = vrcp.pop %v1469
    %v1471 = vmul.f32 %v1469, %v1470
    %v1472 = vsub.f32 1.0, %v1471
    %v1473 = vmul.f32 %v1470, %v1472
    %v1474 = vadd.f32 %v1470, %v1473
    %vm1475 = vweird.f32 %v1469
    %vm1476 = vweird.f32 %v1470
    %vm1477 = vmor %vm1475, %vm1476
    %v1478 = vsel %vm1477, %v1470, %v1474
    %v1479 = vand.u32 2147483647, %v1469
    %vm1480 = vcmp.eq.f32.partialorder %v1479, 8.507059e+37
    %v1481 = vand.u32 %v1469, 2147483648
    %v1482 = vor.u32 1.1754944e-38, %v1481
    %v1483 = vsel %vm1480, %v1482, %v1478
    %v1484 = vmul.f32 1.0, %v1483
    %v1485 = vxor.u32 %v1463, 2147483648
    %v1486 = vmul.f32 %v1485, 1.442695
    %v1487 = vpow.pop %v1486
    %v1488 = vadd.f32 %v1487, 1.0
    %v1489 = vrcp.pop %v1488
    %v1490 = vmul.f32 %v1488, %v1489
    %v1491 = vsub.f32 1.0, %v1490
    %v1492 = vmul.f32 %v1489, %v1491
    %v1493 = vadd.f32 %v1489, %v1492
    %vm1494 = vweird.f32 %v1488
    %vm1495 = vweird.f32 %v1489
    %vm1496 = vmor %vm1494, %vm1495
    %v1497 = vsel %vm1496, %v1489, %v1493
    %v1498 = vand.u32 2147483647, %v1488
    %vm1499 = vcmp.eq.f32.partialorder %v1498, 8.507059e+37
    %v1500 = vand.u32 %v1488, 2147483648
    %v1501 = vor.u32 1.1754944e-38, %v1500
    %v1502 = vsel %vm1499, %v1501, %v1497
    %v1503 = vmul.f32 1.0, %v1502
    %v1504 = vtanh.pop %v1464
    %v1505 = vxor.u32 %v1465, 2147483648
    %v1506 = vmul.f32 %v1505, 1.442695
    %v1507 = vpow.pop %v1506
    %v1508 = vadd.f32 %v1507, 1.0
    %v1509 = vrcp.pop %v1508
    %v1510 = vmul.f32 %v1508, %v1509
    %v1511 = vsub.f32 1.0, %v1510
    %v1512 = vmul.f32 %v1509, %v1511
    %v1513 = vadd.f32 %v1509, %v1512
    %vm1514 = vweird.f32 %v1508
    %vm1515 = vweird.f32 %v1509
    %vm1516 = vmor %vm1514, %vm1515
    %v1517 = vsel %vm1516, %v1509, %v1513
    %v1518 = vand.u32 2147483647, %v1508
    %vm1519 = vcmp.eq.f32.partialorder %v1518, 8.507059e+37
    %v1520 = vand.u32 %v1508, 2147483648
    %v1521 = vor.u32 1.1754944e-38, %v1520
    %v1522 = vsel %vm1519, %v1521, %v1517
    %v1523 = vmul.f32 1.0, %v1522
    %v1524 = vmul.f32 %v1503, 0.0
    %v1525 = vmul.f32 %v1484, %v1504
    %v1526 = vadd.f32 %v1524, %v1525
    %v1527 = vtanh.pop %v1526
    %v1528 = vmul.f32 %v1523, %v1527
    %v1529 = vld [vmem:[#allocation2 + $0x40] sm:$0xff]
    %v1530 = vld [vmem:[#allocation2 + $0x48] sm:$0xff]
    %v1531 = vld [vmem:[#allocation2 + $0x50] sm:$0xff]
    %v1532 = vld [vmem:[#allocation2 + $0x58] sm:$0xff]
    %1533 = vmatpush.msra.mxu0 %v1167
    %1534 = vmatpush.msra.mxu0 %v1163
    %1535 = vmatpush.msra.mxu0 %v1159
    %1536 = vmatpush.msra.mxu0 %v1155
    %1537 = vmatpush.msra.mxu0 %v1151
    %1538 = vmatpush.msra.mxu0 %v1147
    %1539 = vmatpush.msra.mxu0 %v1143
    %1540 = vmatpush.msra.mxu0 %v1139
    %1541 = vmatpush.msra.mxu0 %v1135
    %1542 = vmatpush.msra.mxu0 %v1131
    %1543 = vmatpush.msra.mxu0 %v1127
    %1544 = vmatpush.msra.mxu0 %v1123
    %1545 = vmatpush.msra.mxu0 %v1119
    %1546 = vmatpush.msra.mxu0 %v1115
    %1547 = vmatpush.msra.mxu0 %v1111
    %1548 = vmatpush.msra.mxu0 %v1107
    %1549 = vmatmul.f32.gmra.mxu0 %v1317
    %v1550 = vpop.f32.mrf.mxu0
    %v1551 = vadd.f32 0.0, %v1550
    %1552 = vdwg.mxu0
    %1553 = vmatpush.msra.mxu0 %v1168
    %1554 = vmatpush.msra.mxu0 %v1164
    %1555 = vmatpush.msra.mxu0 %v1160
    %1556 = vmatpush.msra.mxu0 %v1156
    %1557 = vmatpush.msra.mxu0 %v1152
    %1558 = vmatpush.msra.mxu0 %v1148
    %1559 = vmatpush.msra.mxu0 %v1144
    %1560 = vmatpush.msra.mxu0 %v1140
    %1561 = vmatpush.msra.mxu0 %v1136
    %1562 = vmatpush.msra.mxu0 %v1132
    %1563 = vmatpush.msra.mxu0 %v1128
    %1564 = vmatpush.msra.mxu0 %v1124
    %1565 = vmatpush.msra.mxu0 %v1120
    %1566 = vmatpush.msra.mxu0 %v1116
    %1567 = vmatpush.msra.mxu0 %v1112
    %1568 = vmatpush.msra.mxu0 %v1108
    %1569 = vmatmul.f32.gmra.mxu0 %v1317
    %v1570 = vpop.f32.mrf.mxu0
    %v1571 = vadd.f32 0.0, %v1570
    %1572 = vdwg.mxu0
    %1573 = vmatpush.msra.mxu0 %v1169
    %1574 = vmatpush.msra.mxu0 %v1165
    %1575 = vmatpush.msra.mxu0 %v1161
    %1576 = vmatpush.msra.mxu0 %v1157
    %1577 = vmatpush.msra.mxu0 %v1153
    %1578 = vmatpush.msra.mxu0 %v1149
    %1579 = vmatpush.msra.mxu0 %v1145
    %1580 = vmatpush.msra.mxu0 %v1141
    %1581 = vmatpush.msra.mxu0 %v1137
    %1582 = vmatpush.msra.mxu0 %v1133
    %1583 = vmatpush.msra.mxu0 %v1129
    %1584 = vmatpush.msra.mxu0 %v1125
    %1585 = vmatpush.msra.mxu0 %v1121
    %1586 = vmatpush.msra.mxu0 %v1117
    %1587 = vmatpush.msra.mxu0 %v1113
    %1588 = vmatpush.msra.mxu0 %v1109
    %1589 = vmatmul.f32.gmra.mxu0 %v1317
    %v1590 = vpop.f32.mrf.mxu0
    %v1591 = vadd.f32 0.0, %v1590
    %1592 = vdwg.mxu0
    %1593 = vmatpush.msra.mxu0 %v1170
    %1594 = vmatpush.msra.mxu0 %v1166
    %1595 = vmatpush.msra.mxu0 %v1162
    %1596 = vmatpush.msra.mxu0 %v1158
    %1597 = vmatpush.msra.mxu0 %v1154
    %1598 = vmatpush.msra.mxu0 %v1150
    %1599 = vmatpush.msra.mxu0 %v1146
    %1600 = vmatpush.msra.mxu0 %v1142
    %1601 = vmatpush.msra.mxu0 %v1138
    %1602 = vmatpush.msra.mxu0 %v1134
    %1603 = vmatpush.msra.mxu0 %v1130
    %1604 = vmatpush.msra.mxu0 %v1126
    %1605 = vmatpush.msra.mxu0 %v1122
    %1606 = vmatpush.msra.mxu0 %v1118
    %1607 = vmatpush.msra.mxu0 %v1114
    %1608 = vmatpush.msra.mxu0 %v1110
    %1609 = vmatmul.f32.gmra.mxu0 %v1317
    %v1610 = vpop.f32.mrf.mxu0
    %v1611 = vadd.f32 0.0, %v1610
    %1612 = vdwg.mxu0
    %v1613 = vadd.f32 %v1529, %v1551
    %v1614 = vadd.f32 %v1530, %v1571
    %v1615 = vadd.f32 %v1531, %v1591
    %v1616 = vadd.f32 %v1532, %v1611
    %v1617 = vxor.u32 %v1613, 2147483648
    %v1618 = vmul.f32 %v1617, 1.442695
    %v1619 = vpow.pop %v1618
    %v1620 = vadd.f32 %v1619, 1.0
    %v1621 = vrcp.pop %v1620
    %v1622 = vmul.f32 %v1620, %v1621
    %v1623 = vsub.f32 1.0, %v1622
    %v1624 = vmul.f32 %v1621, %v1623
    %v1625 = vadd.f32 %v1621, %v1624
    %vm1626 = vweird.f32 %v1620
    %vm1627 = vweird.f32 %v1621
    %vm1628 = vmor %vm1626, %vm1627
    %v1629 = vsel %vm1628, %v1621, %v1625
    %v1630 = vand.u32 2147483647, %v1620
    %vm1631 = vcmp.eq.f32.partialorder %v1630, 8.507059e+37
    %v1632 = vand.u32 %v1620, 2147483648
    %v1633 = vor.u32 1.1754944e-38, %v1632
    %v1634 = vsel %vm1631, %v1633, %v1629
    %v1635 = vmul.f32 1.0, %v1634
    %v1636 = vxor.u32 %v1614, 2147483648
    %v1637 = vmul.f32 %v1636, 1.442695
    %v1638 = vpow.pop %v1637
    %v1639 = vadd.f32 %v1638, 1.0
    %v1640 = vrcp.pop %v1639
    %v1641 = vmul.f32 %v1639, %v1640
    %v1642 = vsub.f32 1.0, %v1641
    %v1643 = vmul.f32 %v1640, %v1642
    %v1644 = vadd.f32 %v1640, %v1643
    %vm1645 = vweird.f32 %v1639
    %vm1646 = vweird.f32 %v1640
    %vm1647 = vmor %vm1645, %vm1646
    %v1648 = vsel %vm1647, %v1640, %v1644
    %v1649 = vand.u32 2147483647, %v1639
    %vm1650 = vcmp.eq.f32.partialorder %v1649, 8.507059e+37
    %v1651 = vand.u32 %v1639, 2147483648
    %v1652 = vor.u32 1.1754944e-38, %v1651
    %v1653 = vsel %vm1650, %v1652, %v1648
    %v1654 = vmul.f32 1.0, %v1653
    %v1655 = vtanh.pop %v1615
    %v1656 = vxor.u32 %v1616, 2147483648
    %v1657 = vmul.f32 %v1656, 1.442695
    %v1658 = vpow.pop %v1657
    %v1659 = vadd.f32 %v1658, 1.0
    %v1660 = vrcp.pop %v1659
    %v1661 = vmul.f32 %v1659, %v1660
    %v1662 = vsub.f32 1.0, %v1661
    %v1663 = vmul.f32 %v1660, %v1662
    %v1664 = vadd.f32 %v1660, %v1663
    %vm1665 = vweird.f32 %v1659
    %vm1666 = vweird.f32 %v1660
    %vm1667 = vmor %vm1665, %vm1666
    %v1668 = vsel %vm1667, %v1660, %v1664
    %v1669 = vand.u32 2147483647, %v1659
    %vm1670 = vcmp.eq.f32.partialorder %v1669, 8.507059e+37
    %v1671 = vand.u32 %v1659, 2147483648
    %v1672 = vor.u32 1.1754944e-38, %v1671
    %v1673 = vsel %vm1670, %v1672, %v1668
    %v1674 = vmul.f32 1.0, %v1673
    %v1675 = vmul.f32 %v1654, %v1315
    %v1676 = vmul.f32 %v1635, %v1655
    %v1677 = vadd.f32 %v1675, %v1676
    %v1678 = vtanh.pop %v1677
    %v1679 = vmul.f32 %v1674, %v1678
    %v1680 = vld [vmem:[#allocation2 + $0x80] sm:$0xff]
    %v1681 = vld [vmem:[#allocation2 + $0x88] sm:$0xff]
    %v1682 = vld [vmem:[#allocation2 + $0x90] sm:$0xff]
    %v1683 = vld [vmem:[#allocation2 + $0x98] sm:$0xff]
    %1684 = vmatpush.msra.mxu0 %v1167
    %1685 = vmatpush.msra.mxu0 %v1163
    %1686 = vmatpush.msra.mxu0 %v1159
    %1687 = vmatpush.msra.mxu0 %v1155
    %1688 = vmatpush.msra.mxu0 %v1151
    %1689 = vmatpush.msra.mxu0 %v1147
    %1690 = vmatpush.msra.mxu0 %v1143
    %1691 = vmatpush.msra.mxu0 %v1139
    %1692 = vmatpush.msra.mxu0 %v1135
    %1693 = vmatpush.msra.mxu0 %v1131
    %1694 = vmatpush.msra.mxu0 %v1127
    %1695 = vmatpush.msra.mxu0 %v1123
    %1696 = vmatpush.msra.mxu0 %v1119
    %1697 = vmatpush.msra.mxu0 %v1115
    %1698 = vmatpush.msra.mxu0 %v1111
    %1699 = vmatpush.msra.mxu0 %v1107
    %1700 = vmatmul.f32.gmra.mxu0 %v1679
    %v1701 = vpop.f32.mrf.mxu0
    %v1702 = vadd.f32 0.0, %v1701
    %1703 = vdwg.mxu0
    %1704 = vmatpush.msra.mxu0 %v1168
    %1705 = vmatpush.msra.mxu0 %v1164
    %1706 = vmatpush.msra.mxu0 %v1160
    %1707 = vmatpush.msra.mxu0 %v1156
    %1708 = vmatpush.msra.mxu0 %v1152
    %1709 = vmatpush.msra.mxu0 %v1148
    %1710 = vmatpush.msra.mxu0 %v1144
    %1711 = vmatpush.msra.mxu0 %v1140
    %1712 = vmatpush.msra.mxu0 %v1136
    %1713 = vmatpush.msra.mxu0 %v1132
    %1714 = vmatpush.msra.mxu0 %v1128
    %1715 = vmatpush.msra.mxu0 %v1124
    %1716 = vmatpush.msra.mxu0 %v1120
    %1717 = vmatpush.msra.mxu0 %v1116
    %1718 = vmatpush.msra.mxu0 %v1112
    %1719 = vmatpush.msra.mxu0 %v1108
    %1720 = vmatmul.f32.gmra.mxu0 %v1679
    %v1721 = vpop.f32.mrf.mxu0
    %v1722 = vadd.f32 0.0, %v1721
    %1723 = vdwg.mxu0
    %1724 = vmatpush.msra.mxu0 %v1169
    %1725 = vmatpush.msra.mxu0 %v1165
    %1726 = vmatpush.msra.mxu0 %v1161
    %1727 = vmatpush.msra.mxu0 %v1157
    %1728 = vmatpush.msra.mxu0 %v1153
    %1729 = vmatpush.msra.mxu0 %v1149
    %1730 = vmatpush.msra.mxu0 %v1145
    %1731 = vmatpush.msra.mxu0 %v1141
    %1732 = vmatpush.msra.mxu0 %v1137
    %1733 = vmatpush.msra.mxu0 %v1133
    %1734 = vmatpush.msra.mxu0 %v1129
    %1735 = vmatpush.msra.mxu0 %v1125
    %1736 = vmatpush.msra.mxu0 %v1121
    %1737 = vmatpush.msra.mxu0 %v1117
    %1738 = vmatpush.msra.mxu0 %v1113
    %1739 = vmatpush.msra.mxu0 %v1109
    %1740 = vmatmul.f32.gmra.mxu0 %v1679
    %v1741 = vpop.f32.mrf.mxu0
    %v1742 = vadd.f32 0.0, %v1741
    %1743 = vdwg.mxu0
    %1744 = vmatpush.msra.mxu0 %v1170
    %1745 = vmatpush.msra.mxu0 %v1166
    %1746 = vmatpush.msra.mxu0 %v1162
    %1747 = vmatpush.msra.mxu0 %v1158
    %1748 = vmatpush.msra.mxu0 %v1154
    %1749 = vmatpush.msra.mxu0 %v1150
    %1750 = vmatpush.msra.mxu0 %v1146
    %1751 = vmatpush.msra.mxu0 %v1142
    %1752 = vmatpush.msra.mxu0 %v1138
    %1753 = vmatpush.msra.mxu0 %v1134
    %1754 = vmatpush.msra.mxu0 %v1130
    %1755 = vmatpush.msra.mxu0 %v1126
    %1756 = vmatpush.msra.mxu0 %v1122
    %1757 = vmatpush.msra.mxu0 %v1118
    %1758 = vmatpush.msra.mxu0 %v1114
    %1759 = vmatpush.msra.mxu0 %v1110
    %1760 = vmatmul.f32.gmra.mxu0 %v1679
    %v1761 = vpop.f32.mrf.mxu0
    %v1762 = vadd.f32 0.0, %v1761
    %1763 = vdwg.mxu0
    %v1764 = vadd.f32 %v1680, %v1702
    %v1765 = vadd.f32 %v1681, %v1722
    %v1766 = vadd.f32 %v1682, %v1742
    %v1767 = vadd.f32 %v1683, %v1762
    %v1768 = vxor.u32 %v1764, 2147483648
    %v1769 = vmul.f32 %v1768, 1.442695
    %v1770 = vpow.pop %v1769
    %v1771 = vadd.f32 %v1770, 1.0
    %v1772 = vrcp.pop %v1771
    %v1773 = vmul.f32 %v1771, %v1772
    %v1774 = vsub.f32 1.0, %v1773
    %v1775 = vmul.f32 %v1772, %v1774
    %v1776 = vadd.f32 %v1772, %v1775
    %vm1777 = vweird.f32 %v1771
    %vm1778 = vweird.f32 %v1772
    %vm1779 = vmor %vm1777, %vm1778
    %v1780 = vsel %vm1779, %v1772, %v1776
    %v1781 = vand.u32 2147483647, %v1771
    %vm1782 = vcmp.eq.f32.partialorder %v1781, 8.507059e+37
    %v1783 = vand.u32 %v1771, 2147483648
    %v1784 = vor.u32 1.1754944e-38, %v1783
    %v1785 = vsel %vm1782, %v1784, %v1780
    %v1786 = vmul.f32 1.0, %v1785
    %v1787 = vxor.u32 %v1765, 2147483648
    %v1788 = vmul.f32 %v1787, 1.442695
    %v1789 = vpow.pop %v1788
    %v1790 = vadd.f32 %v1789, 1.0
    %v1791 = vrcp.pop %v1790
    %v1792 = vmul.f32 %v1790, %v1791
    %v1793 = vsub.f32 1.0, %v1792
    %v1794 = vmul.f32 %v1791, %v1793
    %v1795 = vadd.f32 %v1791, %v1794
    %vm1796 = vweird.f32 %v1790
    %vm1797 = vweird.f32 %v1791
    %vm1798 = vmor %vm1796, %vm1797
    %v1799 = vsel %vm1798, %v1791, %v1795
    %v1800 = vand.u32 2147483647, %v1790
    %vm1801 = vcmp.eq.f32.partialorder %v1800, 8.507059e+37
    %v1802 = vand.u32 %v1790, 2147483648
    %v1803 = vor.u32 1.1754944e-38, %v1802
    %v1804 = vsel %vm1801, %v1803, %v1799
    %v1805 = vmul.f32 1.0, %v1804
    %v1806 = vtanh.pop %v1766
    %v1807 = vxor.u32 %v1767, 2147483648
    %v1808 = vmul.f32 %v1807, 1.442695
    %v1809 = vpow.pop %v1808
    %v1810 = vadd.f32 %v1809, 1.0
    %v1811 = vrcp.pop %v1810
    %v1812 = vmul.f32 %v1810, %v1811
    %v1813 = vsub.f32 1.0, %v1812
    %v1814 = vmul.f32 %v1811, %v1813
    %v1815 = vadd.f32 %v1811, %v1814
    %vm1816 = vweird.f32 %v1810
    %vm1817 = vweird.f32 %v1811
    %vm1818 = vmor %vm1816, %vm1817
    %v1819 = vsel %vm1818, %v1811, %v1815
    %v1820 = vand.u32 2147483647, %v1810
    %vm1821 = vcmp.eq.f32.partialorder %v1820, 8.507059e+37
    %v1822 = vand.u32 %v1810, 2147483648
    %v1823 = vor.u32 1.1754944e-38, %v1822
    %v1824 = vsel %vm1821, %v1823, %v1819
    %v1825 = vmul.f32 1.0, %v1824
    %v1826 = vmul.f32 %v1805, %v1677
    %v1827 = vmul.f32 %v1786, %v1806
    %v1828 = vadd.f32 %v1826, %v1827
    %v1829 = vtanh.pop %v1828
    %v1830 = vmul.f32 %v1825, %v1829
    %v1831 = vld [vmem:[#allocation2 + $0xc0] sm:$0xff]
    %v1832 = vld [vmem:[#allocation2 + $0xc8] sm:$0xff]
    %v1833 = vld [vmem:[#allocation2 + $0xd0] sm:$0xff]
    %v1834 = vld [vmem:[#allocation2 + $0xd8] sm:$0xff]
    %1835 = vmatpush.msra.mxu0 %v1167
    %1836 = vmatpush.msra.mxu0 %v1163
    %1837 = vmatpush.msra.mxu0 %v1159
    %1838 = vmatpush.msra.mxu0 %v1155
    %1839 = vmatpush.msra.mxu0 %v1151
    %1840 = vmatpush.msra.mxu0 %v1147
    %1841 = vmatpush.msra.mxu0 %v1143
    %1842 = vmatpush.msra.mxu0 %v1139
    %1843 = vmatpush.msra.mxu0 %v1135
    %1844 = vmatpush.msra.mxu0 %v1131
    %1845 = vmatpush.msra.mxu0 %v1127
    %1846 = vmatpush.msra.mxu0 %v1123
    %1847 = vmatpush.msra.mxu0 %v1119
    %1848 = vmatpush.msra.mxu0 %v1115
    %1849 = vmatpush.msra.mxu0 %v1111
    %1850 = vmatpush.msra.mxu0 %v1107
    %1851 = vmatmul.f32.gmra.mxu0 %v1830
    %v1852 = vpop.f32.mrf.mxu0
    %v1853 = vadd.f32 0.0, %v1852
    %1854 = vdwg.mxu0
    %1855 = vmatpush.msra.mxu0 %v1168
    %1856 = vmatpush.msra.mxu0 %v1164
    %1857 = vmatpush.msra.mxu0 %v1160
    %1858 = vmatpush.msra.mxu0 %v1156
    %1859 = vmatpush.msra.mxu0 %v1152
    %1860 = vmatpush.msra.mxu0 %v1148
    %1861 = vmatpush.msra.mxu0 %v1144
    %1862 = vmatpush.msra.mxu0 %v1140
    %1863 = vmatpush.msra.mxu0 %v1136
    %1864 = vmatpush.msra.mxu0 %v1132
    %1865 = vmatpush.msra.mxu0 %v1128
    %1866 = vmatpush.msra.mxu0 %v1124
    %1867 = vmatpush.msra.mxu0 %v1120
    %1868 = vmatpush.msra.mxu0 %v1116
    %1869 = vmatpush.msra.mxu0 %v1112
    %1870 = vmatpush.msra.mxu0 %v1108
    %1871 = vmatmul.f32.gmra.mxu0 %v1830
    %v1872 = vpop.f32.mrf.mxu0
    %v1873 = vadd.f32 0.0, %v1872
    %1874 = vdwg.mxu0
    %1875 = vmatpush.msra.mxu0 %v1169
    %1876 = vmatpush.msra.mxu0 %v1165
    %1877 = vmatpush.msra.mxu0 %v1161
    %1878 = vmatpush.msra.mxu0 %v1157
    %1879 = vmatpush.msra.mxu0 %v1153
    %1880 = vmatpush.msra.mxu0 %v1149
    %1881 = vmatpush.msra.mxu0 %v1145
    %1882 = vmatpush.msra.mxu0 %v1141
    %1883 = vmatpush.msra.mxu0 %v1137
    %1884 = vmatpush.msra.mxu0 %v1133
    %1885 = vmatpush.msra.mxu0 %v1129
    %1886 = vmatpush.msra.mxu0 %v1125
    %1887 = vmatpush.msra.mxu0 %v1121
    %1888 = vmatpush.msra.mxu0 %v1117
    %1889 = vmatpush.msra.mxu0 %v1113
    %1890 = vmatpush.msra.mxu0 %v1109
    %1891 = vmatmul.f32.gmra.mxu0 %v1830
    %v1892 = vpop.f32.mrf.mxu0
    %v1893 = vadd.f32 0.0, %v1892
    %1894 = vdwg.mxu0
    %1895 = vmatpush.msra.mxu0 %v1170
    %1896 = vmatpush.msra.mxu0 %v1166
    %1897 = vmatpush.msra.mxu0 %v1162
    %1898 = vmatpush.msra.mxu0 %v1158
    %1899 = vmatpush.msra.mxu0 %v1154
    %1900 = vmatpush.msra.mxu0 %v1150
    %1901 = vmatpush.msra.mxu0 %v1146
    %1902 = vmatpush.msra.mxu0 %v1142
    %1903 = vmatpush.msra.mxu0 %v1138
    %1904 = vmatpush.msra.mxu0 %v1134
    %1905 = vmatpush.msra.mxu0 %v1130
    %1906 = vmatpush.msra.mxu0 %v1126
    %1907 = vmatpush.msra.mxu0 %v1122
    %1908 = vmatpush.msra.mxu0 %v1118
    %1909 = vmatpush.msra.mxu0 %v1114
    %1910 = vmatpush.msra.mxu0 %v1110
    %1911 = vmatmul.f32.gmra.mxu0 %v1830
    %v1912 = vpop.f32.mrf.mxu0
    %v1913 = vadd.f32 0.0, %v1912
    %1914 = vdwg.mxu0
    %v1915 = vadd.f32 %v1831, %v1853
    %v1916 = vadd.f32 %v1832, %v1873
    %v1917 = vadd.f32 %v1833, %v1893
    %v1918 = vadd.f32 %v1834, %v1913
    %v1919 = vxor.u32 %v1915, 2147483648
    %v1920 = vmul.f32 %v1919, 1.442695
    %v1921 = vpow.pop %v1920
    %v1922 = vadd.f32 %v1921, 1.0
    %v1923 = vrcp.pop %v1922
    %v1924 = vmul.f32 %v1922, %v1923
    %v1925 = vsub.f32 1.0, %v1924
    %v1926 = vmul.f32 %v1923, %v1925
    %v1927 = vadd.f32 %v1923, %v1926
    %vm1928 = vweird.f32 %v1922
    %vm1929 = vweird.f32 %v1923
    %vm1930 = vmor %vm1928, %vm1929
    %v1931 = vsel %vm1930, %v1923, %v1927
    %v1932 = vand.u32 2147483647, %v1922
    %vm1933 = vcmp.eq.f32.partialorder %v1932, 8.507059e+37
    %v1934 = vand.u32 %v1922, 2147483648
    %v1935 = vor.u32 1.1754944e-38, %v1934
    %v1936 = vsel %vm1933, %v1935, %v1931
    %v1937 = vmul.f32 1.0, %v1936
    %v1938 = vxor.u32 %v1916, 2147483648
    %v1939 = vmul.f32 %v1938, 1.442695
    %v1940 = vpow.pop %v1939
    %v1941 = vadd.f32 %v1940, 1.0
    %v1942 = vrcp.pop %v1941
    %v1943 = vmul.f32 %v1941, %v1942
    %v1944 = vsub.f32 1.0, %v1943
    %v1945 = vmul.f32 %v1942, %v1944
    %v1946 = vadd.f32 %v1942, %v1945
    %vm1947 = vweird.f32 %v1941
    %vm1948 = vweird.f32 %v1942
    %vm1949 = vmor %vm1947, %vm1948
    %v1950 = vsel %vm1949, %v1942, %v1946
    %v1951 = vand.u32 2147483647, %v1941
    %vm1952 = vcmp.eq.f32.partialorder %v1951, 8.507059e+37
    %v1953 = vand.u32 %v1941, 2147483648
    %v1954 = vor.u32 1.1754944e-38, %v1953
    %v1955 = vsel %vm1952, %v1954, %v1950
    %v1956 = vmul.f32 1.0, %v1955
    %v1957 = vtanh.pop %v1917
    %v1958 = vxor.u32 %v1918, 2147483648
    %v1959 = vmul.f32 %v1958, 1.442695
    %v1960 = vpow.pop %v1959
    %v1961 = vadd.f32 %v1960, 1.0
    %v1962 = vrcp.pop %v1961
    %v1963 = vmul.f32 %v1961, %v1962
    %v1964 = vsub.f32 1.0, %v1963
    %v1965 = vmul.f32 %v1962, %v1964
    %v1966 = vadd.f32 %v1962, %v1965
    %vm1967 = vweird.f32 %v1961
    %vm1968 = vweird.f32 %v1962
    %vm1969 = vmor %vm1967, %vm1968
    %v1970 = vsel %vm1969, %v1962, %v1966
    %v1971 = vand.u32 2147483647, %v1961
    %vm1972 = vcmp.eq.f32.partialorder %v1971, 8.507059e+37
    %v1973 = vand.u32 %v1961, 2147483648
    %v1974 = vor.u32 1.1754944e-38, %v1973
    %v1975 = vsel %vm1972, %v1974, %v1970
    %v1976 = vmul.f32 1.0, %v1975
    %v1977 = vmul.f32 %v1956, %v1828
    %v1978 = vmul.f32 %v1937, %v1957
    %v1979 = vadd.f32 %v1977, %v1978
    %v1980 = vtanh.pop %v1979
    %v1981 = vmul.f32 %v1976, %v1980
    %v1982 = vld [vmem:[#allocation2 + $0x100] sm:$0xff]
    %v1983 = vld [vmem:[#allocation2 + $0x108] sm:$0xff]
    %v1984 = vld [vmem:[#allocation2 + $0x110] sm:$0xff]
    %v1985 = vld [vmem:[#allocation2 + $0x118] sm:$0xff]
    %1986 = vmatpush.msra.mxu0 %v1167
    %1987 = vmatpush.msra.mxu0 %v1163
    %1988 = vmatpush.msra.mxu0 %v1159
    %1989 = vmatpush.msra.mxu0 %v1155
    %1990 = vmatpush.msra.mxu0 %v1151
    %1991 = vmatpush.msra.mxu0 %v1147
    %1992 = vmatpush.msra.mxu0 %v1143
    %1993 = vmatpush.msra.mxu0 %v1139
    %1994 = vmatpush.msra.mxu0 %v1135
    %1995 = vmatpush.msra.mxu0 %v1131
    %1996 = vmatpush.msra.mxu0 %v1127
    %1997 = vmatpush.msra.mxu0 %v1123
    %1998 = vmatpush.msra.mxu0 %v1119
    %1999 = vmatpush.msra.mxu0 %v1115
    %2000 = vmatpush.msra.mxu0 %v1111
    %2001 = vmatpush.msra.mxu0 %v1107
    %2002 = vmatmul.f32.gmra.mxu0 %v1981
    %v2003 = vpop.f32.mrf.mxu0
    %v2004 = vadd.f32 0.0, %v2003
    %2005 = vdwg.mxu0
    %2006 = vmatpush.msra.mxu0 %v1168
    %2007 = vmatpush.msra.mxu0 %v1164
    %2008 = vmatpush.msra.mxu0 %v1160
    %2009 = vmatpush.msra.mxu0 %v1156
    %2010 = vmatpush.msra.mxu0 %v1152
    %2011 = vmatpush.msra.mxu0 %v1148
    %2012 = vmatpush.msra.mxu0 %v1144
    %2013 = vmatpush.msra.mxu0 %v1140
    %2014 = vmatpush.msra.mxu0 %v1136
    %2015 = vmatpush.msra.mxu0 %v1132
    %2016 = vmatpush.msra.mxu0 %v1128
    %2017 = vmatpush.msra.mxu0 %v1124
    %2018 = vmatpush.msra.mxu0 %v1120
    %2019 = vmatpush.msra.mxu0 %v1116
    %2020 = vmatpush.msra.mxu0 %v1112
    %2021 = vmatpush.msra.mxu0 %v1108
    %2022 = vmatmul.f32.gmra.mxu0 %v1981
    %v2023 = vpop.f32.mrf.mxu0
    %v2024 = vadd.f32 0.0, %v2023
    %2025 = vdwg.mxu0
    %2026 = vmatpush.msra.mxu0 %v1169
    %2027 = vmatpush.msra.mxu0 %v1165
    %2028 = vmatpush.msra.mxu0 %v1161
    %2029 = vmatpush.msra.mxu0 %v1157
    %2030 = vmatpush.msra.mxu0 %v1153
    %2031 = vmatpush.msra.mxu0 %v1149
    %2032 = vmatpush.msra.mxu0 %v1145
    %2033 = vmatpush.msra.mxu0 %v1141
    %2034 = vmatpush.msra.mxu0 %v1137
    %2035 = vmatpush.msra.mxu0 %v1133
    %2036 = vmatpush.msra.mxu0 %v1129
    %2037 = vmatpush.msra.mxu0 %v1125
    %2038 = vmatpush.msra.mxu0 %v1121
    %2039 = vmatpush.msra.mxu0 %v1117
    %2040 = vmatpush.msra.mxu0 %v1113
    %2041 = vmatpush.msra.mxu0 %v1109
    %2042 = vmatmul.f32.gmra.mxu0 %v1981
    %v2043 = vpop.f32.mrf.mxu0
    %v2044 = vadd.f32 0.0, %v2043
    %2045 = vdwg.mxu0
    %2046 = vmatpush.msra.mxu0 %v1170
    %2047 = vmatpush.msra.mxu0 %v1166
    %2048 = vmatpush.msra.mxu0 %v1162
    %2049 = vmatpush.msra.mxu0 %v1158
    %2050 = vmatpush.msra.mxu0 %v1154
    %2051 = vmatpush.msra.mxu0 %v1150
    %2052 = vmatpush.msra.mxu0 %v1146
    %2053 = vmatpush.msra.mxu0 %v1142
    %2054 = vmatpush.msra.mxu0 %v1138
    %2055 = vmatpush.msra.mxu0 %v1134
    %2056 = vmatpush.msra.mxu0 %v1130
    %2057 = vmatpush.msra.mxu0 %v1126
    %2058 = vmatpush.msra.mxu0 %v1122
    %2059 = vmatpush.msra.mxu0 %v1118
    %2060 = vmatpush.msra.mxu0 %v1114
    %2061 = vmatpush.msra.mxu0 %v1110
    %2062 = vmatmul.f32.gmra.mxu0 %v1981
    %v2063 = vpop.f32.mrf.mxu0
    %v2064 = vadd.f32 0.0, %v2063
    %2065 = vdwg.mxu0
    %v2066 = vadd.f32 %v1982, %v2004
    %v2067 = vadd.f32 %v1983, %v2024
    %v2068 = vadd.f32 %v1984, %v2044
    %v2069 = vadd.f32 %v1985, %v2064
    %v2070 = vxor.u32 %v2066, 2147483648
    %v2071 = vmul.f32 %v2070, 1.442695
    %v2072 = vpow.pop %v2071
    %v2073 = vadd.f32 %v2072, 1.0
    %v2074 = vrcp.pop %v2073
    %v2075 = vmul.f32 %v2073, %v2074
    %v2076 = vsub.f32 1.0, %v2075
    %v2077 = vmul.f32 %v2074, %v2076
    %v2078 = vadd.f32 %v2074, %v2077
    %vm2079 = vweird.f32 %v2073
    %vm2080 = vweird.f32 %v2074
    %vm2081 = vmor %vm2079, %vm2080
    %v2082 = vsel %vm2081, %v2074, %v2078
    %v2083 = vand.u32 2147483647, %v2073
    %vm2084 = vcmp.eq.f32.partialorder %v2083, 8.507059e+37
    %v2085 = vand.u32 %v2073, 2147483648
    %v2086 = vor.u32 1.1754944e-38, %v2085
    %v2087 = vsel %vm2084, %v2086, %v2082
    %v2088 = vmul.f32 1.0, %v2087
    %v2089 = vxor.u32 %v2067, 2147483648
    %v2090 = vmul.f32 %v2089, 1.442695
    %v2091 = vpow.pop %v2090
    %v2092 = vadd.f32 %v2091, 1.0
    %v2093 = vrcp.pop %v2092
    %v2094 = vmul.f32 %v2092, %v2093
    %v2095 = vsub.f32 1.0, %v2094
    %v2096 = vmul.f32 %v2093, %v2095
    %v2097 = vadd.f32 %v2093, %v2096
    %vm2098 = vweird.f32 %v2092
    %vm2099 = vweird.f32 %v2093
    %vm2100 = vmor %vm2098, %vm2099
    %v2101 = vsel %vm2100, %v2093, %v2097
    %v2102 = vand.u32 2147483647, %v2092
    %vm2103 = vcmp.eq.f32.partialorder %v2102, 8.507059e+37
    %v2104 = vand.u32 %v2092, 2147483648
    %v2105 = vor.u32 1.1754944e-38, %v2104
    %v2106 = vsel %vm2103, %v2105, %v2101
    %v2107 = vmul.f32 1.0, %v2106
    %v2108 = vtanh.pop %v2068
    %v2109 = vxor.u32 %v2069, 2147483648
    %v2110 = vmul.f32 %v2109, 1.442695
    %v2111 = vpow.pop %v2110
    %v2112 = vadd.f32 %v2111, 1.0
    %v2113 = vrcp.pop %v2112
    %v2114 = vmul.f32 %v2112, %v2113
    %v2115 = vsub.f32 1.0, %v2114
    %v2116 = vmul.f32 %v2113, %v2115
    %v2117 = vadd.f32 %v2113, %v2116
    %vm2118 = vweird.f32 %v2112
    %vm2119 = vweird.f32 %v2113
    %vm2120 = vmor %vm2118, %vm2119
    %v2121 = vsel %vm2120, %v2113, %v2117
    %v2122 = vand.u32 2147483647, %v2112
    %vm2123 = vcmp.eq.f32.partialorder %v2122, 8.507059e+37
    %v2124 = vand.u32 %v2112, 2147483648
    %v2125 = vor.u32 1.1754944e-38, %v2124
    %v2126 = vsel %vm2123, %v2125, %v2121
    %v2127 = vmul.f32 1.0, %v2126
    %v2128 = vmul.f32 %v2107, %v1979
    %v2129 = vmul.f32 %v2088, %v2108
    %v2130 = vadd.f32 %v2128, %v2129
    %v2131 = vtanh.pop %v2130
    %v2132 = vmul.f32 %v2127, %v2131
    %v2133 = vld [vmem:[#allocation2 + $0x140] sm:$0xff]
    %v2134 = vld [vmem:[#allocation2 + $0x148] sm:$0xff]
    %v2135 = vld [vmem:[#allocation2 + $0x150] sm:$0xff]
    %v2136 = vld [vmem:[#allocation2 + $0x158] sm:$0xff]
    %2137 = vmatpush.msra.mxu0 %v1167
    %2138 = vmatpush.msra.mxu0 %v1163
    %2139 = vmatpush.msra.mxu0 %v1159
    %2140 = vmatpush.msra.mxu0 %v1155
    %2141 = vmatpush.msra.mxu0 %v1151
    %2142 = vmatpush.msra.mxu0 %v1147
    %2143 = vmatpush.msra.mxu0 %v1143
    %2144 = vmatpush.msra.mxu0 %v1139
    %2145 = vmatpush.msra.mxu0 %v1135
    %2146 = vmatpush.msra.mxu0 %v1131
    %2147 = vmatpush.msra.mxu0 %v1127
    %2148 = vmatpush.msra.mxu0 %v1123
    %2149 = vmatpush.msra.mxu0 %v1119
    %2150 = vmatpush.msra.mxu0 %v1115
    %2151 = vmatpush.msra.mxu0 %v1111
    %2152 = vmatpush.msra.mxu0 %v1107
    %2153 = vmatmul.f32.gmra.mxu0 %v2132
    %v2154 = vpop.f32.mrf.mxu0
    %v2155 = vadd.f32 0.0, %v2154
    %2156 = vdwg.mxu0
    %2157 = vmatpush.msra.mxu0 %v1168
    %2158 = vmatpush.msra.mxu0 %v1164
    %2159 = vmatpush.msra.mxu0 %v1160
    %2160 = vmatpush.msra.mxu0 %v1156
    %2161 = vmatpush.msra.mxu0 %v1152
    %2162 = vmatpush.msra.mxu0 %v1148
    %2163 = vmatpush.msra.mxu0 %v1144
    %2164 = vmatpush.msra.mxu0 %v1140
    %2165 = vmatpush.msra.mxu0 %v1136
    %2166 = vmatpush.msra.mxu0 %v1132
    %2167 = vmatpush.msra.mxu0 %v1128
    %2168 = vmatpush.msra.mxu0 %v1124
    %2169 = vmatpush.msra.mxu0 %v1120
    %2170 = vmatpush.msra.mxu0 %v1116
    %2171 = vmatpush.msra.mxu0 %v1112
    %2172 = vmatpush.msra.mxu0 %v1108
    %2173 = vmatmul.f32.gmra.mxu0 %v2132
    %v2174 = vpop.f32.mrf.mxu0
    %v2175 = vadd.f32 0.0, %v2174
    %2176 = vdwg.mxu0
    %2177 = vmatpush.msra.mxu0 %v1169
    %2178 = vmatpush.msra.mxu0 %v1165
    %2179 = vmatpush.msra.mxu0 %v1161
    %2180 = vmatpush.msra.mxu0 %v1157
    %2181 = vmatpush.msra.mxu0 %v1153
    %2182 = vmatpush.msra.mxu0 %v1149
    %2183 = vmatpush.msra.mxu0 %v1145
    %2184 = vmatpush.msra.mxu0 %v1141
    %2185 = vmatpush.msra.mxu0 %v1137
    %2186 = vmatpush.msra.mxu0 %v1133
    %2187 = vmatpush.msra.mxu0 %v1129
    %2188 = vmatpush.msra.mxu0 %v1125
    %2189 = vmatpush.msra.mxu0 %v1121
    %2190 = vmatpush.msra.mxu0 %v1117
    %2191 = vmatpush.msra.mxu0 %v1113
    %2192 = vmatpush.msra.mxu0 %v1109
    %2193 = vmatmul.f32.gmra.mxu0 %v2132
    %v2194 = vpop.f32.mrf.mxu0
    %v2195 = vadd.f32 0.0, %v2194
    %2196 = vdwg.mxu0
    %2197 = vmatpush.msra.mxu0 %v1170
    %2198 = vmatpush.msra.mxu0 %v1166
    %2199 = vmatpush.msra.mxu0 %v1162
    %2200 = vmatpush.msra.mxu0 %v1158
    %2201 = vmatpush.msra.mxu0 %v1154
    %2202 = vmatpush.msra.mxu0 %v1150
    %2203 = vmatpush.msra.mxu0 %v1146
    %2204 = vmatpush.msra.mxu0 %v1142
    %2205 = vmatpush.msra.mxu0 %v1138
    %2206 = vmatpush.msra.mxu0 %v1134
    %2207 = vmatpush.msra.mxu0 %v1130
    %2208 = vmatpush.msra.mxu0 %v1126
    %2209 = vmatpush.msra.mxu0 %v1122
    %2210 = vmatpush.msra.mxu0 %v1118
    %2211 = vmatpush.msra.mxu0 %v1114
    %2212 = vmatpush.msra.mxu0 %v1110
    %2213 = vmatmul.f32.gmra.mxu0 %v2132
    %v2214 = vpop.f32.mrf.mxu0
    %v2215 = vadd.f32 0.0, %v2214
    %2216 = vdwg.mxu0
    %v2217 = vadd.f32 %v2133, %v2155
    %v2218 = vadd.f32 %v2134, %v2175
    %v2219 = vadd.f32 %v2135, %v2195
    %v2220 = vadd.f32 %v2136, %v2215
    %v2221 = vxor.u32 %v2217, 2147483648
    %v2222 = vmul.f32 %v2221, 1.442695
    %v2223 = vpow.pop %v2222
    %v2224 = vadd.f32 %v2223, 1.0
    %v2225 = vrcp.pop %v2224
    %v2226 = vmul.f32 %v2224, %v2225
    %v2227 = vsub.f32 1.0, %v2226
    %v2228 = vmul.f32 %v2225, %v2227
    %v2229 = vadd.f32 %v2225, %v2228
    %vm2230 = vweird.f32 %v2224
    %vm2231 = vweird.f32 %v2225
    %vm2232 = vmor %vm2230, %vm2231
    %v2233 = vsel %vm2232, %v2225, %v2229
    %v2234 = vand.u32 2147483647, %v2224
    %vm2235 = vcmp.eq.f32.partialorder %v2234, 8.507059e+37
    %v2236 = vand.u32 %v2224, 2147483648
    %v2237 = vor.u32 1.1754944e-38, %v2236
    %v2238 = vsel %vm2235, %v2237, %v2233
    %v2239 = vmul.f32 1.0, %v2238
    %v2240 = vxor.u32 %v2218, 2147483648
    %v2241 = vmul.f32 %v2240, 1.442695
    %v2242 = vpow.pop %v2241
    %v2243 = vadd.f32 %v2242, 1.0
    %v2244 = vrcp.pop %v2243
    %v2245 = vmul.f32 %v2243, %v2244
    %v2246 = vsub.f32 1.0, %v2245
    %v2247 = vmul.f32 %v2244, %v2246
    %v2248 = vadd.f32 %v2244, %v2247
    %vm2249 = vweird.f32 %v2243
    %vm2250 = vweird.f32 %v2244
    %vm2251 = vmor %vm2249, %vm2250
    %v2252 = vsel %vm2251, %v2244, %v2248
    %v2253 = vand.u32 2147483647, %v2243
    %vm2254 = vcmp.eq.f32.partialorder %v2253, 8.507059e+37
    %v2255 = vand.u32 %v2243, 2147483648
    %v2256 = vor.u32 1.1754944e-38, %v2255
    %v2257 = vsel %vm2254, %v2256, %v2252
    %v2258 = vmul.f32 1.0, %v2257
    %v2259 = vtanh.pop %v2219
    %v2260 = vxor.u32 %v2220, 2147483648
    %v2261 = vmul.f32 %v2260, 1.442695
    %v2262 = vpow.pop %v2261
    %v2263 = vadd.f32 %v2262, 1.0
    %v2264 = vrcp.pop %v2263
    %v2265 = vmul.f32 %v2263, %v2264
    %v2266 = vsub.f32 1.0, %v2265
    %v2267 = vmul.f32 %v2264, %v2266
    %v2268 = vadd.f32 %v2264, %v2267
    %vm2269 = vweird.f32 %v2263
    %vm2270 = vweird.f32 %v2264
    %vm2271 = vmor %vm2269, %vm2270
    %v2272 = vsel %vm2271, %v2264, %v2268
    %v2273 = vand.u32 2147483647, %v2263
    %vm2274 = vcmp.eq.f32.partialorder %v2273, 8.507059e+37
    %v2275 = vand.u32 %v2263, 2147483648
    %v2276 = vor.u32 1.1754944e-38, %v2275
    %v2277 = vsel %vm2274, %v2276, %v2272
    %v2278 = vmul.f32 1.0, %v2277
    %v2279 = vmul.f32 %v2258, %v2130
    %v2280 = vmul.f32 %v2239, %v2259
    %v2281 = vadd.f32 %v2279, %v2280
    %v2282 = vtanh.pop %v2281
    %v2283 = vmul.f32 %v2278, %v2282
    %v2284 = vld [vmem:[#allocation2 + $0x180] sm:$0xff]
    %v2285 = vld [vmem:[#allocation2 + $0x188] sm:$0xff]
    %v2286 = vld [vmem:[#allocation2 + $0x190] sm:$0xff]
    %v2287 = vld [vmem:[#allocation2 + $0x198] sm:$0xff]
    %2288 = vmatpush.msra.mxu0 %v1167
    %2289 = vmatpush.msra.mxu0 %v1163
    %2290 = vmatpush.msra.mxu0 %v1159
    %2291 = vmatpush.msra.mxu0 %v1155
    %2292 = vmatpush.msra.mxu0 %v1151
    %2293 = vmatpush.msra.mxu0 %v1147
    %2294 = vmatpush.msra.mxu0 %v1143
    %2295 = vmatpush.msra.mxu0 %v1139
    %2296 = vmatpush.msra.mxu0 %v1135
    %2297 = vmatpush.msra.mxu0 %v1131
    %2298 = vmatpush.msra.mxu0 %v1127
    %2299 = vmatpush.msra.mxu0 %v1123
    %2300 = vmatpush.msra.mxu0 %v1119
    %2301 = vmatpush.msra.mxu0 %v1115
    %2302 = vmatpush.msra.mxu0 %v1111
    %2303 = vmatpush.msra.mxu0 %v1107
    %2304 = vmatmul.f32.gmra.mxu0 %v2283
    %v2305 = vpop.f32.mrf.mxu0
    %v2306 = vadd.f32 0.0, %v2305
    %2307 = vdwg.mxu0
    %2308 = vmatpush.msra.mxu0 %v1168
    %2309 = vmatpush.msra.mxu0 %v1164
    %2310 = vmatpush.msra.mxu0 %v1160
    %2311 = vmatpush.msra.mxu0 %v1156
    %2312 = vmatpush.msra.mxu0 %v1152
    %2313 = vmatpush.msra.mxu0 %v1148
    %2314 = vmatpush.msra.mxu0 %v1144
    %2315 = vmatpush.msra.mxu0 %v1140
    %2316 = vmatpush.msra.mxu0 %v1136
    %2317 = vmatpush.msra.mxu0 %v1132
    %2318 = vmatpush.msra.mxu0 %v1128
    %2319 = vmatpush.msra.mxu0 %v1124
    %2320 = vmatpush.msra.mxu0 %v1120
    %2321 = vmatpush.msra.mxu0 %v1116
    %2322 = vmatpush.msra.mxu0 %v1112
    %2323 = vmatpush.msra.mxu0 %v1108
    %2324 = vmatmul.f32.gmra.mxu0 %v2283
    %v2325 = vpop.f32.mrf.mxu0
    %v2326 = vadd.f32 0.0, %v2325
    %2327 = vdwg.mxu0
    %2328 = vmatpush.msra.mxu0 %v1169
    %2329 = vmatpush.msra.mxu0 %v1165
    %2330 = vmatpush.msra.mxu0 %v1161
    %2331 = vmatpush.msra.mxu0 %v1157
    %2332 = vmatpush.msra.mxu0 %v1153
    %2333 = vmatpush.msra.mxu0 %v1149
    %2334 = vmatpush.msra.mxu0 %v1145
    %2335 = vmatpush.msra.mxu0 %v1141
    %2336 = vmatpush.msra.mxu0 %v1137
    %2337 = vmatpush.msra.mxu0 %v1133
    %2338 = vmatpush.msra.mxu0 %v1129
    %2339 = vmatpush.msra.mxu0 %v1125
    %2340 = vmatpush.msra.mxu0 %v1121
    %2341 = vmatpush.msra.mxu0 %v1117
    %2342 = vmatpush.msra.mxu0 %v1113
    %2343 = vmatpush.msra.mxu0 %v1109
    %2344 = vmatmul.f32.gmra.mxu0 %v2283
    %v2345 = vpop.f32.mrf.mxu0
    %v2346 = vadd.f32 0.0, %v2345
    %2347 = vdwg.mxu0
    %2348 = vmatpush.msra.mxu0 %v1170
    %2349 = vmatpush.msra.mxu0 %v1166
    %2350 = vmatpush.msra.mxu0 %v1162
    %2351 = vmatpush.msra.mxu0 %v1158
    %2352 = vmatpush.msra.mxu0 %v1154
    %2353 = vmatpush.msra.mxu0 %v1150
    %2354 = vmatpush.msra.mxu0 %v1146
    %2355 = vmatpush.msra.mxu0 %v1142
    %2356 = vmatpush.msra.mxu0 %v1138
    %2357 = vmatpush.msra.mxu0 %v1134
    %2358 = vmatpush.msra.mxu0 %v1130
    %2359 = vmatpush.msra.mxu0 %v1126
    %2360 = vmatpush.msra.mxu0 %v1122
    %2361 = vmatpush.msra.mxu0 %v1118
    %2362 = vmatpush.msra.mxu0 %v1114
    %2363 = vmatpush.msra.mxu0 %v1110
    %2364 = vmatmul.f32.gmra.mxu0 %v2283
    %v2365 = vpop.f32.mrf.mxu0
    %v2366 = vadd.f32 0.0, %v2365
    %2367 = vdwg.mxu0
    %v2368 = vadd.f32 %v2284, %v2306
    %v2369 = vadd.f32 %v2285, %v2326
    %v2370 = vadd.f32 %v2286, %v2346
    %v2371 = vadd.f32 %v2287, %v2366
    %v2372 = vxor.u32 %v2368, 2147483648
    %v2373 = vmul.f32 %v2372, 1.442695
    %v2374 = vpow.pop %v2373
    %v2375 = vadd.f32 %v2374, 1.0
    %v2376 = vrcp.pop %v2375
    %v2377 = vmul.f32 %v2375, %v2376
    %v2378 = vsub.f32 1.0, %v2377
    %v2379 = vmul.f32 %v2376, %v2378
    %v2380 = vadd.f32 %v2376, %v2379
    %vm2381 = vweird.f32 %v2375
    %vm2382 = vweird.f32 %v2376
    %vm2383 = vmor %vm2381, %vm2382
    %v2384 = vsel %vm2383, %v2376, %v2380
    %v2385 = vand.u32 2147483647, %v2375
    %vm2386 = vcmp.eq.f32.partialorder %v2385, 8.507059e+37
    %v2387 = vand.u32 %v2375, 2147483648
    %v2388 = vor.u32 1.1754944e-38, %v2387
    %v2389 = vsel %vm2386, %v2388, %v2384
    %v2390 = vmul.f32 1.0, %v2389
    %v2391 = vxor.u32 %v2369, 2147483648
    %v2392 = vmul.f32 %v2391, 1.442695
    %v2393 = vpow.pop %v2392
    %v2394 = vadd.f32 %v2393, 1.0
    %v2395 = vrcp.pop %v2394
    %v2396 = vmul.f32 %v2394, %v2395
    %v2397 = vsub.f32 1.0, %v2396
    %v2398 = vmul.f32 %v2395, %v2397
    %v2399 = vadd.f32 %v2395, %v2398
    %vm2400 = vweird.f32 %v2394
    %vm2401 = vweird.f32 %v2395
    %vm2402 = vmor %vm2400, %vm2401
    %v2403 = vsel %vm2402, %v2395, %v2399
    %v2404 = vand.u32 2147483647, %v2394
    %vm2405 = vcmp.eq.f32.partialorder %v2404, 8.507059e+37
    %v2406 = vand.u32 %v2394, 2147483648
    %v2407 = vor.u32 1.1754944e-38, %v2406
    %v2408 = vsel %vm2405, %v2407, %v2403
    %v2409 = vmul.f32 1.0, %v2408
    %v2410 = vtanh.pop %v2370
    %v2411 = vxor.u32 %v2371, 2147483648
    %v2412 = vmul.f32 %v2411, 1.442695
    %v2413 = vpow.pop %v2412
    %v2414 = vadd.f32 %v2413, 1.0
    %v2415 = vrcp.pop %v2414
    %v2416 = vmul.f32 %v2414, %v2415
    %v2417 = vsub.f32 1.0, %v2416
    %v2418 = vmul.f32 %v2415, %v2417
    %v2419 = vadd.f32 %v2415, %v2418
    %vm2420 = vweird.f32 %v2414
    %vm2421 = vweird.f32 %v2415
    %vm2422 = vmor %vm2420, %vm2421
    %v2423 = vsel %vm2422, %v2415, %v2419
    %v2424 = vand.u32 2147483647, %v2414
    %vm2425 = vcmp.eq.f32.partialorder %v2424, 8.507059e+37
    %v2426 = vand.u32 %v2414, 2147483648
    %v2427 = vor.u32 1.1754944e-38, %v2426
    %v2428 = vsel %vm2425, %v2427, %v2423
    %v2429 = vmul.f32 1.0, %v2428
    %v2430 = vmul.f32 %v2409, %v2281
    %v2431 = vmul.f32 %v2390, %v2410
    %v2432 = vadd.f32 %v2430, %v2431
    %v2433 = vtanh.pop %v2432
    %v2434 = vmul.f32 %v2429, %v2433
    %v2435 = vld [vmem:[#allocation2 + $0x1c0] sm:$0xff]
    %v2436 = vld [vmem:[#allocation2 + $0x1c8] sm:$0xff]
    %v2437 = vld [vmem:[#allocation2 + $0x1d0] sm:$0xff]
    %v2438 = vld [vmem:[#allocation2 + $0x1d8] sm:$0xff]
    %2439 = vmatpush.msra.mxu0 %v1167
    %2440 = vmatpush.msra.mxu0 %v1163
    %2441 = vmatpush.msra.mxu0 %v1159
    %2442 = vmatpush.msra.mxu0 %v1155
    %2443 = vmatpush.msra.mxu0 %v1151
    %2444 = vmatpush.msra.mxu0 %v1147
    %2445 = vmatpush.msra.mxu0 %v1143
    %2446 = vmatpush.msra.mxu0 %v1139
    %2447 = vmatpush.msra.mxu0 %v1135
    %2448 = vmatpush.msra.mxu0 %v1131
    %2449 = vmatpush.msra.mxu0 %v1127
    %2450 = vmatpush.msra.mxu0 %v1123
    %2451 = vmatpush.msra.mxu0 %v1119
    %2452 = vmatpush.msra.mxu0 %v1115
    %2453 = vmatpush.msra.mxu0 %v1111
    %2454 = vmatpush.msra.mxu0 %v1107
    %2455 = vmatmul.f32.gmra.mxu0 %v2434
    %v2456 = vpop.f32.mrf.mxu0
    %v2457 = vadd.f32 0.0, %v2456
    %2458 = vdwg.mxu0
    %2459 = vmatpush.msra.mxu0 %v1168
    %2460 = vmatpush.msra.mxu0 %v1164
    %2461 = vmatpush.msra.mxu0 %v1160
    %2462 = vmatpush.msra.mxu0 %v1156
    %2463 = vmatpush.msra.mxu0 %v1152
    %2464 = vmatpush.msra.mxu0 %v1148
    %2465 = vmatpush.msra.mxu0 %v1144
    %2466 = vmatpush.msra.mxu0 %v1140
    %2467 = vmatpush.msra.mxu0 %v1136
    %2468 = vmatpush.msra.mxu0 %v1132
    %2469 = vmatpush.msra.mxu0 %v1128
    %2470 = vmatpush.msra.mxu0 %v1124
    %2471 = vmatpush.msra.mxu0 %v1120
    %2472 = vmatpush.msra.mxu0 %v1116
    %2473 = vmatpush.msra.mxu0 %v1112
    %2474 = vmatpush.msra.mxu0 %v1108
    %2475 = vmatmul.f32.gmra.mxu0 %v2434
    %v2476 = vpop.f32.mrf.mxu0
    %v2477 = vadd.f32 0.0, %v2476
    %2478 = vdwg.mxu0
    %2479 = vmatpush.msra.mxu0 %v1169
    %2480 = vmatpush.msra.mxu0 %v1165
    %2481 = vmatpush.msra.mxu0 %v1161
    %2482 = vmatpush.msra.mxu0 %v1157
    %2483 = vmatpush.msra.mxu0 %v1153
    %2484 = vmatpush.msra.mxu0 %v1149
    %2485 = vmatpush.msra.mxu0 %v1145
    %2486 = vmatpush.msra.mxu0 %v1141
    %2487 = vmatpush.msra.mxu0 %v1137
    %2488 = vmatpush.msra.mxu0 %v1133
    %2489 = vmatpush.msra.mxu0 %v1129
    %2490 = vmatpush.msra.mxu0 %v1125
    %2491 = vmatpush.msra.mxu0 %v1121
    %2492 = vmatpush.msra.mxu0 %v1117
    %2493 = vmatpush.msra.mxu0 %v1113
    %2494 = vmatpush.msra.mxu0 %v1109
    %2495 = vmatmul.f32.gmra.mxu0 %v2434
    %v2496 = vpop.f32.mrf.mxu0
    %v2497 = vadd.f32 0.0, %v2496
    %2498 = vdwg.mxu0
    %2499 = vmatpush.msra.mxu0 %v1170
    %2500 = vmatpush.msra.mxu0 %v1166
    %2501 = vmatpush.msra.mxu0 %v1162
    %2502 = vmatpush.msra.mxu0 %v1158
    %2503 = vmatpush.msra.mxu0 %v1154
    %2504 = vmatpush.msra.mxu0 %v1150
    %2505 = vmatpush.msra.mxu0 %v1146
    %2506 = vmatpush.msra.mxu0 %v1142
    %2507 = vmatpush.msra.mxu0 %v1138
    %2508 = vmatpush.msra.mxu0 %v1134
    %2509 = vmatpush.msra.mxu0 %v1130
    %2510 = vmatpush.msra.mxu0 %v1126
    %2511 = vmatpush.msra.mxu0 %v1122
    %2512 = vmatpush.msra.mxu0 %v1118
    %2513 = vmatpush.msra.mxu0 %v1114
    %2514 = vmatpush.msra.mxu0 %v1110
    %2515 = vmatmul.f32.gmra.mxu0 %v2434
    %v2516 = vpop.f32.mrf.mxu0
    %v2517 = vadd.f32 0.0, %v2516
    %2518 = vdwg.mxu0
    %v2519 = vadd.f32 %v2435, %v2457
    %v2520 = vadd.f32 %v2436, %v2477
    %v2521 = vadd.f32 %v2437, %v2497
    %v2522 = vadd.f32 %v2438, %v2517
    %v2523 = vxor.u32 %v2519, 2147483648
    %v2524 = vmul.f32 %v2523, 1.442695
    %v2525 = vpow.pop %v2524
    %v2526 = vadd.f32 %v2525, 1.0
    %v2527 = vrcp.pop %v2526
    %v2528 = vmul.f32 %v2526, %v2527
    %v2529 = vsub.f32 1.0, %v2528
    %v2530 = vmul.f32 %v2527, %v2529
    %v2531 = vadd.f32 %v2527, %v2530
    %vm2532 = vweird.f32 %v2526
    %vm2533 = vweird.f32 %v2527
    %vm2534 = vmor %vm2532, %vm2533
    %v2535 = vsel %vm2534, %v2527, %v2531
    %v2536 = vand.u32 2147483647, %v2526
    %vm2537 = vcmp.eq.f32.partialorder %v2536, 8.507059e+37
    %v2538 = vand.u32 %v2526, 2147483648
    %v2539 = vor.u32 1.1754944e-38, %v2538
    %v2540 = vsel %vm2537, %v2539, %v2535
    %v2541 = vmul.f32 1.0, %v2540
    %v2542 = vxor.u32 %v2520, 2147483648
    %v2543 = vmul.f32 %v2542, 1.442695
    %v2544 = vpow.pop %v2543
    %v2545 = vadd.f32 %v2544, 1.0
    %v2546 = vrcp.pop %v2545
    %v2547 = vmul.f32 %v2545, %v2546
    %v2548 = vsub.f32 1.0, %v2547
    %v2549 = vmul.f32 %v2546, %v2548
    %v2550 = vadd.f32 %v2546, %v2549
    %vm2551 = vweird.f32 %v2545
    %vm2552 = vweird.f32 %v2546
    %vm2553 = vmor %vm2551, %vm2552
    %v2554 = vsel %vm2553, %v2546, %v2550
    %v2555 = vand.u32 2147483647, %v2545
    %vm2556 = vcmp.eq.f32.partialorder %v2555, 8.507059e+37
    %v2557 = vand.u32 %v2545, 2147483648
    %v2558 = vor.u32 1.1754944e-38, %v2557
    %v2559 = vsel %vm2556, %v2558, %v2554
    %v2560 = vmul.f32 1.0, %v2559
    %v2561 = vtanh.pop %v2521
    %v2562 = vxor.u32 %v2522, 2147483648
    %v2563 = vmul.f32 %v2562, 1.442695
    %v2564 = vpow.pop %v2563
    %v2565 = vadd.f32 %v2564, 1.0
    %v2566 = vrcp.pop %v2565
    %v2567 = vmul.f32 %v2565, %v2566
    %v2568 = vsub.f32 1.0, %v2567
    %v2569 = vmul.f32 %v2566, %v2568
    %v2570 = vadd.f32 %v2566, %v2569
    %vm2571 = vweird.f32 %v2565
    %vm2572 = vweird.f32 %v2566
    %vm2573 = vmor %vm2571, %vm2572
    %v2574 = vsel %vm2573, %v2566, %v2570
    %v2575 = vand.u32 2147483647, %v2565
    %vm2576 = vcmp.eq.f32.partialorder %v2575, 8.507059e+37
    %v2577 = vand.u32 %v2565, 2147483648
    %v2578 = vor.u32 1.1754944e-38, %v2577
    %v2579 = vsel %vm2576, %v2578, %v2574
    %v2580 = vmul.f32 1.0, %v2579
    %v2581 = vmul.f32 %v2560, %v2432
    %v2582 = vmul.f32 %v2541, %v2561
    %v2583 = vadd.f32 %v2581, %v2582
    %v2584 = vtanh.pop %v2583
    %v2585 = vmul.f32 %v2580, %v2584
    %v2586 = vld [vmem:[#allocation8] sm:$0xff]
    %v2587 = vld [vmem:[#allocation8 + $0x8] sm:$0xff]
    %v2588 = vld [vmem:[#allocation8 + $0x10] sm:$0xff]
    %v2589 = vld [vmem:[#allocation8 + $0x18] sm:$0xff]
    %v2590 = vld [vmem:[#allocation8 + $0x20] sm:$0xff]
    %v2591 = vld [vmem:[#allocation8 + $0x28] sm:$0xff]
    %v2592 = vld [vmem:[#allocation8 + $0x30] sm:$0xff]
    %v2593 = vld [vmem:[#allocation8 + $0x38] sm:$0xff]
    %v2594 = vld [vmem:[#allocation8 + $0x40] sm:$0xff]
    %v2595 = vld [vmem:[#allocation8 + $0x48] sm:$0xff]
    %v2596 = vld [vmem:[#allocation8 + $0x50] sm:$0xff]
    %v2597 = vld [vmem:[#allocation8 + $0x58] sm:$0xff]
    %v2598 = vld [vmem:[#allocation8 + $0x60] sm:$0xff]
    %v2599 = vld [vmem:[#allocation8 + $0x68] sm:$0xff]
    %v2600 = vld [vmem:[#allocation8 + $0x70] sm:$0xff]
    %v2601 = vld [vmem:[#allocation8 + $0x78] sm:$0xff]
    %v2602 = vld [vmem:[#allocation8 + $0x80] sm:$0xff]
    %v2603 = vld [vmem:[#allocation8 + $0x88] sm:$0xff]
    %v2604 = vld [vmem:[#allocation8 + $0x90] sm:$0xff]
    %v2605 = vld [vmem:[#allocation8 + $0x98] sm:$0xff]
    %v2606 = vld [vmem:[#allocation8 + $0xa0] sm:$0xff]
    %v2607 = vld [vmem:[#allocation8 + $0xa8] sm:$0xff]
    %v2608 = vld [vmem:[#allocation8 + $0xb0] sm:$0xff]
    %v2609 = vld [vmem:[#allocation8 + $0xb8] sm:$0xff]
    %v2610 = vld [vmem:[#allocation8 + $0xc0] sm:$0xff]
    %v2611 = vld [vmem:[#allocation8 + $0xc8] sm:$0xff]
    %v2612 = vld [vmem:[#allocation8 + $0xd0] sm:$0xff]
    %v2613 = vld [vmem:[#allocation8 + $0xd8] sm:$0xff]
    %v2614 = vld [vmem:[#allocation8 + $0xe0] sm:$0xff]
    %v2615 = vld [vmem:[#allocation8 + $0xe8] sm:$0xff]
    %v2616 = vld [vmem:[#allocation8 + $0xf0] sm:$0xff]
    %v2617 = vld [vmem:[#allocation8 + $0xf8] sm:$0xff]
    %v2618 = vld [vmem:[%s6] sm:$0x1]
    %v2620 = vperm.slane %v2618, 0
    %2622 = vmatpush.msra.mxu0 %v2601
    %2623 = vmatpush.msra.mxu0 %v2600
    %2624 = vmatpush.msra.mxu0 %v2599
    %2625 = vmatpush.msra.mxu0 %v2598
    %2626 = vmatpush.msra.mxu0 %v2597
    %2627 = vmatpush.msra.mxu0 %v2596
    %2628 = vmatpush.msra.mxu0 %v2595
    %2629 = vmatpush.msra.mxu0 %v2594
    %2630 = vmatpush.msra.mxu0 %v2593
    %2631 = vmatpush.msra.mxu0 %v2592
    %2632 = vmatpush.msra.mxu0 %v2591
    %2633 = vmatpush.msra.mxu0 %v2590
    %2634 = vmatpush.msra.mxu0 %v2589
    %2635 = vmatpush.msra.mxu0 %v2588
    %2636 = vmatpush.msra.mxu0 %v2587
    %2637 = vmatpush.msra.mxu0 %v2586
    %2638 = vmatmul.f32.gmra.mxu0 %v2585
    %v2639 = vpop.f32.mrf.mxu0
    %v2640 = vadd.f32 %v2620, %v2639
    %2641 = vdwg.mxu0
    %2642 = vmatpush.msra.mxu0 %v2617
    %2643 = vmatpush.msra.mxu0 %v2616
    %2644 = vmatpush.msra.mxu0 %v2615
    %2645 = vmatpush.msra.mxu0 %v2614
    %2646 = vmatpush.msra.mxu0 %v2613
    %2647 = vmatpush.msra.mxu0 %v2612
    %2648 = vmatpush.msra.mxu0 %v2611
    %2649 = vmatpush.msra.mxu0 %v2610
    %2650 = vmatpush.msra.mxu0 %v2609
    %2651 = vmatpush.msra.mxu0 %v2608
    %2652 = vmatpush.msra.mxu0 %v2607
    %2653 = vmatpush.msra.mxu0 %v2606
    %2654 = vmatpush.msra.mxu0 %v2605
    %2655 = vmatpush.msra.mxu0 %v2604
    %2656 = vmatpush.msra.mxu0 %v2603
    %2657 = vmatpush.msra.mxu0 %v2602
    %2658 = vmatmul.f32.gmra.mxu0 %v1528
    %v2659 = vpop.f32.mrf.mxu0
    %v2660 = vadd.f32 %v2640, %v2659
    %2661 = vdwg.mxu0
    %2662 = vst [vmem:[%s7] sm:$0xff] %v2660
    // Predicated region
    $region46: #{bilstm_forward.3} parent=1 // pred_check
      _
    $region47: #{bilstm_forward.3} parent=1 // pred_check_branch
      %2664 = sbr.rel (0) target = $region49
    $region48: #{bilstm_forward.3} parent=1 // pred_region
      _
    $region49: #{bilstm_forward.3} parent=1 // pred_fallthru
      _
    // Predicated region
    $region50: #{bilstm_forward.3} parent=1 // pred_check
      _
    $region51: #{bilstm_forward.3} parent=1 // pred_check_branch
      %2666 = sbr.rel (0) target = $region53
    $region52: #{bilstm_forward.3} parent=1 // pred_region
      _
    $region53: #{bilstm_forward.3} parent=1 // pred_fallthru
      _
    %2667 = vsyncpa [#allocation4], 1
    %2668 = vsyncpa [#allocation6], 1
    %2669 = vsyncpa [#allocation9], 1

// kernel: bilstm_forward.2
$region0: #{bilstm_forward.2}
  #allocation0 [shape = 'u32[]', space=smem, size = 0x4, offset = 0x4, fixed_abs, tag = 'smem constant byte address 0x4 - core index']
  #allocation1 [shape = 'u32[72,128]{1,0:T(1,128)}', space=vmem, size = 0x9000, scoped, tag = 'internal scratch']
  #allocation2 [shape = 'f32[64,1024]{1,0:T(8,128)}', space=vmem, size = 0x40000, scoped, tag = 'scratch operand']
  %s0 = inlined_call_operand.vmem [shape: f32[64,3], index: 0, kind: input, shape index: {}]
  %s1 = inlined_call_operand.vmem [shape: f32[3,1024], index: 1, kind: input, shape index: {}]
  %s2 = inlined_call_operand.vmem [shape: f32[1,1024], index: 2, kind: input, shape index: {}]
  %s3 = inlined_call_operand.hbm [shape: f32[128,512], index: 3, kind: input, shape index: {}]
  %s4 = inlined_call_operand.hbm [shape: f32[128,512], index: 4, kind: input, shape index: {}]
  %s5 = inlined_call_operand.vmem [shape: f32[8,8,256], index: 5, kind: output, shape index: {}]
  %s6 = sld [smem:[#allocation0]]
  $region38: #{bilstm_forward.2} parent=0
    _
  %s8 = ssub.s32 1, %s6
  %s9 = scalar_select 0, %s8, %s6
  $region1: #{bilstm_forward.2} parent=0
    #allocation3 [shape = 'u8[262144]{0}', space=vmem, size = 0x40000, scoped, tag = 'input window, operand 3, single buffered']
    #allocation4 [shape = 's32[1]{0}', space=sflag, size = 0x4, scoped, tag = 'scoped memory for bilstm_forward.2']
    #allocation5 [shape = 'u8[262144]{0}', space=vmem, size = 0x40000, scoped, tag = 'input window, operand 4, single buffered']
    #allocation6 [shape = 's32[1]{0}', space=sflag, size = 0x4, scoped, tag = 'scoped memory for bilstm_forward.2']
    %10 = vsyncpa [#allocation4], 0
    %11 = vsyncpa [#allocation6], 0
    // Predicated region
    $region2: #{bilstm_forward.2} parent=1 // pred_check
      _
    $region3: #{bilstm_forward.2} parent=1 // pred_check_branch
      %13 = sbr.rel (0) target = $region5
    $region4: #{bilstm_forward.2} parent=1 // pred_region
      _
    $region5: #{bilstm_forward.2} parent=1 // pred_fallthru
      _
    // Predicated region
    $region6: #{bilstm_forward.2} parent=1 // pred_check
      _
    $region7: #{bilstm_forward.2} parent=1 // pred_check_branch
      %15 = sbr.rel (0) target = $region9
    $region8: #{bilstm_forward.2} parent=1 // pred_region
      _
    $region9: #{bilstm_forward.2} parent=1 // pred_fallthru
      _
    // Predicated region
    $region10: #{bilstm_forward.2} parent=1 // pred_check
      _
    $region11: #{bilstm_forward.2} parent=1 // pred_check_branch
      %17 = sbr.rel (0) target = $region13
    $region12: #{bilstm_forward.2} parent=1 // pred_region
      _
    $region13: #{bilstm_forward.2} parent=1 // pred_fallthru
      _
    // Predicated region
    $region14: #{bilstm_forward.2} parent=1 // pred_check
      _
    $region15: #{bilstm_forward.2} parent=1 // pred_check_branch
      %19 = sbr.rel (0) target = $region17
    $region16: #{bilstm_forward.2} parent=1 // pred_region
      %21 = vsyncadd [#allocation4], 0
      %s22 = sshll.u32 %s3, 4
      %s23 = int_to_ptr.hbm [resolvable:$true] %s22
      %s24 = sshll.u32 [#allocation3], 4
      %s25 = int_to_ptr.vmem [resolvable:$true] %s24
      %30 = dma.hbm_to_vmem [thread:$0]  %s23, 8192, %s25, [#allocation4], 512, 512, 32
    $region17: #{bilstm_forward.2} parent=1 // pred_fallthru
      _
    // Predicated region
    $region18: #{bilstm_forward.2} parent=1 // pred_check
      _
    $region19: #{bilstm_forward.2} parent=1 // pred_check_branch
      %32 = sbr.rel (0) target = $region21
    $region20: #{bilstm_forward.2} parent=1 // pred_region
      %34 = vsyncadd [#allocation6], 0
      %s35 = sshll.u32 %s4, 4
      %s36 = int_to_ptr.hbm [resolvable:$true] %s35
      %s37 = sshll.u32 [#allocation5], 4
      %s38 = int_to_ptr.vmem [resolvable:$true] %s37
      %43 = dma.hbm_to_vmem [thread:$0]  %s36, 8192, %s38, [#allocation6], 512, 512, 32
    $region21: #{bilstm_forward.2} parent=1 // pred_fallthru
      _
    // Predicated region
    $region22: #{bilstm_forward.2} parent=1 // pred_check
      _
    $region23: #{bilstm_forward.2} parent=1 // pred_check_branch
      %45 = sbr.rel (0) target = $region25
    $region24: #{bilstm_forward.2} parent=1 // pred_region
      %47 = dma.done [#allocation4], 8192
    $region25: #{bilstm_forward.2} parent=1 // pred_fallthru
      _
    // Predicated region
    $region26: #{bilstm_forward.2} parent=1 // pred_check
      _
    $region27: #{bilstm_forward.2} parent=1 // pred_check_branch
      %49 = sbr.rel (0) target = $region29
    $region28: #{bilstm_forward.2} parent=1 // pred_region
      %51 = dma.done [#allocation6], 8192
    $region29: #{bilstm_forward.2} parent=1 // pred_fallthru
      _
    %v52 = vld [vmem:[%s0] sm:$0xff]
    %v53 = vld [vmem:[%s0 + $0x8] sm:$0xff]
    %v54 = vld [vmem:[%s0 + $0x10] sm:$0xff]
    %v55 = vld [vmem:[%s0 + $0x18] sm:$0xff]
    %v56 = vld [vmem:[%s0 + $0x20] sm:$0xff]
    %v57 = vld [vmem:[%s0 + $0x28] sm:$0xff]
    %v58 = vld [vmem:[%s0 + $0x30] sm:$0xff]
    %v59 = vld [vmem:[%s0 + $0x38] sm:$0xff]
    %v60 = vld [vmem:[%s1] sm:$0x77]
    %v61 = vld [vmem:[%s1 + $0x8] sm:$0x77]
    %v62 = vld [vmem:[%s1 + $0x10] sm:$0x77]
    %v63 = vld [vmem:[%s1 + $0x18] sm:$0x77]
    %v64 = vld [vmem:[%s2] sm:$0xff]
    %v66 = vperm.slane %v64, 0
    %v67 = vperm.slane %v64, 1
    %v68 = vperm.slane %v64, 2
    %v69 = vperm.slane %v64, 3
    %v70 = vperm.slane %v64, 4
    %v71 = vperm.slane %v64, 5
    %v72 = vperm.slane %v64, 6
    %v73 = vperm.slane %v64, 7
    %86 = vst [vmem:[#allocation1] ss:$2 sm:$0xff] %v60
    %s87 = scalar_lea.vmem [#allocation1], 16
    %88 = vst [vmem:[%s87] ss:$2 sm:$0xff] %v61
    %s89 = scalar_lea.vmem [#allocation1], 32
    %90 = vst [vmem:[%s89] ss:$2 sm:$0xff] %v62
    %s91 = scalar_lea.vmem [#allocation1], 48
    %92 = vst [vmem:[%s91] ss:$2 sm:$0xff] %v63
    %v93 = vld.sshfl [vmem:[#allocation1] sm:$0xff pattern:$0x75316420]
    %v94 = vld.sshfl [vmem:[#allocation1 + $0x8] sm:$0xff pattern:$0x75316420]
    %v95 = vld.sshfl [vmem:[#allocation1 + $0x10] sm:$0xff pattern:$0x75316420]
    %v96 = vld.sshfl [vmem:[#allocation1 + $0x18] sm:$0xff pattern:$0x75316420]
    %v97 = vld.sshfl [vmem:[#allocation1 + $0x20] sm:$0xff pattern:$0x75316420]
    %v98 = vld.sshfl [vmem:[#allocation1 + $0x28] sm:$0xff pattern:$0x75316420]
    %v99 = vld.sshfl [vmem:[#allocation1 + $0x30] sm:$0xff pattern:$0x75316420]
    %v100 = vld.sshfl [vmem:[#allocation1 + $0x38] sm:$0xff pattern:$0x75316420]
    %vm101 = vcmask 23552
    %v103 = vsel %vm101, %v52, 0
    %v106 = vsel %vm101, %v53, 0
    %v109 = vsel %vm101, %v54, 0
    %v112 = vsel %vm101, %v55, 0
    %v115 = vsel %vm101, %v56, 0
    %v118 = vsel %vm101, %v57, 0
    %v121 = vsel %vm101, %v58, 0
    %v124 = vsel %vm101, %v59, 0
    %vm126 = vcmask 1042432
    %v127 = vsel %vm126, %v93, 0
    %v129 = vsel %vm126, %v94, 0
    %v131 = vsel %vm126, %v95, 0
    %v133 = vsel %vm126, %v96, 0
    %v135 = vsel %vm126, %v97, 0
    %v137 = vsel %vm126, %v98, 0
    %v139 = vsel %vm126, %v99, 0
    %v141 = vsel %vm126, %v100, 0
    %143 = vmatpush.msra.mxu0 0.0
    %144 = vmatpush.msra.mxu0 0.0
    %145 = vmatpush.msra.mxu0 0.0
    %146 = vmatpush.msra.mxu0 0.0
    %147 = vmatpush.msra.mxu0 0.0
    %148 = vmatpush.msra.mxu0 0.0
    %149 = vmatpush.msra.mxu0 0.0
    %150 = vmatpush.msra.mxu0 0.0
    %151 = vmatpush.msra.mxu0 0.0
    %152 = vmatpush.msra.mxu0 0.0
    %153 = vmatpush.msra.mxu0 0.0
    %154 = vmatpush.msra.mxu0 0.0
    %155 = vmatpush.msra.mxu0 0.0
    %156 = vmatpush.msra.mxu0 0.0
    %157 = vmatpush.msra.mxu0 0.0
    %158 = vmatpush.msra.mxu0 %v127
    %159 = vmatmul.f32.gmra.mxu0 %v103
    %v160 = vpop.f32.mrf.mxu0
    %v161 = vadd.f32 %v66, %v160
    %162 = vmatmul.f32.gmra.mxu0 %v106
    %v163 = vpop.f32.mrf.mxu0
    %v164 = vadd.f32 %v66, %v163
    %165 = vmatmul.f32.gmra.mxu0 %v109
    %v166 = vpop.f32.mrf.mxu0
    %v167 = vadd.f32 %v66, %v166
    %168 = vmatmul.f32.gmra.mxu0 %v112
    %v169 = vpop.f32.mrf.mxu0
    %v170 = vadd.f32 %v66, %v169
    %171 = vmatmul.f32.gmra.mxu0 %v115
    %v172 = vpop.f32.mrf.mxu0
    %v173 = vadd.f32 %v66, %v172
    %174 = vmatmul.f32.gmra.mxu0 %v118
    %v175 = vpop.f32.mrf.mxu0
    %v176 = vadd.f32 %v66, %v175
    %177 = vmatmul.f32.gmra.mxu0 %v121
    %v178 = vpop.f32.mrf.mxu0
    %v179 = vadd.f32 %v66, %v178
    %180 = vmatmul.f32.gmra.mxu0 %v124
    %v181 = vpop.f32.mrf.mxu0
    %v182 = vadd.f32 %v66, %v181
    %183 = vdwg.mxu0
    %184 = vmatpush.msra.mxu0 0.0
    %185 = vmatpush.msra.mxu0 0.0
    %186 = vmatpush.msra.mxu0 0.0
    %187 = vmatpush.msra.mxu0 0.0
    %188 = vmatpush.msra.mxu0 0.0
    %189 = vmatpush.msra.mxu0 0.0
    %190 = vmatpush.msra.mxu0 0.0
    %191 = vmatpush.msra.mxu0 0.0
    %192 = vmatpush.msra.mxu0 0.0
    %193 = vmatpush.msra.mxu0 0.0
    %194 = vmatpush.msra.mxu0 0.0
    %195 = vmatpush.msra.mxu0 0.0
    %196 = vmatpush.msra.mxu0 0.0
    %197 = vmatpush.msra.mxu0 0.0
    %198 = vmatpush.msra.mxu0 0.0
    %199 = vmatpush.msra.mxu0 %v129
    %200 = vmatmul.f32.gmra.mxu0 %v103
    %v201 = vpop.f32.mrf.mxu0
    %v202 = vadd.f32 %v67, %v201
    %203 = vmatmul.f32.gmra.mxu0 %v106
    %v204 = vpop.f32.mrf.mxu0
    %v205 = vadd.f32 %v67, %v204
    %206 = vmatmul.f32.gmra.mxu0 %v109
    %v207 = vpop.f32.mrf.mxu0
    %v208 = vadd.f32 %v67, %v207
    %209 = vmatmul.f32.gmra.mxu0 %v112
    %v210 = vpop.f32.mrf.mxu0
    %v211 = vadd.f32 %v67, %v210
    %212 = vmatmul.f32.gmra.mxu0 %v115
    %v213 = vpop.f32.mrf.mxu0
    %v214 = vadd.f32 %v67, %v213
    %215 = vmatmul.f32.gmra.mxu0 %v118
    %v216 = vpop.f32.mrf.mxu0
    %v217 = vadd.f32 %v67, %v216
    %218 = vmatmul.f32.gmra.mxu0 %v121
    %v219 = vpop.f32.mrf.mxu0
    %v220 = vadd.f32 %v67, %v219
    %221 = vmatmul.f32.gmra.mxu0 %v124
    %v222 = vpop.f32.mrf.mxu0
    %v223 = vadd.f32 %v67, %v222
    %224 = vdwg.mxu0
    %225 = vmatpush.msra.mxu0 0.0
    %226 = vmatpush.msra.mxu0 0.0
    %227 = vmatpush.msra.mxu0 0.0
    %228 = vmatpush.msra.mxu0 0.0
    %229 = vmatpush.msra.mxu0 0.0
    %230 = vmatpush.msra.mxu0 0.0
    %231 = vmatpush.msra.mxu0 0.0
    %232 = vmatpush.msra.mxu0 0.0
    %233 = vmatpush.msra.mxu0 0.0
    %234 = vmatpush.msra.mxu0 0.0
    %235 = vmatpush.msra.mxu0 0.0
    %236 = vmatpush.msra.mxu0 0.0
    %237 = vmatpush.msra.mxu0 0.0
    %238 = vmatpush.msra.mxu0 0.0
    %239 = vmatpush.msra.mxu0 0.0
    %240 = vmatpush.msra.mxu0 %v131
    %241 = vmatmul.f32.gmra.mxu0 %v103
    %v242 = vpop.f32.mrf.mxu0
    %v243 = vadd.f32 %v68, %v242
    %244 = vmatmul.f32.gmra.mxu0 %v106
    %v245 = vpop.f32.mrf.mxu0
    %v246 = vadd.f32 %v68, %v245
    %247 = vmatmul.f32.gmra.mxu0 %v109
    %v248 = vpop.f32.mrf.mxu0
    %v249 = vadd.f32 %v68, %v248
    %250 = vmatmul.f32.gmra.mxu0 %v112
    %v251 = vpop.f32.mrf.mxu0
    %v252 = vadd.f32 %v68, %v251
    %253 = vmatmul.f32.gmra.mxu0 %v115
    %v254 = vpop.f32.mrf.mxu0
    %v255 = vadd.f32 %v68, %v254
    %256 = vmatmul.f32.gmra.mxu0 %v118
    %v257 = vpop.f32.mrf.mxu0
    %v258 = vadd.f32 %v68, %v257
    %259 = vmatmul.f32.gmra.mxu0 %v121
    %v260 = vpop.f32.mrf.mxu0
    %v261 = vadd.f32 %v68, %v260
    %262 = vmatmul.f32.gmra.mxu0 %v124
    %v263 = vpop.f32.mrf.mxu0
    %v264 = vadd.f32 %v68, %v263
    %265 = vdwg.mxu0
    %266 = vmatpush.msra.mxu0 0.0
    %267 = vmatpush.msra.mxu0 0.0
    %268 = vmatpush.msra.mxu0 0.0
    %269 = vmatpush.msra.mxu0 0.0
    %270 = vmatpush.msra.mxu0 0.0
    %271 = vmatpush.msra.mxu0 0.0
    %272 = vmatpush.msra.mxu0 0.0
    %273 = vmatpush.msra.mxu0 0.0
    %274 = vmatpush.msra.mxu0 0.0
    %275 = vmatpush.msra.mxu0 0.0
    %276 = vmatpush.msra.mxu0 0.0
    %277 = vmatpush.msra.mxu0 0.0
    %278 = vmatpush.msra.mxu0 0.0
    %279 = vmatpush.msra.mxu0 0.0
    %280 = vmatpush.msra.mxu0 0.0
    %281 = vmatpush.msra.mxu0 %v133
    %282 = vmatmul.f32.gmra.mxu0 %v103
    %v283 = vpop.f32.mrf.mxu0
    %v284 = vadd.f32 %v69, %v283
    %285 = vmatmul.f32.gmra.mxu0 %v106
    %v286 = vpop.f32.mrf.mxu0
    %v287 = vadd.f32 %v69, %v286
    %288 = vmatmul.f32.gmra.mxu0 %v109
    %v289 = vpop.f32.mrf.mxu0
    %v290 = vadd.f32 %v69, %v289
    %291 = vmatmul.f32.gmra.mxu0 %v112
    %v292 = vpop.f32.mrf.mxu0
    %v293 = vadd.f32 %v69, %v292
    %294 = vmatmul.f32.gmra.mxu0 %v115
    %v295 = vpop.f32.mrf.mxu0
    %v296 = vadd.f32 %v69, %v295
    %297 = vmatmul.f32.gmra.mxu0 %v118
    %v298 = vpop.f32.mrf.mxu0
    %v299 = vadd.f32 %v69, %v298
    %300 = vmatmul.f32.gmra.mxu0 %v121
    %v301 = vpop.f32.mrf.mxu0
    %v302 = vadd.f32 %v69, %v301
    %303 = vmatmul.f32.gmra.mxu0 %v124
    %v304 = vpop.f32.mrf.mxu0
    %v305 = vadd.f32 %v69, %v304
    %306 = vdwg.mxu0
    %307 = vmatpush.msra.mxu0 0.0
    %308 = vmatpush.msra.mxu0 0.0
    %309 = vmatpush.msra.mxu0 0.0
    %310 = vmatpush.msra.mxu0 0.0
    %311 = vmatpush.msra.mxu0 0.0
    %312 = vmatpush.msra.mxu0 0.0
    %313 = vmatpush.msra.mxu0 0.0
    %314 = vmatpush.msra.mxu0 0.0
    %315 = vmatpush.msra.mxu0 0.0
    %316 = vmatpush.msra.mxu0 0.0
    %317 = vmatpush.msra.mxu0 0.0
    %318 = vmatpush.msra.mxu0 0.0
    %319 = vmatpush.msra.mxu0 0.0
    %320 = vmatpush.msra.mxu0 0.0
    %321 = vmatpush.msra.mxu0 0.0
    %322 = vmatpush.msra.mxu0 %v135
    %323 = vmatmul.f32.gmra.mxu0 %v103
    %v324 = vpop.f32.mrf.mxu0
    %v325 = vadd.f32 %v70, %v324
    %326 = vmatmul.f32.gmra.mxu0 %v106
    %v327 = vpop.f32.mrf.mxu0
    %v328 = vadd.f32 %v70, %v327
    %329 = vmatmul.f32.gmra.mxu0 %v109
    %v330 = vpop.f32.mrf.mxu0
    %v331 = vadd.f32 %v70, %v330
    %332 = vmatmul.f32.gmra.mxu0 %v112
    %v333 = vpop.f32.mrf.mxu0
    %v334 = vadd.f32 %v70, %v333
    %335 = vmatmul.f32.gmra.mxu0 %v115
    %v336 = vpop.f32.mrf.mxu0
    %v337 = vadd.f32 %v70, %v336
    %338 = vmatmul.f32.gmra.mxu0 %v118
    %v339 = vpop.f32.mrf.mxu0
    %v340 = vadd.f32 %v70, %v339
    %341 = vmatmul.f32.gmra.mxu0 %v121
    %v342 = vpop.f32.mrf.mxu0
    %v343 = vadd.f32 %v70, %v342
    %344 = vmatmul.f32.gmra.mxu0 %v124
    %v345 = vpop.f32.mrf.mxu0
    %v346 = vadd.f32 %v70, %v345
    %347 = vdwg.mxu0
    %348 = vmatpush.msra.mxu0 0.0
    %349 = vmatpush.msra.mxu0 0.0
    %350 = vmatpush.msra.mxu0 0.0
    %351 = vmatpush.msra.mxu0 0.0
    %352 = vmatpush.msra.mxu0 0.0
    %353 = vmatpush.msra.mxu0 0.0
    %354 = vmatpush.msra.mxu0 0.0
    %355 = vmatpush.msra.mxu0 0.0
    %356 = vmatpush.msra.mxu0 0.0
    %357 = vmatpush.msra.mxu0 0.0
    %358 = vmatpush.msra.mxu0 0.0
    %359 = vmatpush.msra.mxu0 0.0
    %360 = vmatpush.msra.mxu0 0.0
    %361 = vmatpush.msra.mxu0 0.0
    %362 = vmatpush.msra.mxu0 0.0
    %363 = vmatpush.msra.mxu0 %v137
    %364 = vmatmul.f32.gmra.mxu0 %v103
    %v365 = vpop.f32.mrf.mxu0
    %v366 = vadd.f32 %v71, %v365
    %367 = vmatmul.f32.gmra.mxu0 %v106
    %v368 = vpop.f32.mrf.mxu0
    %v369 = vadd.f32 %v71, %v368
    %370 = vmatmul.f32.gmra.mxu0 %v109
    %v371 = vpop.f32.mrf.mxu0
    %v372 = vadd.f32 %v71, %v371
    %373 = vmatmul.f32.gmra.mxu0 %v112
    %v374 = vpop.f32.mrf.mxu0
    %v375 = vadd.f32 %v71, %v374
    %376 = vmatmul.f32.gmra.mxu0 %v115
    %v377 = vpop.f32.mrf.mxu0
    %v378 = vadd.f32 %v71, %v377
    %379 = vmatmul.f32.gmra.mxu0 %v118
    %v380 = vpop.f32.mrf.mxu0
    %v381 = vadd.f32 %v71, %v380
    %382 = vmatmul.f32.gmra.mxu0 %v121
    %v383 = vpop.f32.mrf.mxu0
    %v384 = vadd.f32 %v71, %v383
    %385 = vmatmul.f32.gmra.mxu0 %v124
    %v386 = vpop.f32.mrf.mxu0
    %v387 = vadd.f32 %v71, %v386
    %388 = vdwg.mxu0
    %389 = vmatpush.msra.mxu0 0.0
    %390 = vmatpush.msra.mxu0 0.0
    %391 = vmatpush.msra.mxu0 0.0
    %392 = vmatpush.msra.mxu0 0.0
    %393 = vmatpush.msra.mxu0 0.0
    %394 = vmatpush.msra.mxu0 0.0
    %395 = vmatpush.msra.mxu0 0.0
    %396 = vmatpush.msra.mxu0 0.0
    %397 = vmatpush.msra.mxu0 0.0
    %398 = vmatpush.msra.mxu0 0.0
    %399 = vmatpush.msra.mxu0 0.0
    %400 = vmatpush.msra.mxu0 0.0
    %401 = vmatpush.msra.mxu0 0.0
    %402 = vmatpush.msra.mxu0 0.0
    %403 = vmatpush.msra.mxu0 0.0
    %404 = vmatpush.msra.mxu0 %v139
    %405 = vmatmul.f32.gmra.mxu0 %v103
    %v406 = vpop.f32.mrf.mxu0
    %v407 = vadd.f32 %v72, %v406
    %408 = vmatmul.f32.gmra.mxu0 %v106
    %v409 = vpop.f32.mrf.mxu0
    %v410 = vadd.f32 %v72, %v409
    %411 = vmatmul.f32.gmra.mxu0 %v109
    %v412 = vpop.f32.mrf.mxu0
    %v413 = vadd.f32 %v72, %v412
    %414 = vmatmul.f32.gmra.mxu0 %v112
    %v415 = vpop.f32.mrf.mxu0
    %v416 = vadd.f32 %v72, %v415
    %417 = vmatmul.f32.gmra.mxu0 %v115
    %v418 = vpop.f32.mrf.mxu0
    %v419 = vadd.f32 %v72, %v418
    %420 = vmatmul.f32.gmra.mxu0 %v118
    %v421 = vpop.f32.mrf.mxu0
    %v422 = vadd.f32 %v72, %v421
    %423 = vmatmul.f32.gmra.mxu0 %v121
    %v424 = vpop.f32.mrf.mxu0
    %v425 = vadd.f32 %v72, %v424
    %426 = vmatmul.f32.gmra.mxu0 %v124
    %v427 = vpop.f32.mrf.mxu0
    %v428 = vadd.f32 %v72, %v427
    %429 = vdwg.mxu0
    %430 = vmatpush.msra.mxu0 0.0
    %431 = vmatpush.msra.mxu0 0.0
    %432 = vmatpush.msra.mxu0 0.0
    %433 = vmatpush.msra.mxu0 0.0
    %434 = vmatpush.msra.mxu0 0.0
    %435 = vmatpush.msra.mxu0 0.0
    %436 = vmatpush.msra.mxu0 0.0
    %437 = vmatpush.msra.mxu0 0.0
    %438 = vmatpush.msra.mxu0 0.0
    %439 = vmatpush.msra.mxu0 0.0
    %440 = vmatpush.msra.mxu0 0.0
    %441 = vmatpush.msra.mxu0 0.0
    %442 = vmatpush.msra.mxu0 0.0
    %443 = vmatpush.msra.mxu0 0.0
    %444 = vmatpush.msra.mxu0 0.0
    %445 = vmatpush.msra.mxu0 %v141
    %446 = vmatmul.f32.gmra.mxu0 %v103
    %v447 = vpop.f32.mrf.mxu0
    %v448 = vadd.f32 %v73, %v447
    %449 = vmatmul.f32.gmra.mxu0 %v106
    %v450 = vpop.f32.mrf.mxu0
    %v451 = vadd.f32 %v73, %v450
    %452 = vmatmul.f32.gmra.mxu0 %v109
    %v453 = vpop.f32.mrf.mxu0
    %v454 = vadd.f32 %v73, %v453
    %455 = vmatmul.f32.gmra.mxu0 %v112
    %v456 = vpop.f32.mrf.mxu0
    %v457 = vadd.f32 %v73, %v456
    %458 = vmatmul.f32.gmra.mxu0 %v115
    %v459 = vpop.f32.mrf.mxu0
    %v460 = vadd.f32 %v73, %v459
    %461 = vmatmul.f32.gmra.mxu0 %v118
    %v462 = vpop.f32.mrf.mxu0
    %v463 = vadd.f32 %v73, %v462
    %464 = vmatmul.f32.gmra.mxu0 %v121
    %v465 = vpop.f32.mrf.mxu0
    %v466 = vadd.f32 %v73, %v465
    %467 = vmatmul.f32.gmra.mxu0 %v124
    %v468 = vpop.f32.mrf.mxu0
    %v469 = vadd.f32 %v73, %v468
    %470 = vdwg.mxu0
    %471 = vst [vmem:[#allocation2] sm:$0xff] %v161
    %472 = vst [vmem:[#allocation2 + $0x8] sm:$0xff] %v202
    %473 = vst [vmem:[#allocation2 + $0x10] sm:$0xff] %v243
    %474 = vst [vmem:[#allocation2 + $0x18] sm:$0xff] %v284
    %475 = vst [vmem:[#allocation2 + $0x20] sm:$0xff] %v325
    %476 = vst [vmem:[#allocation2 + $0x28] sm:$0xff] %v366
    %477 = vst [vmem:[#allocation2 + $0x30] sm:$0xff] %v407
    %478 = vst [vmem:[#allocation2 + $0x38] sm:$0xff] %v448
    %479 = vst [vmem:[#allocation2 + $0x40] sm:$0xff] %v164
    %480 = vst [vmem:[#allocation2 + $0x48] sm:$0xff] %v205
    %481 = vst [vmem:[#allocation2 + $0x50] sm:$0xff] %v246
    %482 = vst [vmem:[#allocation2 + $0x58] sm:$0xff] %v287
    %483 = vst [vmem:[#allocation2 + $0x60] sm:$0xff] %v328
    %484 = vst [vmem:[#allocation2 + $0x68] sm:$0xff] %v369
    %485 = vst [vmem:[#allocation2 + $0x70] sm:$0xff] %v410
    %486 = vst [vmem:[#allocation2 + $0x78] sm:$0xff] %v451
    %487 = vst [vmem:[#allocation2 + $0x80] sm:$0xff] %v167
    %488 = vst [vmem:[#allocation2 + $0x88] sm:$0xff] %v208
    %489 = vst [vmem:[#allocation2 + $0x90] sm:$0xff] %v249
    %490 = vst [vmem:[#allocation2 + $0x98] sm:$0xff] %v290
    %491 = vst [vmem:[#allocation2 + $0xa0] sm:$0xff] %v331
    %492 = vst [vmem:[#allocation2 + $0xa8] sm:$0xff] %v372
    %493 = vst [vmem:[#allocation2 + $0xb0] sm:$0xff] %v413
    %494 = vst [vmem:[#allocation2 + $0xb8] sm:$0xff] %v454
    %495 = vst [vmem:[#allocation2 + $0xc0] sm:$0xff] %v170
    %496 = vst [vmem:[#allocation2 + $0xc8] sm:$0xff] %v211
    %497 = vst [vmem:[#allocation2 + $0xd0] sm:$0xff] %v252
    %498 = vst [vmem:[#allocation2 + $0xd8] sm:$0xff] %v293
    %499 = vst [vmem:[#allocation2 + $0xe0] sm:$0xff] %v334
    %500 = vst [vmem:[#allocation2 + $0xe8] sm:$0xff] %v375
    %501 = vst [vmem:[#allocation2 + $0xf0] sm:$0xff] %v416
    %502 = vst [vmem:[#allocation2 + $0xf8] sm:$0xff] %v457
    %503 = vst [vmem:[#allocation2 + $0x100] sm:$0xff] %v173
    %504 = vst [vmem:[#allocation2 + $0x108] sm:$0xff] %v214
    %505 = vst [vmem:[#allocation2 + $0x110] sm:$0xff] %v255
    %506 = vst [vmem:[#allocation2 + $0x118] sm:$0xff] %v296
    %507 = vst [vmem:[#allocation2 + $0x120] sm:$0xff] %v337
    %508 = vst [vmem:[#allocation2 + $0x128] sm:$0xff] %v378
    %509 = vst [vmem:[#allocation2 + $0x130] sm:$0xff] %v419
    %510 = vst [vmem:[#allocation2 + $0x138] sm:$0xff] %v460
    %511 = vst [vmem:[#allocation2 + $0x140] sm:$0xff] %v176
    %512 = vst [vmem:[#allocation2 + $0x148] sm:$0xff] %v217
    %513 = vst [vmem:[#allocation2 + $0x150] sm:$0xff] %v258
    %514 = vst [vmem:[#allocation2 + $0x158] sm:$0xff] %v299
    %515 = vst [vmem:[#allocation2 + $0x160] sm:$0xff] %v340
    %516 = vst [vmem:[#allocation2 + $0x168] sm:$0xff] %v381
    %517 = vst [vmem:[#allocation2 + $0x170] sm:$0xff] %v422
    %518 = vst [vmem:[#allocation2 + $0x178] sm:$0xff] %v463
    %519 = vst [vmem:[#allocation2 + $0x180] sm:$0xff] %v179
    %520 = vst [vmem:[#allocation2 + $0x188] sm:$0xff] %v220
    %521 = vst [vmem:[#allocation2 + $0x190] sm:$0xff] %v261
    %522 = vst [vmem:[#allocation2 + $0x198] sm:$0xff] %v302
    %523 = vst [vmem:[#allocation2 + $0x1a0] sm:$0xff] %v343
    %524 = vst [vmem:[#allocation2 + $0x1a8] sm:$0xff] %v384
    %525 = vst [vmem:[#allocation2 + $0x1b0] sm:$0xff] %v425
    %526 = vst [vmem:[#allocation2 + $0x1b8] sm:$0xff] %v466
    %527 = vst [vmem:[#allocation2 + $0x1c0] sm:$0xff] %v182
    %528 = vst [vmem:[#allocation2 + $0x1c8] sm:$0xff] %v223
    %529 = vst [vmem:[#allocation2 + $0x1d0] sm:$0xff] %v264
    %530 = vst [vmem:[#allocation2 + $0x1d8] sm:$0xff] %v305
    %531 = vst [vmem:[#allocation2 + $0x1e0] sm:$0xff] %v346
    %532 = vst [vmem:[#allocation2 + $0x1e8] sm:$0xff] %v387
    %533 = vst [vmem:[#allocation2 + $0x1f0] sm:$0xff] %v428
    %534 = vst [vmem:[#allocation2 + $0x1f8] sm:$0xff] %v469
    %v535 = vld [vmem:[#allocation2] sm:$0xff]
    %v536 = vld [vmem:[#allocation2 + $0x8] sm:$0xff]
    %v537 = vld [vmem:[#allocation2 + $0x10] sm:$0xff]
    %v538 = vld [vmem:[#allocation2 + $0x18] sm:$0xff]
    %v539 = vld [vmem:[#allocation2 + $0x1e0] sm:$0xff]
    %v540 = vld [vmem:[#allocation2 + $0x1e8] sm:$0xff]
    %v541 = vld [vmem:[#allocation2 + $0x1f0] sm:$0xff]
    %v542 = vld [vmem:[#allocation2 + $0x1f8] sm:$0xff]
    %v543 = vld [vmem:[#allocation3] sm:$0xff]
    %v544 = vld [vmem:[#allocation3 + $0x8] sm:$0xff]
    %v545 = vld [vmem:[#allocation3 + $0x10] sm:$0xff]
    %v546 = vld [vmem:[#allocation3 + $0x18] sm:$0xff]
    %v547 = vld [vmem:[#allocation3 + $0x20] sm:$0xff]
    %v548 = vld [vmem:[#allocation3 + $0x28] sm:$0xff]
    %v549 = vld [vmem:[#allocation3 + $0x30] sm:$0xff]
    %v550 = vld [vmem:[#allocation3 + $0x38] sm:$0xff]
    %v551 = vld [vmem:[#allocation3 + $0x40] sm:$0xff]
    %v552 = vld [vmem:[#allocation3 + $0x48] sm:$0xff]
    %v553 = vld [vmem:[#allocation3 + $0x50] sm:$0xff]
    %v554 = vld [vmem:[#allocation3 + $0x58] sm:$0xff]
    %v555 = vld [vmem:[#allocation3 + $0x60] sm:$0xff]
    %v556 = vld [vmem:[#allocation3 + $0x68] sm:$0xff]
    %v557 = vld [vmem:[#allocation3 + $0x70] sm:$0xff]
    %v558 = vld [vmem:[#allocation3 + $0x78] sm:$0xff]
    %v559 = vld [vmem:[#allocation3 + $0x80] sm:$0xff]
    %v560 = vld [vmem:[#allocation3 + $0x88] sm:$0xff]
    %v561 = vld [vmem:[#allocation3 + $0x90] sm:$0xff]
    %v562 = vld [vmem:[#allocation3 + $0x98] sm:$0xff]
    %v563 = vld [vmem:[#allocation3 + $0xa0] sm:$0xff]
    %v564 = vld [vmem:[#allocation3 + $0xa8] sm:$0xff]
    %v565 = vld [vmem:[#allocation3 + $0xb0] sm:$0xff]
    %v566 = vld [vmem:[#allocation3 + $0xb8] sm:$0xff]
    %v567 = vld [vmem:[#allocation3 + $0xc0] sm:$0xff]
    %v568 = vld [vmem:[#allocation3 + $0xc8] sm:$0xff]
    %v569 = vld [vmem:[#allocation3 + $0xd0] sm:$0xff]
    %v570 = vld [vmem:[#allocation3 + $0xd8] sm:$0xff]
    %v571 = vld [vmem:[#allocation3 + $0xe0] sm:$0xff]
    %v572 = vld [vmem:[#allocation3 + $0xe8] sm:$0xff]
    %v573 = vld [vmem:[#allocation3 + $0xf0] sm:$0xff]
    %v574 = vld [vmem:[#allocation3 + $0xf8] sm:$0xff]
    %v575 = vld [vmem:[#allocation3 + $0x100] sm:$0xff]
    %v576 = vld [vmem:[#allocation3 + $0x108] sm:$0xff]
    %v577 = vld [vmem:[#allocation3 + $0x110] sm:$0xff]
    %v578 = vld [vmem:[#allocation3 + $0x118] sm:$0xff]
    %v579 = vld [vmem:[#allocation3 + $0x120] sm:$0xff]
    %v580 = vld [vmem:[#allocation3 + $0x128] sm:$0xff]
    %v581 = vld [vmem:[#allocation3 + $0x130] sm:$0xff]
    %v582 = vld [vmem:[#allocation3 + $0x138] sm:$0xff]
    %v583 = vld [vmem:[#allocation3 + $0x140] sm:$0xff]
    %v584 = vld [vmem:[#allocation3 + $0x148] sm:$0xff]
    %v585 = vld [vmem:[#allocation3 + $0x150] sm:$0xff]
    %v586 = vld [vmem:[#allocation3 + $0x158] sm:$0xff]
    %v587 = vld [vmem:[#allocation3 + $0x160] sm:$0xff]
    %v588 = vld [vmem:[#allocation3 + $0x168] sm:$0xff]
    %v589 = vld [vmem:[#allocation3 + $0x170] sm:$0xff]
    %v590 = vld [vmem:[#allocation3 + $0x178] sm:$0xff]
    %v591 = vld [vmem:[#allocation3 + $0x180] sm:$0xff]
    %v592 = vld [vmem:[#allocation3 + $0x188] sm:$0xff]
    %v593 = vld [vmem:[#allocation3 + $0x190] sm:$0xff]
    %v594 = vld [vmem:[#allocation3 + $0x198] sm:$0xff]
    %v595 = vld [vmem:[#allocation3 + $0x1a0] sm:$0xff]
    %v596 = vld [vmem:[#allocation3 + $0x1a8] sm:$0xff]
    %v597 = vld [vmem:[#allocation3 + $0x1b0] sm:$0xff]
    %v598 = vld [vmem:[#allocation3 + $0x1b8] sm:$0xff]
    %v599 = vld [vmem:[#allocation3 + $0x1c0] sm:$0xff]
    %v600 = vld [vmem:[#allocation3 + $0x1c8] sm:$0xff]
    %v601 = vld [vmem:[#allocation3 + $0x1d0] sm:$0xff]
    %v602 = vld [vmem:[#allocation3 + $0x1d8] sm:$0xff]
    %v603 = vld [vmem:[#allocation3 + $0x1e0] sm:$0xff]
    %v604 = vld [vmem:[#allocation3 + $0x1e8] sm:$0xff]
    %v605 = vld [vmem:[#allocation3 + $0x1f0] sm:$0xff]
    %v606 = vld [vmem:[#allocation3 + $0x1f8] sm:$0xff]
    %607 = vmatpush.msra.mxu0 %v603
    %608 = vmatpush.msra.mxu0 %v599
    %609 = vmatpush.msra.mxu0 %v595
    %610 = vmatpush.msra.mxu0 %v591
    %611 = vmatpush.msra.mxu0 %v587
    %612 = vmatpush.msra.mxu0 %v583
    %613 = vmatpush.msra.mxu0 %v579
    %614 = vmatpush.msra.mxu0 %v575
    %615 = vmatpush.msra.mxu0 %v571
    %616 = vmatpush.msra.mxu0 %v567
    %617 = vmatpush.msra.mxu0 %v563
    %618 = vmatpush.msra.mxu0 %v559
    %619 = vmatpush.msra.mxu0 %v555
    %620 = vmatpush.msra.mxu0 %v551
    %621 = vmatpush.msra.mxu0 %v547
    %622 = vmatpush.msra.mxu0 %v543
    %623 = vmatmul.f32.gmra.mxu0 0.0
    %v624 = vpop.f32.mrf.mxu0
    %v625 = vadd.f32 0.0, %v624
    %626 = vdwg.mxu0
    %627 = vmatpush.msra.mxu0 %v604
    %628 = vmatpush.msra.mxu0 %v600
    %629 = vmatpush.msra.mxu0 %v596
    %630 = vmatpush.msra.mxu0 %v592
    %631 = vmatpush.msra.mxu0 %v588
    %632 = vmatpush.msra.mxu0 %v584
    %633 = vmatpush.msra.mxu0 %v580
    %634 = vmatpush.msra.mxu0 %v576
    %635 = vmatpush.msra.mxu0 %v572
    %636 = vmatpush.msra.mxu0 %v568
    %637 = vmatpush.msra.mxu0 %v564
    %638 = vmatpush.msra.mxu0 %v560
    %639 = vmatpush.msra.mxu0 %v556
    %640 = vmatpush.msra.mxu0 %v552
    %641 = vmatpush.msra.mxu0 %v548
    %642 = vmatpush.msra.mxu0 %v544
    %643 = vmatmul.f32.gmra.mxu0 0.0
    %v644 = vpop.f32.mrf.mxu0
    %v645 = vadd.f32 0.0, %v644
    %646 = vdwg.mxu0
    %647 = vmatpush.msra.mxu0 %v605
    %648 = vmatpush.msra.mxu0 %v601
    %649 = vmatpush.msra.mxu0 %v597
    %650 = vmatpush.msra.mxu0 %v593
    %651 = vmatpush.msra.mxu0 %v589
    %652 = vmatpush.msra.mxu0 %v585
    %653 = vmatpush.msra.mxu0 %v581
    %654 = vmatpush.msra.mxu0 %v577
    %655 = vmatpush.msra.mxu0 %v573
    %656 = vmatpush.msra.mxu0 %v569
    %657 = vmatpush.msra.mxu0 %v565
    %658 = vmatpush.msra.mxu0 %v561
    %659 = vmatpush.msra.mxu0 %v557
    %660 = vmatpush.msra.mxu0 %v553
    %661 = vmatpush.msra.mxu0 %v549
    %662 = vmatpush.msra.mxu0 %v545
    %663 = vmatmul.f32.gmra.mxu0 0.0
    %v664 = vpop.f32.mrf.mxu0
    %v665 = vadd.f32 0.0, %v664
    %666 = vdwg.mxu0
    %667 = vmatpush.msra.mxu0 %v606
    %668 = vmatpush.msra.mxu0 %v602
    %669 = vmatpush.msra.mxu0 %v598
    %670 = vmatpush.msra.mxu0 %v594
    %671 = vmatpush.msra.mxu0 %v590
    %672 = vmatpush.msra.mxu0 %v586
    %673 = vmatpush.msra.mxu0 %v582
    %674 = vmatpush.msra.mxu0 %v578
    %675 = vmatpush.msra.mxu0 %v574
    %676 = vmatpush.msra.mxu0 %v570
    %677 = vmatpush.msra.mxu0 %v566
    %678 = vmatpush.msra.mxu0 %v562
    %679 = vmatpush.msra.mxu0 %v558
    %680 = vmatpush.msra.mxu0 %v554
    %681 = vmatpush.msra.mxu0 %v550
    %682 = vmatpush.msra.mxu0 %v546
    %683 = vmatmul.f32.gmra.mxu0 0.0
    %v684 = vpop.f32.mrf.mxu0
    %v685 = vadd.f32 0.0, %v684
    %686 = vdwg.mxu0
    %v687 = vadd.f32 %v535, %v625
    %v688 = vadd.f32 %v536, %v645
    %v689 = vadd.f32 %v537, %v665
    %v690 = vadd.f32 %v538, %v685
    %v691 = vxor.u32 %v687, 2147483648
    %v692 = vmul.f32 %v691, 1.442695
    %v693 = vpow.pop %v692
    %v694 = vadd.f32 %v693, 1.0
    %v695 = vrcp.pop %v694
    %v696 = vmul.f32 %v694, %v695
    %v697 = vsub.f32 1.0, %v696
    %v698 = vmul.f32 %v695, %v697
    %v699 = vadd.f32 %v695, %v698
    %vm700 = vweird.f32 %v694
    %vm701 = vweird.f32 %v695
    %vm702 = vmor %vm700, %vm701
    %v703 = vsel %vm702, %v695, %v699
    %v704 = vand.u32 2147483647, %v694
    %vm705 = vcmp.eq.f32.partialorder %v704, 8.507059e+37
    %v706 = vand.u32 %v694, 2147483648
    %v707 = vor.u32 1.1754944e-38, %v706
    %v708 = vsel %vm705, %v707, %v703
    %v709 = vmul.f32 1.0, %v708
    %v710 = vxor.u32 %v688, 2147483648
    %v711 = vmul.f32 %v710, 1.442695
    %v712 = vpow.pop %v711
    %v713 = vadd.f32 %v712, 1.0
    %v714 = vrcp.pop %v713
    %v715 = vmul.f32 %v713, %v714
    %v716 = vsub.f32 1.0, %v715
    %v717 = vmul.f32 %v714, %v716
    %v718 = vadd.f32 %v714, %v717
    %vm719 = vweird.f32 %v713
    %vm720 = vweird.f32 %v714
    %vm721 = vmor %vm719, %vm720
    %v722 = vsel %vm721, %v714, %v718
    %v723 = vand.u32 2147483647, %v713
    %vm724 = vcmp.eq.f32.partialorder %v723, 8.507059e+37
    %v725 = vand.u32 %v713, 2147483648
    %v726 = vor.u32 1.1754944e-38, %v725
    %v727 = vsel %vm724, %v726, %v722
    %v728 = vmul.f32 1.0, %v727
    %v729 = vtanh.pop %v689
    %v730 = vxor.u32 %v690, 2147483648
    %v731 = vmul.f32 %v730, 1.442695
    %v732 = vpow.pop %v731
    %v733 = vadd.f32 %v732, 1.0
    %v734 = vrcp.pop %v733
    %v735 = vmul.f32 %v733, %v734
    %v736 = vsub.f32 1.0, %v735
    %v737 = vmul.f32 %v734, %v736
    %v738 = vadd.f32 %v734, %v737
    %vm739 = vweird.f32 %v733
    %vm740 = vweird.f32 %v734
    %vm741 = vmor %vm739, %vm740
    %v742 = vsel %vm741, %v734, %v738
    %v743 = vand.u32 2147483647, %v733
    %vm744 = vcmp.eq.f32.partialorder %v743, 8.507059e+37
    %v745 = vand.u32 %v733, 2147483648
    %v746 = vor.u32 1.1754944e-38, %v745
    %v747 = vsel %vm744, %v746, %v742
    %v748 = vmul.f32 1.0, %v747
    %v749 = vmul.f32 %v728, 0.0
    %v750 = vmul.f32 %v709, %v729
    %v751 = vadd.f32 %v749, %v750
    %v752 = vtanh.pop %v751
    %v753 = vmul.f32 %v748, %v752
    %v754 = vld [vmem:[#allocation5] sm:$0xff]
    %v755 = vld [vmem:[#allocation5 + $0x8] sm:$0xff]
    %v756 = vld [vmem:[#allocation5 + $0x10] sm:$0xff]
    %v757 = vld [vmem:[#allocation5 + $0x18] sm:$0xff]
    %v758 = vld [vmem:[#allocation5 + $0x20] sm:$0xff]
    %v759 = vld [vmem:[#allocation5 + $0x28] sm:$0xff]
    %v760 = vld [vmem:[#allocation5 + $0x30] sm:$0xff]
    %v761 = vld [vmem:[#allocation5 + $0x38] sm:$0xff]
    %v762 = vld [vmem:[#allocation5 + $0x40] sm:$0xff]
    %v763 = vld [vmem:[#allocation5 + $0x48] sm:$0xff]
    %v764 = vld [vmem:[#allocation5 + $0x50] sm:$0xff]
    %v765 = vld [vmem:[#allocation5 + $0x58] sm:$0xff]
    %v766 = vld [vmem:[#allocation5 + $0x60] sm:$0xff]
    %v767 = vld [vmem:[#allocation5 + $0x68] sm:$0xff]
    %v768 = vld [vmem:[#allocation5 + $0x70] sm:$0xff]
    %v769 = vld [vmem:[#allocation5 + $0x78] sm:$0xff]
    %v770 = vld [vmem:[#allocation5 + $0x80] sm:$0xff]
    %v771 = vld [vmem:[#allocation5 + $0x88] sm:$0xff]
    %v772 = vld [vmem:[#allocation5 + $0x90] sm:$0xff]
    %v773 = vld [vmem:[#allocation5 + $0x98] sm:$0xff]
    %v774 = vld [vmem:[#allocation5 + $0xa0] sm:$0xff]
    %v775 = vld [vmem:[#allocation5 + $0xa8] sm:$0xff]
    %v776 = vld [vmem:[#allocation5 + $0xb0] sm:$0xff]
    %v777 = vld [vmem:[#allocation5 + $0xb8] sm:$0xff]
    %v778 = vld [vmem:[#allocation5 + $0xc0] sm:$0xff]
    %v779 = vld [vmem:[#allocation5 + $0xc8] sm:$0xff]
    %v780 = vld [vmem:[#allocation5 + $0xd0] sm:$0xff]
    %v781 = vld [vmem:[#allocation5 + $0xd8] sm:$0xff]
    %v782 = vld [vmem:[#allocation5 + $0xe0] sm:$0xff]
    %v783 = vld [vmem:[#allocation5 + $0xe8] sm:$0xff]
    %v784 = vld [vmem:[#allocation5 + $0xf0] sm:$0xff]
    %v785 = vld [vmem:[#allocation5 + $0xf8] sm:$0xff]
    %v786 = vld [vmem:[#allocation5 + $0x100] sm:$0xff]
    %v787 = vld [vmem:[#allocation5 + $0x108] sm:$0xff]
    %v788 = vld [vmem:[#allocation5 + $0x110] sm:$0xff]
    %v789 = vld [vmem:[#allocation5 + $0x118] sm:$0xff]
    %v790 = vld [vmem:[#allocation5 + $0x120] sm:$0xff]
    %v791 = vld [vmem:[#allocation5 + $0x128] sm:$0xff]
    %v792 = vld [vmem:[#allocation5 + $0x130] sm:$0xff]
    %v793 = vld [vmem:[#allocation5 + $0x138] sm:$0xff]
    %v794 = vld [vmem:[#allocation5 + $0x140] sm:$0xff]
    %v795 = vld [vmem:[#allocation5 + $0x148] sm:$0xff]
    %v796 = vld [vmem:[#allocation5 + $0x150] sm:$0xff]
    %v797 = vld [vmem:[#allocation5 + $0x158] sm:$0xff]
    %v798 = vld [vmem:[#allocation5 + $0x160] sm:$0xff]
    %v799 = vld [vmem:[#allocation5 + $0x168] sm:$0xff]
    %v800 = vld [vmem:[#allocation5 + $0x170] sm:$0xff]
    %v801 = vld [vmem:[#allocation5 + $0x178] sm:$0xff]
    %v802 = vld [vmem:[#allocation5 + $0x180] sm:$0xff]
    %v803 = vld [vmem:[#allocation5 + $0x188] sm:$0xff]
    %v804 = vld [vmem:[#allocation5 + $0x190] sm:$0xff]
    %v805 = vld [vmem:[#allocation5 + $0x198] sm:$0xff]
    %v806 = vld [vmem:[#allocation5 + $0x1a0] sm:$0xff]
    %v807 = vld [vmem:[#allocation5 + $0x1a8] sm:$0xff]
    %v808 = vld [vmem:[#allocation5 + $0x1b0] sm:$0xff]
    %v809 = vld [vmem:[#allocation5 + $0x1b8] sm:$0xff]
    %v810 = vld [vmem:[#allocation5 + $0x1c0] sm:$0xff]
    %v811 = vld [vmem:[#allocation5 + $0x1c8] sm:$0xff]
    %v812 = vld [vmem:[#allocation5 + $0x1d0] sm:$0xff]
    %v813 = vld [vmem:[#allocation5 + $0x1d8] sm:$0xff]
    %v814 = vld [vmem:[#allocation5 + $0x1e0] sm:$0xff]
    %v815 = vld [vmem:[#allocation5 + $0x1e8] sm:$0xff]
    %v816 = vld [vmem:[#allocation5 + $0x1f0] sm:$0xff]
    %v817 = vld [vmem:[#allocation5 + $0x1f8] sm:$0xff]
    %818 = vmatpush.msra.mxu0 %v814
    %819 = vmatpush.msra.mxu0 %v810
    %820 = vmatpush.msra.mxu0 %v806
    %821 = vmatpush.msra.mxu0 %v802
    %822 = vmatpush.msra.mxu0 %v798
    %823 = vmatpush.msra.mxu0 %v794
    %824 = vmatpush.msra.mxu0 %v790
    %825 = vmatpush.msra.mxu0 %v786
    %826 = vmatpush.msra.mxu0 %v782
    %827 = vmatpush.msra.mxu0 %v778
    %828 = vmatpush.msra.mxu0 %v774
    %829 = vmatpush.msra.mxu0 %v770
    %830 = vmatpush.msra.mxu0 %v766
    %831 = vmatpush.msra.mxu0 %v762
    %832 = vmatpush.msra.mxu0 %v758
    %833 = vmatpush.msra.mxu0 %v754
    %834 = vmatmul.f32.gmra.mxu0 0.0
    %v835 = vpop.f32.mrf.mxu0
    %v836 = vadd.f32 0.0, %v835
    %837 = vdwg.mxu0
    %838 = vmatpush.msra.mxu0 %v815
    %839 = vmatpush.msra.mxu0 %v811
    %840 = vmatpush.msra.mxu0 %v807
    %841 = vmatpush.msra.mxu0 %v803
    %842 = vmatpush.msra.mxu0 %v799
    %843 = vmatpush.msra.mxu0 %v795
    %844 = vmatpush.msra.mxu0 %v791
    %845 = vmatpush.msra.mxu0 %v787
    %846 = vmatpush.msra.mxu0 %v783
    %847 = vmatpush.msra.mxu0 %v779
    %848 = vmatpush.msra.mxu0 %v775
    %849 = vmatpush.msra.mxu0 %v771
    %850 = vmatpush.msra.mxu0 %v767
    %851 = vmatpush.msra.mxu0 %v763
    %852 = vmatpush.msra.mxu0 %v759
    %853 = vmatpush.msra.mxu0 %v755
    %854 = vmatmul.f32.gmra.mxu0 0.0
    %v855 = vpop.f32.mrf.mxu0
    %v856 = vadd.f32 0.0, %v855
    %857 = vdwg.mxu0
    %858 = vmatpush.msra.mxu0 %v816
    %859 = vmatpush.msra.mxu0 %v812
    %860 = vmatpush.msra.mxu0 %v808
    %861 = vmatpush.msra.mxu0 %v804
    %862 = vmatpush.msra.mxu0 %v800
    %863 = vmatpush.msra.mxu0 %v796
    %864 = vmatpush.msra.mxu0 %v792
    %865 = vmatpush.msra.mxu0 %v788
    %866 = vmatpush.msra.mxu0 %v784
    %867 = vmatpush.msra.mxu0 %v780
    %868 = vmatpush.msra.mxu0 %v776
    %869 = vmatpush.msra.mxu0 %v772
    %870 = vmatpush.msra.mxu0 %v768
    %871 = vmatpush.msra.mxu0 %v764
    %872 = vmatpush.msra.mxu0 %v760
    %873 = vmatpush.msra.mxu0 %v756
    %874 = vmatmul.f32.gmra.mxu0 0.0
    %v875 = vpop.f32.mrf.mxu0
    %v876 = vadd.f32 0.0, %v875
    %877 = vdwg.mxu0
    %878 = vmatpush.msra.mxu0 %v817
    %879 = vmatpush.msra.mxu0 %v813
    %880 = vmatpush.msra.mxu0 %v809
    %881 = vmatpush.msra.mxu0 %v805
    %882 = vmatpush.msra.mxu0 %v801
    %883 = vmatpush.msra.mxu0 %v797
    %884 = vmatpush.msra.mxu0 %v793
    %885 = vmatpush.msra.mxu0 %v789
    %886 = vmatpush.msra.mxu0 %v785
    %887 = vmatpush.msra.mxu0 %v781
    %888 = vmatpush.msra.mxu0 %v777
    %889 = vmatpush.msra.mxu0 %v773
    %890 = vmatpush.msra.mxu0 %v769
    %891 = vmatpush.msra.mxu0 %v765
    %892 = vmatpush.msra.mxu0 %v761
    %893 = vmatpush.msra.mxu0 %v757
    %894 = vmatmul.f32.gmra.mxu0 0.0
    %v895 = vpop.f32.mrf.mxu0
    %v896 = vadd.f32 0.0, %v895
    %897 = vdwg.mxu0
    %v898 = vadd.f32 %v539, %v836
    %v899 = vadd.f32 %v540, %v856
    %v900 = vadd.f32 %v541, %v876
    %v901 = vadd.f32 %v542, %v896
    %v902 = vxor.u32 %v898, 2147483648
    %v903 = vmul.f32 %v902, 1.442695
    %v904 = vpow.pop %v903
    %v905 = vadd.f32 %v904, 1.0
    %v906 = vrcp.pop %v905
    %v907 = vmul.f32 %v905, %v906
    %v908 = vsub.f32 1.0, %v907
    %v909 = vmul.f32 %v906, %v908
    %v910 = vadd.f32 %v906, %v909
    %vm911 = vweird.f32 %v905
    %vm912 = vweird.f32 %v906
    %vm913 = vmor %vm911, %vm912
    %v914 = vsel %vm913, %v906, %v910
    %v915 = vand.u32 2147483647, %v905
    %vm916 = vcmp.eq.f32.partialorder %v915, 8.507059e+37
    %v917 = vand.u32 %v905, 2147483648
    %v918 = vor.u32 1.1754944e-38, %v917
    %v919 = vsel %vm916, %v918, %v914
    %v920 = vmul.f32 1.0, %v919
    %v921 = vxor.u32 %v899, 2147483648
    %v922 = vmul.f32 %v921, 1.442695
    %v923 = vpow.pop %v922
    %v924 = vadd.f32 %v923, 1.0
    %v925 = vrcp.pop %v924
    %v926 = vmul.f32 %v924, %v925
    %v927 = vsub.f32 1.0, %v926
    %v928 = vmul.f32 %v925, %v927
    %v929 = vadd.f32 %v925, %v928
    %vm930 = vweird.f32 %v924
    %vm931 = vweird.f32 %v925
    %vm932 = vmor %vm930, %vm931
    %v933 = vsel %vm932, %v925, %v929
    %v934 = vand.u32 2147483647, %v924
    %vm935 = vcmp.eq.f32.partialorder %v934, 8.507059e+37
    %v936 = vand.u32 %v924, 2147483648
    %v937 = vor.u32 1.1754944e-38, %v936
    %v938 = vsel %vm935, %v937, %v933
    %v939 = vmul.f32 1.0, %v938
    %v940 = vtanh.pop %v900
    %v941 = vxor.u32 %v901, 2147483648
    %v942 = vmul.f32 %v941, 1.442695
    %v943 = vpow.pop %v942
    %v944 = vadd.f32 %v943, 1.0
    %v945 = vrcp.pop %v944
    %v946 = vmul.f32 %v944, %v945
    %v947 = vsub.f32 1.0, %v946
    %v948 = vmul.f32 %v945, %v947
    %v949 = vadd.f32 %v945, %v948
    %vm950 = vweird.f32 %v944
    %vm951 = vweird.f32 %v945
    %vm952 = vmor %vm950, %vm951
    %v953 = vsel %vm952, %v945, %v949
    %v954 = vand.u32 2147483647, %v944
    %vm955 = vcmp.eq.f32.partialorder %v954, 8.507059e+37
    %v956 = vand.u32 %v944, 2147483648
    %v957 = vor.u32 1.1754944e-38, %v956
    %v958 = vsel %vm955, %v957, %v953
    %v959 = vmul.f32 1.0, %v958
    %v960 = vmul.f32 %v939, 0.0
    %v961 = vmul.f32 %v920, %v940
    %v962 = vadd.f32 %v960, %v961
    %v963 = vtanh.pop %v962
    %v964 = vmul.f32 %v959, %v963
    %965 = vst [vmem:[%s5] sm:$0xff] %v753
    %s966 = scalar_lea.vmem %s5, 112
    %967 = vst [vmem:[%s966 + $0x8] sm:$0xff] %v964
    %v968 = vld [vmem:[#allocation2 + $0x40] sm:$0xff]
    %v969 = vld [vmem:[#allocation2 + $0x48] sm:$0xff]
    %v970 = vld [vmem:[#allocation2 + $0x50] sm:$0xff]
    %v971 = vld [vmem:[#allocation2 + $0x58] sm:$0xff]
    %v972 = vld [vmem:[#allocation2 + $0x1a0] sm:$0xff]
    %v973 = vld [vmem:[#allocation2 + $0x1a8] sm:$0xff]
    %v974 = vld [vmem:[#allocation2 + $0x1b0] sm:$0xff]
    %v975 = vld [vmem:[#allocation2 + $0x1b8] sm:$0xff]
    %v976 = vld [vmem:[#allocation3] sm:$0xff]
    %v977 = vld [vmem:[#allocation3 + $0x8] sm:$0xff]
    %v978 = vld [vmem:[#allocation3 + $0x10] sm:$0xff]
    %v979 = vld [vmem:[#allocation3 + $0x18] sm:$0xff]
    %v980 = vld [vmem:[#allocation3 + $0x20] sm:$0xff]
    %v981 = vld [vmem:[#allocation3 + $0x28] sm:$0xff]
    %v982 = vld [vmem:[#allocation3 + $0x30] sm:$0xff]
    %v983 = vld [vmem:[#allocation3 + $0x38] sm:$0xff]
    %v984 = vld [vmem:[#allocation3 + $0x40] sm:$0xff]
    %v985 = vld [vmem:[#allocation3 + $0x48] sm:$0xff]
    %v986 = vld [vmem:[#allocation3 + $0x50] sm:$0xff]
    %v987 = vld [vmem:[#allocation3 + $0x58] sm:$0xff]
    %v988 = vld [vmem:[#allocation3 + $0x60] sm:$0xff]
    %v989 = vld [vmem:[#allocation3 + $0x68] sm:$0xff]
    %v990 = vld [vmem:[#allocation3 + $0x70] sm:$0xff]
    %v991 = vld [vmem:[#allocation3 + $0x78] sm:$0xff]
    %v992 = vld [vmem:[#allocation3 + $0x80] sm:$0xff]
    %v993 = vld [vmem:[#allocation3 + $0x88] sm:$0xff]
    %v994 = vld [vmem:[#allocation3 + $0x90] sm:$0xff]
    %v995 = vld [vmem:[#allocation3 + $0x98] sm:$0xff]
    %v996 = vld [vmem:[#allocation3 + $0xa0] sm:$0xff]
    %v997 = vld [vmem:[#allocation3 + $0xa8] sm:$0xff]
    %v998 = vld [vmem:[#allocation3 + $0xb0] sm:$0xff]
    %v999 = vld [vmem:[#allocation3 + $0xb8] sm:$0xff]
    %v1000 = vld [vmem:[#allocation3 + $0xc0] sm:$0xff]
    %v1001 = vld [vmem:[#allocation3 + $0xc8] sm:$0xff]
    %v1002 = vld [vmem:[#allocation3 + $0xd0] sm:$0xff]
    %v1003 = vld [vmem:[#allocation3 + $0xd8] sm:$0xff]
    %v1004 = vld [vmem:[#allocation3 + $0xe0] sm:$0xff]
    %v1005 = vld [vmem:[#allocation3 + $0xe8] sm:$0xff]
    %v1006 = vld [vmem:[#allocation3 + $0xf0] sm:$0xff]
    %v1007 = vld [vmem:[#allocation3 + $0xf8] sm:$0xff]
    %v1008 = vld [vmem:[#allocation3 + $0x100] sm:$0xff]
    %v1009 = vld [vmem:[#allocation3 + $0x108] sm:$0xff]
    %v1010 = vld [vmem:[#allocation3 + $0x110] sm:$0xff]
    %v1011 = vld [vmem:[#allocation3 + $0x118] sm:$0xff]
    %v1012 = vld [vmem:[#allocation3 + $0x120] sm:$0xff]
    %v1013 = vld [vmem:[#allocation3 + $0x128] sm:$0xff]
    %v1014 = vld [vmem:[#allocation3 + $0x130] sm:$0xff]
    %v1015 = vld [vmem:[#allocation3 + $0x138] sm:$0xff]
    %v1016 = vld [vmem:[#allocation3 + $0x140] sm:$0xff]
    %v1017 = vld [vmem:[#allocation3 + $0x148] sm:$0xff]
    %v1018 = vld [vmem:[#allocation3 + $0x150] sm:$0xff]
    %v1019 = vld [vmem:[#allocation3 + $0x158] sm:$0xff]
    %v1020 = vld [vmem:[#allocation3 + $0x160] sm:$0xff]
    %v1021 = vld [vmem:[#allocation3 + $0x168] sm:$0xff]
    %v1022 = vld [vmem:[#allocation3 + $0x170] sm:$0xff]
    %v1023 = vld [vmem:[#allocation3 + $0x178] sm:$0xff]
    %v1024 = vld [vmem:[#allocation3 + $0x180] sm:$0xff]
    %v1025 = vld [vmem:[#allocation3 + $0x188] sm:$0xff]
    %v1026 = vld [vmem:[#allocation3 + $0x190] sm:$0xff]
    %v1027 = vld [vmem:[#allocation3 + $0x198] sm:$0xff]
    %v1028 = vld [vmem:[#allocation3 + $0x1a0] sm:$0xff]
    %v1029 = vld [vmem:[#allocation3 + $0x1a8] sm:$0xff]
    %v1030 = vld [vmem:[#allocation3 + $0x1b0] sm:$0xff]
    %v1031 = vld [vmem:[#allocation3 + $0x1b8] sm:$0xff]
    %v1032 = vld [vmem:[#allocation3 + $0x1c0] sm:$0xff]
    %v1033 = vld [vmem:[#allocation3 + $0x1c8] sm:$0xff]
    %v1034 = vld [vmem:[#allocation3 + $0x1d0] sm:$0xff]
    %v1035 = vld [vmem:[#allocation3 + $0x1d8] sm:$0xff]
    %v1036 = vld [vmem:[#allocation3 + $0x1e0] sm:$0xff]
    %v1037 = vld [vmem:[#allocation3 + $0x1e8] sm:$0xff]
    %v1038 = vld [vmem:[#allocation3 + $0x1f0] sm:$0xff]
    %v1039 = vld [vmem:[#allocation3 + $0x1f8] sm:$0xff]
    %1040 = vmatpush.msra.mxu0 %v1036
    %1041 = vmatpush.msra.mxu0 %v1032
    %1042 = vmatpush.msra.mxu0 %v1028
    %1043 = vmatpush.msra.mxu0 %v1024
    %1044 = vmatpush.msra.mxu0 %v1020
    %1045 = vmatpush.msra.mxu0 %v1016
    %1046 = vmatpush.msra.mxu0 %v1012
    %1047 = vmatpush.msra.mxu0 %v1008
    %1048 = vmatpush.msra.mxu0 %v1004
    %1049 = vmatpush.msra.mxu0 %v1000
    %1050 = vmatpush.msra.mxu0 %v996
    %1051 = vmatpush.msra.mxu0 %v992
    %1052 = vmatpush.msra.mxu0 %v988
    %1053 = vmatpush.msra.mxu0 %v984
    %1054 = vmatpush.msra.mxu0 %v980
    %1055 = vmatpush.msra.mxu0 %v976
    %1056 = vmatmul.f32.gmra.mxu0 %v753
    %v1057 = vpop.f32.mrf.mxu0
    %v1058 = vadd.f32 0.0, %v1057
    %1059 = vdwg.mxu0
    %1060 = vmatpush.msra.mxu0 %v1037
    %1061 = vmatpush.msra.mxu0 %v1033
    %1062 = vmatpush.msra.mxu0 %v1029
    %1063 = vmatpush.msra.mxu0 %v1025
    %1064 = vmatpush.msra.mxu0 %v1021
    %1065 = vmatpush.msra.mxu0 %v1017
    %1066 = vmatpush.msra.mxu0 %v1013
    %1067 = vmatpush.msra.mxu0 %v1009
    %1068 = vmatpush.msra.mxu0 %v1005
    %1069 = vmatpush.msra.mxu0 %v1001
    %1070 = vmatpush.msra.mxu0 %v997
    %1071 = vmatpush.msra.mxu0 %v993
    %1072 = vmatpush.msra.mxu0 %v989
    %1073 = vmatpush.msra.mxu0 %v985
    %1074 = vmatpush.msra.mxu0 %v981
    %1075 = vmatpush.msra.mxu0 %v977
    %1076 = vmatmul.f32.gmra.mxu0 %v753
    %v1077 = vpop.f32.mrf.mxu0
    %v1078 = vadd.f32 0.0, %v1077
    %1079 = vdwg.mxu0
    %1080 = vmatpush.msra.mxu0 %v1038
    %1081 = vmatpush.msra.mxu0 %v1034
    %1082 = vmatpush.msra.mxu0 %v1030
    %1083 = vmatpush.msra.mxu0 %v1026
    %1084 = vmatpush.msra.mxu0 %v1022
    %1085 = vmatpush.msra.mxu0 %v1018
    %1086 = vmatpush.msra.mxu0 %v1014
    %1087 = vmatpush.msra.mxu0 %v1010
    %1088 = vmatpush.msra.mxu0 %v1006
    %1089 = vmatpush.msra.mxu0 %v1002
    %1090 = vmatpush.msra.mxu0 %v998
    %1091 = vmatpush.msra.mxu0 %v994
    %1092 = vmatpush.msra.mxu0 %v990
    %1093 = vmatpush.msra.mxu0 %v986
    %1094 = vmatpush.msra.mxu0 %v982
    %1095 = vmatpush.msra.mxu0 %v978
    %1096 = vmatmul.f32.gmra.mxu0 %v753
    %v1097 = vpop.f32.mrf.mxu0
    %v1098 = vadd.f32 0.0, %v1097
    %1099 = vdwg.mxu0
    %1100 = vmatpush.msra.mxu0 %v1039
    %1101 = vmatpush.msra.mxu0 %v1035
    %1102 = vmatpush.msra.mxu0 %v1031
    %1103 = vmatpush.msra.mxu0 %v1027
    %1104 = vmatpush.msra.mxu0 %v1023
    %1105 = vmatpush.msra.mxu0 %v1019
    %1106 = vmatpush.msra.mxu0 %v1015
    %1107 = vmatpush.msra.mxu0 %v1011
    %1108 = vmatpush.msra.mxu0 %v1007
    %1109 = vmatpush.msra.mxu0 %v1003
    %1110 = vmatpush.msra.mxu0 %v999
    %1111 = vmatpush.msra.mxu0 %v995
    %1112 = vmatpush.msra.mxu0 %v991
    %1113 = vmatpush.msra.mxu0 %v987
    %1114 = vmatpush.msra.mxu0 %v983
    %1115 = vmatpush.msra.mxu0 %v979
    %1116 = vmatmul.f32.gmra.mxu0 %v753
    %v1117 = vpop.f32.mrf.mxu0
    %v1118 = vadd.f32 0.0, %v1117
    %1119 = vdwg.mxu0
    %v1120 = vadd.f32 %v968, %v1058
    %v1121 = vadd.f32 %v969, %v1078
    %v1122 = vadd.f32 %v970, %v1098
    %v1123 = vadd.f32 %v971, %v1118
    %v1124 = vxor.u32 %v1120, 2147483648
    %v1125 = vmul.f32 %v1124, 1.442695
    %v1126 = vpow.pop %v1125
    %v1127 = vadd.f32 %v1126, 1.0
    %v1128 = vrcp.pop %v1127
    %v1129 = vmul.f32 %v1127, %v1128
    %v1130 = vsub.f32 1.0, %v1129
    %v1131 = vmul.f32 %v1128, %v1130
    %v1132 = vadd.f32 %v1128, %v1131
    %vm1133 = vweird.f32 %v1127
    %vm1134 = vweird.f32 %v1128
    %vm1135 = vmor %vm1133, %vm1134
    %v1136 = vsel %vm1135, %v1128, %v1132
    %v1137 = vand.u32 2147483647, %v1127
    %vm1138 = vcmp.eq.f32.partialorder %v1137, 8.507059e+37
    %v1139 = vand.u32 %v1127, 2147483648
    %v1140 = vor.u32 1.1754944e-38, %v1139
    %v1141 = vsel %vm1138, %v1140, %v1136
    %v1142 = vmul.f32 1.0, %v1141
    %v1143 = vxor.u32 %v1121, 2147483648
    %v1144 = vmul.f32 %v1143, 1.442695
    %v1145 = vpow.pop %v1144
    %v1146 = vadd.f32 %v1145, 1.0
    %v1147 = vrcp.pop %v1146
    %v1148 = vmul.f32 %v1146, %v1147
    %v1149 = vsub.f32 1.0, %v1148
    %v1150 = vmul.f32 %v1147, %v1149
    %v1151 = vadd.f32 %v1147, %v1150
    %vm1152 = vweird.f32 %v1146
    %vm1153 = vweird.f32 %v1147
    %vm1154 = vmor %vm1152, %vm1153
    %v1155 = vsel %vm1154, %v1147, %v1151
    %v1156 = vand.u32 2147483647, %v1146
    %vm1157 = vcmp.eq.f32.partialorder %v1156, 8.507059e+37
    %v1158 = vand.u32 %v1146, 2147483648
    %v1159 = vor.u32 1.1754944e-38, %v1158
    %v1160 = vsel %vm1157, %v1159, %v1155
    %v1161 = vmul.f32 1.0, %v1160
    %v1162 = vtanh.pop %v1122
    %v1163 = vxor.u32 %v1123, 2147483648
    %v1164 = vmul.f32 %v1163, 1.442695
    %v1165 = vpow.pop %v1164
    %v1166 = vadd.f32 %v1165, 1.0
    %v1167 = vrcp.pop %v1166
    %v1168 = vmul.f32 %v1166, %v1167
    %v1169 = vsub.f32 1.0, %v1168
    %v1170 = vmul.f32 %v1167, %v1169
    %v1171 = vadd.f32 %v1167, %v1170
    %vm1172 = vweird.f32 %v1166
    %vm1173 = vweird.f32 %v1167
    %vm1174 = vmor %vm1172, %vm1173
    %v1175 = vsel %vm1174, %v1167, %v1171
    %v1176 = vand.u32 2147483647, %v1166
    %vm1177 = vcmp.eq.f32.partialorder %v1176, 8.507059e+37
    %v1178 = vand.u32 %v1166, 2147483648
    %v1179 = vor.u32 1.1754944e-38, %v1178
    %v1180 = vsel %vm1177, %v1179, %v1175
    %v1181 = vmul.f32 1.0, %v1180
    %v1182 = vmul.f32 %v1161, %v751
    %v1183 = vmul.f32 %v1142, %v1162
    %v1184 = vadd.f32 %v1182, %v1183
    %v1185 = vtanh.pop %v1184
    %v1186 = vmul.f32 %v1181, %v1185
    %v1187 = vld [vmem:[#allocation5] sm:$0xff]
    %v1188 = vld [vmem:[#allocation5 + $0x8] sm:$0xff]
    %v1189 = vld [vmem:[#allocation5 + $0x10] sm:$0xff]
    %v1190 = vld [vmem:[#allocation5 + $0x18] sm:$0xff]
    %v1191 = vld [vmem:[#allocation5 + $0x20] sm:$0xff]
    %v1192 = vld [vmem:[#allocation5 + $0x28] sm:$0xff]
    %v1193 = vld [vmem:[#allocation5 + $0x30] sm:$0xff]
    %v1194 = vld [vmem:[#allocation5 + $0x38] sm:$0xff]
    %v1195 = vld [vmem:[#allocation5 + $0x40] sm:$0xff]
    %v1196 = vld [vmem:[#allocation5 + $0x48] sm:$0xff]
    %v1197 = vld [vmem:[#allocation5 + $0x50] sm:$0xff]
    %v1198 = vld [vmem:[#allocation5 + $0x58] sm:$0xff]
    %v1199 = vld [vmem:[#allocation5 + $0x60] sm:$0xff]
    %v1200 = vld [vmem:[#allocation5 + $0x68] sm:$0xff]
    %v1201 = vld [vmem:[#allocation5 + $0x70] sm:$0xff]
    %v1202 = vld [vmem:[#allocation5 + $0x78] sm:$0xff]
    %v1203 = vld [vmem:[#allocation5 + $0x80] sm:$0xff]
    %v1204 = vld [vmem:[#allocation5 + $0x88] sm:$0xff]
    %v1205 = vld [vmem:[#allocation5 + $0x90] sm:$0xff]
    %v1206 = vld [vmem:[#allocation5 + $0x98] sm:$0xff]
    %v1207 = vld [vmem:[#allocation5 + $0xa0] sm:$0xff]
    %v1208 = vld [vmem:[#allocation5 + $0xa8] sm:$0xff]
    %v1209 = vld [vmem:[#allocation5 + $0xb0] sm:$0xff]
    %v1210 = vld [vmem:[#allocation5 + $0xb8] sm:$0xff]
    %v1211 = vld [vmem:[#allocation5 + $0xc0] sm:$0xff]
    %v1212 = vld [vmem:[#allocation5 + $0xc8] sm:$0xff]
    %v1213 = vld [vmem:[#allocation5 + $0xd0] sm:$0xff]
    %v1214 = vld [vmem:[#allocation5 + $0xd8] sm:$0xff]
    %v1215 = vld [vmem:[#allocation5 + $0xe0] sm:$0xff]
    %v1216 = vld [vmem:[#allocation5 + $0xe8] sm:$0xff]
    %v1217 = vld [vmem:[#allocation5 + $0xf0] sm:$0xff]
    %v1218 = vld [vmem:[#allocation5 + $0xf8] sm:$0xff]
    %v1219 = vld [vmem:[#allocation5 + $0x100] sm:$0xff]
    %v1220 = vld [vmem:[#allocation5 + $0x108] sm:$0xff]
    %v1221 = vld [vmem:[#allocation5 + $0x110] sm:$0xff]
    %v1222 = vld [vmem:[#allocation5 + $0x118] sm:$0xff]
    %v1223 = vld [vmem:[#allocation5 + $0x120] sm:$0xff]
    %v1224 = vld [vmem:[#allocation5 + $0x128] sm:$0xff]
    %v1225 = vld [vmem:[#allocation5 + $0x130] sm:$0xff]
    %v1226 = vld [vmem:[#allocation5 + $0x138] sm:$0xff]
    %v1227 = vld [vmem:[#allocation5 + $0x140] sm:$0xff]
    %v1228 = vld [vmem:[#allocation5 + $0x148] sm:$0xff]
    %v1229 = vld [vmem:[#allocation5 + $0x150] sm:$0xff]
    %v1230 = vld [vmem:[#allocation5 + $0x158] sm:$0xff]
    %v1231 = vld [vmem:[#allocation5 + $0x160] sm:$0xff]
    %v1232 = vld [vmem:[#allocation5 + $0x168] sm:$0xff]
    %v1233 = vld [vmem:[#allocation5 + $0x170] sm:$0xff]
    %v1234 = vld [vmem:[#allocation5 + $0x178] sm:$0xff]
    %v1235 = vld [vmem:[#allocation5 + $0x180] sm:$0xff]
    %v1236 = vld [vmem:[#allocation5 + $0x188] sm:$0xff]
    %v1237 = vld [vmem:[#allocation5 + $0x190] sm:$0xff]
    %v1238 = vld [vmem:[#allocation5 + $0x198] sm:$0xff]
    %v1239 = vld [vmem:[#allocation5 + $0x1a0] sm:$0xff]
    %v1240 = vld [vmem:[#allocation5 + $0x1a8] sm:$0xff]
    %v1241 = vld [vmem:[#allocation5 + $0x1b0] sm:$0xff]
    %v1242 = vld [vmem:[#allocation5 + $0x1b8] sm:$0xff]
    %v1243 = vld [vmem:[#allocation5 + $0x1c0] sm:$0xff]
    %v1244 = vld [vmem:[#allocation5 + $0x1c8] sm:$0xff]
    %v1245 = vld [vmem:[#allocation5 + $0x1d0] sm:$0xff]
    %v1246 = vld [vmem:[#allocation5 + $0x1d8] sm:$0xff]
    %v1247 = vld [vmem:[#allocation5 + $0x1e0] sm:$0xff]
    %v1248 = vld [vmem:[#allocation5 + $0x1e8] sm:$0xff]
    %v1249 = vld [vmem:[#allocation5 + $0x1f0] sm:$0xff]
    %v1250 = vld [vmem:[#allocation5 + $0x1f8] sm:$0xff]
    %1251 = vmatpush.msra.mxu0 %v1247
    %1252 = vmatpush.msra.mxu0 %v1243
    %1253 = vmatpush.msra.mxu0 %v1239
    %1254 = vmatpush.msra.mxu0 %v1235
    %1255 = vmatpush.msra.mxu0 %v1231
    %1256 = vmatpush.msra.mxu0 %v1227
    %1257 = vmatpush.msra.mxu0 %v1223
    %1258 = vmatpush.msra.mxu0 %v1219
    %1259 = vmatpush.msra.mxu0 %v1215
    %1260 = vmatpush.msra.mxu0 %v1211
    %1261 = vmatpush.msra.mxu0 %v1207
    %1262 = vmatpush.msra.mxu0 %v1203
    %1263 = vmatpush.msra.mxu0 %v1199
    %1264 = vmatpush.msra.mxu0 %v1195
    %1265 = vmatpush.msra.mxu0 %v1191
    %1266 = vmatpush.msra.mxu0 %v1187
    %1267 = vmatmul.f32.gmra.mxu0 %v964
    %v1268 = vpop.f32.mrf.mxu0
    %v1269 = vadd.f32 0.0, %v1268
    %1270 = vdwg.mxu0
    %1271 = vmatpush.msra.mxu0 %v1248
    %1272 = vmatpush.msra.mxu0 %v1244
    %1273 = vmatpush.msra.mxu0 %v1240
    %1274 = vmatpush.msra.mxu0 %v1236
    %1275 = vmatpush.msra.mxu0 %v1232
    %1276 = vmatpush.msra.mxu0 %v1228
    %1277 = vmatpush.msra.mxu0 %v1224
    %1278 = vmatpush.msra.mxu0 %v1220
    %1279 = vmatpush.msra.mxu0 %v1216
    %1280 = vmatpush.msra.mxu0 %v1212
    %1281 = vmatpush.msra.mxu0 %v1208
    %1282 = vmatpush.msra.mxu0 %v1204
    %1283 = vmatpush.msra.mxu0 %v1200
    %1284 = vmatpush.msra.mxu0 %v1196
    %1285 = vmatpush.msra.mxu0 %v1192
    %1286 = vmatpush.msra.mxu0 %v1188
    %1287 = vmatmul.f32.gmra.mxu0 %v964
    %v1288 = vpop.f32.mrf.mxu0
    %v1289 = vadd.f32 0.0, %v1288
    %1290 = vdwg.mxu0
    %1291 = vmatpush.msra.mxu0 %v1249
    %1292 = vmatpush.msra.mxu0 %v1245
    %1293 = vmatpush.msra.mxu0 %v1241
    %1294 = vmatpush.msra.mxu0 %v1237
    %1295 = vmatpush.msra.mxu0 %v1233
    %1296 = vmatpush.msra.mxu0 %v1229
    %1297 = vmatpush.msra.mxu0 %v1225
    %1298 = vmatpush.msra.mxu0 %v1221
    %1299 = vmatpush.msra.mxu0 %v1217
    %1300 = vmatpush.msra.mxu0 %v1213
    %1301 = vmatpush.msra.mxu0 %v1209
    %1302 = vmatpush.msra.mxu0 %v1205
    %1303 = vmatpush.msra.mxu0 %v1201
    %1304 = vmatpush.msra.mxu0 %v1197
    %1305 = vmatpush.msra.mxu0 %v1193
    %1306 = vmatpush.msra.mxu0 %v1189
    %1307 = vmatmul.f32.gmra.mxu0 %v964
    %v1308 = vpop.f32.mrf.mxu0
    %v1309 = vadd.f32 0.0, %v1308
    %1310 = vdwg.mxu0
    %1311 = vmatpush.msra.mxu0 %v1250
    %1312 = vmatpush.msra.mxu0 %v1246
    %1313 = vmatpush.msra.mxu0 %v1242
    %1314 = vmatpush.msra.mxu0 %v1238
    %1315 = vmatpush.msra.mxu0 %v1234
    %1316 = vmatpush.msra.mxu0 %v1230
    %1317 = vmatpush.msra.mxu0 %v1226
    %1318 = vmatpush.msra.mxu0 %v1222
    %1319 = vmatpush.msra.mxu0 %v1218
    %1320 = vmatpush.msra.mxu0 %v1214
    %1321 = vmatpush.msra.mxu0 %v1210
    %1322 = vmatpush.msra.mxu0 %v1206
    %1323 = vmatpush.msra.mxu0 %v1202
    %1324 = vmatpush.msra.mxu0 %v1198
    %1325 = vmatpush.msra.mxu0 %v1194
    %1326 = vmatpush.msra.mxu0 %v1190
    %1327 = vmatmul.f32.gmra.mxu0 %v964
    %v1328 = vpop.f32.mrf.mxu0
    %v1329 = vadd.f32 0.0, %v1328
    %1330 = vdwg.mxu0
    %v1331 = vadd.f32 %v972, %v1269
    %v1332 = vadd.f32 %v973, %v1289
    %v1333 = vadd.f32 %v974, %v1309
    %v1334 = vadd.f32 %v975, %v1329
    %v1335 = vxor.u32 %v1331, 2147483648
    %v1336 = vmul.f32 %v1335, 1.442695
    %v1337 = vpow.pop %v1336
    %v1338 = vadd.f32 %v1337, 1.0
    %v1339 = vrcp.pop %v1338
    %v1340 = vmul.f32 %v1338, %v1339
    %v1341 = vsub.f32 1.0, %v1340
    %v1342 = vmul.f32 %v1339, %v1341
    %v1343 = vadd.f32 %v1339, %v1342
    %vm1344 = vweird.f32 %v1338
    %vm1345 = vweird.f32 %v1339
    %vm1346 = vmor %vm1344, %vm1345
    %v1347 = vsel %vm1346, %v1339, %v1343
    %v1348 = vand.u32 2147483647, %v1338
    %vm1349 = vcmp.eq.f32.partialorder %v1348, 8.507059e+37
    %v1350 = vand.u32 %v1338, 2147483648
    %v1351 = vor.u32 1.1754944e-38, %v1350
    %v1352 = vsel %vm1349, %v1351, %v1347
    %v1353 = vmul.f32 1.0, %v1352
    %v1354 = vxor.u32 %v1332, 2147483648
    %v1355 = vmul.f32 %v1354, 1.442695
    %v1356 = vpow.pop %v1355
    %v1357 = vadd.f32 %v1356, 1.0
    %v1358 = vrcp.pop %v1357
    %v1359 = vmul.f32 %v1357, %v1358
    %v1360 = vsub.f32 1.0, %v1359
    %v1361 = vmul.f32 %v1358, %v1360
    %v1362 = vadd.f32 %v1358, %v1361
    %vm1363 = vweird.f32 %v1357
    %vm1364 = vweird.f32 %v1358
    %vm1365 = vmor %vm1363, %vm1364
    %v1366 = vsel %vm1365, %v1358, %v1362
    %v1367 = vand.u32 2147483647, %v1357
    %vm1368 = vcmp.eq.f32.partialorder %v1367, 8.507059e+37
    %v1369 = vand.u32 %v1357, 2147483648
    %v1370 = vor.u32 1.1754944e-38, %v1369
    %v1371 = vsel %vm1368, %v1370, %v1366
    %v1372 = vmul.f32 1.0, %v1371
    %v1373 = vtanh.pop %v1333
    %v1374 = vxor.u32 %v1334, 2147483648
    %v1375 = vmul.f32 %v1374, 1.442695
    %v1376 = vpow.pop %v1375
    %v1377 = vadd.f32 %v1376, 1.0
    %v1378 = vrcp.pop %v1377
    %v1379 = vmul.f32 %v1377, %v1378
    %v1380 = vsub.f32 1.0, %v1379
    %v1381 = vmul.f32 %v1378, %v1380
    %v1382 = vadd.f32 %v1378, %v1381
    %vm1383 = vweird.f32 %v1377
    %vm1384 = vweird.f32 %v1378
    %vm1385 = vmor %vm1383, %vm1384
    %v1386 = vsel %vm1385, %v1378, %v1382
    %v1387 = vand.u32 2147483647, %v1377
    %vm1388 = vcmp.eq.f32.partialorder %v1387, 8.507059e+37
    %v1389 = vand.u32 %v1377, 2147483648
    %v1390 = vor.u32 1.1754944e-38, %v1389
    %v1391 = vsel %vm1388, %v1390, %v1386
    %v1392 = vmul.f32 1.0, %v1391
    %v1393 = vmul.f32 %v1372, %v962
    %v1394 = vmul.f32 %v1353, %v1373
    %v1395 = vadd.f32 %v1393, %v1394
    %v1396 = vtanh.pop %v1395
    %v1397 = vmul.f32 %v1392, %v1396
    %s1398 = scalar_lea.vmem %s5, 16
    %1399 = vst [vmem:[%s1398] sm:$0xff] %v1186
    %s1400 = scalar_lea.vmem %s5, 96
    %1401 = vst [vmem:[%s1400 + $0x8] sm:$0xff] %v1397
    %v1402 = vld [vmem:[#allocation2 + $0x80] sm:$0xff]
    %v1403 = vld [vmem:[#allocation2 + $0x88] sm:$0xff]
    %v1404 = vld [vmem:[#allocation2 + $0x90] sm:$0xff]
    %v1405 = vld [vmem:[#allocation2 + $0x98] sm:$0xff]
    %v1406 = vld [vmem:[#allocation2 + $0x160] sm:$0xff]
    %v1407 = vld [vmem:[#allocation2 + $0x168] sm:$0xff]
    %v1408 = vld [vmem:[#allocation2 + $0x170] sm:$0xff]
    %v1409 = vld [vmem:[#allocation2 + $0x178] sm:$0xff]
    %v1410 = vld [vmem:[#allocation3] sm:$0xff]
    %v1411 = vld [vmem:[#allocation3 + $0x8] sm:$0xff]
    %v1412 = vld [vmem:[#allocation3 + $0x10] sm:$0xff]
    %v1413 = vld [vmem:[#allocation3 + $0x18] sm:$0xff]
    %v1414 = vld [vmem:[#allocation3 + $0x20] sm:$0xff]
    %v1415 = vld [vmem:[#allocation3 + $0x28] sm:$0xff]
    %v1416 = vld [vmem:[#allocation3 + $0x30] sm:$0xff]
    %v1417 = vld [vmem:[#allocation3 + $0x38] sm:$0xff]
    %v1418 = vld [vmem:[#allocation3 + $0x40] sm:$0xff]
    %v1419 = vld [vmem:[#allocation3 + $0x48] sm:$0xff]
    %v1420 = vld [vmem:[#allocation3 + $0x50] sm:$0xff]
    %v1421 = vld [vmem:[#allocation3 + $0x58] sm:$0xff]
    %v1422 = vld [vmem:[#allocation3 + $0x60] sm:$0xff]
    %v1423 = vld [vmem:[#allocation3 + $0x68] sm:$0xff]
    %v1424 = vld [vmem:[#allocation3 + $0x70] sm:$0xff]
    %v1425 = vld [vmem:[#allocation3 + $0x78] sm:$0xff]
    %v1426 = vld [vmem:[#allocation3 + $0x80] sm:$0xff]
    %v1427 = vld [vmem:[#allocation3 + $0x88] sm:$0xff]
    %v1428 = vld [vmem:[#allocation3 + $0x90] sm:$0xff]
    %v1429 = vld [vmem:[#allocation3 + $0x98] sm:$0xff]
    %v1430 = vld [vmem:[#allocation3 + $0xa0] sm:$0xff]
    %v1431 = vld [vmem:[#allocation3 + $0xa8] sm:$0xff]
    %v1432 = vld [vmem:[#allocation3 + $0xb0] sm:$0xff]
    %v1433 = vld [vmem:[#allocation3 + $0xb8] sm:$0xff]
    %v1434 = vld [vmem:[#allocation3 + $0xc0] sm:$0xff]
    %v1435 = vld [vmem:[#allocation3 + $0xc8] sm:$0xff]
    %v1436 = vld [vmem:[#allocation3 + $0xd0] sm:$0xff]
    %v1437 = vld [vmem:[#allocation3 + $0xd8] sm:$0xff]
    %v1438 = vld [vmem:[#allocation3 + $0xe0] sm:$0xff]
    %v1439 = vld [vmem:[#allocation3 + $0xe8] sm:$0xff]
    %v1440 = vld [vmem:[#allocation3 + $0xf0] sm:$0xff]
    %v1441 = vld [vmem:[#allocation3 + $0xf8] sm:$0xff]
    %v1442 = vld [vmem:[#allocation3 + $0x100] sm:$0xff]
    %v1443 = vld [vmem:[#allocation3 + $0x108] sm:$0xff]
    %v1444 = vld [vmem:[#allocation3 + $0x110] sm:$0xff]
    %v1445 = vld [vmem:[#allocation3 + $0x118] sm:$0xff]
    %v1446 = vld [vmem:[#allocation3 + $0x120] sm:$0xff]
    %v1447 = vld [vmem:[#allocation3 + $0x128] sm:$0xff]
    %v1448 = vld [vmem:[#allocation3 + $0x130] sm:$0xff]
    %v1449 = vld [vmem:[#allocation3 + $0x138] sm:$0xff]
    %v1450 = vld [vmem:[#allocation3 + $0x140] sm:$0xff]
    %v1451 = vld [vmem:[#allocation3 + $0x148] sm:$0xff]
    %v1452 = vld [vmem:[#allocation3 + $0x150] sm:$0xff]
    %v1453 = vld [vmem:[#allocation3 + $0x158] sm:$0xff]
    %v1454 = vld [vmem:[#allocation3 + $0x160] sm:$0xff]
    %v1455 = vld [vmem:[#allocation3 + $0x168] sm:$0xff]
    %v1456 = vld [vmem:[#allocation3 + $0x170] sm:$0xff]
    %v1457 = vld [vmem:[#allocation3 + $0x178] sm:$0xff]
    %v1458 = vld [vmem:[#allocation3 + $0x180] sm:$0xff]
    %v1459 = vld [vmem:[#allocation3 + $0x188] sm:$0xff]
    %v1460 = vld [vmem:[#allocation3 + $0x190] sm:$0xff]
    %v1461 = vld [vmem:[#allocation3 + $0x198] sm:$0xff]
    %v1462 = vld [vmem:[#allocation3 + $0x1a0] sm:$0xff]
    %v1463 = vld [vmem:[#allocation3 + $0x1a8] sm:$0xff]
    %v1464 = vld [vmem:[#allocation3 + $0x1b0] sm:$0xff]
    %v1465 = vld [vmem:[#allocation3 + $0x1b8] sm:$0xff]
    %v1466 = vld [vmem:[#allocation3 + $0x1c0] sm:$0xff]
    %v1467 = vld [vmem:[#allocation3 + $0x1c8] sm:$0xff]
    %v1468 = vld [vmem:[#allocation3 + $0x1d0] sm:$0xff]
    %v1469 = vld [vmem:[#allocation3 + $0x1d8] sm:$0xff]
    %v1470 = vld [vmem:[#allocation3 + $0x1e0] sm:$0xff]
    %v1471 = vld [vmem:[#allocation3 + $0x1e8] sm:$0xff]
    %v1472 = vld [vmem:[#allocation3 + $0x1f0] sm:$0xff]
    %v1473 = vld [vmem:[#allocation3 + $0x1f8] sm:$0xff]
    %1474 = vmatpush.msra.mxu0 %v1470
    %1475 = vmatpush.msra.mxu0 %v1466
    %1476 = vmatpush.msra.mxu0 %v1462
    %1477 = vmatpush.msra.mxu0 %v1458
    %1478 = vmatpush.msra.mxu0 %v1454
    %1479 = vmatpush.msra.mxu0 %v1450
    %1480 = vmatpush.msra.mxu0 %v1446
    %1481 = vmatpush.msra.mxu0 %v1442
    %1482 = vmatpush.msra.mxu0 %v1438
    %1483 = vmatpush.msra.mxu0 %v1434
    %1484 = vmatpush.msra.mxu0 %v1430
    %1485 = vmatpush.msra.mxu0 %v1426
    %1486 = vmatpush.msra.mxu0 %v1422
    %1487 = vmatpush.msra.mxu0 %v1418
    %1488 = vmatpush.msra.mxu0 %v1414
    %1489 = vmatpush.msra.mxu0 %v1410
    %1490 = vmatmul.f32.gmra.mxu0 %v1186
    %v1491 = vpop.f32.mrf.mxu0
    %v1492 = vadd.f32 0.0, %v1491
    %1493 = vdwg.mxu0
    %1494 = vmatpush.msra.mxu0 %v1471
    %1495 = vmatpush.msra.mxu0 %v1467
    %1496 = vmatpush.msra.mxu0 %v1463
    %1497 = vmatpush.msra.mxu0 %v1459
    %1498 = vmatpush.msra.mxu0 %v1455
    %1499 = vmatpush.msra.mxu0 %v1451
    %1500 = vmatpush.msra.mxu0 %v1447
    %1501 = vmatpush.msra.mxu0 %v1443
    %1502 = vmatpush.msra.mxu0 %v1439
    %1503 = vmatpush.msra.mxu0 %v1435
    %1504 = vmatpush.msra.mxu0 %v1431
    %1505 = vmatpush.msra.mxu0 %v1427
    %1506 = vmatpush.msra.mxu0 %v1423
    %1507 = vmatpush.msra.mxu0 %v1419
    %1508 = vmatpush.msra.mxu0 %v1415
    %1509 = vmatpush.msra.mxu0 %v1411
    %1510 = vmatmul.f32.gmra.mxu0 %v1186
    %v1511 = vpop.f32.mrf.mxu0
    %v1512 = vadd.f32 0.0, %v1511
    %1513 = vdwg.mxu0
    %1514 = vmatpush.msra.mxu0 %v1472
    %1515 = vmatpush.msra.mxu0 %v1468
    %1516 = vmatpush.msra.mxu0 %v1464
    %1517 = vmatpush.msra.mxu0 %v1460
    %1518 = vmatpush.msra.mxu0 %v1456
    %1519 = vmatpush.msra.mxu0 %v1452
    %1520 = vmatpush.msra.mxu0 %v1448
    %1521 = vmatpush.msra.mxu0 %v1444
    %1522 = vmatpush.msra.mxu0 %v1440
    %1523 = vmatpush.msra.mxu0 %v1436
    %1524 = vmatpush.msra.mxu0 %v1432
    %1525 = vmatpush.msra.mxu0 %v1428
    %1526 = vmatpush.msra.mxu0 %v1424
    %1527 = vmatpush.msra.mxu0 %v1420
    %1528 = vmatpush.msra.mxu0 %v1416
    %1529 = vmatpush.msra.mxu0 %v1412
    %1530 = vmatmul.f32.gmra.mxu0 %v1186
    %v1531 = vpop.f32.mrf.mxu0
    %v1532 = vadd.f32 0.0, %v1531
    %1533 = vdwg.mxu0
    %1534 = vmatpush.msra.mxu0 %v1473
    %1535 = vmatpush.msra.mxu0 %v1469
    %1536 = vmatpush.msra.mxu0 %v1465
    %1537 = vmatpush.msra.mxu0 %v1461
    %1538 = vmatpush.msra.mxu0 %v1457
    %1539 = vmatpush.msra.mxu0 %v1453
    %1540 = vmatpush.msra.mxu0 %v1449
    %1541 = vmatpush.msra.mxu0 %v1445
    %1542 = vmatpush.msra.mxu0 %v1441
    %1543 = vmatpush.msra.mxu0 %v1437
    %1544 = vmatpush.msra.mxu0 %v1433
    %1545 = vmatpush.msra.mxu0 %v1429
    %1546 = vmatpush.msra.mxu0 %v1425
    %1547 = vmatpush.msra.mxu0 %v1421
    %1548 = vmatpush.msra.mxu0 %v1417
    %1549 = vmatpush.msra.mxu0 %v1413
    %1550 = vmatmul.f32.gmra.mxu0 %v1186
    %v1551 = vpop.f32.mrf.mxu0
    %v1552 = vadd.f32 0.0, %v1551
    %1553 = vdwg.mxu0
    %v1554 = vadd.f32 %v1402, %v1492
    %v1555 = vadd.f32 %v1403, %v1512
    %v1556 = vadd.f32 %v1404, %v1532
    %v1557 = vadd.f32 %v1405, %v1552
    %v1558 = vxor.u32 %v1554, 2147483648
    %v1559 = vmul.f32 %v1558, 1.442695
    %v1560 = vpow.pop %v1559
    %v1561 = vadd.f32 %v1560, 1.0
    %v1562 = vrcp.pop %v1561
    %v1563 = vmul.f32 %v1561, %v1562
    %v1564 = vsub.f32 1.0, %v1563
    %v1565 = vmul.f32 %v1562, %v1564
    %v1566 = vadd.f32 %v1562, %v1565
    %vm1567 = vweird.f32 %v1561
    %vm1568 = vweird.f32 %v1562
    %vm1569 = vmor %vm1567, %vm1568
    %v1570 = vsel %vm1569, %v1562, %v1566
    %v1571 = vand.u32 2147483647, %v1561
    %vm1572 = vcmp.eq.f32.partialorder %v1571, 8.507059e+37
    %v1573 = vand.u32 %v1561, 2147483648
    %v1574 = vor.u32 1.1754944e-38, %v1573
    %v1575 = vsel %vm1572, %v1574, %v1570
    %v1576 = vmul.f32 1.0, %v1575
    %v1577 = vxor.u32 %v1555, 2147483648
    %v1578 = vmul.f32 %v1577, 1.442695
    %v1579 = vpow.pop %v1578
    %v1580 = vadd.f32 %v1579, 1.0
    %v1581 = vrcp.pop %v1580
    %v1582 = vmul.f32 %v1580, %v1581
    %v1583 = vsub.f32 1.0, %v1582
    %v1584 = vmul.f32 %v1581, %v1583
    %v1585 = vadd.f32 %v1581, %v1584
    %vm1586 = vweird.f32 %v1580
    %vm1587 = vweird.f32 %v1581
    %vm1588 = vmor %vm1586, %vm1587
    %v1589 = vsel %vm1588, %v1581, %v1585
    %v1590 = vand.u32 2147483647, %v1580
    %vm1591 = vcmp.eq.f32.partialorder %v1590, 8.507059e+37
    %v1592 = vand.u32 %v1580, 2147483648
    %v1593 = vor.u32 1.1754944e-38, %v1592
    %v1594 = vsel %vm1591, %v1593, %v1589
    %v1595 = vmul.f32 1.0, %v1594
    %v1596 = vtanh.pop %v1556
    %v1597 = vxor.u32 %v1557, 2147483648
    %v1598 = vmul.f32 %v1597, 1.442695
    %v1599 = vpow.pop %v1598
    %v1600 = vadd.f32 %v1599, 1.0
    %v1601 = vrcp.pop %v1600
    %v1602 = vmul.f32 %v1600, %v1601
    %v1603 = vsub.f32 1.0, %v1602
    %v1604 = vmul.f32 %v1601, %v1603
    %v1605 = vadd.f32 %v1601, %v1604
    %vm1606 = vweird.f32 %v1600
    %vm1607 = vweird.f32 %v1601
    %vm1608 = vmor %vm1606, %vm1607
    %v1609 = vsel %vm1608, %v1601, %v1605
    %v1610 = vand.u32 2147483647, %v1600
    %vm1611 = vcmp.eq.f32.partialorder %v1610, 8.507059e+37
    %v1612 = vand.u32 %v1600, 2147483648
    %v1613 = vor.u32 1.1754944e-38, %v1612
    %v1614 = vsel %vm1611, %v1613, %v1609
    %v1615 = vmul.f32 1.0, %v1614
    %v1616 = vmul.f32 %v1595, %v1184
    %v1617 = vmul.f32 %v1576, %v1596
    %v1618 = vadd.f32 %v1616, %v1617
    %v1619 = vtanh.pop %v1618
    %v1620 = vmul.f32 %v1615, %v1619
    %v1621 = vld [vmem:[#allocation5] sm:$0xff]
    %v1622 = vld [vmem:[#allocation5 + $0x8] sm:$0xff]
    %v1623 = vld [vmem:[#allocation5 + $0x10] sm:$0xff]
    %v1624 = vld [vmem:[#allocation5 + $0x18] sm:$0xff]
    %v1625 = vld [vmem:[#allocation5 + $0x20] sm:$0xff]
    %v1626 = vld [vmem:[#allocation5 + $0x28] sm:$0xff]
    %v1627 = vld [vmem:[#allocation5 + $0x30] sm:$0xff]
    %v1628 = vld [vmem:[#allocation5 + $0x38] sm:$0xff]
    %v1629 = vld [vmem:[#allocation5 + $0x40] sm:$0xff]
    %v1630 = vld [vmem:[#allocation5 + $0x48] sm:$0xff]
    %v1631 = vld [vmem:[#allocation5 + $0x50] sm:$0xff]
    %v1632 = vld [vmem:[#allocation5 + $0x58] sm:$0xff]
    %v1633 = vld [vmem:[#allocation5 + $0x60] sm:$0xff]
    %v1634 = vld [vmem:[#allocation5 + $0x68] sm:$0xff]
    %v1635 = vld [vmem:[#allocation5 + $0x70] sm:$0xff]
    %v1636 = vld [vmem:[#allocation5 + $0x78] sm:$0xff]
    %v1637 = vld [vmem:[#allocation5 + $0x80] sm:$0xff]
    %v1638 = vld [vmem:[#allocation5 + $0x88] sm:$0xff]
    %v1639 = vld [vmem:[#allocation5 + $0x90] sm:$0xff]
    %v1640 = vld [vmem:[#allocation5 + $0x98] sm:$0xff]
    %v1641 = vld [vmem:[#allocation5 + $0xa0] sm:$0xff]
    %v1642 = vld [vmem:[#allocation5 + $0xa8] sm:$0xff]
    %v1643 = vld [vmem:[#allocation5 + $0xb0] sm:$0xff]
    %v1644 = vld [vmem:[#allocation5 + $0xb8] sm:$0xff]
    %v1645 = vld [vmem:[#allocation5 + $0xc0] sm:$0xff]
    %v1646 = vld [vmem:[#allocation5 + $0xc8] sm:$0xff]
    %v1647 = vld [vmem:[#allocation5 + $0xd0] sm:$0xff]
    %v1648 = vld [vmem:[#allocation5 + $0xd8] sm:$0xff]
    %v1649 = vld [vmem:[#allocation5 + $0xe0] sm:$0xff]
    %v1650 = vld [vmem:[#allocation5 + $0xe8] sm:$0xff]
    %v1651 = vld [vmem:[#allocation5 + $0xf0] sm:$0xff]
    %v1652 = vld [vmem:[#allocation5 + $0xf8] sm:$0xff]
    %v1653 = vld [vmem:[#allocation5 + $0x100] sm:$0xff]
    %v1654 = vld [vmem:[#allocation5 + $0x108] sm:$0xff]
    %v1655 = vld [vmem:[#allocation5 + $0x110] sm:$0xff]
    %v1656 = vld [vmem:[#allocation5 + $0x118] sm:$0xff]
    %v1657 = vld [vmem:[#allocation5 + $0x120] sm:$0xff]
    %v1658 = vld [vmem:[#allocation5 + $0x128] sm:$0xff]
    %v1659 = vld [vmem:[#allocation5 + $0x130] sm:$0xff]
    %v1660 = vld [vmem:[#allocation5 + $0x138] sm:$0xff]
    %v1661 = vld [vmem:[#allocation5 + $0x140] sm:$0xff]
    %v1662 = vld [vmem:[#allocation5 + $0x148] sm:$0xff]
    %v1663 = vld [vmem:[#allocation5 + $0x150] sm:$0xff]
    %v1664 = vld [vmem:[#allocation5 + $0x158] sm:$0xff]
    %v1665 = vld [vmem:[#allocation5 + $0x160] sm:$0xff]
    %v1666 = vld [vmem:[#allocation5 + $0x168] sm:$0xff]
    %v1667 = vld [vmem:[#allocation5 + $0x170] sm:$0xff]
    %v1668 = vld [vmem:[#allocation5 + $0x178] sm:$0xff]
    %v1669 = vld [vmem:[#allocation5 + $0x180] sm:$0xff]
    %v1670 = vld [vmem:[#allocation5 + $0x188] sm:$0xff]
    %v1671 = vld [vmem:[#allocation5 + $0x190] sm:$0xff]
    %v1672 = vld [vmem:[#allocation5 + $0x198] sm:$0xff]
    %v1673 = vld [vmem:[#allocation5 + $0x1a0] sm:$0xff]
    %v1674 = vld [vmem:[#allocation5 + $0x1a8] sm:$0xff]
    %v1675 = vld [vmem:[#allocation5 + $0x1b0] sm:$0xff]
    %v1676 = vld [vmem:[#allocation5 + $0x1b8] sm:$0xff]
    %v1677 = vld [vmem:[#allocation5 + $0x1c0] sm:$0xff]
    %v1678 = vld [vmem:[#allocation5 + $0x1c8] sm:$0xff]
    %v1679 = vld [vmem:[#allocation5 + $0x1d0] sm:$0xff]
    %v1680 = vld [vmem:[#allocation5 + $0x1d8] sm:$0xff]
    %v1681 = vld [vmem:[#allocation5 + $0x1e0] sm:$0xff]
    %v1682 = vld [vmem:[#allocation5 + $0x1e8] sm:$0xff]
    %v1683 = vld [vmem:[#allocation5 + $0x1f0] sm:$0xff]
    %v1684 = vld [vmem:[#allocation5 + $0x1f8] sm:$0xff]
    %1685 = vmatpush.msra.mxu0 %v1681
    %1686 = vmatpush.msra.mxu0 %v1677
    %1687 = vmatpush.msra.mxu0 %v1673
    %1688 = vmatpush.msra.mxu0 %v1669
    %1689 = vmatpush.msra.mxu0 %v1665
    %1690 = vmatpush.msra.mxu0 %v1661
    %1691 = vmatpush.msra.mxu0 %v1657
    %1692 = vmatpush.msra.mxu0 %v1653
    %1693 = vmatpush.msra.mxu0 %v1649
    %1694 = vmatpush.msra.mxu0 %v1645
    %1695 = vmatpush.msra.mxu0 %v1641
    %1696 = vmatpush.msra.mxu0 %v1637
    %1697 = vmatpush.msra.mxu0 %v1633
    %1698 = vmatpush.msra.mxu0 %v1629
    %1699 = vmatpush.msra.mxu0 %v1625
    %1700 = vmatpush.msra.mxu0 %v1621
    %1701 = vmatmul.f32.gmra.mxu0 %v1397
    %v1702 = vpop.f32.mrf.mxu0
    %v1703 = vadd.f32 0.0, %v1702
    %1704 = vdwg.mxu0
    %1705 = vmatpush.msra.mxu0 %v1682
    %1706 = vmatpush.msra.mxu0 %v1678
    %1707 = vmatpush.msra.mxu0 %v1674
    %1708 = vmatpush.msra.mxu0 %v1670
    %1709 = vmatpush.msra.mxu0 %v1666
    %1710 = vmatpush.msra.mxu0 %v1662
    %1711 = vmatpush.msra.mxu0 %v1658
    %1712 = vmatpush.msra.mxu0 %v1654
    %1713 = vmatpush.msra.mxu0 %v1650
    %1714 = vmatpush.msra.mxu0 %v1646
    %1715 = vmatpush.msra.mxu0 %v1642
    %1716 = vmatpush.msra.mxu0 %v1638
    %1717 = vmatpush.msra.mxu0 %v1634
    %1718 = vmatpush.msra.mxu0 %v1630
    %1719 = vmatpush.msra.mxu0 %v1626
    %1720 = vmatpush.msra.mxu0 %v1622
    %1721 = vmatmul.f32.gmra.mxu0 %v1397
    %v1722 = vpop.f32.mrf.mxu0
    %v1723 = vadd.f32 0.0, %v1722
    %1724 = vdwg.mxu0
    %1725 = vmatpush.msra.mxu0 %v1683
    %1726 = vmatpush.msra.mxu0 %v1679
    %1727 = vmatpush.msra.mxu0 %v1675
    %1728 = vmatpush.msra.mxu0 %v1671
    %1729 = vmatpush.msra.mxu0 %v1667
    %1730 = vmatpush.msra.mxu0 %v1663
    %1731 = vmatpush.msra.mxu0 %v1659
    %1732 = vmatpush.msra.mxu0 %v1655
    %1733 = vmatpush.msra.mxu0 %v1651
    %1734 = vmatpush.msra.mxu0 %v1647
    %1735 = vmatpush.msra.mxu0 %v1643
    %1736 = vmatpush.msra.mxu0 %v1639
    %1737 = vmatpush.msra.mxu0 %v1635
    %1738 = vmatpush.msra.mxu0 %v1631
    %1739 = vmatpush.msra.mxu0 %v1627
    %1740 = vmatpush.msra.mxu0 %v1623
    %1741 = vmatmul.f32.gmra.mxu0 %v1397
    %v1742 = vpop.f32.mrf.mxu0
    %v1743 = vadd.f32 0.0, %v1742
    %1744 = vdwg.mxu0
    %1745 = vmatpush.msra.mxu0 %v1684
    %1746 = vmatpush.msra.mxu0 %v1680
    %1747 = vmatpush.msra.mxu0 %v1676
    %1748 = vmatpush.msra.mxu0 %v1672
    %1749 = vmatpush.msra.mxu0 %v1668
    %1750 = vmatpush.msra.mxu0 %v1664
    %1751 = vmatpush.msra.mxu0 %v1660
    %1752 = vmatpush.msra.mxu0 %v1656
    %1753 = vmatpush.msra.mxu0 %v1652
    %1754 = vmatpush.msra.mxu0 %v1648
    %1755 = vmatpush.msra.mxu0 %v1644
    %1756 = vmatpush.msra.mxu0 %v1640
    %1757 = vmatpush.msra.mxu0 %v1636
    %1758 = vmatpush.msra.mxu0 %v1632
    %1759 = vmatpush.msra.mxu0 %v1628
    %1760 = vmatpush.msra.mxu0 %v1624
    %1761 = vmatmul.f32.gmra.mxu0 %v1397
    %v1762 = vpop.f32.mrf.mxu0
    %v1763 = vadd.f32 0.0, %v1762
    %1764 = vdwg.mxu0
    %v1765 = vadd.f32 %v1406, %v1703
    %v1766 = vadd.f32 %v1407, %v1723
    %v1767 = vadd.f32 %v1408, %v1743
    %v1768 = vadd.f32 %v1409, %v1763
    %v1769 = vxor.u32 %v1765, 2147483648
    %v1770 = vmul.f32 %v1769, 1.442695
    %v1771 = vpow.pop %v1770
    %v1772 = vadd.f32 %v1771, 1.0
    %v1773 = vrcp.pop %v1772
    %v1774 = vmul.f32 %v1772, %v1773
    %v1775 = vsub.f32 1.0, %v1774
    %v1776 = vmul.f32 %v1773, %v1775
    %v1777 = vadd.f32 %v1773, %v1776
    %vm1778 = vweird.f32 %v1772
    %vm1779 = vweird.f32 %v1773
    %vm1780 = vmor %vm1778, %vm1779
    %v1781 = vsel %vm1780, %v1773, %v1777
    %v1782 = vand.u32 2147483647, %v1772
    %vm1783 = vcmp.eq.f32.partialorder %v1782, 8.507059e+37
    %v1784 = vand.u32 %v1772, 2147483648
    %v1785 = vor.u32 1.1754944e-38, %v1784
    %v1786 = vsel %vm1783, %v1785, %v1781
    %v1787 = vmul.f32 1.0, %v1786
    %v1788 = vxor.u32 %v1766, 2147483648
    %v1789 = vmul.f32 %v1788, 1.442695
    %v1790 = vpow.pop %v1789
    %v1791 = vadd.f32 %v1790, 1.0
    %v1792 = vrcp.pop %v1791
    %v1793 = vmul.f32 %v1791, %v1792
    %v1794 = vsub.f32 1.0, %v1793
    %v1795 = vmul.f32 %v1792, %v1794
    %v1796 = vadd.f32 %v1792, %v1795
    %vm1797 = vweird.f32 %v1791
    %vm1798 = vweird.f32 %v1792
    %vm1799 = vmor %vm1797, %vm1798
    %v1800 = vsel %vm1799, %v1792, %v1796
    %v1801 = vand.u32 2147483647, %v1791
    %vm1802 = vcmp.eq.f32.partialorder %v1801, 8.507059e+37
    %v1803 = vand.u32 %v1791, 2147483648
    %v1804 = vor.u32 1.1754944e-38, %v1803
    %v1805 = vsel %vm1802, %v1804, %v1800
    %v1806 = vmul.f32 1.0, %v1805
    %v1807 = vtanh.pop %v1767
    %v1808 = vxor.u32 %v1768, 2147483648
    %v1809 = vmul.f32 %v1808, 1.442695
    %v1810 = vpow.pop %v1809
    %v1811 = vadd.f32 %v1810, 1.0
    %v1812 = vrcp.pop %v1811
    %v1813 = vmul.f32 %v1811, %v1812
    %v1814 = vsub.f32 1.0, %v1813
    %v1815 = vmul.f32 %v1812, %v1814
    %v1816 = vadd.f32 %v1812, %v1815
    %vm1817 = vweird.f32 %v1811
    %vm1818 = vweird.f32 %v1812
    %vm1819 = vmor %vm1817, %vm1818
    %v1820 = vsel %vm1819, %v1812, %v1816
    %v1821 = vand.u32 2147483647, %v1811
    %vm1822 = vcmp.eq.f32.partialorder %v1821, 8.507059e+37
    %v1823 = vand.u32 %v1811, 2147483648
    %v1824 = vor.u32 1.1754944e-38, %v1823
    %v1825 = vsel %vm1822, %v1824, %v1820
    %v1826 = vmul.f32 1.0, %v1825
    %v1827 = vmul.f32 %v1806, %v1395
    %v1828 = vmul.f32 %v1787, %v1807
    %v1829 = vadd.f32 %v1827, %v1828
    %v1830 = vtanh.pop %v1829
    %v1831 = vmul.f32 %v1826, %v1830
    %s1832 = scalar_lea.vmem %s5, 32
    %1833 = vst [vmem:[%s1832] sm:$0xff] %v1620
    %s1834 = scalar_lea.vmem %s5, 80
    %1835 = vst [vmem:[%s1834 + $0x8] sm:$0xff] %v1831
    %v1836 = vld [vmem:[#allocation2 + $0xc0] sm:$0xff]
    %v1837 = vld [vmem:[#allocation2 + $0xc8] sm:$0xff]
    %v1838 = vld [vmem:[#allocation2 + $0xd0] sm:$0xff]
    %v1839 = vld [vmem:[#allocation2 + $0xd8] sm:$0xff]
    %v1840 = vld [vmem:[#allocation2 + $0x120] sm:$0xff]
    %v1841 = vld [vmem:[#allocation2 + $0x128] sm:$0xff]
    %v1842 = vld [vmem:[#allocation2 + $0x130] sm:$0xff]
    %v1843 = vld [vmem:[#allocation2 + $0x138] sm:$0xff]
    %v1844 = vld [vmem:[#allocation3] sm:$0xff]
    %v1845 = vld [vmem:[#allocation3 + $0x8] sm:$0xff]
    %v1846 = vld [vmem:[#allocation3 + $0x10] sm:$0xff]
    %v1847 = vld [vmem:[#allocation3 + $0x18] sm:$0xff]
    %v1848 = vld [vmem:[#allocation3 + $0x20] sm:$0xff]
    %v1849 = vld [vmem:[#allocation3 + $0x28] sm:$0xff]
    %v1850 = vld [vmem:[#allocation3 + $0x30] sm:$0xff]
    %v1851 = vld [vmem:[#allocation3 + $0x38] sm:$0xff]
    %v1852 = vld [vmem:[#allocation3 + $0x40] sm:$0xff]
    %v1853 = vld [vmem:[#allocation3 + $0x48] sm:$0xff]
    %v1854 = vld [vmem:[#allocation3 + $0x50] sm:$0xff]
    %v1855 = vld [vmem:[#allocation3 + $0x58] sm:$0xff]
    %v1856 = vld [vmem:[#allocation3 + $0x60] sm:$0xff]
    %v1857 = vld [vmem:[#allocation3 + $0x68] sm:$0xff]
    %v1858 = vld [vmem:[#allocation3 + $0x70] sm:$0xff]
    %v1859 = vld [vmem:[#allocation3 + $0x78] sm:$0xff]
    %v1860 = vld [vmem:[#allocation3 + $0x80] sm:$0xff]
    %v1861 = vld [vmem:[#allocation3 + $0x88] sm:$0xff]
    %v1862 = vld [vmem:[#allocation3 + $0x90] sm:$0xff]
    %v1863 = vld [vmem:[#allocation3 + $0x98] sm:$0xff]
    %v1864 = vld [vmem:[#allocation3 + $0xa0] sm:$0xff]
    %v1865 = vld [vmem:[#allocation3 + $0xa8] sm:$0xff]
    %v1866 = vld [vmem:[#allocation3 + $0xb0] sm:$0xff]
    %v1867 = vld [vmem:[#allocation3 + $0xb8] sm:$0xff]
    %v1868 = vld [vmem:[#allocation3 + $0xc0] sm:$0xff]
    %v1869 = vld [vmem:[#allocation3 + $0xc8] sm:$0xff]
    %v1870 = vld [vmem:[#allocation3 + $0xd0] sm:$0xff]
    %v1871 = vld [vmem:[#allocation3 + $0xd8] sm:$0xff]
    %v1872 = vld [vmem:[#allocation3 + $0xe0] sm:$0xff]
    %v1873 = vld [vmem:[#allocation3 + $0xe8] sm:$0xff]
    %v1874 = vld [vmem:[#allocation3 + $0xf0] sm:$0xff]
    %v1875 = vld [vmem:[#allocation3 + $0xf8] sm:$0xff]
    %v1876 = vld [vmem:[#allocation3 + $0x100] sm:$0xff]
    %v1877 = vld [vmem:[#allocation3 + $0x108] sm:$0xff]
    %v1878 = vld [vmem:[#allocation3 + $0x110] sm:$0xff]
    %v1879 = vld [vmem:[#allocation3 + $0x118] sm:$0xff]
    %v1880 = vld [vmem:[#allocation3 + $0x120] sm:$0xff]
    %v1881 = vld [vmem:[#allocation3 + $0x128] sm:$0xff]
    %v1882 = vld [vmem:[#allocation3 + $0x130] sm:$0xff]
    %v1883 = vld [vmem:[#allocation3 + $0x138] sm:$0xff]
    %v1884 = vld [vmem:[#allocation3 + $0x140] sm:$0xff]
    %v1885 = vld [vmem:[#allocation3 + $0x148] sm:$0xff]
    %v1886 = vld [vmem:[#allocation3 + $0x150] sm:$0xff]
    %v1887 = vld [vmem:[#allocation3 + $0x158] sm:$0xff]
    %v1888 = vld [vmem:[#allocation3 + $0x160] sm:$0xff]
    %v1889 = vld [vmem:[#allocation3 + $0x168] sm:$0xff]
    %v1890 = vld [vmem:[#allocation3 + $0x170] sm:$0xff]
    %v1891 = vld [vmem:[#allocation3 + $0x178] sm:$0xff]
    %v1892 = vld [vmem:[#allocation3 + $0x180] sm:$0xff]
    %v1893 = vld [vmem:[#allocation3 + $0x188] sm:$0xff]
    %v1894 = vld [vmem:[#allocation3 + $0x190] sm:$0xff]
    %v1895 = vld [vmem:[#allocation3 + $0x198] sm:$0xff]
    %v1896 = vld [vmem:[#allocation3 + $0x1a0] sm:$0xff]
    %v1897 = vld [vmem:[#allocation3 + $0x1a8] sm:$0xff]
    %v1898 = vld [vmem:[#allocation3 + $0x1b0] sm:$0xff]
    %v1899 = vld [vmem:[#allocation3 + $0x1b8] sm:$0xff]
    %v1900 = vld [vmem:[#allocation3 + $0x1c0] sm:$0xff]
    %v1901 = vld [vmem:[#allocation3 + $0x1c8] sm:$0xff]
    %v1902 = vld [vmem:[#allocation3 + $0x1d0] sm:$0xff]
    %v1903 = vld [vmem:[#allocation3 + $0x1d8] sm:$0xff]
    %v1904 = vld [vmem:[#allocation3 + $0x1e0] sm:$0xff]
    %v1905 = vld [vmem:[#allocation3 + $0x1e8] sm:$0xff]
    %v1906 = vld [vmem:[#allocation3 + $0x1f0] sm:$0xff]
    %v1907 = vld [vmem:[#allocation3 + $0x1f8] sm:$0xff]
    %1908 = vmatpush.msra.mxu0 %v1904
    %1909 = vmatpush.msra.mxu0 %v1900
    %1910 = vmatpush.msra.mxu0 %v1896
    %1911 = vmatpush.msra.mxu0 %v1892
    %1912 = vmatpush.msra.mxu0 %v1888
    %1913 = vmatpush.msra.mxu0 %v1884
    %1914 = vmatpush.msra.mxu0 %v1880
    %1915 = vmatpush.msra.mxu0 %v1876
    %1916 = vmatpush.msra.mxu0 %v1872
    %1917 = vmatpush.msra.mxu0 %v1868
    %1918 = vmatpush.msra.mxu0 %v1864
    %1919 = vmatpush.msra.mxu0 %v1860
    %1920 = vmatpush.msra.mxu0 %v1856
    %1921 = vmatpush.msra.mxu0 %v1852
    %1922 = vmatpush.msra.mxu0 %v1848
    %1923 = vmatpush.msra.mxu0 %v1844
    %1924 = vmatmul.f32.gmra.mxu0 %v1620
    %v1925 = vpop.f32.mrf.mxu0
    %v1926 = vadd.f32 0.0, %v1925
    %1927 = vdwg.mxu0
    %1928 = vmatpush.msra.mxu0 %v1905
    %1929 = vmatpush.msra.mxu0 %v1901
    %1930 = vmatpush.msra.mxu0 %v1897
    %1931 = vmatpush.msra.mxu0 %v1893
    %1932 = vmatpush.msra.mxu0 %v1889
    %1933 = vmatpush.msra.mxu0 %v1885
    %1934 = vmatpush.msra.mxu0 %v1881
    %1935 = vmatpush.msra.mxu0 %v1877
    %1936 = vmatpush.msra.mxu0 %v1873
    %1937 = vmatpush.msra.mxu0 %v1869
    %1938 = vmatpush.msra.mxu0 %v1865
    %1939 = vmatpush.msra.mxu0 %v1861
    %1940 = vmatpush.msra.mxu0 %v1857
    %1941 = vmatpush.msra.mxu0 %v1853
    %1942 = vmatpush.msra.mxu0 %v1849
    %1943 = vmatpush.msra.mxu0 %v1845
    %1944 = vmatmul.f32.gmra.mxu0 %v1620
    %v1945 = vpop.f32.mrf.mxu0
    %v1946 = vadd.f32 0.0, %v1945
    %1947 = vdwg.mxu0
    %1948 = vmatpush.msra.mxu0 %v1906
    %1949 = vmatpush.msra.mxu0 %v1902
    %1950 = vmatpush.msra.mxu0 %v1898
    %1951 = vmatpush.msra.mxu0 %v1894
    %1952 = vmatpush.msra.mxu0 %v1890
    %1953 = vmatpush.msra.mxu0 %v1886
    %1954 = vmatpush.msra.mxu0 %v1882
    %1955 = vmatpush.msra.mxu0 %v1878
    %1956 = vmatpush.msra.mxu0 %v1874
    %1957 = vmatpush.msra.mxu0 %v1870
    %1958 = vmatpush.msra.mxu0 %v1866
    %1959 = vmatpush.msra.mxu0 %v1862
    %1960 = vmatpush.msra.mxu0 %v1858
    %1961 = vmatpush.msra.mxu0 %v1854
    %1962 = vmatpush.msra.mxu0 %v1850
    %1963 = vmatpush.msra.mxu0 %v1846
    %1964 = vmatmul.f32.gmra.mxu0 %v1620
    %v1965 = vpop.f32.mrf.mxu0
    %v1966 = vadd.f32 0.0, %v1965
    %1967 = vdwg.mxu0
    %1968 = vmatpush.msra.mxu0 %v1907
    %1969 = vmatpush.msra.mxu0 %v1903
    %1970 = vmatpush.msra.mxu0 %v1899
    %1971 = vmatpush.msra.mxu0 %v1895
    %1972 = vmatpush.msra.mxu0 %v1891
    %1973 = vmatpush.msra.mxu0 %v1887
    %1974 = vmatpush.msra.mxu0 %v1883
    %1975 = vmatpush.msra.mxu0 %v1879
    %1976 = vmatpush.msra.mxu0 %v1875
    %1977 = vmatpush.msra.mxu0 %v1871
    %1978 = vmatpush.msra.mxu0 %v1867
    %1979 = vmatpush.msra.mxu0 %v1863
    %1980 = vmatpush.msra.mxu0 %v1859
    %1981 = vmatpush.msra.mxu0 %v1855
    %1982 = vmatpush.msra.mxu0 %v1851
    %1983 = vmatpush.msra.mxu0 %v1847
    %1984 = vmatmul.f32.gmra.mxu0 %v1620
    %v1985 = vpop.f32.mrf.mxu0
    %v1986 = vadd.f32 0.0, %v1985
    %1987 = vdwg.mxu0
    %v1988 = vadd.f32 %v1836, %v1926
    %v1989 = vadd.f32 %v1837, %v1946
    %v1990 = vadd.f32 %v1838, %v1966
    %v1991 = vadd.f32 %v1839, %v1986
    %v1992 = vxor.u32 %v1988, 2147483648
    %v1993 = vmul.f32 %v1992, 1.442695
    %v1994 = vpow.pop %v1993
    %v1995 = vadd.f32 %v1994, 1.0
    %v1996 = vrcp.pop %v1995
    %v1997 = vmul.f32 %v1995, %v1996
    %v1998 = vsub.f32 1.0, %v1997
    %v1999 = vmul.f32 %v1996, %v1998
    %v2000 = vadd.f32 %v1996, %v1999
    %vm2001 = vweird.f32 %v1995
    %vm2002 = vweird.f32 %v1996
    %vm2003 = vmor %vm2001, %vm2002
    %v2004 = vsel %vm2003, %v1996, %v2000
    %v2005 = vand.u32 2147483647, %v1995
    %vm2006 = vcmp.eq.f32.partialorder %v2005, 8.507059e+37
    %v2007 = vand.u32 %v1995, 2147483648
    %v2008 = vor.u32 1.1754944e-38, %v2007
    %v2009 = vsel %vm2006, %v2008, %v2004
    %v2010 = vmul.f32 1.0, %v2009
    %v2011 = vxor.u32 %v1989, 2147483648
    %v2012 = vmul.f32 %v2011, 1.442695
    %v2013 = vpow.pop %v2012
    %v2014 = vadd.f32 %v2013, 1.0
    %v2015 = vrcp.pop %v2014
    %v2016 = vmul.f32 %v2014, %v2015
    %v2017 = vsub.f32 1.0, %v2016
    %v2018 = vmul.f32 %v2015, %v2017
    %v2019 = vadd.f32 %v2015, %v2018
    %vm2020 = vweird.f32 %v2014
    %vm2021 = vweird.f32 %v2015
    %vm2022 = vmor %vm2020, %vm2021
    %v2023 = vsel %vm2022, %v2015, %v2019
    %v2024 = vand.u32 2147483647, %v2014
    %vm2025 = vcmp.eq.f32.partialorder %v2024, 8.507059e+37
    %v2026 = vand.u32 %v2014, 2147483648
    %v2027 = vor.u32 1.1754944e-38, %v2026
    %v2028 = vsel %vm2025, %v2027, %v2023
    %v2029 = vmul.f32 1.0, %v2028
    %v2030 = vtanh.pop %v1990
    %v2031 = vxor.u32 %v1991, 2147483648
    %v2032 = vmul.f32 %v2031, 1.442695
    %v2033 = vpow.pop %v2032
    %v2034 = vadd.f32 %v2033, 1.0
    %v2035 = vrcp.pop %v2034
    %v2036 = vmul.f32 %v2034, %v2035
    %v2037 = vsub.f32 1.0, %v2036
    %v2038 = vmul.f32 %v2035, %v2037
    %v2039 = vadd.f32 %v2035, %v2038
    %vm2040 = vweird.f32 %v2034
    %vm2041 = vweird.f32 %v2035
    %vm2042 = vmor %vm2040, %vm2041
    %v2043 = vsel %vm2042, %v2035, %v2039
    %v2044 = vand.u32 2147483647, %v2034
    %vm2045 = vcmp.eq.f32.partialorder %v2044, 8.507059e+37
    %v2046 = vand.u32 %v2034, 2147483648
    %v2047 = vor.u32 1.1754944e-38, %v2046
    %v2048 = vsel %vm2045, %v2047, %v2043
    %v2049 = vmul.f32 1.0, %v2048
    %v2050 = vmul.f32 %v2029, %v1618
    %v2051 = vmul.f32 %v2010, %v2030
    %v2052 = vadd.f32 %v2050, %v2051
    %v2053 = vtanh.pop %v2052
    %v2054 = vmul.f32 %v2049, %v2053
    %v2055 = vld [vmem:[#allocation5] sm:$0xff]
    %v2056 = vld [vmem:[#allocation5 + $0x8] sm:$0xff]
    %v2057 = vld [vmem:[#allocation5 + $0x10] sm:$0xff]
    %v2058 = vld [vmem:[#allocation5 + $0x18] sm:$0xff]
    %v2059 = vld [vmem:[#allocation5 + $0x20] sm:$0xff]
    %v2060 = vld [vmem:[#allocation5 + $0x28] sm:$0xff]
    %v2061 = vld [vmem:[#allocation5 + $0x30] sm:$0xff]
    %v2062 = vld [vmem:[#allocation5 + $0x38] sm:$0xff]
    %v2063 = vld [vmem:[#allocation5 + $0x40] sm:$0xff]
    %v2064 = vld [vmem:[#allocation5 + $0x48] sm:$0xff]
    %v2065 = vld [vmem:[#allocation5 + $0x50] sm:$0xff]
    %v2066 = vld [vmem:[#allocation5 + $0x58] sm:$0xff]
    %v2067 = vld [vmem:[#allocation5 + $0x60] sm:$0xff]
    %v2068 = vld [vmem:[#allocation5 + $0x68] sm:$0xff]
    %v2069 = vld [vmem:[#allocation5 + $0x70] sm:$0xff]
    %v2070 = vld [vmem:[#allocation5 + $0x78] sm:$0xff]
    %v2071 = vld [vmem:[#allocation5 + $0x80] sm:$0xff]
    %v2072 = vld [vmem:[#allocation5 + $0x88] sm:$0xff]
    %v2073 = vld [vmem:[#allocation5 + $0x90] sm:$0xff]
    %v2074 = vld [vmem:[#allocation5 + $0x98] sm:$0xff]
    %v2075 = vld [vmem:[#allocation5 + $0xa0] sm:$0xff]
    %v2076 = vld [vmem:[#allocation5 + $0xa8] sm:$0xff]
    %v2077 = vld [vmem:[#allocation5 + $0xb0] sm:$0xff]
    %v2078 = vld [vmem:[#allocation5 + $0xb8] sm:$0xff]
    %v2079 = vld [vmem:[#allocation5 + $0xc0] sm:$0xff]
    %v2080 = vld [vmem:[#allocation5 + $0xc8] sm:$0xff]
    %v2081 = vld [vmem:[#allocation5 + $0xd0] sm:$0xff]
    %v2082 = vld [vmem:[#allocation5 + $0xd8] sm:$0xff]
    %v2083 = vld [vmem:[#allocation5 + $0xe0] sm:$0xff]
    %v2084 = vld [vmem:[#allocation5 + $0xe8] sm:$0xff]
    %v2085 = vld [vmem:[#allocation5 + $0xf0] sm:$0xff]
    %v2086 = vld [vmem:[#allocation5 + $0xf8] sm:$0xff]
    %v2087 = vld [vmem:[#allocation5 + $0x100] sm:$0xff]
    %v2088 = vld [vmem:[#allocation5 + $0x108] sm:$0xff]
    %v2089 = vld [vmem:[#allocation5 + $0x110] sm:$0xff]
    %v2090 = vld [vmem:[#allocation5 + $0x118] sm:$0xff]
    %v2091 = vld [vmem:[#allocation5 + $0x120] sm:$0xff]
    %v2092 = vld [vmem:[#allocation5 + $0x128] sm:$0xff]
    %v2093 = vld [vmem:[#allocation5 + $0x130] sm:$0xff]
    %v2094 = vld [vmem:[#allocation5 + $0x138] sm:$0xff]
    %v2095 = vld [vmem:[#allocation5 + $0x140] sm:$0xff]
    %v2096 = vld [vmem:[#allocation5 + $0x148] sm:$0xff]
    %v2097 = vld [vmem:[#allocation5 + $0x150] sm:$0xff]
    %v2098 = vld [vmem:[#allocation5 + $0x158] sm:$0xff]
    %v2099 = vld [vmem:[#allocation5 + $0x160] sm:$0xff]
    %v2100 = vld [vmem:[#allocation5 + $0x168] sm:$0xff]
    %v2101 = vld [vmem:[#allocation5 + $0x170] sm:$0xff]
    %v2102 = vld [vmem:[#allocation5 + $0x178] sm:$0xff]
    %v2103 = vld [vmem:[#allocation5 + $0x180] sm:$0xff]
    %v2104 = vld [vmem:[#allocation5 + $0x188] sm:$0xff]
    %v2105 = vld [vmem:[#allocation5 + $0x190] sm:$0xff]
    %v2106 = vld [vmem:[#allocation5 + $0x198] sm:$0xff]
    %v2107 = vld [vmem:[#allocation5 + $0x1a0] sm:$0xff]
    %v2108 = vld [vmem:[#allocation5 + $0x1a8] sm:$0xff]
    %v2109 = vld [vmem:[#allocation5 + $0x1b0] sm:$0xff]
    %v2110 = vld [vmem:[#allocation5 + $0x1b8] sm:$0xff]
    %v2111 = vld [vmem:[#allocation5 + $0x1c0] sm:$0xff]
    %v2112 = vld [vmem:[#allocation5 + $0x1c8] sm:$0xff]
    %v2113 = vld [vmem:[#allocation5 + $0x1d0] sm:$0xff]
    %v2114 = vld [vmem:[#allocation5 + $0x1d8] sm:$0xff]
    %v2115 = vld [vmem:[#allocation5 + $0x1e0] sm:$0xff]
    %v2116 = vld [vmem:[#allocation5 + $0x1e8] sm:$0xff]
    %v2117 = vld [vmem:[#allocation5 + $0x1f0] sm:$0xff]
    %v2118 = vld [vmem:[#allocation5 + $0x1f8] sm:$0xff]
    %2119 = vmatpush.msra.mxu0 %v2115
    %2120 = vmatpush.msra.mxu0 %v2111
    %2121 = vmatpush.msra.mxu0 %v2107
    %2122 = vmatpush.msra.mxu0 %v2103
    %2123 = vmatpush.msra.mxu0 %v2099
    %2124 = vmatpush.msra.mxu0 %v2095
    %2125 = vmatpush.msra.mxu0 %v2091
    %2126 = vmatpush.msra.mxu0 %v2087
    %2127 = vmatpush.msra.mxu0 %v2083
    %2128 = vmatpush.msra.mxu0 %v2079
    %2129 = vmatpush.msra.mxu0 %v2075
    %2130 = vmatpush.msra.mxu0 %v2071
    %2131 = vmatpush.msra.mxu0 %v2067
    %2132 = vmatpush.msra.mxu0 %v2063
    %2133 = vmatpush.msra.mxu0 %v2059
    %2134 = vmatpush.msra.mxu0 %v2055
    %2135 = vmatmul.f32.gmra.mxu0 %v1831
    %v2136 = vpop.f32.mrf.mxu0
    %v2137 = vadd.f32 0.0, %v2136
    %2138 = vdwg.mxu0
    %2139 = vmatpush.msra.mxu0 %v2116
    %2140 = vmatpush.msra.mxu0 %v2112
    %2141 = vmatpush.msra.mxu0 %v2108
    %2142 = vmatpush.msra.mxu0 %v2104
    %2143 = vmatpush.msra.mxu0 %v2100
    %2144 = vmatpush.msra.mxu0 %v2096
    %2145 = vmatpush.msra.mxu0 %v2092
    %2146 = vmatpush.msra.mxu0 %v2088
    %2147 = vmatpush.msra.mxu0 %v2084
    %2148 = vmatpush.msra.mxu0 %v2080
    %2149 = vmatpush.msra.mxu0 %v2076
    %2150 = vmatpush.msra.mxu0 %v2072
    %2151 = vmatpush.msra.mxu0 %v2068
    %2152 = vmatpush.msra.mxu0 %v2064
    %2153 = vmatpush.msra.mxu0 %v2060
    %2154 = vmatpush.msra.mxu0 %v2056
    %2155 = vmatmul.f32.gmra.mxu0 %v1831
    %v2156 = vpop.f32.mrf.mxu0
    %v2157 = vadd.f32 0.0, %v2156
    %2158 = vdwg.mxu0
    %2159 = vmatpush.msra.mxu0 %v2117
    %2160 = vmatpush.msra.mxu0 %v2113
    %2161 = vmatpush.msra.mxu0 %v2109
    %2162 = vmatpush.msra.mxu0 %v2105
    %2163 = vmatpush.msra.mxu0 %v2101
    %2164 = vmatpush.msra.mxu0 %v2097
    %2165 = vmatpush.msra.mxu0 %v2093
    %2166 = vmatpush.msra.mxu0 %v2089
    %2167 = vmatpush.msra.mxu0 %v2085
    %2168 = vmatpush.msra.mxu0 %v2081
    %2169 = vmatpush.msra.mxu0 %v2077
    %2170 = vmatpush.msra.mxu0 %v2073
    %2171 = vmatpush.msra.mxu0 %v2069
    %2172 = vmatpush.msra.mxu0 %v2065
    %2173 = vmatpush.msra.mxu0 %v2061
    %2174 = vmatpush.msra.mxu0 %v2057
    %2175 = vmatmul.f32.gmra.mxu0 %v1831
    %v2176 = vpop.f32.mrf.mxu0
    %v2177 = vadd.f32 0.0, %v2176
    %2178 = vdwg.mxu0
    %2179 = vmatpush.msra.mxu0 %v2118
    %2180 = vmatpush.msra.mxu0 %v2114
    %2181 = vmatpush.msra.mxu0 %v2110
    %2182 = vmatpush.msra.mxu0 %v2106
    %2183 = vmatpush.msra.mxu0 %v2102
    %2184 = vmatpush.msra.mxu0 %v2098
    %2185 = vmatpush.msra.mxu0 %v2094
    %2186 = vmatpush.msra.mxu0 %v2090
    %2187 = vmatpush.msra.mxu0 %v2086
    %2188 = vmatpush.msra.mxu0 %v2082
    %2189 = vmatpush.msra.mxu0 %v2078
    %2190 = vmatpush.msra.mxu0 %v2074
    %2191 = vmatpush.msra.mxu0 %v2070
    %2192 = vmatpush.msra.mxu0 %v2066
    %2193 = vmatpush.msra.mxu0 %v2062
    %2194 = vmatpush.msra.mxu0 %v2058
    %2195 = vmatmul.f32.gmra.mxu0 %v1831
    %v2196 = vpop.f32.mrf.mxu0
    %v2197 = vadd.f32 0.0, %v2196
    %2198 = vdwg.mxu0
    %v2199 = vadd.f32 %v1840, %v2137
    %v2200 = vadd.f32 %v1841, %v2157
    %v2201 = vadd.f32 %v1842, %v2177
    %v2202 = vadd.f32 %v1843, %v2197
    %v2203 = vxor.u32 %v2199, 2147483648
    %v2204 = vmul.f32 %v2203, 1.442695
    %v2205 = vpow.pop %v2204
    %v2206 = vadd.f32 %v2205, 1.0
    %v2207 = vrcp.pop %v2206
    %v2208 = vmul.f32 %v2206, %v2207
    %v2209 = vsub.f32 1.0, %v2208
    %v2210 = vmul.f32 %v2207, %v2209
    %v2211 = vadd.f32 %v2207, %v2210
    %vm2212 = vweird.f32 %v2206
    %vm2213 = vweird.f32 %v2207
    %vm2214 = vmor %vm2212, %vm2213
    %v2215 = vsel %vm2214, %v2207, %v2211
    %v2216 = vand.u32 2147483647, %v2206
    %vm2217 = vcmp.eq.f32.partialorder %v2216, 8.507059e+37
    %v2218 = vand.u32 %v2206, 2147483648
    %v2219 = vor.u32 1.1754944e-38, %v2218
    %v2220 = vsel %vm2217, %v2219, %v2215
    %v2221 = vmul.f32 1.0, %v2220
    %v2222 = vxor.u32 %v2200, 2147483648
    %v2223 = vmul.f32 %v2222, 1.442695
    %v2224 = vpow.pop %v2223
    %v2225 = vadd.f32 %v2224, 1.0
    %v2226 = vrcp.pop %v2225
    %v2227 = vmul.f32 %v2225, %v2226
    %v2228 = vsub.f32 1.0, %v2227
    %v2229 = vmul.f32 %v2226, %v2228
    %v2230 = vadd.f32 %v2226, %v2229
    %vm2231 = vweird.f32 %v2225
    %vm2232 = vweird.f32 %v2226
    %vm2233 = vmor %vm2231, %vm2232
    %v2234 = vsel %vm2233, %v2226, %v2230
    %v2235 = vand.u32 2147483647, %v2225
    %vm2236 = vcmp.eq.f32.partialorder %v2235, 8.507059e+37
    %v2237 = vand.u32 %v2225, 2147483648
    %v2238 = vor.u32 1.1754944e-38, %v2237
    %v2239 = vsel %vm2236, %v2238, %v2234
    %v2240 = vmul.f32 1.0, %v2239
    %v2241 = vtanh.pop %v2201
    %v2242 = vxor.u32 %v2202, 2147483648
    %v2243 = vmul.f32 %v2242, 1.442695
    %v2244 = vpow.pop %v2243
    %v2245 = vadd.f32 %v2244, 1.0
    %v2246 = vrcp.pop %v2245
    %v2247 = vmul.f32 %v2245, %v2246
    %v2248 = vsub.f32 1.0, %v2247
    %v2249 = vmul.f32 %v2246, %v2248
    %v2250 = vadd.f32 %v2246, %v2249
    %vm2251 = vweird.f32 %v2245
    %vm2252 = vweird.f32 %v2246
    %vm2253 = vmor %vm2251, %vm2252
    %v2254 = vsel %vm2253, %v2246, %v2250
    %v2255 = vand.u32 2147483647, %v2245
    %vm2256 = vcmp.eq.f32.partialorder %v2255, 8.507059e+37
    %v2257 = vand.u32 %v2245, 2147483648
    %v2258 = vor.u32 1.1754944e-38, %v2257
    %v2259 = vsel %vm2256, %v2258, %v2254
    %v2260 = vmul.f32 1.0, %v2259
    %v2261 = vmul.f32 %v2240, %v1829
    %v2262 = vmul.f32 %v2221, %v2241
    %v2263 = vadd.f32 %v2261, %v2262
    %v2264 = vtanh.pop %v2263
    %v2265 = vmul.f32 %v2260, %v2264
    %s2266 = scalar_lea.vmem %s5, 48
    %2267 = vst [vmem:[%s2266] sm:$0xff] %v2054
    %s2268 = scalar_lea.vmem %s5, 64
    %2269 = vst [vmem:[%s2268 + $0x8] sm:$0xff] %v2265
    %v2270 = vld [vmem:[#allocation2 + $0x100] sm:$0xff]
    %v2271 = vld [vmem:[#allocation2 + $0x108] sm:$0xff]
    %v2272 = vld [vmem:[#allocation2 + $0x110] sm:$0xff]
    %v2273 = vld [vmem:[#allocation2 + $0x118] sm:$0xff]
    %v2274 = vld [vmem:[#allocation2 + $0xe0] sm:$0xff]
    %v2275 = vld [vmem:[#allocation2 + $0xe8] sm:$0xff]
    %v2276 = vld [vmem:[#allocation2 + $0xf0] sm:$0xff]
    %v2277 = vld [vmem:[#allocation2 + $0xf8] sm:$0xff]
    %v2278 = vld [vmem:[#allocation3] sm:$0xff]
    %v2279 = vld [vmem:[#allocation3 + $0x8] sm:$0xff]
    %v2280 = vld [vmem:[#allocation3 + $0x10] sm:$0xff]
    %v2281 = vld [vmem:[#allocation3 + $0x18] sm:$0xff]
    %v2282 = vld [vmem:[#allocation3 + $0x20] sm:$0xff]
    %v2283 = vld [vmem:[#allocation3 + $0x28] sm:$0xff]
    %v2284 = vld [vmem:[#allocation3 + $0x30] sm:$0xff]
    %v2285 = vld [vmem:[#allocation3 + $0x38] sm:$0xff]
    %v2286 = vld [vmem:[#allocation3 + $0x40] sm:$0xff]
    %v2287 = vld [vmem:[#allocation3 + $0x48] sm:$0xff]
    %v2288 = vld [vmem:[#allocation3 + $0x50] sm:$0xff]
    %v2289 = vld [vmem:[#allocation3 + $0x58] sm:$0xff]
    %v2290 = vld [vmem:[#allocation3 + $0x60] sm:$0xff]
    %v2291 = vld [vmem:[#allocation3 + $0x68] sm:$0xff]
    %v2292 = vld [vmem:[#allocation3 + $0x70] sm:$0xff]
    %v2293 = vld [vmem:[#allocation3 + $0x78] sm:$0xff]
    %v2294 = vld [vmem:[#allocation3 + $0x80] sm:$0xff]
    %v2295 = vld [vmem:[#allocation3 + $0x88] sm:$0xff]
    %v2296 = vld [vmem:[#allocation3 + $0x90] sm:$0xff]
    %v2297 = vld [vmem:[#allocation3 + $0x98] sm:$0xff]
    %v2298 = vld [vmem:[#allocation3 + $0xa0] sm:$0xff]
    %v2299 = vld [vmem:[#allocation3 + $0xa8] sm:$0xff]
    %v2300 = vld [vmem:[#allocation3 + $0xb0] sm:$0xff]
    %v2301 = vld [vmem:[#allocation3 + $0xb8] sm:$0xff]
    %v2302 = vld [vmem:[#allocation3 + $0xc0] sm:$0xff]
    %v2303 = vld [vmem:[#allocation3 + $0xc8] sm:$0xff]
    %v2304 = vld [vmem:[#allocation3 + $0xd0] sm:$0xff]
    %v2305 = vld [vmem:[#allocation3 + $0xd8] sm:$0xff]
    %v2306 = vld [vmem:[#allocation3 + $0xe0] sm:$0xff]
    %v2307 = vld [vmem:[#allocation3 + $0xe8] sm:$0xff]
    %v2308 = vld [vmem:[#allocation3 + $0xf0] sm:$0xff]
    %v2309 = vld [vmem:[#allocation3 + $0xf8] sm:$0xff]
    %v2310 = vld [vmem:[#allocation3 + $0x100] sm:$0xff]
    %v2311 = vld [vmem:[#allocation3 + $0x108] sm:$0xff]
    %v2312 = vld [vmem:[#allocation3 + $0x110] sm:$0xff]
    %v2313 = vld [vmem:[#allocation3 + $0x118] sm:$0xff]
    %v2314 = vld [vmem:[#allocation3 + $0x120] sm:$0xff]
    %v2315 = vld [vmem:[#allocation3 + $0x128] sm:$0xff]
    %v2316 = vld [vmem:[#allocation3 + $0x130] sm:$0xff]
    %v2317 = vld [vmem:[#allocation3 + $0x138] sm:$0xff]
    %v2318 = vld [vmem:[#allocation3 + $0x140] sm:$0xff]
    %v2319 = vld [vmem:[#allocation3 + $0x148] sm:$0xff]
    %v2320 = vld [vmem:[#allocation3 + $0x150] sm:$0xff]
    %v2321 = vld [vmem:[#allocation3 + $0x158] sm:$0xff]
    %v2322 = vld [vmem:[#allocation3 + $0x160] sm:$0xff]
    %v2323 = vld [vmem:[#allocation3 + $0x168] sm:$0xff]
    %v2324 = vld [vmem:[#allocation3 + $0x170] sm:$0xff]
    %v2325 = vld [vmem:[#allocation3 + $0x178] sm:$0xff]
    %v2326 = vld [vmem:[#allocation3 + $0x180] sm:$0xff]
    %v2327 = vld [vmem:[#allocation3 + $0x188] sm:$0xff]
    %v2328 = vld [vmem:[#allocation3 + $0x190] sm:$0xff]
    %v2329 = vld [vmem:[#allocation3 + $0x198] sm:$0xff]
    %v2330 = vld [vmem:[#allocation3 + $0x1a0] sm:$0xff]
    %v2331 = vld [vmem:[#allocation3 + $0x1a8] sm:$0xff]
    %v2332 = vld [vmem:[#allocation3 + $0x1b0] sm:$0xff]
    %v2333 = vld [vmem:[#allocation3 + $0x1b8] sm:$0xff]
    %v2334 = vld [vmem:[#allocation3 + $0x1c0] sm:$0xff]
    %v2335 = vld [vmem:[#allocation3 + $0x1c8] sm:$0xff]
    %v2336 = vld [vmem:[#allocation3 + $0x1d0] sm:$0xff]
    %v2337 = vld [vmem:[#allocation3 + $0x1d8] sm:$0xff]
    %v2338 = vld [vmem:[#allocation3 + $0x1e0] sm:$0xff]
    %v2339 = vld [vmem:[#allocation3 + $0x1e8] sm:$0xff]
    %v2340 = vld [vmem:[#allocation3 + $0x1f0] sm:$0xff]
    %v2341 = vld [vmem:[#allocation3 + $0x1f8] sm:$0xff]
    %2342 = vmatpush.msra.mxu0 %v2338
    %2343 = vmatpush.msra.mxu0 %v2334
    %2344 = vmatpush.msra.mxu0 %v2330
    %2345 = vmatpush.msra.mxu0 %v2326
    %2346 = vmatpush.msra.mxu0 %v2322
    %2347 = vmatpush.msra.mxu0 %v2318
    %2348 = vmatpush.msra.mxu0 %v2314
    %2349 = vmatpush.msra.mxu0 %v2310
    %2350 = vmatpush.msra.mxu0 %v2306
    %2351 = vmatpush.msra.mxu0 %v2302
    %2352 = vmatpush.msra.mxu0 %v2298
    %2353 = vmatpush.msra.mxu0 %v2294
    %2354 = vmatpush.msra.mxu0 %v2290
    %2355 = vmatpush.msra.mxu0 %v2286
    %2356 = vmatpush.msra.mxu0 %v2282
    %2357 = vmatpush.msra.mxu0 %v2278
    %2358 = vmatmul.f32.gmra.mxu0 %v2054
    %v2359 = vpop.f32.mrf.mxu0
    %v2360 = vadd.f32 0.0, %v2359
    %2361 = vdwg.mxu0
    %2362 = vmatpush.msra.mxu0 %v2339
    %2363 = vmatpush.msra.mxu0 %v2335
    %2364 = vmatpush.msra.mxu0 %v2331
    %2365 = vmatpush.msra.mxu0 %v2327
    %2366 = vmatpush.msra.mxu0 %v2323
    %2367 = vmatpush.msra.mxu0 %v2319
    %2368 = vmatpush.msra.mxu0 %v2315
    %2369 = vmatpush.msra.mxu0 %v2311
    %2370 = vmatpush.msra.mxu0 %v2307
    %2371 = vmatpush.msra.mxu0 %v2303
    %2372 = vmatpush.msra.mxu0 %v2299
    %2373 = vmatpush.msra.mxu0 %v2295
    %2374 = vmatpush.msra.mxu0 %v2291
    %2375 = vmatpush.msra.mxu0 %v2287
    %2376 = vmatpush.msra.mxu0 %v2283
    %2377 = vmatpush.msra.mxu0 %v2279
    %2378 = vmatmul.f32.gmra.mxu0 %v2054
    %v2379 = vpop.f32.mrf.mxu0
    %v2380 = vadd.f32 0.0, %v2379
    %2381 = vdwg.mxu0
    %2382 = vmatpush.msra.mxu0 %v2340
    %2383 = vmatpush.msra.mxu0 %v2336
    %2384 = vmatpush.msra.mxu0 %v2332
    %2385 = vmatpush.msra.mxu0 %v2328
    %2386 = vmatpush.msra.mxu0 %v2324
    %2387 = vmatpush.msra.mxu0 %v2320
    %2388 = vmatpush.msra.mxu0 %v2316
    %2389 = vmatpush.msra.mxu0 %v2312
    %2390 = vmatpush.msra.mxu0 %v2308
    %2391 = vmatpush.msra.mxu0 %v2304
    %2392 = vmatpush.msra.mxu0 %v2300
    %2393 = vmatpush.msra.mxu0 %v2296
    %2394 = vmatpush.msra.mxu0 %v2292
    %2395 = vmatpush.msra.mxu0 %v2288
    %2396 = vmatpush.msra.mxu0 %v2284
    %2397 = vmatpush.msra.mxu0 %v2280
    %2398 = vmatmul.f32.gmra.mxu0 %v2054
    %v2399 = vpop.f32.mrf.mxu0
    %v2400 = vadd.f32 0.0, %v2399
    %2401 = vdwg.mxu0
    %2402 = vmatpush.msra.mxu0 %v2341
    %2403 = vmatpush.msra.mxu0 %v2337
    %2404 = vmatpush.msra.mxu0 %v2333
    %2405 = vmatpush.msra.mxu0 %v2329
    %2406 = vmatpush.msra.mxu0 %v2325
    %2407 = vmatpush.msra.mxu0 %v2321
    %2408 = vmatpush.msra.mxu0 %v2317
    %2409 = vmatpush.msra.mxu0 %v2313
    %2410 = vmatpush.msra.mxu0 %v2309
    %2411 = vmatpush.msra.mxu0 %v2305
    %2412 = vmatpush.msra.mxu0 %v2301
    %2413 = vmatpush.msra.mxu0 %v2297
    %2414 = vmatpush.msra.mxu0 %v2293
    %2415 = vmatpush.msra.mxu0 %v2289
    %2416 = vmatpush.msra.mxu0 %v2285
    %2417 = vmatpush.msra.mxu0 %v2281
    %2418 = vmatmul.f32.gmra.mxu0 %v2054
    %v2419 = vpop.f32.mrf.mxu0
    %v2420 = vadd.f32 0.0, %v2419
    %2421 = vdwg.mxu0
    %v2422 = vadd.f32 %v2270, %v2360
    %v2423 = vadd.f32 %v2271, %v2380
    %v2424 = vadd.f32 %v2272, %v2400
    %v2425 = vadd.f32 %v2273, %v2420
    %v2426 = vxor.u32 %v2422, 2147483648
    %v2427 = vmul.f32 %v2426, 1.442695
    %v2428 = vpow.pop %v2427
    %v2429 = vadd.f32 %v2428, 1.0
    %v2430 = vrcp.pop %v2429
    %v2431 = vmul.f32 %v2429, %v2430
    %v2432 = vsub.f32 1.0, %v2431
    %v2433 = vmul.f32 %v2430, %v2432
    %v2434 = vadd.f32 %v2430, %v2433
    %vm2435 = vweird.f32 %v2429
    %vm2436 = vweird.f32 %v2430
    %vm2437 = vmor %vm2435, %vm2436
    %v2438 = vsel %vm2437, %v2430, %v2434
    %v2439 = vand.u32 2147483647, %v2429
    %vm2440 = vcmp.eq.f32.partialorder %v2439, 8.507059e+37
    %v2441 = vand.u32 %v2429, 2147483648
    %v2442 = vor.u32 1.1754944e-38, %v2441
    %v2443 = vsel %vm2440, %v2442, %v2438
    %v2444 = vmul.f32 1.0, %v2443
    %v2445 = vxor.u32 %v2423, 2147483648
    %v2446 = vmul.f32 %v2445, 1.442695
    %v2447 = vpow.pop %v2446
    %v2448 = vadd.f32 %v2447, 1.0
    %v2449 = vrcp.pop %v2448
    %v2450 = vmul.f32 %v2448, %v2449
    %v2451 = vsub.f32 1.0, %v2450
    %v2452 = vmul.f32 %v2449, %v2451
    %v2453 = vadd.f32 %v2449, %v2452
    %vm2454 = vweird.f32 %v2448
    %vm2455 = vweird.f32 %v2449
    %vm2456 = vmor %vm2454, %vm2455
    %v2457 = vsel %vm2456, %v2449, %v2453
    %v2458 = vand.u32 2147483647, %v2448
    %vm2459 = vcmp.eq.f32.partialorder %v2458, 8.507059e+37
    %v2460 = vand.u32 %v2448, 2147483648
    %v2461 = vor.u32 1.1754944e-38, %v2460
    %v2462 = vsel %vm2459, %v2461, %v2457
    %v2463 = vmul.f32 1.0, %v2462
    %v2464 = vtanh.pop %v2424
    %v2465 = vxor.u32 %v2425, 2147483648
    %v2466 = vmul.f32 %v2465, 1.442695
    %v2467 = vpow.pop %v2466
    %v2468 = vadd.f32 %v2467, 1.0
    %v2469 = vrcp.pop %v2468
    %v2470 = vmul.f32 %v2468, %v2469
    %v2471 = vsub.f32 1.0, %v2470
    %v2472 = vmul.f32 %v2469, %v2471
    %v2473 = vadd.f32 %v2469, %v2472
    %vm2474 = vweird.f32 %v2468
    %vm2475 = vweird.f32 %v2469
    %vm2476 = vmor %vm2474, %vm2475
    %v2477 = vsel %vm2476, %v2469, %v2473
    %v2478 = vand.u32 2147483647, %v2468
    %vm2479 = vcmp.eq.f32.partialorder %v2478, 8.507059e+37
    %v2480 = vand.u32 %v2468, 2147483648
    %v2481 = vor.u32 1.1754944e-38, %v2480
    %v2482 = vsel %vm2479, %v2481, %v2477
    %v2483 = vmul.f32 1.0, %v2482
    %v2484 = vmul.f32 %v2463, %v2052
    %v2485 = vmul.f32 %v2444, %v2464
    %v2486 = vadd.f32 %v2484, %v2485
    %v2487 = vtanh.pop %v2486
    %v2488 = vmul.f32 %v2483, %v2487
    %v2489 = vld [vmem:[#allocation5] sm:$0xff]
    %v2490 = vld [vmem:[#allocation5 + $0x8] sm:$0xff]
    %v2491 = vld [vmem:[#allocation5 + $0x10] sm:$0xff]
    %v2492 = vld [vmem:[#allocation5 + $0x18] sm:$0xff]
    %v2493 = vld [vmem:[#allocation5 + $0x20] sm:$0xff]
    %v2494 = vld [vmem:[#allocation5 + $0x28] sm:$0xff]
    %v2495 = vld [vmem:[#allocation5 + $0x30] sm:$0xff]
    %v2496 = vld [vmem:[#allocation5 + $0x38] sm:$0xff]
    %v2497 = vld [vmem:[#allocation5 + $0x40] sm:$0xff]
    %v2498 = vld [vmem:[#allocation5 + $0x48] sm:$0xff]
    %v2499 = vld [vmem:[#allocation5 + $0x50] sm:$0xff]
    %v2500 = vld [vmem:[#allocation5 + $0x58] sm:$0xff]
    %v2501 = vld [vmem:[#allocation5 + $0x60] sm:$0xff]
    %v2502 = vld [vmem:[#allocation5 + $0x68] sm:$0xff]
    %v2503 = vld [vmem:[#allocation5 + $0x70] sm:$0xff]
    %v2504 = vld [vmem:[#allocation5 + $0x78] sm:$0xff]
    %v2505 = vld [vmem:[#allocation5 + $0x80] sm:$0xff]
    %v2506 = vld [vmem:[#allocation5 + $0x88] sm:$0xff]
    %v2507 = vld [vmem:[#allocation5 + $0x90] sm:$0xff]
    %v2508 = vld [vmem:[#allocation5 + $0x98] sm:$0xff]
    %v2509 = vld [vmem:[#allocation5 + $0xa0] sm:$0xff]
    %v2510 = vld [vmem:[#allocation5 + $0xa8] sm:$0xff]
    %v2511 = vld [vmem:[#allocation5 + $0xb0] sm:$0xff]
    %v2512 = vld [vmem:[#allocation5 + $0xb8] sm:$0xff]
    %v2513 = vld [vmem:[#allocation5 + $0xc0] sm:$0xff]
    %v2514 = vld [vmem:[#allocation5 + $0xc8] sm:$0xff]
    %v2515 = vld [vmem:[#allocation5 + $0xd0] sm:$0xff]
    %v2516 = vld [vmem:[#allocation5 + $0xd8] sm:$0xff]
    %v2517 = vld [vmem:[#allocation5 + $0xe0] sm:$0xff]
    %v2518 = vld [vmem:[#allocation5 + $0xe8] sm:$0xff]
    %v2519 = vld [vmem:[#allocation5 + $0xf0] sm:$0xff]
    %v2520 = vld [vmem:[#allocation5 + $0xf8] sm:$0xff]
    %v2521 = vld [vmem:[#allocation5 + $0x100] sm:$0xff]
    %v2522 = vld [vmem:[#allocation5 + $0x108] sm:$0xff]
    %v2523 = vld [vmem:[#allocation5 + $0x110] sm:$0xff]
    %v2524 = vld [vmem:[#allocation5 + $0x118] sm:$0xff]
    %v2525 = vld [vmem:[#allocation5 + $0x120] sm:$0xff]
    %v2526 = vld [vmem:[#allocation5 + $0x128] sm:$0xff]
    %v2527 = vld [vmem:[#allocation5 + $0x130] sm:$0xff]
    %v2528 = vld [vmem:[#allocation5 + $0x138] sm:$0xff]
    %v2529 = vld [vmem:[#allocation5 + $0x140] sm:$0xff]
    %v2530 = vld [vmem:[#allocation5 + $0x148] sm:$0xff]
    %v2531 = vld [vmem:[#allocation5 + $0x150] sm:$0xff]
    %v2532 = vld [vmem:[#allocation5 + $0x158] sm:$0xff]
    %v2533 = vld [vmem:[#allocation5 + $0x160] sm:$0xff]
    %v2534 = vld [vmem:[#allocation5 + $0x168] sm:$0xff]
    %v2535 = vld [vmem:[#allocation5 + $0x170] sm:$0xff]
    %v2536 = vld [vmem:[#allocation5 + $0x178] sm:$0xff]
    %v2537 = vld [vmem:[#allocation5 + $0x180] sm:$0xff]
    %v2538 = vld [vmem:[#allocation5 + $0x188] sm:$0xff]
    %v2539 = vld [vmem:[#allocation5 + $0x190] sm:$0xff]
    %v2540 = vld [vmem:[#allocation5 + $0x198] sm:$0xff]
    %v2541 = vld [vmem:[#allocation5 + $0x1a0] sm:$0xff]
    %v2542 = vld [vmem:[#allocation5 + $0x1a8] sm:$0xff]
    %v2543 = vld [vmem:[#allocation5 + $0x1b0] sm:$0xff]
    %v2544 = vld [vmem:[#allocation5 + $0x1b8] sm:$0xff]
    %v2545 = vld [vmem:[#allocation5 + $0x1c0] sm:$0xff]
    %v2546 = vld [vmem:[#allocation5 + $0x1c8] sm:$0xff]
    %v2547 = vld [vmem:[#allocation5 + $0x1d0] sm:$0xff]
    %v2548 = vld [vmem:[#allocation5 + $0x1d8] sm:$0xff]
    %v2549 = vld [vmem:[#allocation5 + $0x1e0] sm:$0xff]
    %v2550 = vld [vmem:[#allocation5 + $0x1e8] sm:$0xff]
    %v2551 = vld [vmem:[#allocation5 + $0x1f0] sm:$0xff]
    %v2552 = vld [vmem:[#allocation5 + $0x1f8] sm:$0xff]
    %2553 = vmatpush.msra.mxu0 %v2549
    %2554 = vmatpush.msra.mxu0 %v2545
    %2555 = vmatpush.msra.mxu0 %v2541
    %2556 = vmatpush.msra.mxu0 %v2537
    %2557 = vmatpush.msra.mxu0 %v2533
    %2558 = vmatpush.msra.mxu0 %v2529
    %2559 = vmatpush.msra.mxu0 %v2525
    %2560 = vmatpush.msra.mxu0 %v2521
    %2561 = vmatpush.msra.mxu0 %v2517
    %2562 = vmatpush.msra.mxu0 %v2513
    %2563 = vmatpush.msra.mxu0 %v2509
    %2564 = vmatpush.msra.mxu0 %v2505
    %2565 = vmatpush.msra.mxu0 %v2501
    %2566 = vmatpush.msra.mxu0 %v2497
    %2567 = vmatpush.msra.mxu0 %v2493
    %2568 = vmatpush.msra.mxu0 %v2489
    %2569 = vmatmul.f32.gmra.mxu0 %v2265
    %v2570 = vpop.f32.mrf.mxu0
    %v2571 = vadd.f32 0.0, %v2570
    %2572 = vdwg.mxu0
    %2573 = vmatpush.msra.mxu0 %v2550
    %2574 = vmatpush.msra.mxu0 %v2546
    %2575 = vmatpush.msra.mxu0 %v2542
    %2576 = vmatpush.msra.mxu0 %v2538
    %2577 = vmatpush.msra.mxu0 %v2534
    %2578 = vmatpush.msra.mxu0 %v2530
    %2579 = vmatpush.msra.mxu0 %v2526
    %2580 = vmatpush.msra.mxu0 %v2522
    %2581 = vmatpush.msra.mxu0 %v2518
    %2582 = vmatpush.msra.mxu0 %v2514
    %2583 = vmatpush.msra.mxu0 %v2510
    %2584 = vmatpush.msra.mxu0 %v2506
    %2585 = vmatpush.msra.mxu0 %v2502
    %2586 = vmatpush.msra.mxu0 %v2498
    %2587 = vmatpush.msra.mxu0 %v2494
    %2588 = vmatpush.msra.mxu0 %v2490
    %2589 = vmatmul.f32.gmra.mxu0 %v2265
    %v2590 = vpop.f32.mrf.mxu0
    %v2591 = vadd.f32 0.0, %v2590
    %2592 = vdwg.mxu0
    %2593 = vmatpush.msra.mxu0 %v2551
    %2594 = vmatpush.msra.mxu0 %v2547
    %2595 = vmatpush.msra.mxu0 %v2543
    %2596 = vmatpush.msra.mxu0 %v2539
    %2597 = vmatpush.msra.mxu0 %v2535
    %2598 = vmatpush.msra.mxu0 %v2531
    %2599 = vmatpush.msra.mxu0 %v2527
    %2600 = vmatpush.msra.mxu0 %v2523
    %2601 = vmatpush.msra.mxu0 %v2519
    %2602 = vmatpush.msra.mxu0 %v2515
    %2603 = vmatpush.msra.mxu0 %v2511
    %2604 = vmatpush.msra.mxu0 %v2507
    %2605 = vmatpush.msra.mxu0 %v2503
    %2606 = vmatpush.msra.mxu0 %v2499
    %2607 = vmatpush.msra.mxu0 %v2495
    %2608 = vmatpush.msra.mxu0 %v2491
    %2609 = vmatmul.f32.gmra.mxu0 %v2265
    %v2610 = vpop.f32.mrf.mxu0
    %v2611 = vadd.f32 0.0, %v2610
    %2612 = vdwg.mxu0
    %2613 = vmatpush.msra.mxu0 %v2552
    %2614 = vmatpush.msra.mxu0 %v2548
    %2615 = vmatpush.msra.mxu0 %v2544
    %2616 = vmatpush.msra.mxu0 %v2540
    %2617 = vmatpush.msra.mxu0 %v2536
    %2618 = vmatpush.msra.mxu0 %v2532
    %2619 = vmatpush.msra.mxu0 %v2528
    %2620 = vmatpush.msra.mxu0 %v2524
    %2621 = vmatpush.msra.mxu0 %v2520
    %2622 = vmatpush.msra.mxu0 %v2516
    %2623 = vmatpush.msra.mxu0 %v2512
    %2624 = vmatpush.msra.mxu0 %v2508
    %2625 = vmatpush.msra.mxu0 %v2504
    %2626 = vmatpush.msra.mxu0 %v2500
    %2627 = vmatpush.msra.mxu0 %v2496
    %2628 = vmatpush.msra.mxu0 %v2492
    %2629 = vmatmul.f32.gmra.mxu0 %v2265
    %v2630 = vpop.f32.mrf.mxu0
    %v2631 = vadd.f32 0.0, %v2630
    %2632 = vdwg.mxu0
    %v2633 = vadd.f32 %v2274, %v2571
    %v2634 = vadd.f32 %v2275, %v2591
    %v2635 = vadd.f32 %v2276, %v2611
    %v2636 = vadd.f32 %v2277, %v2631
    %v2637 = vxor.u32 %v2633, 2147483648
    %v2638 = vmul.f32 %v2637, 1.442695
    %v2639 = vpow.pop %v2638
    %v2640 = vadd.f32 %v2639, 1.0
    %v2641 = vrcp.pop %v2640
    %v2642 = vmul.f32 %v2640, %v2641
    %v2643 = vsub.f32 1.0, %v2642
    %v2644 = vmul.f32 %v2641, %v2643
    %v2645 = vadd.f32 %v2641, %v2644
    %vm2646 = vweird.f32 %v2640
    %vm2647 = vweird.f32 %v2641
    %vm2648 = vmor %vm2646, %vm2647
    %v2649 = vsel %vm2648, %v2641, %v2645
    %v2650 = vand.u32 2147483647, %v2640
    %vm2651 = vcmp.eq.f32.partialorder %v2650, 8.507059e+37
    %v2652 = vand.u32 %v2640, 2147483648
    %v2653 = vor.u32 1.1754944e-38, %v2652
    %v2654 = vsel %vm2651, %v2653, %v2649
    %v2655 = vmul.f32 1.0, %v2654
    %v2656 = vxor.u32 %v2634, 2147483648
    %v2657 = vmul.f32 %v2656, 1.442695
    %v2658 = vpow.pop %v2657
    %v2659 = vadd.f32 %v2658, 1.0
    %v2660 = vrcp.pop %v2659
    %v2661 = vmul.f32 %v2659, %v2660
    %v2662 = vsub.f32 1.0, %v2661
    %v2663 = vmul.f32 %v2660, %v2662
    %v2664 = vadd.f32 %v2660, %v2663
    %vm2665 = vweird.f32 %v2659
    %vm2666 = vweird.f32 %v2660
    %vm2667 = vmor %vm2665, %vm2666
    %v2668 = vsel %vm2667, %v2660, %v2664
    %v2669 = vand.u32 2147483647, %v2659
    %vm2670 = vcmp.eq.f32.partialorder %v2669, 8.507059e+37
    %v2671 = vand.u32 %v2659, 2147483648
    %v2672 = vor.u32 1.1754944e-38, %v2671
    %v2673 = vsel %vm2670, %v2672, %v2668
    %v2674 = vmul.f32 1.0, %v2673
    %v2675 = vtanh.pop %v2635
    %v2676 = vxor.u32 %v2636, 2147483648
    %v2677 = vmul.f32 %v2676, 1.442695
    %v2678 = vpow.pop %v2677
    %v2679 = vadd.f32 %v2678, 1.0
    %v2680 = vrcp.pop %v2679
    %v2681 = vmul.f32 %v2679, %v2680
    %v2682 = vsub.f32 1.0, %v2681
    %v2683 = vmul.f32 %v2680, %v2682
    %v2684 = vadd.f32 %v2680, %v2683
    %vm2685 = vweird.f32 %v2679
    %vm2686 = vweird.f32 %v2680
    %vm2687 = vmor %vm2685, %vm2686
    %v2688 = vsel %vm2687, %v2680, %v2684
    %v2689 = vand.u32 2147483647, %v2679
    %vm2690 = vcmp.eq.f32.partialorder %v2689, 8.507059e+37
    %v2691 = vand.u32 %v2679, 2147483648
    %v2692 = vor.u32 1.1754944e-38, %v2691
    %v2693 = vsel %vm2690, %v2692, %v2688
    %v2694 = vmul.f32 1.0, %v2693
    %v2695 = vmul.f32 %v2674, %v2263
    %v2696 = vmul.f32 %v2655, %v2675
    %v2697 = vadd.f32 %v2695, %v2696
    %v2698 = vtanh.pop %v2697
    %v2699 = vmul.f32 %v2694, %v2698
    %2700 = vst [vmem:[%s2268] sm:$0xff] %v2488
    %2701 = vst [vmem:[%s2266 + $0x8] sm:$0xff] %v2699
    %v2702 = vld [vmem:[#allocation2 + $0x140] sm:$0xff]
    %v2703 = vld [vmem:[#allocation2 + $0x148] sm:$0xff]
    %v2704 = vld [vmem:[#allocation2 + $0x150] sm:$0xff]
    %v2705 = vld [vmem:[#allocation2 + $0x158] sm:$0xff]
    %v2706 = vld [vmem:[#allocation2 + $0xa0] sm:$0xff]
    %v2707 = vld [vmem:[#allocation2 + $0xa8] sm:$0xff]
    %v2708 = vld [vmem:[#allocation2 + $0xb0] sm:$0xff]
    %v2709 = vld [vmem:[#allocation2 + $0xb8] sm:$0xff]
    %v2710 = vld [vmem:[#allocation3] sm:$0xff]
    %v2711 = vld [vmem:[#allocation3 + $0x8] sm:$0xff]
    %v2712 = vld [vmem:[#allocation3 + $0x10] sm:$0xff]
    %v2713 = vld [vmem:[#allocation3 + $0x18] sm:$0xff]
    %v2714 = vld [vmem:[#allocation3 + $0x20] sm:$0xff]
    %v2715 = vld [vmem:[#allocation3 + $0x28] sm:$0xff]
    %v2716 = vld [vmem:[#allocation3 + $0x30] sm:$0xff]
    %v2717 = vld [vmem:[#allocation3 + $0x38] sm:$0xff]
    %v2718 = vld [vmem:[#allocation3 + $0x40] sm:$0xff]
    %v2719 = vld [vmem:[#allocation3 + $0x48] sm:$0xff]
    %v2720 = vld [vmem:[#allocation3 + $0x50] sm:$0xff]
    %v2721 = vld [vmem:[#allocation3 + $0x58] sm:$0xff]
    %v2722 = vld [vmem:[#allocation3 + $0x60] sm:$0xff]
    %v2723 = vld [vmem:[#allocation3 + $0x68] sm:$0xff]
    %v2724 = vld [vmem:[#allocation3 + $0x70] sm:$0xff]
    %v2725 = vld [vmem:[#allocation3 + $0x78] sm:$0xff]
    %v2726 = vld [vmem:[#allocation3 + $0x80] sm:$0xff]
    %v2727 = vld [vmem:[#allocation3 + $0x88] sm:$0xff]
    %v2728 = vld [vmem:[#allocation3 + $0x90] sm:$0xff]
    %v2729 = vld [vmem:[#allocation3 + $0x98] sm:$0xff]
    %v2730 = vld [vmem:[#allocation3 + $0xa0] sm:$0xff]
    %v2731 = vld [vmem:[#allocation3 + $0xa8] sm:$0xff]
    %v2732 = vld [vmem:[#allocation3 + $0xb0] sm:$0xff]
    %v2733 = vld [vmem:[#allocation3 + $0xb8] sm:$0xff]
    %v2734 = vld [vmem:[#allocation3 + $0xc0] sm:$0xff]
    %v2735 = vld [vmem:[#allocation3 + $0xc8] sm:$0xff]
    %v2736 = vld [vmem:[#allocation3 + $0xd0] sm:$0xff]
    %v2737 = vld [vmem:[#allocation3 + $0xd8] sm:$0xff]
    %v2738 = vld [vmem:[#allocation3 + $0xe0] sm:$0xff]
    %v2739 = vld [vmem:[#allocation3 + $0xe8] sm:$0xff]
    %v2740 = vld [vmem:[#allocation3 + $0xf0] sm:$0xff]
    %v2741 = vld [vmem:[#allocation3 + $0xf8] sm:$0xff]
    %v2742 = vld [vmem:[#allocation3 + $0x100] sm:$0xff]
    %v2743 = vld [vmem:[#allocation3 + $0x108] sm:$0xff]
    %v2744 = vld [vmem:[#allocation3 + $0x110] sm:$0xff]
    %v2745 = vld [vmem:[#allocation3 + $0x118] sm:$0xff]
    %v2746 = vld [vmem:[#allocation3 + $0x120] sm:$0xff]
    %v2747 = vld [vmem:[#allocation3 + $0x128] sm:$0xff]
    %v2748 = vld [vmem:[#allocation3 + $0x130] sm:$0xff]
    %v2749 = vld [vmem:[#allocation3 + $0x138] sm:$0xff]
    %v2750 = vld [vmem:[#allocation3 + $0x140] sm:$0xff]
    %v2751 = vld [vmem:[#allocation3 + $0x148] sm:$0xff]
    %v2752 = vld [vmem:[#allocation3 + $0x150] sm:$0xff]
    %v2753 = vld [vmem:[#allocation3 + $0x158] sm:$0xff]
    %v2754 = vld [vmem:[#allocation3 + $0x160] sm:$0xff]
    %v2755 = vld [vmem:[#allocation3 + $0x168] sm:$0xff]
    %v2756 = vld [vmem:[#allocation3 + $0x170] sm:$0xff]
    %v2757 = vld [vmem:[#allocation3 + $0x178] sm:$0xff]
    %v2758 = vld [vmem:[#allocation3 + $0x180] sm:$0xff]
    %v2759 = vld [vmem:[#allocation3 + $0x188] sm:$0xff]
    %v2760 = vld [vmem:[#allocation3 + $0x190] sm:$0xff]
    %v2761 = vld [vmem:[#allocation3 + $0x198] sm:$0xff]
    %v2762 = vld [vmem:[#allocation3 + $0x1a0] sm:$0xff]
    %v2763 = vld [vmem:[#allocation3 + $0x1a8] sm:$0xff]
    %v2764 = vld [vmem:[#allocation3 + $0x1b0] sm:$0xff]
    %v2765 = vld [vmem:[#allocation3 + $0x1b8] sm:$0xff]
    %v2766 = vld [vmem:[#allocation3 + $0x1c0] sm:$0xff]
    %v2767 = vld [vmem:[#allocation3 + $0x1c8] sm:$0xff]
    %v2768 = vld [vmem:[#allocation3 + $0x1d0] sm:$0xff]
    %v2769 = vld [vmem:[#allocation3 + $0x1d8] sm:$0xff]
    %v2770 = vld [vmem:[#allocation3 + $0x1e0] sm:$0xff]
    %v2771 = vld [vmem:[#allocation3 + $0x1e8] sm:$0xff]
    %v2772 = vld [vmem:[#allocation3 + $0x1f0] sm:$0xff]
    %v2773 = vld [vmem:[#allocation3 + $0x1f8] sm:$0xff]
    %2774 = vmatpush.msra.mxu0 %v2770
    %2775 = vmatpush.msra.mxu0 %v2766
    %2776 = vmatpush.msra.mxu0 %v2762
    %2777 = vmatpush.msra.mxu0 %v2758
    %2778 = vmatpush.msra.mxu0 %v2754
    %2779 = vmatpush.msra.mxu0 %v2750
    %2780 = vmatpush.msra.mxu0 %v2746
    %2781 = vmatpush.msra.mxu0 %v2742
    %2782 = vmatpush.msra.mxu0 %v2738
    %2783 = vmatpush.msra.mxu0 %v2734
    %2784 = vmatpush.msra.mxu0 %v2730
    %2785 = vmatpush.msra.mxu0 %v2726
    %2786 = vmatpush.msra.mxu0 %v2722
    %2787 = vmatpush.msra.mxu0 %v2718
    %2788 = vmatpush.msra.mxu0 %v2714
    %2789 = vmatpush.msra.mxu0 %v2710
    %2790 = vmatmul.f32.gmra.mxu0 %v2488
    %v2791 = vpop.f32.mrf.mxu0
    %v2792 = vadd.f32 0.0, %v2791
    %2793 = vdwg.mxu0
    %2794 = vmatpush.msra.mxu0 %v2771
    %2795 = vmatpush.msra.mxu0 %v2767
    %2796 = vmatpush.msra.mxu0 %v2763
    %2797 = vmatpush.msra.mxu0 %v2759
    %2798 = vmatpush.msra.mxu0 %v2755
    %2799 = vmatpush.msra.mxu0 %v2751
    %2800 = vmatpush.msra.mxu0 %v2747
    %2801 = vmatpush.msra.mxu0 %v2743
    %2802 = vmatpush.msra.mxu0 %v2739
    %2803 = vmatpush.msra.mxu0 %v2735
    %2804 = vmatpush.msra.mxu0 %v2731
    %2805 = vmatpush.msra.mxu0 %v2727
    %2806 = vmatpush.msra.mxu0 %v2723
    %2807 = vmatpush.msra.mxu0 %v2719
    %2808 = vmatpush.msra.mxu0 %v2715
    %2809 = vmatpush.msra.mxu0 %v2711
    %2810 = vmatmul.f32.gmra.mxu0 %v2488
    %v2811 = vpop.f32.mrf.mxu0
    %v2812 = vadd.f32 0.0, %v2811
    %2813 = vdwg.mxu0
    %2814 = vmatpush.msra.mxu0 %v2772
    %2815 = vmatpush.msra.mxu0 %v2768
    %2816 = vmatpush.msra.mxu0 %v2764
    %2817 = vmatpush.msra.mxu0 %v2760
    %2818 = vmatpush.msra.mxu0 %v2756
    %2819 = vmatpush.msra.mxu0 %v2752
    %2820 = vmatpush.msra.mxu0 %v2748
    %2821 = vmatpush.msra.mxu0 %v2744
    %2822 = vmatpush.msra.mxu0 %v2740
    %2823 = vmatpush.msra.mxu0 %v2736
    %2824 = vmatpush.msra.mxu0 %v2732
    %2825 = vmatpush.msra.mxu0 %v2728
    %2826 = vmatpush.msra.mxu0 %v2724
    %2827 = vmatpush.msra.mxu0 %v2720
    %2828 = vmatpush.msra.mxu0 %v2716
    %2829 = vmatpush.msra.mxu0 %v2712
    %2830 = vmatmul.f32.gmra.mxu0 %v2488
    %v2831 = vpop.f32.mrf.mxu0
    %v2832 = vadd.f32 0.0, %v2831
    %2833 = vdwg.mxu0
    %2834 = vmatpush.msra.mxu0 %v2773
    %2835 = vmatpush.msra.mxu0 %v2769
    %2836 = vmatpush.msra.mxu0 %v2765
    %2837 = vmatpush.msra.mxu0 %v2761
    %2838 = vmatpush.msra.mxu0 %v2757
    %2839 = vmatpush.msra.mxu0 %v2753
    %2840 = vmatpush.msra.mxu0 %v2749
    %2841 = vmatpush.msra.mxu0 %v2745
    %2842 = vmatpush.msra.mxu0 %v2741
    %2843 = vmatpush.msra.mxu0 %v2737
    %2844 = vmatpush.msra.mxu0 %v2733
    %2845 = vmatpush.msra.mxu0 %v2729
    %2846 = vmatpush.msra.mxu0 %v2725
    %2847 = vmatpush.msra.mxu0 %v2721
    %2848 = vmatpush.msra.mxu0 %v2717
    %2849 = vmatpush.msra.mxu0 %v2713
    %2850 = vmatmul.f32.gmra.mxu0 %v2488
    %v2851 = vpop.f32.mrf.mxu0
    %v2852 = vadd.f32 0.0, %v2851
    %2853 = vdwg.mxu0
    %v2854 = vadd.f32 %v2702, %v2792
    %v2855 = vadd.f32 %v2703, %v2812
    %v2856 = vadd.f32 %v2704, %v2832
    %v2857 = vadd.f32 %v2705, %v2852
    %v2858 = vxor.u32 %v2854, 2147483648
    %v2859 = vmul.f32 %v2858, 1.442695
    %v2860 = vpow.pop %v2859
    %v2861 = vadd.f32 %v2860, 1.0
    %v2862 = vrcp.pop %v2861
    %v2863 = vmul.f32 %v2861, %v2862
    %v2864 = vsub.f32 1.0, %v2863
    %v2865 = vmul.f32 %v2862, %v2864
    %v2866 = vadd.f32 %v2862, %v2865
    %vm2867 = vweird.f32 %v2861
    %vm2868 = vweird.f32 %v2862
    %vm2869 = vmor %vm2867, %vm2868
    %v2870 = vsel %vm2869, %v2862, %v2866
    %v2871 = vand.u32 2147483647, %v2861
    %vm2872 = vcmp.eq.f32.partialorder %v2871, 8.507059e+37
    %v2873 = vand.u32 %v2861, 2147483648
    %v2874 = vor.u32 1.1754944e-38, %v2873
    %v2875 = vsel %vm2872, %v2874, %v2870
    %v2876 = vmul.f32 1.0, %v2875
    %v2877 = vxor.u32 %v2855, 2147483648
    %v2878 = vmul.f32 %v2877, 1.442695
    %v2879 = vpow.pop %v2878
    %v2880 = vadd.f32 %v2879, 1.0
    %v2881 = vrcp.pop %v2880
    %v2882 = vmul.f32 %v2880, %v2881
    %v2883 = vsub.f32 1.0, %v2882
    %v2884 = vmul.f32 %v2881, %v2883
    %v2885 = vadd.f32 %v2881, %v2884
    %vm2886 = vweird.f32 %v2880
    %vm2887 = vweird.f32 %v2881
    %vm2888 = vmor %vm2886, %vm2887
    %v2889 = vsel %vm2888, %v2881, %v2885
    %v2890 = vand.u32 2147483647, %v2880
    %vm2891 = vcmp.eq.f32.partialorder %v2890, 8.507059e+37
    %v2892 = vand.u32 %v2880, 2147483648
    %v2893 = vor.u32 1.1754944e-38, %v2892
    %v2894 = vsel %vm2891, %v2893, %v2889
    %v2895 = vmul.f32 1.0, %v2894
    %v2896 = vtanh.pop %v2856
    %v2897 = vxor.u32 %v2857, 2147483648
    %v2898 = vmul.f32 %v2897, 1.442695
    %v2899 = vpow.pop %v2898
    %v2900 = vadd.f32 %v2899, 1.0
    %v2901 = vrcp.pop %v2900
    %v2902 = vmul.f32 %v2900, %v2901
    %v2903 = vsub.f32 1.0, %v2902
    %v2904 = vmul.f32 %v2901, %v2903
    %v2905 = vadd.f32 %v2901, %v2904
    %vm2906 = vweird.f32 %v2900
    %vm2907 = vweird.f32 %v2901
    %vm2908 = vmor %vm2906, %vm2907
    %v2909 = vsel %vm2908, %v2901, %v2905
    %v2910 = vand.u32 2147483647, %v2900
    %vm2911 = vcmp.eq.f32.partialorder %v2910, 8.507059e+37
    %v2912 = vand.u32 %v2900, 2147483648
    %v2913 = vor.u32 1.1754944e-38, %v2912
    %v2914 = vsel %vm2911, %v2913, %v2909
    %v2915 = vmul.f32 1.0, %v2914
    %v2916 = vmul.f32 %v2895, %v2486
    %v2917 = vmul.f32 %v2876, %v2896
    %v2918 = vadd.f32 %v2916, %v2917
    %v2919 = vtanh.pop %v2918
    %v2920 = vmul.f32 %v2915, %v2919
    %v2921 = vld [vmem:[#allocation5] sm:$0xff]
    %v2922 = vld [vmem:[#allocation5 + $0x8] sm:$0xff]
    %v2923 = vld [vmem:[#allocation5 + $0x10] sm:$0xff]
    %v2924 = vld [vmem:[#allocation5 + $0x18] sm:$0xff]
    %v2925 = vld [vmem:[#allocation5 + $0x20] sm:$0xff]
    %v2926 = vld [vmem:[#allocation5 + $0x28] sm:$0xff]
    %v2927 = vld [vmem:[#allocation5 + $0x30] sm:$0xff]
    %v2928 = vld [vmem:[#allocation5 + $0x38] sm:$0xff]
    %v2929 = vld [vmem:[#allocation5 + $0x40] sm:$0xff]
    %v2930 = vld [vmem:[#allocation5 + $0x48] sm:$0xff]
    %v2931 = vld [vmem:[#allocation5 + $0x50] sm:$0xff]
    %v2932 = vld [vmem:[#allocation5 + $0x58] sm:$0xff]
    %v2933 = vld [vmem:[#allocation5 + $0x60] sm:$0xff]
    %v2934 = vld [vmem:[#allocation5 + $0x68] sm:$0xff]
    %v2935 = vld [vmem:[#allocation5 + $0x70] sm:$0xff]
    %v2936 = vld [vmem:[#allocation5 + $0x78] sm:$0xff]
    %v2937 = vld [vmem:[#allocation5 + $0x80] sm:$0xff]
    %v2938 = vld [vmem:[#allocation5 + $0x88] sm:$0xff]
    %v2939 = vld [vmem:[#allocation5 + $0x90] sm:$0xff]
    %v2940 = vld [vmem:[#allocation5 + $0x98] sm:$0xff]
    %v2941 = vld [vmem:[#allocation5 + $0xa0] sm:$0xff]
    %v2942 = vld [vmem:[#allocation5 + $0xa8] sm:$0xff]
    %v2943 = vld [vmem:[#allocation5 + $0xb0] sm:$0xff]
    %v2944 = vld [vmem:[#allocation5 + $0xb8] sm:$0xff]
    %v2945 = vld [vmem:[#allocation5 + $0xc0] sm:$0xff]
    %v2946 = vld [vmem:[#allocation5 + $0xc8] sm:$0xff]
    %v2947 = vld [vmem:[#allocation5 + $0xd0] sm:$0xff]
    %v2948 = vld [vmem:[#allocation5 + $0xd8] sm:$0xff]
    %v2949 = vld [vmem:[#allocation5 + $0xe0] sm:$0xff]
    %v2950 = vld [vmem:[#allocation5 + $0xe8] sm:$0xff]
    %v2951 = vld [vmem:[#allocation5 + $0xf0] sm:$0xff]
    %v2952 = vld [vmem:[#allocation5 + $0xf8] sm:$0xff]
    %v2953 = vld [vmem:[#allocation5 + $0x100] sm:$0xff]
    %v2954 = vld [vmem:[#allocation5 + $0x108] sm:$0xff]
    %v2955 = vld [vmem:[#allocation5 + $0x110] sm:$0xff]
    %v2956 = vld [vmem:[#allocation5 + $0x118] sm:$0xff]
    %v2957 = vld [vmem:[#allocation5 + $0x120] sm:$0xff]
    %v2958 = vld [vmem:[#allocation5 + $0x128] sm:$0xff]
    %v2959 = vld [vmem:[#allocation5 + $0x130] sm:$0xff]
    %v2960 = vld [vmem:[#allocation5 + $0x138] sm:$0xff]
    %v2961 = vld [vmem:[#allocation5 + $0x140] sm:$0xff]
    %v2962 = vld [vmem:[#allocation5 + $0x148] sm:$0xff]
    %v2963 = vld [vmem:[#allocation5 + $0x150] sm:$0xff]
    %v2964 = vld [vmem:[#allocation5 + $0x158] sm:$0xff]
    %v2965 = vld [vmem:[#allocation5 + $0x160] sm:$0xff]
    %v2966 = vld [vmem:[#allocation5 + $0x168] sm:$0xff]
    %v2967 = vld [vmem:[#allocation5 + $0x170] sm:$0xff]
    %v2968 = vld [vmem:[#allocation5 + $0x178] sm:$0xff]
    %v2969 = vld [vmem:[#allocation5 + $0x180] sm:$0xff]
    %v2970 = vld [vmem:[#allocation5 + $0x188] sm:$0xff]
    %v2971 = vld [vmem:[#allocation5 + $0x190] sm:$0xff]
    %v2972 = vld [vmem:[#allocation5 + $0x198] sm:$0xff]
    %v2973 = vld [vmem:[#allocation5 + $0x1a0] sm:$0xff]
    %v2974 = vld [vmem:[#allocation5 + $0x1a8] sm:$0xff]
    %v2975 = vld [vmem:[#allocation5 + $0x1b0] sm:$0xff]
    %v2976 = vld [vmem:[#allocation5 + $0x1b8] sm:$0xff]
    %v2977 = vld [vmem:[#allocation5 + $0x1c0] sm:$0xff]
    %v2978 = vld [vmem:[#allocation5 + $0x1c8] sm:$0xff]
    %v2979 = vld [vmem:[#allocation5 + $0x1d0] sm:$0xff]
    %v2980 = vld [vmem:[#allocation5 + $0x1d8] sm:$0xff]
    %v2981 = vld [vmem:[#allocation5 + $0x1e0] sm:$0xff]
    %v2982 = vld [vmem:[#allocation5 + $0x1e8] sm:$0xff]
    %v2983 = vld [vmem:[#allocation5 + $0x1f0] sm:$0xff]
    %v2984 = vld [vmem:[#allocation5 + $0x1f8] sm:$0xff]
    %2985 = vmatpush.msra.mxu0 %v2981
    %2986 = vmatpush.msra.mxu0 %v2977
    %2987 = vmatpush.msra.mxu0 %v2973
    %2988 = vmatpush.msra.mxu0 %v2969
    %2989 = vmatpush.msra.mxu0 %v2965
    %2990 = vmatpush.msra.mxu0 %v2961
    %2991 = vmatpush.msra.mxu0 %v2957
    %2992 = vmatpush.msra.mxu0 %v2953
    %2993 = vmatpush.msra.mxu0 %v2949
    %2994 = vmatpush.msra.mxu0 %v2945
    %2995 = vmatpush.msra.mxu0 %v2941
    %2996 = vmatpush.msra.mxu0 %v2937
    %2997 = vmatpush.msra.mxu0 %v2933
    %2998 = vmatpush.msra.mxu0 %v2929
    %2999 = vmatpush.msra.mxu0 %v2925
    %3000 = vmatpush.msra.mxu0 %v2921
    %3001 = vmatmul.f32.gmra.mxu0 %v2699
    %v3002 = vpop.f32.mrf.mxu0
    %v3003 = vadd.f32 0.0, %v3002
    %3004 = vdwg.mxu0
    %3005 = vmatpush.msra.mxu0 %v2982
    %3006 = vmatpush.msra.mxu0 %v2978
    %3007 = vmatpush.msra.mxu0 %v2974
    %3008 = vmatpush.msra.mxu0 %v2970
    %3009 = vmatpush.msra.mxu0 %v2966
    %3010 = vmatpush.msra.mxu0 %v2962
    %3011 = vmatpush.msra.mxu0 %v2958
    %3012 = vmatpush.msra.mxu0 %v2954
    %3013 = vmatpush.msra.mxu0 %v2950
    %3014 = vmatpush.msra.mxu0 %v2946
    %3015 = vmatpush.msra.mxu0 %v2942
    %3016 = vmatpush.msra.mxu0 %v2938
    %3017 = vmatpush.msra.mxu0 %v2934
    %3018 = vmatpush.msra.mxu0 %v2930
    %3019 = vmatpush.msra.mxu0 %v2926
    %3020 = vmatpush.msra.mxu0 %v2922
    %3021 = vmatmul.f32.gmra.mxu0 %v2699
    %v3022 = vpop.f32.mrf.mxu0
    %v3023 = vadd.f32 0.0, %v3022
    %3024 = vdwg.mxu0
    %3025 = vmatpush.msra.mxu0 %v2983
    %3026 = vmatpush.msra.mxu0 %v2979
    %3027 = vmatpush.msra.mxu0 %v2975
    %3028 = vmatpush.msra.mxu0 %v2971
    %3029 = vmatpush.msra.mxu0 %v2967
    %3030 = vmatpush.msra.mxu0 %v2963
    %3031 = vmatpush.msra.mxu0 %v2959
    %3032 = vmatpush.msra.mxu0 %v2955
    %3033 = vmatpush.msra.mxu0 %v2951
    %3034 = vmatpush.msra.mxu0 %v2947
    %3035 = vmatpush.msra.mxu0 %v2943
    %3036 = vmatpush.msra.mxu0 %v2939
    %3037 = vmatpush.msra.mxu0 %v2935
    %3038 = vmatpush.msra.mxu0 %v2931
    %3039 = vmatpush.msra.mxu0 %v2927
    %3040 = vmatpush.msra.mxu0 %v2923
    %3041 = vmatmul.f32.gmra.mxu0 %v2699
    %v3042 = vpop.f32.mrf.mxu0
    %v3043 = vadd.f32 0.0, %v3042
    %3044 = vdwg.mxu0
    %3045 = vmatpush.msra.mxu0 %v2984
    %3046 = vmatpush.msra.mxu0 %v2980
    %3047 = vmatpush.msra.mxu0 %v2976
    %3048 = vmatpush.msra.mxu0 %v2972
    %3049 = vmatpush.msra.mxu0 %v2968
    %3050 = vmatpush.msra.mxu0 %v2964
    %3051 = vmatpush.msra.mxu0 %v2960
    %3052 = vmatpush.msra.mxu0 %v2956
    %3053 = vmatpush.msra.mxu0 %v2952
    %3054 = vmatpush.msra.mxu0 %v2948
    %3055 = vmatpush.msra.mxu0 %v2944
    %3056 = vmatpush.msra.mxu0 %v2940
    %3057 = vmatpush.msra.mxu0 %v2936
    %3058 = vmatpush.msra.mxu0 %v2932
    %3059 = vmatpush.msra.mxu0 %v2928
    %3060 = vmatpush.msra.mxu0 %v2924
    %3061 = vmatmul.f32.gmra.mxu0 %v2699
    %v3062 = vpop.f32.mrf.mxu0
    %v3063 = vadd.f32 0.0, %v3062
    %3064 = vdwg.mxu0
    %v3065 = vadd.f32 %v2706, %v3003
    %v3066 = vadd.f32 %v2707, %v3023
    %v3067 = vadd.f32 %v2708, %v3043
    %v3068 = vadd.f32 %v2709, %v3063
    %v3069 = vxor.u32 %v3065, 2147483648
    %v3070 = vmul.f32 %v3069, 1.442695
    %v3071 = vpow.pop %v3070
    %v3072 = vadd.f32 %v3071, 1.0
    %v3073 = vrcp.pop %v3072
    %v3074 = vmul.f32 %v3072, %v3073
    %v3075 = vsub.f32 1.0, %v3074
    %v3076 = vmul.f32 %v3073, %v3075
    %v3077 = vadd.f32 %v3073, %v3076
    %vm3078 = vweird.f32 %v3072
    %vm3079 = vweird.f32 %v3073
    %vm3080 = vmor %vm3078, %vm3079
    %v3081 = vsel %vm3080, %v3073, %v3077
    %v3082 = vand.u32 2147483647, %v3072
    %vm3083 = vcmp.eq.f32.partialorder %v3082, 8.507059e+37
    %v3084 = vand.u32 %v3072, 2147483648
    %v3085 = vor.u32 1.1754944e-38, %v3084
    %v3086 = vsel %vm3083, %v3085, %v3081
    %v3087 = vmul.f32 1.0, %v3086
    %v3088 = vxor.u32 %v3066, 2147483648
    %v3089 = vmul.f32 %v3088, 1.442695
    %v3090 = vpow.pop %v3089
    %v3091 = vadd.f32 %v3090, 1.0
    %v3092 = vrcp.pop %v3091
    %v3093 = vmul.f32 %v3091, %v3092
    %v3094 = vsub.f32 1.0, %v3093
    %v3095 = vmul.f32 %v3092, %v3094
    %v3096 = vadd.f32 %v3092, %v3095
    %vm3097 = vweird.f32 %v3091
    %vm3098 = vweird.f32 %v3092
    %vm3099 = vmor %vm3097, %vm3098
    %v3100 = vsel %vm3099, %v3092, %v3096
    %v3101 = vand.u32 2147483647, %v3091
    %vm3102 = vcmp.eq.f32.partialorder %v3101, 8.507059e+37
    %v3103 = vand.u32 %v3091, 2147483648
    %v3104 = vor.u32 1.1754944e-38, %v3103
    %v3105 = vsel %vm3102, %v3104, %v3100
    %v3106 = vmul.f32 1.0, %v3105
    %v3107 = vtanh.pop %v3067
    %v3108 = vxor.u32 %v3068, 2147483648
    %v3109 = vmul.f32 %v3108, 1.442695
    %v3110 = vpow.pop %v3109
    %v3111 = vadd.f32 %v3110, 1.0
    %v3112 = vrcp.pop %v3111
    %v3113 = vmul.f32 %v3111, %v3112
    %v3114 = vsub.f32 1.0, %v3113
    %v3115 = vmul.f32 %v3112, %v3114
    %v3116 = vadd.f32 %v3112, %v3115
    %vm3117 = vweird.f32 %v3111
    %vm3118 = vweird.f32 %v3112
    %vm3119 = vmor %vm3117, %vm3118
    %v3120 = vsel %vm3119, %v3112, %v3116
    %v3121 = vand.u32 2147483647, %v3111
    %vm3122 = vcmp.eq.f32.partialorder %v3121, 8.507059e+37
    %v3123 = vand.u32 %v3111, 2147483648
    %v3124 = vor.u32 1.1754944e-38, %v3123
    %v3125 = vsel %vm3122, %v3124, %v3120
    %v3126 = vmul.f32 1.0, %v3125
    %v3127 = vmul.f32 %v3106, %v2697
    %v3128 = vmul.f32 %v3087, %v3107
    %v3129 = vadd.f32 %v3127, %v3128
    %v3130 = vtanh.pop %v3129
    %v3131 = vmul.f32 %v3126, %v3130
    %3132 = vst [vmem:[%s1834] sm:$0xff] %v2920
    %3133 = vst [vmem:[%s1832 + $0x8] sm:$0xff] %v3131
    %v3134 = vld [vmem:[#allocation2 + $0x180] sm:$0xff]
    %v3135 = vld [vmem:[#allocation2 + $0x188] sm:$0xff]
    %v3136 = vld [vmem:[#allocation2 + $0x190] sm:$0xff]
    %v3137 = vld [vmem:[#allocation2 + $0x198] sm:$0xff]
    %v3138 = vld [vmem:[#allocation2 + $0x60] sm:$0xff]
    %v3139 = vld [vmem:[#allocation2 + $0x68] sm:$0xff]
    %v3140 = vld [vmem:[#allocation2 + $0x70] sm:$0xff]
    %v3141 = vld [vmem:[#allocation2 + $0x78] sm:$0xff]
    %v3142 = vld [vmem:[#allocation3] sm:$0xff]
    %v3143 = vld [vmem:[#allocation3 + $0x8] sm:$0xff]
    %v3144 = vld [vmem:[#allocation3 + $0x10] sm:$0xff]
    %v3145 = vld [vmem:[#allocation3 + $0x18] sm:$0xff]
    %v3146 = vld [vmem:[#allocation3 + $0x20] sm:$0xff]
    %v3147 = vld [vmem:[#allocation3 + $0x28] sm:$0xff]
    %v3148 = vld [vmem:[#allocation3 + $0x30] sm:$0xff]
    %v3149 = vld [vmem:[#allocation3 + $0x38] sm:$0xff]
    %v3150 = vld [vmem:[#allocation3 + $0x40] sm:$0xff]
    %v3151 = vld [vmem:[#allocation3 + $0x48] sm:$0xff]
    %v3152 = vld [vmem:[#allocation3 + $0x50] sm:$0xff]
    %v3153 = vld [vmem:[#allocation3 + $0x58] sm:$0xff]
    %v3154 = vld [vmem:[#allocation3 + $0x60] sm:$0xff]
    %v3155 = vld [vmem:[#allocation3 + $0x68] sm:$0xff]
    %v3156 = vld [vmem:[#allocation3 + $0x70] sm:$0xff]
    %v3157 = vld [vmem:[#allocation3 + $0x78] sm:$0xff]
    %v3158 = vld [vmem:[#allocation3 + $0x80] sm:$0xff]
    %v3159 = vld [vmem:[#allocation3 + $0x88] sm:$0xff]
    %v3160 = vld [vmem:[#allocation3 + $0x90] sm:$0xff]
    %v3161 = vld [vmem:[#allocation3 + $0x98] sm:$0xff]
    %v3162 = vld [vmem:[#allocation3 + $0xa0] sm:$0xff]
    %v3163 = vld [vmem:[#allocation3 + $0xa8] sm:$0xff]
    %v3164 = vld [vmem:[#allocation3 + $0xb0] sm:$0xff]
    %v3165 = vld [vmem:[#allocation3 + $0xb8] sm:$0xff]
    %v3166 = vld [vmem:[#allocation3 + $0xc0] sm:$0xff]
    %v3167 = vld [vmem:[#allocation3 + $0xc8] sm:$0xff]
    %v3168 = vld [vmem:[#allocation3 + $0xd0] sm:$0xff]
    %v3169 = vld [vmem:[#allocation3 + $0xd8] sm:$0xff]
    %v3170 = vld [vmem:[#allocation3 + $0xe0] sm:$0xff]
    %v3171 = vld [vmem:[#allocation3 + $0xe8] sm:$0xff]
    %v3172 = vld [vmem:[#allocation3 + $0xf0] sm:$0xff]
    %v3173 = vld [vmem:[#allocation3 + $0xf8] sm:$0xff]
    %v3174 = vld [vmem:[#allocation3 + $0x100] sm:$0xff]
    %v3175 = vld [vmem:[#allocation3 + $0x108] sm:$0xff]
    %v3176 = vld [vmem:[#allocation3 + $0x110] sm:$0xff]
    %v3177 = vld [vmem:[#allocation3 + $0x118] sm:$0xff]
    %v3178 = vld [vmem:[#allocation3 + $0x120] sm:$0xff]
    %v3179 = vld [vmem:[#allocation3 + $0x128] sm:$0xff]
    %v3180 = vld [vmem:[#allocation3 + $0x130] sm:$0xff]
    %v3181 = vld [vmem:[#allocation3 + $0x138] sm:$0xff]
    %v3182 = vld [vmem:[#allocation3 + $0x140] sm:$0xff]
    %v3183 = vld [vmem:[#allocation3 + $0x148] sm:$0xff]
    %v3184 = vld [vmem:[#allocation3 + $0x150] sm:$0xff]
    %v3185 = vld [vmem:[#allocation3 + $0x158] sm:$0xff]
    %v3186 = vld [vmem:[#allocation3 + $0x160] sm:$0xff]
    %v3187 = vld [vmem:[#allocation3 + $0x168] sm:$0xff]
    %v3188 = vld [vmem:[#allocation3 + $0x170] sm:$0xff]
    %v3189 = vld [vmem:[#allocation3 + $0x178] sm:$0xff]
    %v3190 = vld [vmem:[#allocation3 + $0x180] sm:$0xff]
    %v3191 = vld [vmem:[#allocation3 + $0x188] sm:$0xff]
    %v3192 = vld [vmem:[#allocation3 + $0x190] sm:$0xff]
    %v3193 = vld [vmem:[#allocation3 + $0x198] sm:$0xff]
    %v3194 = vld [vmem:[#allocation3 + $0x1a0] sm:$0xff]
    %v3195 = vld [vmem:[#allocation3 + $0x1a8] sm:$0xff]
    %v3196 = vld [vmem:[#allocation3 + $0x1b0] sm:$0xff]
    %v3197 = vld [vmem:[#allocation3 + $0x1b8] sm:$0xff]
    %v3198 = vld [vmem:[#allocation3 + $0x1c0] sm:$0xff]
    %v3199 = vld [vmem:[#allocation3 + $0x1c8] sm:$0xff]
    %v3200 = vld [vmem:[#allocation3 + $0x1d0] sm:$0xff]
    %v3201 = vld [vmem:[#allocation3 + $0x1d8] sm:$0xff]
    %v3202 = vld [vmem:[#allocation3 + $0x1e0] sm:$0xff]
    %v3203 = vld [vmem:[#allocation3 + $0x1e8] sm:$0xff]
    %v3204 = vld [vmem:[#allocation3 + $0x1f0] sm:$0xff]
    %v3205 = vld [vmem:[#allocation3 + $0x1f8] sm:$0xff]
    %3206 = vmatpush.msra.mxu0 %v3202
    %3207 = vmatpush.msra.mxu0 %v3198
    %3208 = vmatpush.msra.mxu0 %v3194
    %3209 = vmatpush.msra.mxu0 %v3190
    %3210 = vmatpush.msra.mxu0 %v3186
    %3211 = vmatpush.msra.mxu0 %v3182
    %3212 = vmatpush.msra.mxu0 %v3178
    %3213 = vmatpush.msra.mxu0 %v3174
    %3214 = vmatpush.msra.mxu0 %v3170
    %3215 = vmatpush.msra.mxu0 %v3166
    %3216 = vmatpush.msra.mxu0 %v3162
    %3217 = vmatpush.msra.mxu0 %v3158
    %3218 = vmatpush.msra.mxu0 %v3154
    %3219 = vmatpush.msra.mxu0 %v3150
    %3220 = vmatpush.msra.mxu0 %v3146
    %3221 = vmatpush.msra.mxu0 %v3142
    %3222 = vmatmul.f32.gmra.mxu0 %v2920
    %v3223 = vpop.f32.mrf.mxu0
    %v3224 = vadd.f32 0.0, %v3223
    %3225 = vdwg.mxu0
    %3226 = vmatpush.msra.mxu0 %v3203
    %3227 = vmatpush.msra.mxu0 %v3199
    %3228 = vmatpush.msra.mxu0 %v3195
    %3229 = vmatpush.msra.mxu0 %v3191
    %3230 = vmatpush.msra.mxu0 %v3187
    %3231 = vmatpush.msra.mxu0 %v3183
    %3232 = vmatpush.msra.mxu0 %v3179
    %3233 = vmatpush.msra.mxu0 %v3175
    %3234 = vmatpush.msra.mxu0 %v3171
    %3235 = vmatpush.msra.mxu0 %v3167
    %3236 = vmatpush.msra.mxu0 %v3163
    %3237 = vmatpush.msra.mxu0 %v3159
    %3238 = vmatpush.msra.mxu0 %v3155
    %3239 = vmatpush.msra.mxu0 %v3151
    %3240 = vmatpush.msra.mxu0 %v3147
    %3241 = vmatpush.msra.mxu0 %v3143
    %3242 = vmatmul.f32.gmra.mxu0 %v2920
    %v3243 = vpop.f32.mrf.mxu0
    %v3244 = vadd.f32 0.0, %v3243
    %3245 = vdwg.mxu0
    %3246 = vmatpush.msra.mxu0 %v3204
    %3247 = vmatpush.msra.mxu0 %v3200
    %3248 = vmatpush.msra.mxu0 %v3196
    %3249 = vmatpush.msra.mxu0 %v3192
    %3250 = vmatpush.msra.mxu0 %v3188
    %3251 = vmatpush.msra.mxu0 %v3184
    %3252 = vmatpush.msra.mxu0 %v3180
    %3253 = vmatpush.msra.mxu0 %v3176
    %3254 = vmatpush.msra.mxu0 %v3172
    %3255 = vmatpush.msra.mxu0 %v3168
    %3256 = vmatpush.msra.mxu0 %v3164
    %3257 = vmatpush.msra.mxu0 %v3160
    %3258 = vmatpush.msra.mxu0 %v3156
    %3259 = vmatpush.msra.mxu0 %v3152
    %3260 = vmatpush.msra.mxu0 %v3148
    %3261 = vmatpush.msra.mxu0 %v3144
    %3262 = vmatmul.f32.gmra.mxu0 %v2920
    %v3263 = vpop.f32.mrf.mxu0
    %v3264 = vadd.f32 0.0, %v3263
    %3265 = vdwg.mxu0
    %3266 = vmatpush.msra.mxu0 %v3205
    %3267 = vmatpush.msra.mxu0 %v3201
    %3268 = vmatpush.msra.mxu0 %v3197
    %3269 = vmatpush.msra.mxu0 %v3193
    %3270 = vmatpush.msra.mxu0 %v3189
    %3271 = vmatpush.msra.mxu0 %v3185
    %3272 = vmatpush.msra.mxu0 %v3181
    %3273 = vmatpush.msra.mxu0 %v3177
    %3274 = vmatpush.msra.mxu0 %v3173
    %3275 = vmatpush.msra.mxu0 %v3169
    %3276 = vmatpush.msra.mxu0 %v3165
    %3277 = vmatpush.msra.mxu0 %v3161
    %3278 = vmatpush.msra.mxu0 %v3157
    %3279 = vmatpush.msra.mxu0 %v3153
    %3280 = vmatpush.msra.mxu0 %v3149
    %3281 = vmatpush.msra.mxu0 %v3145
    %3282 = vmatmul.f32.gmra.mxu0 %v2920
    %v3283 = vpop.f32.mrf.mxu0
    %v3284 = vadd.f32 0.0, %v3283
    %3285 = vdwg.mxu0
    %v3286 = vadd.f32 %v3134, %v3224
    %v3287 = vadd.f32 %v3135, %v3244
    %v3288 = vadd.f32 %v3136, %v3264
    %v3289 = vadd.f32 %v3137, %v3284
    %v3290 = vxor.u32 %v3286, 2147483648
    %v3291 = vmul.f32 %v3290, 1.442695
    %v3292 = vpow.pop %v3291
    %v3293 = vadd.f32 %v3292, 1.0
    %v3294 = vrcp.pop %v3293
    %v3295 = vmul.f32 %v3293, %v3294
    %v3296 = vsub.f32 1.0, %v3295
    %v3297 = vmul.f32 %v3294, %v3296
    %v3298 = vadd.f32 %v3294, %v3297
    %vm3299 = vweird.f32 %v3293
    %vm3300 = vweird.f32 %v3294
    %vm3301 = vmor %vm3299, %vm3300
    %v3302 = vsel %vm3301, %v3294, %v3298
    %v3303 = vand.u32 2147483647, %v3293
    %vm3304 = vcmp.eq.f32.partialorder %v3303, 8.507059e+37
    %v3305 = vand.u32 %v3293, 2147483648
    %v3306 = vor.u32 1.1754944e-38, %v3305
    %v3307 = vsel %vm3304, %v3306, %v3302
    %v3308 = vmul.f32 1.0, %v3307
    %v3309 = vxor.u32 %v3287, 2147483648
    %v3310 = vmul.f32 %v3309, 1.442695
    %v3311 = vpow.pop %v3310
    %v3312 = vadd.f32 %v3311, 1.0
    %v3313 = vrcp.pop %v3312
    %v3314 = vmul.f32 %v3312, %v3313
    %v3315 = vsub.f32 1.0, %v3314
    %v3316 = vmul.f32 %v3313, %v3315
    %v3317 = vadd.f32 %v3313, %v3316
    %vm3318 = vweird.f32 %v3312
    %vm3319 = vweird.f32 %v3313
    %vm3320 = vmor %vm3318, %vm3319
    %v3321 = vsel %vm3320, %v3313, %v3317
    %v3322 = vand.u32 2147483647, %v3312
    %vm3323 = vcmp.eq.f32.partialorder %v3322, 8.507059e+37
    %v3324 = vand.u32 %v3312, 2147483648
    %v3325 = vor.u32 1.1754944e-38, %v3324
    %v3326 = vsel %vm3323, %v3325, %v3321
    %v3327 = vmul.f32 1.0, %v3326
    %v3328 = vtanh.pop %v3288
    %v3329 = vxor.u32 %v3289, 2147483648
    %v3330 = vmul.f32 %v3329, 1.442695
    %v3331 = vpow.pop %v3330
    %v3332 = vadd.f32 %v3331, 1.0
    %v3333 = vrcp.pop %v3332
    %v3334 = vmul.f32 %v3332, %v3333
    %v3335 = vsub.f32 1.0, %v3334
    %v3336 = vmul.f32 %v3333, %v3335
    %v3337 = vadd.f32 %v3333, %v3336
    %vm3338 = vweird.f32 %v3332
    %vm3339 = vweird.f32 %v3333
    %vm3340 = vmor %vm3338, %vm3339
    %v3341 = vsel %vm3340, %v3333, %v3337
    %v3342 = vand.u32 2147483647, %v3332
    %vm3343 = vcmp.eq.f32.partialorder %v3342, 8.507059e+37
    %v3344 = vand.u32 %v3332, 2147483648
    %v3345 = vor.u32 1.1754944e-38, %v3344
    %v3346 = vsel %vm3343, %v3345, %v3341
    %v3347 = vmul.f32 1.0, %v3346
    %v3348 = vmul.f32 %v3327, %v2918
    %v3349 = vmul.f32 %v3308, %v3328
    %v3350 = vadd.f32 %v3348, %v3349
    %v3351 = vtanh.pop %v3350
    %v3352 = vmul.f32 %v3347, %v3351
    %v3353 = vld [vmem:[#allocation5] sm:$0xff]
    %v3354 = vld [vmem:[#allocation5 + $0x8] sm:$0xff]
    %v3355 = vld [vmem:[#allocation5 + $0x10] sm:$0xff]
    %v3356 = vld [vmem:[#allocation5 + $0x18] sm:$0xff]
    %v3357 = vld [vmem:[#allocation5 + $0x20] sm:$0xff]
    %v3358 = vld [vmem:[#allocation5 + $0x28] sm:$0xff]
    %v3359 = vld [vmem:[#allocation5 + $0x30] sm:$0xff]
    %v3360 = vld [vmem:[#allocation5 + $0x38] sm:$0xff]
    %v3361 = vld [vmem:[#allocation5 + $0x40] sm:$0xff]
    %v3362 = vld [vmem:[#allocation5 + $0x48] sm:$0xff]
    %v3363 = vld [vmem:[#allocation5 + $0x50] sm:$0xff]
    %v3364 = vld [vmem:[#allocation5 + $0x58] sm:$0xff]
    %v3365 = vld [vmem:[#allocation5 + $0x60] sm:$0xff]
    %v3366 = vld [vmem:[#allocation5 + $0x68] sm:$0xff]
    %v3367 = vld [vmem:[#allocation5 + $0x70] sm:$0xff]
    %v3368 = vld [vmem:[#allocation5 + $0x78] sm:$0xff]
    %v3369 = vld [vmem:[#allocation5 + $0x80] sm:$0xff]
    %v3370 = vld [vmem:[#allocation5 + $0x88] sm:$0xff]
    %v3371 = vld [vmem:[#allocation5 + $0x90] sm:$0xff]
    %v3372 = vld [vmem:[#allocation5 + $0x98] sm:$0xff]
    %v3373 = vld [vmem:[#allocation5 + $0xa0] sm:$0xff]
    %v3374 = vld [vmem:[#allocation5 + $0xa8] sm:$0xff]
    %v3375 = vld [vmem:[#allocation5 + $0xb0] sm:$0xff]
    %v3376 = vld [vmem:[#allocation5 + $0xb8] sm:$0xff]
    %v3377 = vld [vmem:[#allocation5 + $0xc0] sm:$0xff]
    %v3378 = vld [vmem:[#allocation5 + $0xc8] sm:$0xff]
    %v3379 = vld [vmem:[#allocation5 + $0xd0] sm:$0xff]
    %v3380 = vld [vmem:[#allocation5 + $0xd8] sm:$0xff]
    %v3381 = vld [vmem:[#allocation5 + $0xe0] sm:$0xff]
    %v3382 = vld [vmem:[#allocation5 + $0xe8] sm:$0xff]
    %v3383 = vld [vmem:[#allocation5 + $0xf0] sm:$0xff]
    %v3384 = vld [vmem:[#allocation5 + $0xf8] sm:$0xff]
    %v3385 = vld [vmem:[#allocation5 + $0x100] sm:$0xff]
    %v3386 = vld [vmem:[#allocation5 + $0x108] sm:$0xff]
    %v3387 = vld [vmem:[#allocation5 + $0x110] sm:$0xff]
    %v3388 = vld [vmem:[#allocation5 + $0x118] sm:$0xff]
    %v3389 = vld [vmem:[#allocation5 + $0x120] sm:$0xff]
    %v3390 = vld [vmem:[#allocation5 + $0x128] sm:$0xff]
    %v3391 = vld [vmem:[#allocation5 + $0x130] sm:$0xff]
    %v3392 = vld [vmem:[#allocation5 + $0x138] sm:$0xff]
    %v3393 = vld [vmem:[#allocation5 + $0x140] sm:$0xff]
    %v3394 = vld [vmem:[#allocation5 + $0x148] sm:$0xff]
    %v3395 = vld [vmem:[#allocation5 + $0x150] sm:$0xff]
    %v3396 = vld [vmem:[#allocation5 + $0x158] sm:$0xff]
    %v3397 = vld [vmem:[#allocation5 + $0x160] sm:$0xff]
    %v3398 = vld [vmem:[#allocation5 + $0x168] sm:$0xff]
    %v3399 = vld [vmem:[#allocation5 + $0x170] sm:$0xff]
    %v3400 = vld [vmem:[#allocation5 + $0x178] sm:$0xff]
    %v3401 = vld [vmem:[#allocation5 + $0x180] sm:$0xff]
    %v3402 = vld [vmem:[#allocation5 + $0x188] sm:$0xff]
    %v3403 = vld [vmem:[#allocation5 + $0x190] sm:$0xff]
    %v3404 = vld [vmem:[#allocation5 + $0x198] sm:$0xff]
    %v3405 = vld [vmem:[#allocation5 + $0x1a0] sm:$0xff]
    %v3406 = vld [vmem:[#allocation5 + $0x1a8] sm:$0xff]
    %v3407 = vld [vmem:[#allocation5 + $0x1b0] sm:$0xff]
    %v3408 = vld [vmem:[#allocation5 + $0x1b8] sm:$0xff]
    %v3409 = vld [vmem:[#allocation5 + $0x1c0] sm:$0xff]
    %v3410 = vld [vmem:[#allocation5 + $0x1c8] sm:$0xff]
    %v3411 = vld [vmem:[#allocation5 + $0x1d0] sm:$0xff]
    %v3412 = vld [vmem:[#allocation5 + $0x1d8] sm:$0xff]
    %v3413 = vld [vmem:[#allocation5 + $0x1e0] sm:$0xff]
    %v3414 = vld [vmem:[#allocation5 + $0x1e8] sm:$0xff]
    %v3415 = vld [vmem:[#allocation5 + $0x1f0] sm:$0xff]
    %v3416 = vld [vmem:[#allocation5 + $0x1f8] sm:$0xff]
    %3417 = vmatpush.msra.mxu0 %v3413
    %3418 = vmatpush.msra.mxu0 %v3409
    %3419 = vmatpush.msra.mxu0 %v3405
    %3420 = vmatpush.msra.mxu0 %v3401
    %3421 = vmatpush.msra.mxu0 %v3397
    %3422 = vmatpush.msra.mxu0 %v3393
    %3423 = vmatpush.msra.mxu0 %v3389
    %3424 = vmatpush.msra.mxu0 %v3385
    %3425 = vmatpush.msra.mxu0 %v3381
    %3426 = vmatpush.msra.mxu0 %v3377
    %3427 = vmatpush.msra.mxu0 %v3373
    %3428 = vmatpush.msra.mxu0 %v3369
    %3429 = vmatpush.msra.mxu0 %v3365
    %3430 = vmatpush.msra.mxu0 %v3361
    %3431 = vmatpush.msra.mxu0 %v3357
    %3432 = vmatpush.msra.mxu0 %v3353
    %3433 = vmatmul.f32.gmra.mxu0 %v3131
    %v3434 = vpop.f32.mrf.mxu0
    %v3435 = vadd.f32 0.0, %v3434
    %3436 = vdwg.mxu0
    %3437 = vmatpush.msra.mxu0 %v3414
    %3438 = vmatpush.msra.mxu0 %v3410
    %3439 = vmatpush.msra.mxu0 %v3406
    %3440 = vmatpush.msra.mxu0 %v3402
    %3441 = vmatpush.msra.mxu0 %v3398
    %3442 = vmatpush.msra.mxu0 %v3394
    %3443 = vmatpush.msra.mxu0 %v3390
    %3444 = vmatpush.msra.mxu0 %v3386
    %3445 = vmatpush.msra.mxu0 %v3382
    %3446 = vmatpush.msra.mxu0 %v3378
    %3447 = vmatpush.msra.mxu0 %v3374
    %3448 = vmatpush.msra.mxu0 %v3370
    %3449 = vmatpush.msra.mxu0 %v3366
    %3450 = vmatpush.msra.mxu0 %v3362
    %3451 = vmatpush.msra.mxu0 %v3358
    %3452 = vmatpush.msra.mxu0 %v3354
    %3453 = vmatmul.f32.gmra.mxu0 %v3131
    %v3454 = vpop.f32.mrf.mxu0
    %v3455 = vadd.f32 0.0, %v3454
    %3456 = vdwg.mxu0
    %3457 = vmatpush.msra.mxu0 %v3415
    %3458 = vmatpush.msra.mxu0 %v3411
    %3459 = vmatpush.msra.mxu0 %v3407
    %3460 = vmatpush.msra.mxu0 %v3403
    %3461 = vmatpush.msra.mxu0 %v3399
    %3462 = vmatpush.msra.mxu0 %v3395
    %3463 = vmatpush.msra.mxu0 %v3391
    %3464 = vmatpush.msra.mxu0 %v3387
    %3465 = vmatpush.msra.mxu0 %v3383
    %3466 = vmatpush.msra.mxu0 %v3379
    %3467 = vmatpush.msra.mxu0 %v3375
    %3468 = vmatpush.msra.mxu0 %v3371
    %3469 = vmatpush.msra.mxu0 %v3367
    %3470 = vmatpush.msra.mxu0 %v3363
    %3471 = vmatpush.msra.mxu0 %v3359
    %3472 = vmatpush.msra.mxu0 %v3355
    %3473 = vmatmul.f32.gmra.mxu0 %v3131
    %v3474 = vpop.f32.mrf.mxu0
    %v3475 = vadd.f32 0.0, %v3474
    %3476 = vdwg.mxu0
    %3477 = vmatpush.msra.mxu0 %v3416
    %3478 = vmatpush.msra.mxu0 %v3412
    %3479 = vmatpush.msra.mxu0 %v3408
    %3480 = vmatpush.msra.mxu0 %v3404
    %3481 = vmatpush.msra.mxu0 %v3400
    %3482 = vmatpush.msra.mxu0 %v3396
    %3483 = vmatpush.msra.mxu0 %v3392
    %3484 = vmatpush.msra.mxu0 %v3388
    %3485 = vmatpush.msra.mxu0 %v3384
    %3486 = vmatpush.msra.mxu0 %v3380
    %3487 = vmatpush.msra.mxu0 %v3376
    %3488 = vmatpush.msra.mxu0 %v3372
    %3489 = vmatpush.msra.mxu0 %v3368
    %3490 = vmatpush.msra.mxu0 %v3364
    %3491 = vmatpush.msra.mxu0 %v3360
    %3492 = vmatpush.msra.mxu0 %v3356
    %3493 = vmatmul.f32.gmra.mxu0 %v3131
    %v3494 = vpop.f32.mrf.mxu0
    %v3495 = vadd.f32 0.0, %v3494
    %3496 = vdwg.mxu0
    %v3497 = vadd.f32 %v3138, %v3435
    %v3498 = vadd.f32 %v3139, %v3455
    %v3499 = vadd.f32 %v3140, %v3475
    %v3500 = vadd.f32 %v3141, %v3495
    %v3501 = vxor.u32 %v3497, 2147483648
    %v3502 = vmul.f32 %v3501, 1.442695
    %v3503 = vpow.pop %v3502
    %v3504 = vadd.f32 %v3503, 1.0
    %v3505 = vrcp.pop %v3504
    %v3506 = vmul.f32 %v3504, %v3505
    %v3507 = vsub.f32 1.0, %v3506
    %v3508 = vmul.f32 %v3505, %v3507
    %v3509 = vadd.f32 %v3505, %v3508
    %vm3510 = vweird.f32 %v3504
    %vm3511 = vweird.f32 %v3505
    %vm3512 = vmor %vm3510, %vm3511
    %v3513 = vsel %vm3512, %v3505, %v3509
    %v3514 = vand.u32 2147483647, %v3504
    %vm3515 = vcmp.eq.f32.partialorder %v3514, 8.507059e+37
    %v3516 = vand.u32 %v3504, 2147483648
    %v3517 = vor.u32 1.1754944e-38, %v3516
    %v3518 = vsel %vm3515, %v3517, %v3513
    %v3519 = vmul.f32 1.0, %v3518
    %v3520 = vxor.u32 %v3498, 2147483648
    %v3521 = vmul.f32 %v3520, 1.442695
    %v3522 = vpow.pop %v3521
    %v3523 = vadd.f32 %v3522, 1.0
    %v3524 = vrcp.pop %v3523
    %v3525 = vmul.f32 %v3523, %v3524
    %v3526 = vsub.f32 1.0, %v3525
    %v3527 = vmul.f32 %v3524, %v3526
    %v3528 = vadd.f32 %v3524, %v3527
    %vm3529 = vweird.f32 %v3523
    %vm3530 = vweird.f32 %v3524
    %vm3531 = vmor %vm3529, %vm3530
    %v3532 = vsel %vm3531, %v3524, %v3528
    %v3533 = vand.u32 2147483647, %v3523
    %vm3534 = vcmp.eq.f32.partialorder %v3533, 8.507059e+37
    %v3535 = vand.u32 %v3523, 2147483648
    %v3536 = vor.u32 1.1754944e-38, %v3535
    %v3537 = vsel %vm3534, %v3536, %v3532
    %v3538 = vmul.f32 1.0, %v3537
    %v3539 = vtanh.pop %v3499
    %v3540 = vxor.u32 %v3500, 2147483648
    %v3541 = vmul.f32 %v3540, 1.442695
    %v3542 = vpow.pop %v3541
    %v3543 = vadd.f32 %v3542, 1.0
    %v3544 = vrcp.pop %v3543
    %v3545 = vmul.f32 %v3543, %v3544
    %v3546 = vsub.f32 1.0, %v3545
    %v3547 = vmul.f32 %v3544, %v3546
    %v3548 = vadd.f32 %v3544, %v3547
    %vm3549 = vweird.f32 %v3543
    %vm3550 = vweird.f32 %v3544
    %vm3551 = vmor %vm3549, %vm3550
    %v3552 = vsel %vm3551, %v3544, %v3548
    %v3553 = vand.u32 2147483647, %v3543
    %vm3554 = vcmp.eq.f32.partialorder %v3553, 8.507059e+37
    %v3555 = vand.u32 %v3543, 2147483648
    %v3556 = vor.u32 1.1754944e-38, %v3555
    %v3557 = vsel %vm3554, %v3556, %v3552
    %v3558 = vmul.f32 1.0, %v3557
    %v3559 = vmul.f32 %v3538, %v3129
    %v3560 = vmul.f32 %v3519, %v3539
    %v3561 = vadd.f32 %v3559, %v3560
    %v3562 = vtanh.pop %v3561
    %v3563 = vmul.f32 %v3558, %v3562
    %3564 = vst [vmem:[%s1400] sm:$0xff] %v3352
    %3565 = vst [vmem:[%s1398 + $0x8] sm:$0xff] %v3563
    %v3566 = vld [vmem:[#allocation2 + $0x1c0] sm:$0xff]
    %v3567 = vld [vmem:[#allocation2 + $0x1c8] sm:$0xff]
    %v3568 = vld [vmem:[#allocation2 + $0x1d0] sm:$0xff]
    %v3569 = vld [vmem:[#allocation2 + $0x1d8] sm:$0xff]
    %v3570 = vld [vmem:[#allocation2 + $0x20] sm:$0xff]
    %v3571 = vld [vmem:[#allocation2 + $0x28] sm:$0xff]
    %v3572 = vld [vmem:[#allocation2 + $0x30] sm:$0xff]
    %v3573 = vld [vmem:[#allocation2 + $0x38] sm:$0xff]
    %v3574 = vld [vmem:[#allocation3] sm:$0xff]
    %v3575 = vld [vmem:[#allocation3 + $0x8] sm:$0xff]
    %v3576 = vld [vmem:[#allocation3 + $0x10] sm:$0xff]
    %v3577 = vld [vmem:[#allocation3 + $0x18] sm:$0xff]
    %v3578 = vld [vmem:[#allocation3 + $0x20] sm:$0xff]
    %v3579 = vld [vmem:[#allocation3 + $0x28] sm:$0xff]
    %v3580 = vld [vmem:[#allocation3 + $0x30] sm:$0xff]
    %v3581 = vld [vmem:[#allocation3 + $0x38] sm:$0xff]
    %v3582 = vld [vmem:[#allocation3 + $0x40] sm:$0xff]
    %v3583 = vld [vmem:[#allocation3 + $0x48] sm:$0xff]
    %v3584 = vld [vmem:[#allocation3 + $0x50] sm:$0xff]
    %v3585 = vld [vmem:[#allocation3 + $0x58] sm:$0xff]
    %v3586 = vld [vmem:[#allocation3 + $0x60] sm:$0xff]
    %v3587 = vld [vmem:[#allocation3 + $0x68] sm:$0xff]
    %v3588 = vld [vmem:[#allocation3 + $0x70] sm:$0xff]
    %v3589 = vld [vmem:[#allocation3 + $0x78] sm:$0xff]
    %v3590 = vld [vmem:[#allocation3 + $0x80] sm:$0xff]
    %v3591 = vld [vmem:[#allocation3 + $0x88] sm:$0xff]
    %v3592 = vld [vmem:[#allocation3 + $0x90] sm:$0xff]
    %v3593 = vld [vmem:[#allocation3 + $0x98] sm:$0xff]
    %v3594 = vld [vmem:[#allocation3 + $0xa0] sm:$0xff]
    %v3595 = vld [vmem:[#allocation3 + $0xa8] sm:$0xff]
    %v3596 = vld [vmem:[#allocation3 + $0xb0] sm:$0xff]
    %v3597 = vld [vmem:[#allocation3 + $0xb8] sm:$0xff]
    %v3598 = vld [vmem:[#allocation3 + $0xc0] sm:$0xff]
    %v3599 = vld [vmem:[#allocation3 + $0xc8] sm:$0xff]
    %v3600 = vld [vmem:[#allocation3 + $0xd0] sm:$0xff]
    %v3601 = vld [vmem:[#allocation3 + $0xd8] sm:$0xff]
    %v3602 = vld [vmem:[#allocation3 + $0xe0] sm:$0xff]
    %v3603 = vld [vmem:[#allocation3 + $0xe8] sm:$0xff]
    %v3604 = vld [vmem:[#allocation3 + $0xf0] sm:$0xff]
    %v3605 = vld [vmem:[#allocation3 + $0xf8] sm:$0xff]
    %v3606 = vld [vmem:[#allocation3 + $0x100] sm:$0xff]
    %v3607 = vld [vmem:[#allocation3 + $0x108] sm:$0xff]
    %v3608 = vld [vmem:[#allocation3 + $0x110] sm:$0xff]
    %v3609 = vld [vmem:[#allocation3 + $0x118] sm:$0xff]
    %v3610 = vld [vmem:[#allocation3 + $0x120] sm:$0xff]
    %v3611 = vld [vmem:[#allocation3 + $0x128] sm:$0xff]
    %v3612 = vld [vmem:[#allocation3 + $0x130] sm:$0xff]
    %v3613 = vld [vmem:[#allocation3 + $0x138] sm:$0xff]
    %v3614 = vld [vmem:[#allocation3 + $0x140] sm:$0xff]
    %v3615 = vld [vmem:[#allocation3 + $0x148] sm:$0xff]
    %v3616 = vld [vmem:[#allocation3 + $0x150] sm:$0xff]
    %v3617 = vld [vmem:[#allocation3 + $0x158] sm:$0xff]
    %v3618 = vld [vmem:[#allocation3 + $0x160] sm:$0xff]
    %v3619 = vld [vmem:[#allocation3 + $0x168] sm:$0xff]
    %v3620 = vld [vmem:[#allocation3 + $0x170] sm:$0xff]
    %v3621 = vld [vmem:[#allocation3 + $0x178] sm:$0xff]
    %v3622 = vld [vmem:[#allocation3 + $0x180] sm:$0xff]
    %v3623 = vld [vmem:[#allocation3 + $0x188] sm:$0xff]
    %v3624 = vld [vmem:[#allocation3 + $0x190] sm:$0xff]
    %v3625 = vld [vmem:[#allocation3 + $0x198] sm:$0xff]
    %v3626 = vld [vmem:[#allocation3 + $0x1a0] sm:$0xff]
    %v3627 = vld [vmem:[#allocation3 + $0x1a8] sm:$0xff]
    %v3628 = vld [vmem:[#allocation3 + $0x1b0] sm:$0xff]
    %v3629 = vld [vmem:[#allocation3 + $0x1b8] sm:$0xff]
    %v3630 = vld [vmem:[#allocation3 + $0x1c0] sm:$0xff]
    %v3631 = vld [vmem:[#allocation3 + $0x1c8] sm:$0xff]
    %v3632 = vld [vmem:[#allocation3 + $0x1d0] sm:$0xff]
    %v3633 = vld [vmem:[#allocation3 + $0x1d8] sm:$0xff]
    %v3634 = vld [vmem:[#allocation3 + $0x1e0] sm:$0xff]
    %v3635 = vld [vmem:[#allocation3 + $0x1e8] sm:$0xff]
    %v3636 = vld [vmem:[#allocation3 + $0x1f0] sm:$0xff]
    %v3637 = vld [vmem:[#allocation3 + $0x1f8] sm:$0xff]
    %3638 = vmatpush.msra.mxu0 %v3634
    %3639 = vmatpush.msra.mxu0 %v3630
    %3640 = vmatpush.msra.mxu0 %v3626
    %3641 = vmatpush.msra.mxu0 %v3622
    %3642 = vmatpush.msra.mxu0 %v3618
    %3643 = vmatpush.msra.mxu0 %v3614
    %3644 = vmatpush.msra.mxu0 %v3610
    %3645 = vmatpush.msra.mxu0 %v3606
    %3646 = vmatpush.msra.mxu0 %v3602
    %3647 = vmatpush.msra.mxu0 %v3598
    %3648 = vmatpush.msra.mxu0 %v3594
    %3649 = vmatpush.msra.mxu0 %v3590
    %3650 = vmatpush.msra.mxu0 %v3586
    %3651 = vmatpush.msra.mxu0 %v3582
    %3652 = vmatpush.msra.mxu0 %v3578
    %3653 = vmatpush.msra.mxu0 %v3574
    %3654 = vmatmul.f32.gmra.mxu0 %v3352
    %v3655 = vpop.f32.mrf.mxu0
    %v3656 = vadd.f32 0.0, %v3655
    %3657 = vdwg.mxu0
    %3658 = vmatpush.msra.mxu0 %v3635
    %3659 = vmatpush.msra.mxu0 %v3631
    %3660 = vmatpush.msra.mxu0 %v3627
    %3661 = vmatpush.msra.mxu0 %v3623
    %3662 = vmatpush.msra.mxu0 %v3619
    %3663 = vmatpush.msra.mxu0 %v3615
    %3664 = vmatpush.msra.mxu0 %v3611
    %3665 = vmatpush.msra.mxu0 %v3607
    %3666 = vmatpush.msra.mxu0 %v3603
    %3667 = vmatpush.msra.mxu0 %v3599
    %3668 = vmatpush.msra.mxu0 %v3595
    %3669 = vmatpush.msra.mxu0 %v3591
    %3670 = vmatpush.msra.mxu0 %v3587
    %3671 = vmatpush.msra.mxu0 %v3583
    %3672 = vmatpush.msra.mxu0 %v3579
    %3673 = vmatpush.msra.mxu0 %v3575
    %3674 = vmatmul.f32.gmra.mxu0 %v3352
    %v3675 = vpop.f32.mrf.mxu0
    %v3676 = vadd.f32 0.0, %v3675
    %3677 = vdwg.mxu0
    %3678 = vmatpush.msra.mxu0 %v3636
    %3679 = vmatpush.msra.mxu0 %v3632
    %3680 = vmatpush.msra.mxu0 %v3628
    %3681 = vmatpush.msra.mxu0 %v3624
    %3682 = vmatpush.msra.mxu0 %v3620
    %3683 = vmatpush.msra.mxu0 %v3616
    %3684 = vmatpush.msra.mxu0 %v3612
    %3685 = vmatpush.msra.mxu0 %v3608
    %3686 = vmatpush.msra.mxu0 %v3604
    %3687 = vmatpush.msra.mxu0 %v3600
    %3688 = vmatpush.msra.mxu0 %v3596
    %3689 = vmatpush.msra.mxu0 %v3592
    %3690 = vmatpush.msra.mxu0 %v3588
    %3691 = vmatpush.msra.mxu0 %v3584
    %3692 = vmatpush.msra.mxu0 %v3580
    %3693 = vmatpush.msra.mxu0 %v3576
    %3694 = vmatmul.f32.gmra.mxu0 %v3352
    %v3695 = vpop.f32.mrf.mxu0
    %v3696 = vadd.f32 0.0, %v3695
    %3697 = vdwg.mxu0
    %3698 = vmatpush.msra.mxu0 %v3637
    %3699 = vmatpush.msra.mxu0 %v3633
    %3700 = vmatpush.msra.mxu0 %v3629
    %3701 = vmatpush.msra.mxu0 %v3625
    %3702 = vmatpush.msra.mxu0 %v3621
    %3703 = vmatpush.msra.mxu0 %v3617
    %3704 = vmatpush.msra.mxu0 %v3613
    %3705 = vmatpush.msra.mxu0 %v3609
    %3706 = vmatpush.msra.mxu0 %v3605
    %3707 = vmatpush.msra.mxu0 %v3601
    %3708 = vmatpush.msra.mxu0 %v3597
    %3709 = vmatpush.msra.mxu0 %v3593
    %3710 = vmatpush.msra.mxu0 %v3589
    %3711 = vmatpush.msra.mxu0 %v3585
    %3712 = vmatpush.msra.mxu0 %v3581
    %3713 = vmatpush.msra.mxu0 %v3577
    %3714 = vmatmul.f32.gmra.mxu0 %v3352
    %v3715 = vpop.f32.mrf.mxu0
    %v3716 = vadd.f32 0.0, %v3715
    %3717 = vdwg.mxu0
    %v3718 = vadd.f32 %v3566, %v3656
    %v3719 = vadd.f32 %v3567, %v3676
    %v3720 = vadd.f32 %v3568, %v3696
    %v3721 = vadd.f32 %v3569, %v3716
    %v3722 = vxor.u32 %v3718, 2147483648
    %v3723 = vmul.f32 %v3722, 1.442695
    %v3724 = vpow.pop %v3723
    %v3725 = vadd.f32 %v3724, 1.0
    %v3726 = vrcp.pop %v3725
    %v3727 = vmul.f32 %v3725, %v3726
    %v3728 = vsub.f32 1.0, %v3727
    %v3729 = vmul.f32 %v3726, %v3728
    %v3730 = vadd.f32 %v3726, %v3729
    %vm3731 = vweird.f32 %v3725
    %vm3732 = vweird.f32 %v3726
    %vm3733 = vmor %vm3731, %vm3732
    %v3734 = vsel %vm3733, %v3726, %v3730
    %v3735 = vand.u32 2147483647, %v3725
    %vm3736 = vcmp.eq.f32.partialorder %v3735, 8.507059e+37
    %v3737 = vand.u32 %v3725, 2147483648
    %v3738 = vor.u32 1.1754944e-38, %v3737
    %v3739 = vsel %vm3736, %v3738, %v3734
    %v3740 = vmul.f32 1.0, %v3739
    %v3741 = vxor.u32 %v3719, 2147483648
    %v3742 = vmul.f32 %v3741, 1.442695
    %v3743 = vpow.pop %v3742
    %v3744 = vadd.f32 %v3743, 1.0
    %v3745 = vrcp.pop %v3744
    %v3746 = vmul.f32 %v3744, %v3745
    %v3747 = vsub.f32 1.0, %v3746
    %v3748 = vmul.f32 %v3745, %v3747
    %v3749 = vadd.f32 %v3745, %v3748
    %vm3750 = vweird.f32 %v3744
    %vm3751 = vweird.f32 %v3745
    %vm3752 = vmor %vm3750, %vm3751
    %v3753 = vsel %vm3752, %v3745, %v3749
    %v3754 = vand.u32 2147483647, %v3744
    %vm3755 = vcmp.eq.f32.partialorder %v3754, 8.507059e+37
    %v3756 = vand.u32 %v3744, 2147483648
    %v3757 = vor.u32 1.1754944e-38, %v3756
    %v3758 = vsel %vm3755, %v3757, %v3753
    %v3759 = vmul.f32 1.0, %v3758
    %v3760 = vtanh.pop %v3720
    %v3761 = vxor.u32 %v3721, 2147483648
    %v3762 = vmul.f32 %v3761, 1.442695
    %v3763 = vpow.pop %v3762
    %v3764 = vadd.f32 %v3763, 1.0
    %v3765 = vrcp.pop %v3764
    %v3766 = vmul.f32 %v3764, %v3765
    %v3767 = vsub.f32 1.0, %v3766
    %v3768 = vmul.f32 %v3765, %v3767
    %v3769 = vadd.f32 %v3765, %v3768
    %vm3770 = vweird.f32 %v3764
    %vm3771 = vweird.f32 %v3765
    %vm3772 = vmor %vm3770, %vm3771
    %v3773 = vsel %vm3772, %v3765, %v3769
    %v3774 = vand.u32 2147483647, %v3764
    %vm3775 = vcmp.eq.f32.partialorder %v3774, 8.507059e+37
    %v3776 = vand.u32 %v3764, 2147483648
    %v3777 = vor.u32 1.1754944e-38, %v3776
    %v3778 = vsel %vm3775, %v3777, %v3773
    %v3779 = vmul.f32 1.0, %v3778
    %v3780 = vmul.f32 %v3759, %v3350
    %v3781 = vmul.f32 %v3740, %v3760
    %v3782 = vadd.f32 %v3780, %v3781
    %v3783 = vtanh.pop %v3782
    %v3784 = vmul.f32 %v3779, %v3783
    %v3785 = vld [vmem:[#allocation5] sm:$0xff]
    %v3786 = vld [vmem:[#allocation5 + $0x8] sm:$0xff]
    %v3787 = vld [vmem:[#allocation5 + $0x10] sm:$0xff]
    %v3788 = vld [vmem:[#allocation5 + $0x18] sm:$0xff]
    %v3789 = vld [vmem:[#allocation5 + $0x20] sm:$0xff]
    %v3790 = vld [vmem:[#allocation5 + $0x28] sm:$0xff]
    %v3791 = vld [vmem:[#allocation5 + $0x30] sm:$0xff]
    %v3792 = vld [vmem:[#allocation5 + $0x38] sm:$0xff]
    %v3793 = vld [vmem:[#allocation5 + $0x40] sm:$0xff]
    %v3794 = vld [vmem:[#allocation5 + $0x48] sm:$0xff]
    %v3795 = vld [vmem:[#allocation5 + $0x50] sm:$0xff]
    %v3796 = vld [vmem:[#allocation5 + $0x58] sm:$0xff]
    %v3797 = vld [vmem:[#allocation5 + $0x60] sm:$0xff]
    %v3798 = vld [vmem:[#allocation5 + $0x68] sm:$0xff]
    %v3799 = vld [vmem:[#allocation5 + $0x70] sm:$0xff]
    %v3800 = vld [vmem:[#allocation5 + $0x78] sm:$0xff]
    %v3801 = vld [vmem:[#allocation5 + $0x80] sm:$0xff]
    %v3802 = vld [vmem:[#allocation5 + $0x88] sm:$0xff]
    %v3803 = vld [vmem:[#allocation5 + $0x90] sm:$0xff]
    %v3804 = vld [vmem:[#allocation5 + $0x98] sm:$0xff]
    %v3805 = vld [vmem:[#allocation5 + $0xa0] sm:$0xff]
    %v3806 = vld [vmem:[#allocation5 + $0xa8] sm:$0xff]
    %v3807 = vld [vmem:[#allocation5 + $0xb0] sm:$0xff]
    %v3808 = vld [vmem:[#allocation5 + $0xb8] sm:$0xff]
    %v3809 = vld [vmem:[#allocation5 + $0xc0] sm:$0xff]
    %v3810 = vld [vmem:[#allocation5 + $0xc8] sm:$0xff]
    %v3811 = vld [vmem:[#allocation5 + $0xd0] sm:$0xff]
    %v3812 = vld [vmem:[#allocation5 + $0xd8] sm:$0xff]
    %v3813 = vld [vmem:[#allocation5 + $0xe0] sm:$0xff]
    %v3814 = vld [vmem:[#allocation5 + $0xe8] sm:$0xff]
    %v3815 = vld [vmem:[#allocation5 + $0xf0] sm:$0xff]
    %v3816 = vld [vmem:[#allocation5 + $0xf8] sm:$0xff]
    %v3817 = vld [vmem:[#allocation5 + $0x100] sm:$0xff]
    %v3818 = vld [vmem:[#allocation5 + $0x108] sm:$0xff]
    %v3819 = vld [vmem:[#allocation5 + $0x110] sm:$0xff]
    %v3820 = vld [vmem:[#allocation5 + $0x118] sm:$0xff]
    %v3821 = vld [vmem:[#allocation5 + $0x120] sm:$0xff]
    %v3822 = vld [vmem:[#allocation5 + $0x128] sm:$0xff]
    %v3823 = vld [vmem:[#allocation5 + $0x130] sm:$0xff]
    %v3824 = vld [vmem:[#allocation5 + $0x138] sm:$0xff]
    %v3825 = vld [vmem:[#allocation5 + $0x140] sm:$0xff]
    %v3826 = vld [vmem:[#allocation5 + $0x148] sm:$0xff]
    %v3827 = vld [vmem:[#allocation5 + $0x150] sm:$0xff]
    %v3828 = vld [vmem:[#allocation5 + $0x158] sm:$0xff]
    %v3829 = vld [vmem:[#allocation5 + $0x160] sm:$0xff]
    %v3830 = vld [vmem:[#allocation5 + $0x168] sm:$0xff]
    %v3831 = vld [vmem:[#allocation5 + $0x170] sm:$0xff]
    %v3832 = vld [vmem:[#allocation5 + $0x178] sm:$0xff]
    %v3833 = vld [vmem:[#allocation5 + $0x180] sm:$0xff]
    %v3834 = vld [vmem:[#allocation5 + $0x188] sm:$0xff]
    %v3835 = vld [vmem:[#allocation5 + $0x190] sm:$0xff]
    %v3836 = vld [vmem:[#allocation5 + $0x198] sm:$0xff]
    %v3837 = vld [vmem:[#allocation5 + $0x1a0] sm:$0xff]
    %v3838 = vld [vmem:[#allocation5 + $0x1a8] sm:$0xff]
    %v3839 = vld [vmem:[#allocation5 + $0x1b0] sm:$0xff]
    %v3840 = vld [vmem:[#allocation5 + $0x1b8] sm:$0xff]
    %v3841 = vld [vmem:[#allocation5 + $0x1c0] sm:$0xff]
    %v3842 = vld [vmem:[#allocation5 + $0x1c8] sm:$0xff]
    %v3843 = vld [vmem:[#allocation5 + $0x1d0] sm:$0xff]
    %v3844 = vld [vmem:[#allocation5 + $0x1d8] sm:$0xff]
    %v3845 = vld [vmem:[#allocation5 + $0x1e0] sm:$0xff]
    %v3846 = vld [vmem:[#allocation5 + $0x1e8] sm:$0xff]
    %v3847 = vld [vmem:[#allocation5 + $0x1f0] sm:$0xff]
    %v3848 = vld [vmem:[#allocation5 + $0x1f8] sm:$0xff]
    %3849 = vmatpush.msra.mxu0 %v3845
    %3850 = vmatpush.msra.mxu0 %v3841
    %3851 = vmatpush.msra.mxu0 %v3837
    %3852 = vmatpush.msra.mxu0 %v3833
    %3853 = vmatpush.msra.mxu0 %v3829
    %3854 = vmatpush.msra.mxu0 %v3825
    %3855 = vmatpush.msra.mxu0 %v3821
    %3856 = vmatpush.msra.mxu0 %v3817
    %3857 = vmatpush.msra.mxu0 %v3813
    %3858 = vmatpush.msra.mxu0 %v3809
    %3859 = vmatpush.msra.mxu0 %v3805
    %3860 = vmatpush.msra.mxu0 %v3801
    %3861 = vmatpush.msra.mxu0 %v3797
    %3862 = vmatpush.msra.mxu0 %v3793
    %3863 = vmatpush.msra.mxu0 %v3789
    %3864 = vmatpush.msra.mxu0 %v3785
    %3865 = vmatmul.f32.gmra.mxu0 %v3563
    %v3866 = vpop.f32.mrf.mxu0
    %v3867 = vadd.f32 0.0, %v3866
    %3868 = vdwg.mxu0
    %3869 = vmatpush.msra.mxu0 %v3846
    %3870 = vmatpush.msra.mxu0 %v3842
    %3871 = vmatpush.msra.mxu0 %v3838
    %3872 = vmatpush.msra.mxu0 %v3834
    %3873 = vmatpush.msra.mxu0 %v3830
    %3874 = vmatpush.msra.mxu0 %v3826
    %3875 = vmatpush.msra.mxu0 %v3822
    %3876 = vmatpush.msra.mxu0 %v3818
    %3877 = vmatpush.msra.mxu0 %v3814
    %3878 = vmatpush.msra.mxu0 %v3810
    %3879 = vmatpush.msra.mxu0 %v3806
    %3880 = vmatpush.msra.mxu0 %v3802
    %3881 = vmatpush.msra.mxu0 %v3798
    %3882 = vmatpush.msra.mxu0 %v3794
    %3883 = vmatpush.msra.mxu0 %v3790
    %3884 = vmatpush.msra.mxu0 %v3786
    %3885 = vmatmul.f32.gmra.mxu0 %v3563
    %v3886 = vpop.f32.mrf.mxu0
    %v3887 = vadd.f32 0.0, %v3886
    %3888 = vdwg.mxu0
    %3889 = vmatpush.msra.mxu0 %v3847
    %3890 = vmatpush.msra.mxu0 %v3843
    %3891 = vmatpush.msra.mxu0 %v3839
    %3892 = vmatpush.msra.mxu0 %v3835
    %3893 = vmatpush.msra.mxu0 %v3831
    %3894 = vmatpush.msra.mxu0 %v3827
    %3895 = vmatpush.msra.mxu0 %v3823
    %3896 = vmatpush.msra.mxu0 %v3819
    %3897 = vmatpush.msra.mxu0 %v3815
    %3898 = vmatpush.msra.mxu0 %v3811
    %3899 = vmatpush.msra.mxu0 %v3807
    %3900 = vmatpush.msra.mxu0 %v3803
    %3901 = vmatpush.msra.mxu0 %v3799
    %3902 = vmatpush.msra.mxu0 %v3795
    %3903 = vmatpush.msra.mxu0 %v3791
    %3904 = vmatpush.msra.mxu0 %v3787
    %3905 = vmatmul.f32.gmra.mxu0 %v3563
    %v3906 = vpop.f32.mrf.mxu0
    %v3907 = vadd.f32 0.0, %v3906
    %3908 = vdwg.mxu0
    %3909 = vmatpush.msra.mxu0 %v3848
    %3910 = vmatpush.msra.mxu0 %v3844
    %3911 = vmatpush.msra.mxu0 %v3840
    %3912 = vmatpush.msra.mxu0 %v3836
    %3913 = vmatpush.msra.mxu0 %v3832
    %3914 = vmatpush.msra.mxu0 %v3828
    %3915 = vmatpush.msra.mxu0 %v3824
    %3916 = vmatpush.msra.mxu0 %v3820
    %3917 = vmatpush.msra.mxu0 %v3816
    %3918 = vmatpush.msra.mxu0 %v3812
    %3919 = vmatpush.msra.mxu0 %v3808
    %3920 = vmatpush.msra.mxu0 %v3804
    %3921 = vmatpush.msra.mxu0 %v3800
    %3922 = vmatpush.msra.mxu0 %v3796
    %3923 = vmatpush.msra.mxu0 %v3792
    %3924 = vmatpush.msra.mxu0 %v3788
    %3925 = vmatmul.f32.gmra.mxu0 %v3563
    %v3926 = vpop.f32.mrf.mxu0
    %v3927 = vadd.f32 0.0, %v3926
    %3928 = vdwg.mxu0
    %v3929 = vadd.f32 %v3570, %v3867
    %v3930 = vadd.f32 %v3571, %v3887
    %v3931 = vadd.f32 %v3572, %v3907
    %v3932 = vadd.f32 %v3573, %v3927
    %v3933 = vxor.u32 %v3929, 2147483648
    %v3934 = vmul.f32 %v3933, 1.442695
    %v3935 = vpow.pop %v3934
    %v3936 = vadd.f32 %v3935, 1.0
    %v3937 = vrcp.pop %v3936
    %v3938 = vmul.f32 %v3936, %v3937
    %v3939 = vsub.f32 1.0, %v3938
    %v3940 = vmul.f32 %v3937, %v3939
    %v3941 = vadd.f32 %v3937, %v3940
    %vm3942 = vweird.f32 %v3936
    %vm3943 = vweird.f32 %v3937
    %vm3944 = vmor %vm3942, %vm3943
    %v3945 = vsel %vm3944, %v3937, %v3941
    %v3946 = vand.u32 2147483647, %v3936
    %vm3947 = vcmp.eq.f32.partialorder %v3946, 8.507059e+37
    %v3948 = vand.u32 %v3936, 2147483648
    %v3949 = vor.u32 1.1754944e-38, %v3948
    %v3950 = vsel %vm3947, %v3949, %v3945
    %v3951 = vmul.f32 1.0, %v3950
    %v3952 = vxor.u32 %v3930, 2147483648
    %v3953 = vmul.f32 %v3952, 1.442695
    %v3954 = vpow.pop %v3953
    %v3955 = vadd.f32 %v3954, 1.0
    %v3956 = vrcp.pop %v3955
    %v3957 = vmul.f32 %v3955, %v3956
    %v3958 = vsub.f32 1.0, %v3957
    %v3959 = vmul.f32 %v3956, %v3958
    %v3960 = vadd.f32 %v3956, %v3959
    %vm3961 = vweird.f32 %v3955
    %vm3962 = vweird.f32 %v3956
    %vm3963 = vmor %vm3961, %vm3962
    %v3964 = vsel %vm3963, %v3956, %v3960
    %v3965 = vand.u32 2147483647, %v3955
    %vm3966 = vcmp.eq.f32.partialorder %v3965, 8.507059e+37
    %v3967 = vand.u32 %v3955, 2147483648
    %v3968 = vor.u32 1.1754944e-38, %v3967
    %v3969 = vsel %vm3966, %v3968, %v3964
    %v3970 = vmul.f32 1.0, %v3969
    %v3971 = vtanh.pop %v3931
    %v3972 = vxor.u32 %v3932, 2147483648
    %v3973 = vmul.f32 %v3972, 1.442695
    %v3974 = vpow.pop %v3973
    %v3975 = vadd.f32 %v3974, 1.0
    %v3976 = vrcp.pop %v3975
    %v3977 = vmul.f32 %v3975, %v3976
    %v3978 = vsub.f32 1.0, %v3977
    %v3979 = vmul.f32 %v3976, %v3978
    %v3980 = vadd.f32 %v3976, %v3979
    %vm3981 = vweird.f32 %v3975
    %vm3982 = vweird.f32 %v3976
    %vm3983 = vmor %vm3981, %vm3982
    %v3984 = vsel %vm3983, %v3976, %v3980
    %v3985 = vand.u32 2147483647, %v3975
    %vm3986 = vcmp.eq.f32.partialorder %v3985, 8.507059e+37
    %v3987 = vand.u32 %v3975, 2147483648
    %v3988 = vor.u32 1.1754944e-38, %v3987
    %v3989 = vsel %vm3986, %v3988, %v3984
    %v3990 = vmul.f32 1.0, %v3989
    %v3991 = vmul.f32 %v3970, %v3561
    %v3992 = vmul.f32 %v3951, %v3971
    %v3993 = vadd.f32 %v3991, %v3992
    %v3994 = vtanh.pop %v3993
    %v3995 = vmul.f32 %v3990, %v3994
    %3996 = vst [vmem:[%s966] sm:$0xff] %v3784
    %3997 = vst [vmem:[%s5 + $0x8] sm:$0xff] %v3995
    // Predicated region
    $region30: #{bilstm_forward.2} parent=1 // pred_check
      _
    $region31: #{bilstm_forward.2} parent=1 // pred_check_branch
      %3999 = sbr.rel (0) target = $region33
    $region32: #{bilstm_forward.2} parent=1 // pred_region
      _
    $region33: #{bilstm_forward.2} parent=1 // pred_fallthru
      _
    // Predicated region
    $region34: #{bilstm_forward.2} parent=1 // pred_check
      _
    $region35: #{bilstm_forward.2} parent=1 // pred_check_branch
      %4001 = sbr.rel (0) target = $region37
    $region36: #{bilstm_forward.2} parent=1 // pred_region
      _
    $region37: #{bilstm_forward.2} parent=1 // pred_fallthru
      _
    %4002 = vsyncpa [#allocation4], 1
    %4003 = vsyncpa [#allocation6], 1

</llo_original>
